<compile_context>
chip_gen: v6e
topology: v6e:2x2x1
jax: 0.10.0
libtpu: 0.0.40
codegen_flags: <defaults>
</compile_context>

<pallas_src>
import functools

import jax
import jax.numpy as jnp
from jax.experimental import pallas as pl
from jax.experimental.pallas import tpu as pltpu


def _attn_net_gated_kernel(x_ref, wa_ref, ba_ref, wb_ref, bb_ref,
                           wc_ref, bc_ref, a_ref):
    # x tile: (TILE_N, L) in bf16; the two big matmuls accumulate in f32 on MXU.
    x = x_ref[...]
    a_pre = jnp.dot(x, wa_ref[...],
                    preferred_element_type=jnp.float32) + ba_ref[...]
    b_pre = jnp.dot(x, wb_ref[...],
                    preferred_element_type=jnp.float32) + bb_ref[...]
    a = jnp.tanh(a_pre)                        # EUP, f32
    b_gate = jax.nn.sigmoid(b_pre)             # EUP, f32
    gated = a * b_gate                         # (TILE_N, D) f32
    # Final projection in f32; output block is lane-dense (C padded to 128).
    a_ref[...] = (jnp.dot(gated, wc_ref[...],
                          preferred_element_type=jnp.float32) + bc_ref[...])


@functools.partial(jax.jit, static_argnames=("tile_n",))
def attn_net_gated_forward(x, params, *, tile_n=256):
    """Attn_Net_Gated forward. Returns (A, x) like the PyTorch module."""
    N, L = x.shape
    D = params["wa"].shape[1]
    C = params["wc"].shape[1]
    c_pad = max(128, pl.cdiv(C, 128) * 128)          # lane-dense output width

    # Pad the (ragged) instance axis up to a multiple of the tile size.
    n_pad = pl.cdiv(N, tile_n) * tile_n
    x_p = jnp.pad(x, ((0, n_pad - N), (0, 0))) if n_pad != N else x

    # bf16 inputs to the dominant (TILE_N, L) x (L, D) matmuls.
    x_bf = x_p.astype(jnp.bfloat16)
    wa = params["wa"].astype(jnp.bfloat16)
    wb = params["wb"].astype(jnp.bfloat16)
    ba = params["ba"].astype(jnp.float32).reshape(1, D)
    bb = params["bb"].astype(jnp.float32).reshape(1, D)

    # Zero-pad the final projection so the output store is 128-lane dense.
    wc = jnp.zeros((D, c_pad), jnp.float32).at[:, :C].set(
        params["wc"].astype(jnp.float32))
    bc = jnp.zeros((1, c_pad), jnp.float32).at[:, :C].set(
        params["bc"].astype(jnp.float32).reshape(1, C))

    grid = (n_pad // tile_n,)
    A_padded = pl.pallas_call(
        _attn_net_gated_kernel,
        out_shape=jax.ShapeDtypeStruct((n_pad, c_pad), jnp.float32),
        grid=grid,
        in_specs=[
            pl.BlockSpec((tile_n, L), lambda i: (i, 0)),   # x tile (streamed)
            pl.BlockSpec((L, D), lambda i: (0, 0)),        # Wa (resident)
            pl.BlockSpec((1, D), lambda i: (0, 0)),        # ba
            pl.BlockSpec((L, D), lambda i: (0, 0)),        # Wb (resident)
            pl.BlockSpec((1, D), lambda i: (0, 0)),        # bb
            pl.BlockSpec((D, c_pad), lambda i: (0, 0)),    # Wc (padded)
            pl.BlockSpec((1, c_pad), lambda i: (0, 0)),    # bc (padded)
        ],
        out_specs=pl.BlockSpec((tile_n, c_pad), lambda i: (i, 0)),
        compiler_params=pltpu.CompilerParams(
            dimension_semantics=("parallel",),
            vmem_limit_bytes=32 * 1024 * 1024,
        ),
    )(x_bf, wa, ba, wb, bb, wc, bc)

    A = A_padded[:N, :C]
    return A, x


def _init_params(key, L, D, C):
    """Deterministic xavier-normal-style init (weights stored as (in, out))."""
    ks = jax.random.split(key, 6)

    def xavier(k, fan_in, fan_out):
        std = (2.0 / (fan_in + fan_out)) ** 0.5
        return std * jax.random.normal(k, (fan_in, fan_out), dtype=jnp.float32)

    def bias(k, fan_in, n):
        bound = 1.0 / (fan_in ** 0.5)
        return jax.random.uniform(k, (n,), jnp.float32, -bound, bound)

    return {
        "wa": xavier(ks[0], L, D), "ba": bias(ks[1], L, D),   # attention_a
        "wb": xavier(ks[2], L, D), "bb": bias(ks[3], L, D),   # attention_b
        "wc": xavier(ks[4], D, C), "bc": bias(ks[5], D, C),   # attention_c
    }


def _reference_forward(x, p):
    """Pure-JAX reference mirroring the kernel's bf16-matmul / f32-accum precision."""
    xb = x.astype(jnp.bfloat16)
    a = jnp.tanh(jnp.dot(xb, p["wa"].astype(jnp.bfloat16),
                         preferred_element_type=jnp.float32)
                 + p["ba"].reshape(1, -1))
    b = jax.nn.sigmoid(jnp.dot(xb, p["wb"].astype(jnp.bfloat16),
                               preferred_element_type=jnp.float32)
                       + p["bb"].reshape(1, -1))
    A = (jnp.dot(a * b, p["wc"], preferred_element_type=jnp.float32)
         + p["bc"].reshape(1, -1))
    return A, x


if __name__ == "__main__":
    # Attn_Net_Gated defaults: L=2048, D=256, n_classes=1.
    L, D, C = 2048, 256, 1
    N = 500                       # small bag; not a multiple of TILE_N (ragged)

    key = jax.random.PRNGKey(0)
    k_x, k_p = jax.random.split(key)
    x = jax.random.normal(k_x, (N, L), dtype=jnp.float32)
    params = _init_params(k_p, L, D, C)

    A, x_out = attn_net_gated_forward(x, params, tile_n=256)
    jax.block_until_ready((A, x_out))

    ref_A, ref_x = _reference_forward(x, params)
    assert A.shape == (N, C), A.shape
    assert jnp.allclose(A, ref_A, atol=1e-3, rtol=1e-3), \
        float(jnp.max(jnp.abs(A - ref_A)))
    assert jnp.array_equal(x_out, x)

    print("KERNEL_OK")
</pallas_src>

<mosaic_0001>
module attributes {stable_mosaic.version = 11 : i64} {
  func.func @_attn_net_gated_kernel(%arg0: i32, %arg1: memref<256x2048xbf16, #tpu.memory_space<vmem>>, %arg2: memref<2048x256xbf16, #tpu.memory_space<vmem>>, %arg3: memref<1x256xf32, #tpu.memory_space<vmem>>, %arg4: memref<2048x256xbf16, #tpu.memory_space<vmem>>, %arg5: memref<1x256xf32, #tpu.memory_space<vmem>>, %arg6: memref<256x128xf32, #tpu.memory_space<vmem>>, %arg7: memref<1x128xf32, #tpu.memory_space<vmem>>, %arg8: memref<256x128xf32, #tpu.memory_space<vmem>>) attributes {dimension_semantics = [#tpu.dimension_semantics<parallel>], iteration_bounds = array<i64: 2>, scalar_prefetch = 0 : i64, scratch_operands = 0 : i64, tpu.core_type = #tpu.core_type<tc>, window_params = [{transform_indices = @transform_0, window_bounds = array<i64: 256, 2048>}, {pipeline_mode = #tpu.pipeline_mode<synchronous>, transform_indices = @transform_1, window_bounds = array<i64: 2048, 256>}, {pipeline_mode = #tpu.pipeline_mode<synchronous>, transform_indices = @transform_2, window_bounds = array<i64: 1, 256>}, {pipeline_mode = #tpu.pipeline_mode<synchronous>, transform_indices = @transform_3, window_bounds = array<i64: 2048, 256>}, {pipeline_mode = #tpu.pipeline_mode<synchronous>, transform_indices = @transform_4, window_bounds = array<i64: 1, 256>}, {pipeline_mode = #tpu.pipeline_mode<synchronous>, transform_indices = @transform_5, window_bounds = array<i64: 256, 128>}, {pipeline_mode = #tpu.pipeline_mode<synchronous>, transform_indices = @transform_6, window_bounds = array<i64: 1, 128>}, {transform_indices = @transform_7, window_bounds = array<i64: 256, 128>}]} {
    %c0 = arith.constant 0 : index
    %c0_0 = arith.constant 0 : index
    %0 = vector.load %arg1[%c0, %c0_0] : memref<256x2048xbf16, #tpu.memory_space<vmem>>, vector<256x2048xbf16>
    %c0_1 = arith.constant 0 : index
    %c0_2 = arith.constant 0 : index
    %1 = vector.load %arg2[%c0_1, %c0_2] : memref<2048x256xbf16, #tpu.memory_space<vmem>>, vector<2048x256xbf16>
    %cst = arith.constant dense<0.000000e+00> : vector<256x256xf32>
    %2 = tpu.matmul %0, %1, %cst {dimension_numbers = #tpu.dot_dimension_numbers<[1], [0], [0], [1], [0, 0, 1, 1], [], []>} : vector<256x2048xbf16>, vector<2048x256xbf16>, vector<256x256xf32> -> vector<256x256xf32>
    %c0_3 = arith.constant 0 : index
    %c0_4 = arith.constant 0 : index
    %3 = vector.load %arg3[%c0_3, %c0_4] : memref<1x256xf32, #tpu.memory_space<vmem>>, vector<1x256xf32>
    %4 = vector.broadcast %3 : vector<1x256xf32> to vector<256x256xf32>
    %5 = arith.addf %2, %4 : vector<256x256xf32>
    %c0_5 = arith.constant 0 : index
    %c0_6 = arith.constant 0 : index
    %6 = vector.load %arg4[%c0_5, %c0_6] : memref<2048x256xbf16, #tpu.memory_space<vmem>>, vector<2048x256xbf16>
    %cst_7 = arith.constant dense<0.000000e+00> : vector<256x256xf32>
    %7 = tpu.matmul %0, %6, %cst_7 {dimension_numbers = #tpu.dot_dimension_numbers<[1], [0], [0], [1], [0, 0, 1, 1], [], []>} : vector<256x2048xbf16>, vector<2048x256xbf16>, vector<256x256xf32> -> vector<256x256xf32>
    %c0_8 = arith.constant 0 : index
    %c0_9 = arith.constant 0 : index
    %8 = vector.load %arg5[%c0_8, %c0_9] : memref<1x256xf32, #tpu.memory_space<vmem>>, vector<1x256xf32>
    %9 = vector.broadcast %8 : vector<1x256xf32> to vector<256x256xf32>
    %10 = arith.addf %7, %9 : vector<256x256xf32>
    %11 = math.tanh %5 : vector<256x256xf32>
    %12 = arith.negf %10 : vector<256x256xf32>
    %13 = math.exp %12 : vector<256x256xf32>
    %cst_10 = arith.constant 1.000000e+00 : f32
    %14 = vector.broadcast %cst_10 : f32 to vector<256x256xf32>
    %15 = arith.addf %14, %13 : vector<256x256xf32>
    %16 = arith.divf %14, %15 : vector<256x256xf32>
    %17 = arith.mulf %11, %16 : vector<256x256xf32>
    %c0_11 = arith.constant 0 : index
    %c0_12 = arith.constant 0 : index
    %18 = vector.load %arg6[%c0_11, %c0_12] : memref<256x128xf32, #tpu.memory_space<vmem>>, vector<256x128xf32>
    %cst_13 = arith.constant dense<0.000000e+00> : vector<256x128xf32>
    %19 = tpu.matmul %17, %18, %cst_13 {dimension_numbers = #tpu.dot_dimension_numbers<[1], [0], [0], [1], [0, 0, 1, 1], [], []>} : vector<256x256xf32>, vector<256x128xf32>, vector<256x128xf32> -> vector<256x128xf32>
    %c0_14 = arith.constant 0 : index
    %c0_15 = arith.constant 0 : index
    %20 = vector.load %arg7[%c0_14, %c0_15] : memref<1x128xf32, #tpu.memory_space<vmem>>, vector<1x128xf32>
    %21 = vector.broadcast %20 : vector<1x128xf32> to vector<256x128xf32>
    %22 = arith.addf %19, %21 : vector<256x128xf32>
    %c0_16 = arith.constant 0 : index
    %c0_17 = arith.constant 0 : index
    %23 = vector.load %arg8[%c0_16, %c0_17] : memref<256x128xf32, #tpu.memory_space<vmem>>, vector<256x128xf32>
    tpu.vector_store %arg8[%c0_16, %c0_17], %22 {strides = array<i32>} : memref<256x128xf32, #tpu.memory_space<vmem>>, vector<256x128xf32>,
    return
  }
  func.func @transform_0(%arg0: i32) -> (i32, i32) {
    %c0_i32 = arith.constant 0 : i32
    %c0_i32_0 = arith.constant 0 : i32
    return %arg0, %c0_i32 : i32, i32
  }
  func.func @transform_1(%arg0: i32) -> (i32, i32) {
    %c0_i32 = arith.constant 0 : i32
    %c0_i32_0 = arith.constant 0 : i32
    %c0_i32_1 = arith.constant 0 : i32
    return %c0_i32, %c0_i32_0 : i32, i32
  }
  func.func @transform_2(%arg0: i32) -> (i32, i32) {
    %c0_i32 = arith.constant 0 : i32
    %c0_i32_0 = arith.constant 0 : i32
    %c0_i32_1 = arith.constant 0 : i32
    return %c0_i32, %c0_i32_0 : i32, i32
  }
  func.func @transform_3(%arg0: i32) -> (i32, i32) {
    %c0_i32 = arith.constant 0 : i32
    %c0_i32_0 = arith.constant 0 : i32
    %c0_i32_1 = arith.constant 0 : i32
    return %c0_i32, %c0_i32_0 : i32, i32
  }
  func.func @transform_4(%arg0: i32) -> (i32, i32) {
    %c0_i32 = arith.constant 0 : i32
    %c0_i32_0 = arith.constant 0 : i32
    %c0_i32_1 = arith.constant 0 : i32
    return %c0_i32, %c0_i32_0 : i32, i32
  }
  func.func @transform_5(%arg0: i32) -> (i32, i32) {
    %c0_i32 = arith.constant 0 : i32
    %c0_i32_0 = arith.constant 0 : i32
    %c0_i32_1 = arith.constant 0 : i32
    return %c0_i32, %c0_i32_0 : i32, i32
  }
  func.func @transform_6(%arg0: i32) -> (i32, i32) {
    %c0_i32 = arith.constant 0 : i32
    %c0_i32_0 = arith.constant 0 : i32
    %c0_i32_1 = arith.constant 0 : i32
    return %c0_i32, %c0_i32_0 : i32, i32
  }
  func.func @transform_7(%arg0: i32) -> (i32, i32) {
    %c0_i32 = arith.constant 0 : i32
    %c0_i32_0 = arith.constant 0 : i32
    return %arg0, %c0_i32 : i32, i32
  }
}

</mosaic_0001>

<llo_original>
// kernel: attn_net_gated_forward.1
$region0: #{attn_net_gated_forward.1}
  #allocation0 [shape = 'u32[]', space=smem, size = 0x4, offset = 0x4, fixed_abs, tag = 'smem constant byte address 0x4 - core index']
  #allocation1 [shape = 'u32[144,128]{1,0:T(1,128)}', space=vmem, size = 0x12000, scoped, tag = 'internal scratch']
  %s0 = inlined_call_operand.vmem [shape: bf16[512,2048], index: 0, kind: input, shape index: {}]
  %s1 = inlined_call_operand.vmem [shape: bf16[2048,256], index: 1, kind: input, shape index: {}]
  %s2 = inlined_call_operand.vmem [shape: f32[1,256], index: 2, kind: input, shape index: {}]
  %s3 = inlined_call_operand.vmem [shape: bf16[2048,256], index: 3, kind: input, shape index: {}]
  %s4 = inlined_call_operand.vmem [shape: f32[1,256], index: 4, kind: input, shape index: {}]
  %s5 = inlined_call_operand.vmem [shape: f32[256,128], index: 5, kind: input, shape index: {}]
  %s6 = inlined_call_operand.vmem [shape: f32[1,128], index: 6, kind: input, shape index: {}]
  %s7 = inlined_call_operand.vmem [shape: f32[512,128], index: 7, kind: output, shape index: {}]
  %s8 = sld [smem:[#allocation0]]
  $region61: #{attn_net_gated_forward.1} parent=0
    _
  %s10 = ssub.s32 1, %s8
  %s11 = scalar_select 0, %s10, %s8
  loop: start=0, step=1, limit=4
  $region2: #{attn_net_gated_forward.1} parent=0 // loop_pre_header
    _
  $region3: #{attn_net_gated_forward.1} parent=0 // loop_header
    %s13 = sphi 0, %s17
    %p14 = scmp.ge.s32.totalorder %s13, 4
    %s23 = sphi 0, %s25
    %s26 = sphi 0, %s23
    %s27 = sphi 0, %s26
    %s43 = sphi 0, %s27
    %s47 = sphi 0, %s47
    %s49 = sphi 0, %s47
    %s50 = sphi 0, %s49
    %s64 = sphi 0, %s50
    %s68 = sphi 0, %s68
    %s70 = sphi 0, %s68
    %s71 = sphi 0, %s70
    %s85 = sphi 0, %s71
    %s89 = sphi 0, %s89
    %s91 = sphi 0, %s89
    %s92 = sphi 0, %s91
    %s106 = sphi 0, %s92
    %s110 = sphi 0, %s110
    %s112 = sphi 0, %s110
    %s113 = sphi 0, %s112
    %s127 = sphi 0, %s113
    %s131 = sphi 0, %s131
    %s133 = sphi 0, %s131
    %s134 = sphi 0, %s133
    %s148 = sphi 0, %s134
    %s152 = sphi 0, %s152
    %s154 = sphi 0, %s152
    %s155 = sphi 0, %s154
    %s169 = sphi 0, %s155
    %s175 = sphi 0, %s177
    %s178 = sphi 0, %s175
    %s179 = sphi 0, %s178
    %s195 = sphi 0, %s179
  $region4: #{attn_net_gated_forward.1} parent=0 // loop_header_branch
    %16 = sbr.rel (%p14) target = $region8
  $region5: #{attn_net_gated_forward.1} parent=0 // loop_body
    %s18 = ssub.s32 %s13, 1
    %s19 = ssub.s32 %s13, 2
    %s20 = sadd.s32 %s13, 1
    %s21 = ssub.s32 %s13, %s20
    %p22 = scmp.eq.s32.totalorder %s21, 0
    %s24 = sadd.s32 %s23, 1
    %s25 = scalar_select %p22, %s23, %s24
    %p28 = pneg %p22
    %p29 = scmp.eq.s32.totalorder %s13, 1
    %p30 = por %p28, %p29
    %p31 = scmp.ne.s32.totalorder %s23, %s26
    %p32 = scmp.eq.s32.totalorder %s13, 0
    %p33 = por %p31, %p32
    %p34 = scmp.ne.s32.totalorder %s23, %s26
    %p35 = scmp.eq.s32.totalorder %s18, 1
    %p36 = por %p34, %p35
    %p37 = scmp.ne.s32.totalorder %s26, %s27
    %p38 = scmp.eq.s32.totalorder %s18, 0
    %p39 = por %p37, %p38
    %p40 = scmp.ne.s32.totalorder %s26, %s27
    %p41 = scmp.eq.s32.totalorder %s19, 1
    %p42 = por %p40, %p41
    %p44 = scmp.ne.s32.totalorder %s27, %s43
    %p45 = scmp.eq.s32.totalorder %s19, 0
    %p46 = por %p44, %p45
    %s48 = sadd.s32 %s47, 1
    %p51 = scmp.eq.s32.totalorder %s13, 1
    %p52 = scmp.ne.s32.totalorder %s47, %s49
    %p53 = scmp.eq.s32.totalorder %s13, 0
    %p54 = por %p52, %p53
    %p55 = scmp.ne.s32.totalorder %s47, %s49
    %p56 = scmp.eq.s32.totalorder %s18, 1
    %p57 = por %p55, %p56
    %p58 = scmp.ne.s32.totalorder %s49, %s50
    %p59 = scmp.eq.s32.totalorder %s18, 0
    %p60 = por %p58, %p59
    %p61 = scmp.ne.s32.totalorder %s49, %s50
    %p62 = scmp.eq.s32.totalorder %s19, 1
    %p63 = por %p61, %p62
    %p65 = scmp.ne.s32.totalorder %s50, %s64
    %p66 = scmp.eq.s32.totalorder %s19, 0
    %p67 = por %p65, %p66
    %s69 = sadd.s32 %s68, 1
    %p72 = scmp.eq.s32.totalorder %s13, 1
    %p73 = scmp.ne.s32.totalorder %s68, %s70
    %p74 = scmp.eq.s32.totalorder %s13, 0
    %p75 = por %p73, %p74
    %p76 = scmp.ne.s32.totalorder %s68, %s70
    %p77 = scmp.eq.s32.totalorder %s18, 1
    %p78 = por %p76, %p77
    %p79 = scmp.ne.s32.totalorder %s70, %s71
    %p80 = scmp.eq.s32.totalorder %s18, 0
    %p81 = por %p79, %p80
    %p82 = scmp.ne.s32.totalorder %s70, %s71
    %p83 = scmp.eq.s32.totalorder %s19, 1
    %p84 = por %p82, %p83
    %p86 = scmp.ne.s32.totalorder %s71, %s85
    %p87 = scmp.eq.s32.totalorder %s19, 0
    %p88 = por %p86, %p87
    %s90 = sadd.s32 %s89, 1
    %p93 = scmp.eq.s32.totalorder %s13, 1
    %p94 = scmp.ne.s32.totalorder %s89, %s91
    %p95 = scmp.eq.s32.totalorder %s13, 0
    %p96 = por %p94, %p95
    %p97 = scmp.ne.s32.totalorder %s89, %s91
    %p98 = scmp.eq.s32.totalorder %s18, 1
    %p99 = por %p97, %p98
    %p100 = scmp.ne.s32.totalorder %s91, %s92
    %p101 = scmp.eq.s32.totalorder %s18, 0
    %p102 = por %p100, %p101
    %p103 = scmp.ne.s32.totalorder %s91, %s92
    %p104 = scmp.eq.s32.totalorder %s19, 1
    %p105 = por %p103, %p104
    %p107 = scmp.ne.s32.totalorder %s92, %s106
    %p108 = scmp.eq.s32.totalorder %s19, 0
    %p109 = por %p107, %p108
    %s111 = sadd.s32 %s110, 1
    %p114 = scmp.eq.s32.totalorder %s13, 1
    %p115 = scmp.ne.s32.totalorder %s110, %s112
    %p116 = scmp.eq.s32.totalorder %s13, 0
    %p117 = por %p115, %p116
    %p118 = scmp.ne.s32.totalorder %s110, %s112
    %p119 = scmp.eq.s32.totalorder %s18, 1
    %p120 = por %p118, %p119
    %p121 = scmp.ne.s32.totalorder %s112, %s113
    %p122 = scmp.eq.s32.totalorder %s18, 0
    %p123 = por %p121, %p122
    %p124 = scmp.ne.s32.totalorder %s112, %s113
    %p125 = scmp.eq.s32.totalorder %s19, 1
    %p126 = por %p124, %p125
    %p128 = scmp.ne.s32.totalorder %s113, %s127
    %p129 = scmp.eq.s32.totalorder %s19, 0
    %p130 = por %p128, %p129
    %s132 = sadd.s32 %s131, 1
    %p135 = scmp.eq.s32.totalorder %s13, 1
    %p136 = scmp.ne.s32.totalorder %s131, %s133
    %p137 = scmp.eq.s32.totalorder %s13, 0
    %p138 = por %p136, %p137
    %p139 = scmp.ne.s32.totalorder %s131, %s133
    %p140 = scmp.eq.s32.totalorder %s18, 1
    %p141 = por %p139, %p140
    %p142 = scmp.ne.s32.totalorder %s133, %s134
    %p143 = scmp.eq.s32.totalorder %s18, 0
    %p144 = por %p142, %p143
    %p145 = scmp.ne.s32.totalorder %s133, %s134
    %p146 = scmp.eq.s32.totalorder %s19, 1
    %p147 = por %p145, %p146
    %p149 = scmp.ne.s32.totalorder %s134, %s148
    %p150 = scmp.eq.s32.totalorder %s19, 0
    %p151 = por %p149, %p150
    %s153 = sadd.s32 %s152, 1
    %p156 = scmp.eq.s32.totalorder %s13, 1
    %p157 = scmp.ne.s32.totalorder %s152, %s154
    %p158 = scmp.eq.s32.totalorder %s13, 0
    %p159 = por %p157, %p158
    %p160 = scmp.ne.s32.totalorder %s152, %s154
    %p161 = scmp.eq.s32.totalorder %s18, 1
    %p162 = por %p160, %p161
    %p163 = scmp.ne.s32.totalorder %s154, %s155
    %p164 = scmp.eq.s32.totalorder %s18, 0
    %p165 = por %p163, %p164
    %p166 = scmp.ne.s32.totalorder %s154, %s155
    %p167 = scmp.eq.s32.totalorder %s19, 1
    %p168 = por %p166, %p167
    %p170 = scmp.ne.s32.totalorder %s155, %s169
    %p171 = scmp.eq.s32.totalorder %s19, 0
    %p172 = por %p170, %p171
    %s173 = ssub.s32 %s13, %s20
    %p174 = scmp.eq.s32.totalorder %s173, 0
    %s176 = sadd.s32 %s175, 1
    %s177 = scalar_select %p174, %s175, %s176
    %p180 = pneg %p174
    %p181 = scmp.eq.s32.totalorder %s13, 1
    %p182 = por %p180, %p181
    %p183 = scmp.ne.s32.totalorder %s175, %s178
    %p184 = scmp.eq.s32.totalorder %s13, 0
    %p185 = por %p183, %p184
    %p186 = scmp.ne.s32.totalorder %s175, %s178
    %p187 = scmp.eq.s32.totalorder %s18, 1
    %p188 = por %p186, %p187
    %p189 = scmp.ne.s32.totalorder %s178, %s179
    %p190 = scmp.eq.s32.totalorder %s18, 0
    %p191 = por %p189, %p190
    %p192 = scmp.ne.s32.totalorder %s178, %s179
    %p193 = scmp.eq.s32.totalorder %s19, 1
    %p194 = por %p192, %p193
    %p196 = scmp.ne.s32.totalorder %s179, %s195
    %p197 = scmp.eq.s32.totalorder %s19, 0
    %p198 = por %p196, %p197
    %p199 = scmp.le.s32.totalorder 1, %s13
    %p200 = scmp.lt.s32.totalorder %s13, 3
    %p201 = pnand %p199, %p200
    %p202 = pneg %p201
    // Predicated region
    $region9: #{attn_net_gated_forward.1} parent=5 // pred_check
      _
    $region10: #{attn_net_gated_forward.1} parent=5 // pred_check_branch
      %204 = sbr.rel (%p201) target = $region12
    $region11: #{attn_net_gated_forward.1} parent=5 // pred_region
      %s205 = ssub.s32 %s13, 1
      // Predicated region
      $region13: #{attn_net_gated_forward.1} parent=11 // pred_check
        %p206 = pneg %p60
      $region14: #{attn_net_gated_forward.1} parent=11 // pred_check_branch
        %208 = sbr.rel (%p206) target = $region16
      $region15: #{attn_net_gated_forward.1} parent=11 // pred_region
        _
      $region16: #{attn_net_gated_forward.1} parent=11 // pred_fallthru
        _
      // Predicated region
      $region17: #{attn_net_gated_forward.1} parent=11 // pred_check
        %p209 = pneg %p81
      $region18: #{attn_net_gated_forward.1} parent=11 // pred_check_branch
        %211 = sbr.rel (%p209) target = $region20
      $region19: #{attn_net_gated_forward.1} parent=11 // pred_region
        _
      $region20: #{attn_net_gated_forward.1} parent=11 // pred_fallthru
        _
      // Predicated region
      $region21: #{attn_net_gated_forward.1} parent=11 // pred_check
        %p212 = pneg %p102
      $region22: #{attn_net_gated_forward.1} parent=11 // pred_check_branch
        %214 = sbr.rel (%p212) target = $region24
      $region23: #{attn_net_gated_forward.1} parent=11 // pred_region
        _
      $region24: #{attn_net_gated_forward.1} parent=11 // pred_fallthru
        _
      // Predicated region
      $region25: #{attn_net_gated_forward.1} parent=11 // pred_check
        %p215 = pneg %p123
      $region26: #{attn_net_gated_forward.1} parent=11 // pred_check_branch
        %217 = sbr.rel (%p215) target = $region28
      $region27: #{attn_net_gated_forward.1} parent=11 // pred_region
        _
      $region28: #{attn_net_gated_forward.1} parent=11 // pred_fallthru
        _
      // Predicated region
      $region29: #{attn_net_gated_forward.1} parent=11 // pred_check
        %p218 = pneg %p144
      $region30: #{attn_net_gated_forward.1} parent=11 // pred_check_branch
        %220 = sbr.rel (%p218) target = $region32
      $region31: #{attn_net_gated_forward.1} parent=11 // pred_region
        _
      $region32: #{attn_net_gated_forward.1} parent=11 // pred_fallthru
        _
      // Predicated region
      $region33: #{attn_net_gated_forward.1} parent=11 // pred_check
        %p221 = pneg %p165
      $region34: #{attn_net_gated_forward.1} parent=11 // pred_check_branch
        %223 = sbr.rel (%p221) target = $region36
      $region35: #{attn_net_gated_forward.1} parent=11 // pred_region
        _
      $region36: #{attn_net_gated_forward.1} parent=11 // pred_fallthru
        _
    $region12: #{attn_net_gated_forward.1} parent=5 // pred_fallthru
      _
    %p224 = scmp.lt.s32.totalorder %s13, 2
    // Predicated region
    $region37: #{attn_net_gated_forward.1} parent=5 // pred_check
      %p225 = pneg %p224
    $region38: #{attn_net_gated_forward.1} parent=5 // pred_check_branch
      %227 = sbr.rel (%p225) target = $region40
    $region39: #{attn_net_gated_forward.1} parent=5 // pred_region
      // Predicated region
      $region41: #{attn_net_gated_forward.1} parent=39 // pred_check
        %p228 = pneg %p33
      $region42: #{attn_net_gated_forward.1} parent=39 // pred_check_branch
        %230 = sbr.rel (%p228) target = $region44
      $region43: #{attn_net_gated_forward.1} parent=39 // pred_region
        %s231 = smul.u32 32, %s13
        %p232 = scmp.lt.s32.totalorder %s231, 63
        %s233 = scalar_select %p232, %s231, 63
        %s234 = smul.addr %s233, 16
        %s235 = smul.addr %s234, 4
        %s236 = scalar_lea.vmem %s0, %s235
        %s237 = smul.u32 32, %s13
      $region44: #{attn_net_gated_forward.1} parent=39 // pred_fallthru
        _
    $region40: #{attn_net_gated_forward.1} parent=5 // pred_fallthru
      _
    %p238 = scmp.le.s32.totalorder 1, %s13
    %p239 = scmp.lt.s32.totalorder %s13, 3
    %p240 = pnand %p238, %p239
    %p241 = pneg %p240
    // Predicated region
    $region45: #{attn_net_gated_forward.1} parent=5 // pred_check
      _
    $region46: #{attn_net_gated_forward.1} parent=5 // pred_check_branch
      %243 = sbr.rel (%p240) target = $region48
    $region47: #{attn_net_gated_forward.1} parent=5 // pred_region
      %s244 = ssub.s32 %s13, 1
      %s245 = smul.u32 32, %s18
      %p246 = scmp.lt.s32.totalorder %s245, 63
      %s247 = scalar_select %p246, %s245, 63
      %s248 = smul.addr %s247, 16
      %s249 = smul.addr %s248, 4
      %s250 = scalar_lea.vmem %s0, %s249
      %p251 = pneg %p39
      %p252 = pneg %p36
      %p253 = pneg %p60
      %p254 = pneg %p57
      %p255 = pneg %p81
      %p256 = pneg %p78
      %p257 = pneg %p102
      %p258 = pneg %p99
      %p259 = pneg %p123
      %p260 = pneg %p120
      %p261 = pneg %p144
      %p262 = pneg %p141
      %p263 = pneg %p165
      %p264 = pneg %p162
      %p265 = pneg %p191
      %p266 = pneg %p188
      %s267 = smul.u32 32, %s18
      %p268 = scmp.lt.s32.totalorder %s267, 63
      %s269 = scalar_select %p268, %s267, 63
      %s270 = smul.addr %s269, 8
      %s271 = scalar_lea.vmem %s7, %s270
      %s272 = smul.u32 32, %s18
      %p273 = scmp.lt.s32.totalorder %s272, 63
      %s274 = scalar_select %p273, %s272, 63
      %s275 = smul.addr %s274, 16
      %s276 = smul.addr %s275, 4
      %s277 = scalar_lea.vmem %s0, %s276
      %s278 = smul.u32 32, %s18
      %s279 = smul.u32 32, %s18
      %p280 = scmp.lt.s32.totalorder %s279, 63
      %s281 = scalar_select %p280, %s279, 63
      %s282 = smul.addr %s281, 8
      %s283 = scalar_lea.vmem %s7, %s282
      %s284 = smul.u32 32, %s18
      %v285 = vld [vmem:[%s277] sm:$0xff]
      %v286 = vld [vmem:[%s277 + $0x8] sm:$0xff]
      %v287 = vld [vmem:[%s277 + $0x10] sm:$0xff]
      %v288 = vld [vmem:[%s277 + $0x18] sm:$0xff]
      %v289 = vld [vmem:[%s277 + $0x20] sm:$0xff]
      %v290 = vld [vmem:[%s277 + $0x28] sm:$0xff]
      %v291 = vld [vmem:[%s277 + $0x30] sm:$0xff]
      %v292 = vld [vmem:[%s277 + $0x38] sm:$0xff]
      %v293 = vld [vmem:[%s277 + $0x40] sm:$0xff]
      %v294 = vld [vmem:[%s277 + $0x48] sm:$0xff]
      %v295 = vld [vmem:[%s277 + $0x50] sm:$0xff]
      %v296 = vld [vmem:[%s277 + $0x58] sm:$0xff]
      %v297 = vld [vmem:[%s277 + $0x60] sm:$0xff]
      %v298 = vld [vmem:[%s277 + $0x68] sm:$0xff]
      %v299 = vld [vmem:[%s277 + $0x70] sm:$0xff]
      %v300 = vld [vmem:[%s277 + $0x78] sm:$0xff]
      %v301 = vld [vmem:[%s277 + $0x80] sm:$0xff]
      %v302 = vld [vmem:[%s277 + $0x88] sm:$0xff]
      %v303 = vld [vmem:[%s277 + $0x90] sm:$0xff]
      %v304 = vld [vmem:[%s277 + $0x98] sm:$0xff]
      %v305 = vld [vmem:[%s277 + $0xa0] sm:$0xff]
      %v306 = vld [vmem:[%s277 + $0xa8] sm:$0xff]
      %v307 = vld [vmem:[%s277 + $0xb0] sm:$0xff]
      %v308 = vld [vmem:[%s277 + $0xb8] sm:$0xff]
      %v309 = vld [vmem:[%s277 + $0xc0] sm:$0xff]
      %v310 = vld [vmem:[%s277 + $0xc8] sm:$0xff]
      %v311 = vld [vmem:[%s277 + $0xd0] sm:$0xff]
      %v312 = vld [vmem:[%s277 + $0xd8] sm:$0xff]
      %v313 = vld [vmem:[%s277 + $0xe0] sm:$0xff]
      %v314 = vld [vmem:[%s277 + $0xe8] sm:$0xff]
      %v315 = vld [vmem:[%s277 + $0xf0] sm:$0xff]
      %v316 = vld [vmem:[%s277 + $0xf8] sm:$0xff]
      %v317 = vld [vmem:[%s277 + $0x100] sm:$0xff]
      %v318 = vld [vmem:[%s277 + $0x108] sm:$0xff]
      %v319 = vld [vmem:[%s277 + $0x110] sm:$0xff]
      %v320 = vld [vmem:[%s277 + $0x118] sm:$0xff]
      %v321 = vld [vmem:[%s277 + $0x120] sm:$0xff]
      %v322 = vld [vmem:[%s277 + $0x128] sm:$0xff]
      %v323 = vld [vmem:[%s277 + $0x130] sm:$0xff]
      %v324 = vld [vmem:[%s277 + $0x138] sm:$0xff]
      %v325 = vld [vmem:[%s277 + $0x140] sm:$0xff]
      %v326 = vld [vmem:[%s277 + $0x148] sm:$0xff]
      %v327 = vld [vmem:[%s277 + $0x150] sm:$0xff]
      %v328 = vld [vmem:[%s277 + $0x158] sm:$0xff]
      %v329 = vld [vmem:[%s277 + $0x160] sm:$0xff]
      %v330 = vld [vmem:[%s277 + $0x168] sm:$0xff]
      %v331 = vld [vmem:[%s277 + $0x170] sm:$0xff]
      %v332 = vld [vmem:[%s277 + $0x178] sm:$0xff]
      %v333 = vld [vmem:[%s277 + $0x180] sm:$0xff]
      %v334 = vld [vmem:[%s277 + $0x188] sm:$0xff]
      %v335 = vld [vmem:[%s277 + $0x190] sm:$0xff]
      %v336 = vld [vmem:[%s277 + $0x198] sm:$0xff]
      %v337 = vld [vmem:[%s277 + $0x1a0] sm:$0xff]
      %v338 = vld [vmem:[%s277 + $0x1a8] sm:$0xff]
      %v339 = vld [vmem:[%s277 + $0x1b0] sm:$0xff]
      %v340 = vld [vmem:[%s277 + $0x1b8] sm:$0xff]
      %v341 = vld [vmem:[%s277 + $0x1c0] sm:$0xff]
      %v342 = vld [vmem:[%s277 + $0x1c8] sm:$0xff]
      %v343 = vld [vmem:[%s277 + $0x1d0] sm:$0xff]
      %v344 = vld [vmem:[%s277 + $0x1d8] sm:$0xff]
      %v345 = vld [vmem:[%s277 + $0x1e0] sm:$0xff]
      %v346 = vld [vmem:[%s277 + $0x1e8] sm:$0xff]
      %v347 = vld [vmem:[%s277 + $0x1f0] sm:$0xff]
      %v348 = vld [vmem:[%s277 + $0x1f8] sm:$0xff]
      %v349 = vld [vmem:[%s277 + $0x200] sm:$0xff]
      %v350 = vld [vmem:[%s277 + $0x208] sm:$0xff]
      %v351 = vld [vmem:[%s277 + $0x210] sm:$0xff]
      %v352 = vld [vmem:[%s277 + $0x218] sm:$0xff]
      %v353 = vld [vmem:[%s277 + $0x220] sm:$0xff]
      %v354 = vld [vmem:[%s277 + $0x228] sm:$0xff]
      %v355 = vld [vmem:[%s277 + $0x230] sm:$0xff]
      %v356 = vld [vmem:[%s277 + $0x238] sm:$0xff]
      %v357 = vld [vmem:[%s277 + $0x240] sm:$0xff]
      %v358 = vld [vmem:[%s277 + $0x248] sm:$0xff]
      %v359 = vld [vmem:[%s277 + $0x250] sm:$0xff]
      %v360 = vld [vmem:[%s277 + $0x258] sm:$0xff]
      %v361 = vld [vmem:[%s277 + $0x260] sm:$0xff]
      %v362 = vld [vmem:[%s277 + $0x268] sm:$0xff]
      %v363 = vld [vmem:[%s277 + $0x270] sm:$0xff]
      %v364 = vld [vmem:[%s277 + $0x278] sm:$0xff]
      %v365 = vld [vmem:[%s277 + $0x280] sm:$0xff]
      %v366 = vld [vmem:[%s277 + $0x288] sm:$0xff]
      %v367 = vld [vmem:[%s277 + $0x290] sm:$0xff]
      %v368 = vld [vmem:[%s277 + $0x298] sm:$0xff]
      %v369 = vld [vmem:[%s277 + $0x2a0] sm:$0xff]
      %v370 = vld [vmem:[%s277 + $0x2a8] sm:$0xff]
      %v371 = vld [vmem:[%s277 + $0x2b0] sm:$0xff]
      %v372 = vld [vmem:[%s277 + $0x2b8] sm:$0xff]
      %v373 = vld [vmem:[%s277 + $0x2c0] sm:$0xff]
      %v374 = vld [vmem:[%s277 + $0x2c8] sm:$0xff]
      %v375 = vld [vmem:[%s277 + $0x2d0] sm:$0xff]
      %v376 = vld [vmem:[%s277 + $0x2d8] sm:$0xff]
      %v377 = vld [vmem:[%s277 + $0x2e0] sm:$0xff]
      %v378 = vld [vmem:[%s277 + $0x2e8] sm:$0xff]
      %v379 = vld [vmem:[%s277 + $0x2f0] sm:$0xff]
      %v380 = vld [vmem:[%s277 + $0x2f8] sm:$0xff]
      %v381 = vld [vmem:[%s277 + $0x300] sm:$0xff]
      %v382 = vld [vmem:[%s277 + $0x308] sm:$0xff]
      %v383 = vld [vmem:[%s277 + $0x310] sm:$0xff]
      %v384 = vld [vmem:[%s277 + $0x318] sm:$0xff]
      %v385 = vld [vmem:[%s277 + $0x320] sm:$0xff]
      %v386 = vld [vmem:[%s277 + $0x328] sm:$0xff]
      %v387 = vld [vmem:[%s277 + $0x330] sm:$0xff]
      %v388 = vld [vmem:[%s277 + $0x338] sm:$0xff]
      %v389 = vld [vmem:[%s277 + $0x340] sm:$0xff]
      %v390 = vld [vmem:[%s277 + $0x348] sm:$0xff]
      %v391 = vld [vmem:[%s277 + $0x350] sm:$0xff]
      %v392 = vld [vmem:[%s277 + $0x358] sm:$0xff]
      %v393 = vld [vmem:[%s277 + $0x360] sm:$0xff]
      %v394 = vld [vmem:[%s277 + $0x368] sm:$0xff]
      %v395 = vld [vmem:[%s277 + $0x370] sm:$0xff]
      %v396 = vld [vmem:[%s277 + $0x378] sm:$0xff]
      %v397 = vld [vmem:[%s277 + $0x380] sm:$0xff]
      %v398 = vld [vmem:[%s277 + $0x388] sm:$0xff]
      %v399 = vld [vmem:[%s277 + $0x390] sm:$0xff]
      %v400 = vld [vmem:[%s277 + $0x398] sm:$0xff]
      %v401 = vld [vmem:[%s277 + $0x3a0] sm:$0xff]
      %v402 = vld [vmem:[%s277 + $0x3a8] sm:$0xff]
      %v403 = vld [vmem:[%s277 + $0x3b0] sm:$0xff]
      %v404 = vld [vmem:[%s277 + $0x3b8] sm:$0xff]
      %v405 = vld [vmem:[%s277 + $0x3c0] sm:$0xff]
      %v406 = vld [vmem:[%s277 + $0x3c8] sm:$0xff]
      %v407 = vld [vmem:[%s277 + $0x3d0] sm:$0xff]
      %v408 = vld [vmem:[%s277 + $0x3d8] sm:$0xff]
      %v409 = vld [vmem:[%s277 + $0x3e0] sm:$0xff]
      %v410 = vld [vmem:[%s277 + $0x3e8] sm:$0xff]
      %v411 = vld [vmem:[%s277 + $0x3f0] sm:$0xff]
      %v412 = vld [vmem:[%s277 + $0x3f8] sm:$0xff]
      %v413 = vld [vmem:[%s277 + $0x400] sm:$0xff]
      %v414 = vld [vmem:[%s277 + $0x408] sm:$0xff]
      %v415 = vld [vmem:[%s277 + $0x410] sm:$0xff]
      %v416 = vld [vmem:[%s277 + $0x418] sm:$0xff]
      %v417 = vld [vmem:[%s277 + $0x420] sm:$0xff]
      %v418 = vld [vmem:[%s277 + $0x428] sm:$0xff]
      %v419 = vld [vmem:[%s277 + $0x430] sm:$0xff]
      %v420 = vld [vmem:[%s277 + $0x438] sm:$0xff]
      %v421 = vld [vmem:[%s277 + $0x440] sm:$0xff]
      %v422 = vld [vmem:[%s277 + $0x448] sm:$0xff]
      %v423 = vld [vmem:[%s277 + $0x450] sm:$0xff]
      %v424 = vld [vmem:[%s277 + $0x458] sm:$0xff]
      %v425 = vld [vmem:[%s277 + $0x460] sm:$0xff]
      %v426 = vld [vmem:[%s277 + $0x468] sm:$0xff]
      %v427 = vld [vmem:[%s277 + $0x470] sm:$0xff]
      %v428 = vld [vmem:[%s277 + $0x478] sm:$0xff]
      %v429 = vld [vmem:[%s277 + $0x480] sm:$0xff]
      %v430 = vld [vmem:[%s277 + $0x488] sm:$0xff]
      %v431 = vld [vmem:[%s277 + $0x490] sm:$0xff]
      %v432 = vld [vmem:[%s277 + $0x498] sm:$0xff]
      %v433 = vld [vmem:[%s277 + $0x4a0] sm:$0xff]
      %v434 = vld [vmem:[%s277 + $0x4a8] sm:$0xff]
      %v435 = vld [vmem:[%s277 + $0x4b0] sm:$0xff]
      %v436 = vld [vmem:[%s277 + $0x4b8] sm:$0xff]
      %v437 = vld [vmem:[%s277 + $0x4c0] sm:$0xff]
      %v438 = vld [vmem:[%s277 + $0x4c8] sm:$0xff]
      %v439 = vld [vmem:[%s277 + $0x4d0] sm:$0xff]
      %v440 = vld [vmem:[%s277 + $0x4d8] sm:$0xff]
      %v441 = vld [vmem:[%s277 + $0x4e0] sm:$0xff]
      %v442 = vld [vmem:[%s277 + $0x4e8] sm:$0xff]
      %v443 = vld [vmem:[%s277 + $0x4f0] sm:$0xff]
      %v444 = vld [vmem:[%s277 + $0x4f8] sm:$0xff]
      %v445 = vld [vmem:[%s277 + $0x500] sm:$0xff]
      %v446 = vld [vmem:[%s277 + $0x508] sm:$0xff]
      %v447 = vld [vmem:[%s277 + $0x510] sm:$0xff]
      %v448 = vld [vmem:[%s277 + $0x518] sm:$0xff]
      %v449 = vld [vmem:[%s277 + $0x520] sm:$0xff]
      %v450 = vld [vmem:[%s277 + $0x528] sm:$0xff]
      %v451 = vld [vmem:[%s277 + $0x530] sm:$0xff]
      %v452 = vld [vmem:[%s277 + $0x538] sm:$0xff]
      %v453 = vld [vmem:[%s277 + $0x540] sm:$0xff]
      %v454 = vld [vmem:[%s277 + $0x548] sm:$0xff]
      %v455 = vld [vmem:[%s277 + $0x550] sm:$0xff]
      %v456 = vld [vmem:[%s277 + $0x558] sm:$0xff]
      %v457 = vld [vmem:[%s277 + $0x560] sm:$0xff]
      %v458 = vld [vmem:[%s277 + $0x568] sm:$0xff]
      %v459 = vld [vmem:[%s277 + $0x570] sm:$0xff]
      %v460 = vld [vmem:[%s277 + $0x578] sm:$0xff]
      %v461 = vld [vmem:[%s277 + $0x580] sm:$0xff]
      %v462 = vld [vmem:[%s277 + $0x588] sm:$0xff]
      %v463 = vld [vmem:[%s277 + $0x590] sm:$0xff]
      %v464 = vld [vmem:[%s277 + $0x598] sm:$0xff]
      %v465 = vld [vmem:[%s277 + $0x5a0] sm:$0xff]
      %v466 = vld [vmem:[%s277 + $0x5a8] sm:$0xff]
      %v467 = vld [vmem:[%s277 + $0x5b0] sm:$0xff]
      %v468 = vld [vmem:[%s277 + $0x5b8] sm:$0xff]
      %v469 = vld [vmem:[%s277 + $0x5c0] sm:$0xff]
      %v470 = vld [vmem:[%s277 + $0x5c8] sm:$0xff]
      %v471 = vld [vmem:[%s277 + $0x5d0] sm:$0xff]
      %v472 = vld [vmem:[%s277 + $0x5d8] sm:$0xff]
      %v473 = vld [vmem:[%s277 + $0x5e0] sm:$0xff]
      %v474 = vld [vmem:[%s277 + $0x5e8] sm:$0xff]
      %v475 = vld [vmem:[%s277 + $0x5f0] sm:$0xff]
      %v476 = vld [vmem:[%s277 + $0x5f8] sm:$0xff]
      %v477 = vld [vmem:[%s277 + $0x600] sm:$0xff]
      %v478 = vld [vmem:[%s277 + $0x608] sm:$0xff]
      %v479 = vld [vmem:[%s277 + $0x610] sm:$0xff]
      %v480 = vld [vmem:[%s277 + $0x618] sm:$0xff]
      %v481 = vld [vmem:[%s277 + $0x620] sm:$0xff]
      %v482 = vld [vmem:[%s277 + $0x628] sm:$0xff]
      %v483 = vld [vmem:[%s277 + $0x630] sm:$0xff]
      %v484 = vld [vmem:[%s277 + $0x638] sm:$0xff]
      %v485 = vld [vmem:[%s277 + $0x640] sm:$0xff]
      %v486 = vld [vmem:[%s277 + $0x648] sm:$0xff]
      %v487 = vld [vmem:[%s277 + $0x650] sm:$0xff]
      %v488 = vld [vmem:[%s277 + $0x658] sm:$0xff]
      %v489 = vld [vmem:[%s277 + $0x660] sm:$0xff]
      %v490 = vld [vmem:[%s277 + $0x668] sm:$0xff]
      %v491 = vld [vmem:[%s277 + $0x670] sm:$0xff]
      %v492 = vld [vmem:[%s277 + $0x678] sm:$0xff]
      %v493 = vld [vmem:[%s277 + $0x680] sm:$0xff]
      %v494 = vld [vmem:[%s277 + $0x688] sm:$0xff]
      %v495 = vld [vmem:[%s277 + $0x690] sm:$0xff]
      %v496 = vld [vmem:[%s277 + $0x698] sm:$0xff]
      %v497 = vld [vmem:[%s277 + $0x6a0] sm:$0xff]
      %v498 = vld [vmem:[%s277 + $0x6a8] sm:$0xff]
      %v499 = vld [vmem:[%s277 + $0x6b0] sm:$0xff]
      %v500 = vld [vmem:[%s277 + $0x6b8] sm:$0xff]
      %v501 = vld [vmem:[%s277 + $0x6c0] sm:$0xff]
      %v502 = vld [vmem:[%s277 + $0x6c8] sm:$0xff]
      %v503 = vld [vmem:[%s277 + $0x6d0] sm:$0xff]
      %v504 = vld [vmem:[%s277 + $0x6d8] sm:$0xff]
      %v505 = vld [vmem:[%s277 + $0x6e0] sm:$0xff]
      %v506 = vld [vmem:[%s277 + $0x6e8] sm:$0xff]
      %v507 = vld [vmem:[%s277 + $0x6f0] sm:$0xff]
      %v508 = vld [vmem:[%s277 + $0x6f8] sm:$0xff]
      %v509 = vld [vmem:[%s277 + $0x700] sm:$0xff]
      %v510 = vld [vmem:[%s277 + $0x708] sm:$0xff]
      %v511 = vld [vmem:[%s277 + $0x710] sm:$0xff]
      %v512 = vld [vmem:[%s277 + $0x718] sm:$0xff]
      %v513 = vld [vmem:[%s277 + $0x720] sm:$0xff]
      %v514 = vld [vmem:[%s277 + $0x728] sm:$0xff]
      %v515 = vld [vmem:[%s277 + $0x730] sm:$0xff]
      %v516 = vld [vmem:[%s277 + $0x738] sm:$0xff]
      %v517 = vld [vmem:[%s277 + $0x740] sm:$0xff]
      %v518 = vld [vmem:[%s277 + $0x748] sm:$0xff]
      %v519 = vld [vmem:[%s277 + $0x750] sm:$0xff]
      %v520 = vld [vmem:[%s277 + $0x758] sm:$0xff]
      %v521 = vld [vmem:[%s277 + $0x760] sm:$0xff]
      %v522 = vld [vmem:[%s277 + $0x768] sm:$0xff]
      %v523 = vld [vmem:[%s277 + $0x770] sm:$0xff]
      %v524 = vld [vmem:[%s277 + $0x778] sm:$0xff]
      %v525 = vld [vmem:[%s277 + $0x780] sm:$0xff]
      %v526 = vld [vmem:[%s277 + $0x788] sm:$0xff]
      %v527 = vld [vmem:[%s277 + $0x790] sm:$0xff]
      %v528 = vld [vmem:[%s277 + $0x798] sm:$0xff]
      %v529 = vld [vmem:[%s277 + $0x7a0] sm:$0xff]
      %v530 = vld [vmem:[%s277 + $0x7a8] sm:$0xff]
      %v531 = vld [vmem:[%s277 + $0x7b0] sm:$0xff]
      %v532 = vld [vmem:[%s277 + $0x7b8] sm:$0xff]
      %v533 = vld [vmem:[%s277 + $0x7c0] sm:$0xff]
      %v534 = vld [vmem:[%s277 + $0x7c8] sm:$0xff]
      %v535 = vld [vmem:[%s277 + $0x7d0] sm:$0xff]
      %v536 = vld [vmem:[%s277 + $0x7d8] sm:$0xff]
      %v537 = vld [vmem:[%s277 + $0x7e0] sm:$0xff]
      %v538 = vld [vmem:[%s277 + $0x7e8] sm:$0xff]
      %v539 = vld [vmem:[%s277 + $0x7f0] sm:$0xff]
      %v540 = vld [vmem:[%s277 + $0x7f8] sm:$0xff]
      %v541 = vld [vmem:[%s1] sm:$0xff]
      %v542 = vld [vmem:[%s1 + $0x8] sm:$0xff]
      %v543 = vld [vmem:[%s1 + $0x10] sm:$0xff]
      %v544 = vld [vmem:[%s1 + $0x18] sm:$0xff]
      %v545 = vld [vmem:[%s1 + $0x20] sm:$0xff]
      %v546 = vld [vmem:[%s1 + $0x28] sm:$0xff]
      %v547 = vld [vmem:[%s1 + $0x30] sm:$0xff]
      %v548 = vld [vmem:[%s1 + $0x38] sm:$0xff]
      %v549 = vld [vmem:[%s1 + $0x40] sm:$0xff]
      %v550 = vld [vmem:[%s1 + $0x48] sm:$0xff]
      %v551 = vld [vmem:[%s1 + $0x50] sm:$0xff]
      %v552 = vld [vmem:[%s1 + $0x58] sm:$0xff]
      %v553 = vld [vmem:[%s1 + $0x60] sm:$0xff]
      %v554 = vld [vmem:[%s1 + $0x68] sm:$0xff]
      %v555 = vld [vmem:[%s1 + $0x70] sm:$0xff]
      %v556 = vld [vmem:[%s1 + $0x78] sm:$0xff]
      %v557 = vld [vmem:[%s1 + $0x80] sm:$0xff]
      %v558 = vld [vmem:[%s1 + $0x88] sm:$0xff]
      %v559 = vld [vmem:[%s1 + $0x90] sm:$0xff]
      %v560 = vld [vmem:[%s1 + $0x98] sm:$0xff]
      %v561 = vld [vmem:[%s1 + $0xa0] sm:$0xff]
      %v562 = vld [vmem:[%s1 + $0xa8] sm:$0xff]
      %v563 = vld [vmem:[%s1 + $0xb0] sm:$0xff]
      %v564 = vld [vmem:[%s1 + $0xb8] sm:$0xff]
      %v565 = vld [vmem:[%s1 + $0xc0] sm:$0xff]
      %v566 = vld [vmem:[%s1 + $0xc8] sm:$0xff]
      %v567 = vld [vmem:[%s1 + $0xd0] sm:$0xff]
      %v568 = vld [vmem:[%s1 + $0xd8] sm:$0xff]
      %v569 = vld [vmem:[%s1 + $0xe0] sm:$0xff]
      %v570 = vld [vmem:[%s1 + $0xe8] sm:$0xff]
      %v571 = vld [vmem:[%s1 + $0xf0] sm:$0xff]
      %v572 = vld [vmem:[%s1 + $0xf8] sm:$0xff]
      %v573 = vld [vmem:[%s1 + $0x100] sm:$0xff]
      %v574 = vld [vmem:[%s1 + $0x108] sm:$0xff]
      %v575 = vld [vmem:[%s1 + $0x110] sm:$0xff]
      %v576 = vld [vmem:[%s1 + $0x118] sm:$0xff]
      %v577 = vld [vmem:[%s1 + $0x120] sm:$0xff]
      %v578 = vld [vmem:[%s1 + $0x128] sm:$0xff]
      %v579 = vld [vmem:[%s1 + $0x130] sm:$0xff]
      %v580 = vld [vmem:[%s1 + $0x138] sm:$0xff]
      %v581 = vld [vmem:[%s1 + $0x140] sm:$0xff]
      %v582 = vld [vmem:[%s1 + $0x148] sm:$0xff]
      %v583 = vld [vmem:[%s1 + $0x150] sm:$0xff]
      %v584 = vld [vmem:[%s1 + $0x158] sm:$0xff]
      %v585 = vld [vmem:[%s1 + $0x160] sm:$0xff]
      %v586 = vld [vmem:[%s1 + $0x168] sm:$0xff]
      %v587 = vld [vmem:[%s1 + $0x170] sm:$0xff]
      %v588 = vld [vmem:[%s1 + $0x178] sm:$0xff]
      %v589 = vld [vmem:[%s1 + $0x180] sm:$0xff]
      %v590 = vld [vmem:[%s1 + $0x188] sm:$0xff]
      %v591 = vld [vmem:[%s1 + $0x190] sm:$0xff]
      %v592 = vld [vmem:[%s1 + $0x198] sm:$0xff]
      %v593 = vld [vmem:[%s1 + $0x1a0] sm:$0xff]
      %v594 = vld [vmem:[%s1 + $0x1a8] sm:$0xff]
      %v595 = vld [vmem:[%s1 + $0x1b0] sm:$0xff]
      %v596 = vld [vmem:[%s1 + $0x1b8] sm:$0xff]
      %v597 = vld [vmem:[%s1 + $0x1c0] sm:$0xff]
      %v598 = vld [vmem:[%s1 + $0x1c8] sm:$0xff]
      %v599 = vld [vmem:[%s1 + $0x1d0] sm:$0xff]
      %v600 = vld [vmem:[%s1 + $0x1d8] sm:$0xff]
      %v601 = vld [vmem:[%s1 + $0x1e0] sm:$0xff]
      %v602 = vld [vmem:[%s1 + $0x1e8] sm:$0xff]
      %v603 = vld [vmem:[%s1 + $0x1f0] sm:$0xff]
      %v604 = vld [vmem:[%s1 + $0x1f8] sm:$0xff]
      %v605 = vld [vmem:[%s1 + $0x200] sm:$0xff]
      %v606 = vld [vmem:[%s1 + $0x208] sm:$0xff]
      %v607 = vld [vmem:[%s1 + $0x210] sm:$0xff]
      %v608 = vld [vmem:[%s1 + $0x218] sm:$0xff]
      %v609 = vld [vmem:[%s1 + $0x220] sm:$0xff]
      %v610 = vld [vmem:[%s1 + $0x228] sm:$0xff]
      %v611 = vld [vmem:[%s1 + $0x230] sm:$0xff]
      %v612 = vld [vmem:[%s1 + $0x238] sm:$0xff]
      %v613 = vld [vmem:[%s1 + $0x240] sm:$0xff]
      %v614 = vld [vmem:[%s1 + $0x248] sm:$0xff]
      %v615 = vld [vmem:[%s1 + $0x250] sm:$0xff]
      %v616 = vld [vmem:[%s1 + $0x258] sm:$0xff]
      %v617 = vld [vmem:[%s1 + $0x260] sm:$0xff]
      %v618 = vld [vmem:[%s1 + $0x268] sm:$0xff]
      %v619 = vld [vmem:[%s1 + $0x270] sm:$0xff]
      %v620 = vld [vmem:[%s1 + $0x278] sm:$0xff]
      %v621 = vld [vmem:[%s1 + $0x280] sm:$0xff]
      %v622 = vld [vmem:[%s1 + $0x288] sm:$0xff]
      %v623 = vld [vmem:[%s1 + $0x290] sm:$0xff]
      %v624 = vld [vmem:[%s1 + $0x298] sm:$0xff]
      %v625 = vld [vmem:[%s1 + $0x2a0] sm:$0xff]
      %v626 = vld [vmem:[%s1 + $0x2a8] sm:$0xff]
      %v627 = vld [vmem:[%s1 + $0x2b0] sm:$0xff]
      %v628 = vld [vmem:[%s1 + $0x2b8] sm:$0xff]
      %v629 = vld [vmem:[%s1 + $0x2c0] sm:$0xff]
      %v630 = vld [vmem:[%s1 + $0x2c8] sm:$0xff]
      %v631 = vld [vmem:[%s1 + $0x2d0] sm:$0xff]
      %v632 = vld [vmem:[%s1 + $0x2d8] sm:$0xff]
      %v633 = vld [vmem:[%s1 + $0x2e0] sm:$0xff]
      %v634 = vld [vmem:[%s1 + $0x2e8] sm:$0xff]
      %v635 = vld [vmem:[%s1 + $0x2f0] sm:$0xff]
      %v636 = vld [vmem:[%s1 + $0x2f8] sm:$0xff]
      %v637 = vld [vmem:[%s1 + $0x300] sm:$0xff]
      %v638 = vld [vmem:[%s1 + $0x308] sm:$0xff]
      %v639 = vld [vmem:[%s1 + $0x310] sm:$0xff]
      %v640 = vld [vmem:[%s1 + $0x318] sm:$0xff]
      %v641 = vld [vmem:[%s1 + $0x320] sm:$0xff]
      %v642 = vld [vmem:[%s1 + $0x328] sm:$0xff]
      %v643 = vld [vmem:[%s1 + $0x330] sm:$0xff]
      %v644 = vld [vmem:[%s1 + $0x338] sm:$0xff]
      %v645 = vld [vmem:[%s1 + $0x340] sm:$0xff]
      %v646 = vld [vmem:[%s1 + $0x348] sm:$0xff]
      %v647 = vld [vmem:[%s1 + $0x350] sm:$0xff]
      %v648 = vld [vmem:[%s1 + $0x358] sm:$0xff]
      %v649 = vld [vmem:[%s1 + $0x360] sm:$0xff]
      %v650 = vld [vmem:[%s1 + $0x368] sm:$0xff]
      %v651 = vld [vmem:[%s1 + $0x370] sm:$0xff]
      %v652 = vld [vmem:[%s1 + $0x378] sm:$0xff]
      %v653 = vld [vmem:[%s1 + $0x380] sm:$0xff]
      %v654 = vld [vmem:[%s1 + $0x388] sm:$0xff]
      %v655 = vld [vmem:[%s1 + $0x390] sm:$0xff]
      %v656 = vld [vmem:[%s1 + $0x398] sm:$0xff]
      %v657 = vld [vmem:[%s1 + $0x3a0] sm:$0xff]
      %v658 = vld [vmem:[%s1 + $0x3a8] sm:$0xff]
      %v659 = vld [vmem:[%s1 + $0x3b0] sm:$0xff]
      %v660 = vld [vmem:[%s1 + $0x3b8] sm:$0xff]
      %v661 = vld [vmem:[%s1 + $0x3c0] sm:$0xff]
      %v662 = vld [vmem:[%s1 + $0x3c8] sm:$0xff]
      %v663 = vld [vmem:[%s1 + $0x3d0] sm:$0xff]
      %v664 = vld [vmem:[%s1 + $0x3d8] sm:$0xff]
      %v665 = vld [vmem:[%s1 + $0x3e0] sm:$0xff]
      %v666 = vld [vmem:[%s1 + $0x3e8] sm:$0xff]
      %v667 = vld [vmem:[%s1 + $0x3f0] sm:$0xff]
      %v668 = vld [vmem:[%s1 + $0x3f8] sm:$0xff]
      %v669 = vld [vmem:[%s1 + $0x400] sm:$0xff]
      %v670 = vld [vmem:[%s1 + $0x408] sm:$0xff]
      %v671 = vld [vmem:[%s1 + $0x410] sm:$0xff]
      %v672 = vld [vmem:[%s1 + $0x418] sm:$0xff]
      %v673 = vld [vmem:[%s1 + $0x420] sm:$0xff]
      %v674 = vld [vmem:[%s1 + $0x428] sm:$0xff]
      %v675 = vld [vmem:[%s1 + $0x430] sm:$0xff]
      %v676 = vld [vmem:[%s1 + $0x438] sm:$0xff]
      %v677 = vld [vmem:[%s1 + $0x440] sm:$0xff]
      %v678 = vld [vmem:[%s1 + $0x448] sm:$0xff]
      %v679 = vld [vmem:[%s1 + $0x450] sm:$0xff]
      %v680 = vld [vmem:[%s1 + $0x458] sm:$0xff]
      %v681 = vld [vmem:[%s1 + $0x460] sm:$0xff]
      %v682 = vld [vmem:[%s1 + $0x468] sm:$0xff]
      %v683 = vld [vmem:[%s1 + $0x470] sm:$0xff]
      %v684 = vld [vmem:[%s1 + $0x478] sm:$0xff]
      %v685 = vld [vmem:[%s1 + $0x480] sm:$0xff]
      %v686 = vld [vmem:[%s1 + $0x488] sm:$0xff]
      %v687 = vld [vmem:[%s1 + $0x490] sm:$0xff]
      %v688 = vld [vmem:[%s1 + $0x498] sm:$0xff]
      %v689 = vld [vmem:[%s1 + $0x4a0] sm:$0xff]
      %v690 = vld [vmem:[%s1 + $0x4a8] sm:$0xff]
      %v691 = vld [vmem:[%s1 + $0x4b0] sm:$0xff]
      %v692 = vld [vmem:[%s1 + $0x4b8] sm:$0xff]
      %v693 = vld [vmem:[%s1 + $0x4c0] sm:$0xff]
      %v694 = vld [vmem:[%s1 + $0x4c8] sm:$0xff]
      %v695 = vld [vmem:[%s1 + $0x4d0] sm:$0xff]
      %v696 = vld [vmem:[%s1 + $0x4d8] sm:$0xff]
      %v697 = vld [vmem:[%s1 + $0x4e0] sm:$0xff]
      %v698 = vld [vmem:[%s1 + $0x4e8] sm:$0xff]
      %v699 = vld [vmem:[%s1 + $0x4f0] sm:$0xff]
      %v700 = vld [vmem:[%s1 + $0x4f8] sm:$0xff]
      %v701 = vld [vmem:[%s1 + $0x500] sm:$0xff]
      %v702 = vld [vmem:[%s1 + $0x508] sm:$0xff]
      %v703 = vld [vmem:[%s1 + $0x510] sm:$0xff]
      %v704 = vld [vmem:[%s1 + $0x518] sm:$0xff]
      %v705 = vld [vmem:[%s1 + $0x520] sm:$0xff]
      %v706 = vld [vmem:[%s1 + $0x528] sm:$0xff]
      %v707 = vld [vmem:[%s1 + $0x530] sm:$0xff]
      %v708 = vld [vmem:[%s1 + $0x538] sm:$0xff]
      %v709 = vld [vmem:[%s1 + $0x540] sm:$0xff]
      %v710 = vld [vmem:[%s1 + $0x548] sm:$0xff]
      %v711 = vld [vmem:[%s1 + $0x550] sm:$0xff]
      %v712 = vld [vmem:[%s1 + $0x558] sm:$0xff]
      %v713 = vld [vmem:[%s1 + $0x560] sm:$0xff]
      %v714 = vld [vmem:[%s1 + $0x568] sm:$0xff]
      %v715 = vld [vmem:[%s1 + $0x570] sm:$0xff]
      %v716 = vld [vmem:[%s1 + $0x578] sm:$0xff]
      %v717 = vld [vmem:[%s1 + $0x580] sm:$0xff]
      %v718 = vld [vmem:[%s1 + $0x588] sm:$0xff]
      %v719 = vld [vmem:[%s1 + $0x590] sm:$0xff]
      %v720 = vld [vmem:[%s1 + $0x598] sm:$0xff]
      %v721 = vld [vmem:[%s1 + $0x5a0] sm:$0xff]
      %v722 = vld [vmem:[%s1 + $0x5a8] sm:$0xff]
      %v723 = vld [vmem:[%s1 + $0x5b0] sm:$0xff]
      %v724 = vld [vmem:[%s1 + $0x5b8] sm:$0xff]
      %v725 = vld [vmem:[%s1 + $0x5c0] sm:$0xff]
      %v726 = vld [vmem:[%s1 + $0x5c8] sm:$0xff]
      %v727 = vld [vmem:[%s1 + $0x5d0] sm:$0xff]
      %v728 = vld [vmem:[%s1 + $0x5d8] sm:$0xff]
      %v729 = vld [vmem:[%s1 + $0x5e0] sm:$0xff]
      %v730 = vld [vmem:[%s1 + $0x5e8] sm:$0xff]
      %v731 = vld [vmem:[%s1 + $0x5f0] sm:$0xff]
      %v732 = vld [vmem:[%s1 + $0x5f8] sm:$0xff]
      %v733 = vld [vmem:[%s1 + $0x600] sm:$0xff]
      %v734 = vld [vmem:[%s1 + $0x608] sm:$0xff]
      %v735 = vld [vmem:[%s1 + $0x610] sm:$0xff]
      %v736 = vld [vmem:[%s1 + $0x618] sm:$0xff]
      %v737 = vld [vmem:[%s1 + $0x620] sm:$0xff]
      %v738 = vld [vmem:[%s1 + $0x628] sm:$0xff]
      %v739 = vld [vmem:[%s1 + $0x630] sm:$0xff]
      %v740 = vld [vmem:[%s1 + $0x638] sm:$0xff]
      %v741 = vld [vmem:[%s1 + $0x640] sm:$0xff]
      %v742 = vld [vmem:[%s1 + $0x648] sm:$0xff]
      %v743 = vld [vmem:[%s1 + $0x650] sm:$0xff]
      %v744 = vld [vmem:[%s1 + $0x658] sm:$0xff]
      %v745 = vld [vmem:[%s1 + $0x660] sm:$0xff]
      %v746 = vld [vmem:[%s1 + $0x668] sm:$0xff]
      %v747 = vld [vmem:[%s1 + $0x670] sm:$0xff]
      %v748 = vld [vmem:[%s1 + $0x678] sm:$0xff]
      %v749 = vld [vmem:[%s1 + $0x680] sm:$0xff]
      %v750 = vld [vmem:[%s1 + $0x688] sm:$0xff]
      %v751 = vld [vmem:[%s1 + $0x690] sm:$0xff]
      %v752 = vld [vmem:[%s1 + $0x698] sm:$0xff]
      %v753 = vld [vmem:[%s1 + $0x6a0] sm:$0xff]
      %v754 = vld [vmem:[%s1 + $0x6a8] sm:$0xff]
      %v755 = vld [vmem:[%s1 + $0x6b0] sm:$0xff]
      %v756 = vld [vmem:[%s1 + $0x6b8] sm:$0xff]
      %v757 = vld [vmem:[%s1 + $0x6c0] sm:$0xff]
      %v758 = vld [vmem:[%s1 + $0x6c8] sm:$0xff]
      %v759 = vld [vmem:[%s1 + $0x6d0] sm:$0xff]
      %v760 = vld [vmem:[%s1 + $0x6d8] sm:$0xff]
      %v761 = vld [vmem:[%s1 + $0x6e0] sm:$0xff]
      %v762 = vld [vmem:[%s1 + $0x6e8] sm:$0xff]
      %v763 = vld [vmem:[%s1 + $0x6f0] sm:$0xff]
      %v764 = vld [vmem:[%s1 + $0x6f8] sm:$0xff]
      %v765 = vld [vmem:[%s1 + $0x700] sm:$0xff]
      %v766 = vld [vmem:[%s1 + $0x708] sm:$0xff]
      %v767 = vld [vmem:[%s1 + $0x710] sm:$0xff]
      %v768 = vld [vmem:[%s1 + $0x718] sm:$0xff]
      %v769 = vld [vmem:[%s1 + $0x720] sm:$0xff]
      %v770 = vld [vmem:[%s1 + $0x728] sm:$0xff]
      %v771 = vld [vmem:[%s1 + $0x730] sm:$0xff]
      %v772 = vld [vmem:[%s1 + $0x738] sm:$0xff]
      %v773 = vld [vmem:[%s1 + $0x740] sm:$0xff]
      %v774 = vld [vmem:[%s1 + $0x748] sm:$0xff]
      %v775 = vld [vmem:[%s1 + $0x750] sm:$0xff]
      %v776 = vld [vmem:[%s1 + $0x758] sm:$0xff]
      %v777 = vld [vmem:[%s1 + $0x760] sm:$0xff]
      %v778 = vld [vmem:[%s1 + $0x768] sm:$0xff]
      %v779 = vld [vmem:[%s1 + $0x770] sm:$0xff]
      %v780 = vld [vmem:[%s1 + $0x778] sm:$0xff]
      %v781 = vld [vmem:[%s1 + $0x780] sm:$0xff]
      %v782 = vld [vmem:[%s1 + $0x788] sm:$0xff]
      %v783 = vld [vmem:[%s1 + $0x790] sm:$0xff]
      %v784 = vld [vmem:[%s1 + $0x798] sm:$0xff]
      %v785 = vld [vmem:[%s1 + $0x7a0] sm:$0xff]
      %v786 = vld [vmem:[%s1 + $0x7a8] sm:$0xff]
      %v787 = vld [vmem:[%s1 + $0x7b0] sm:$0xff]
      %v788 = vld [vmem:[%s1 + $0x7b8] sm:$0xff]
      %v789 = vld [vmem:[%s1 + $0x7c0] sm:$0xff]
      %v790 = vld [vmem:[%s1 + $0x7c8] sm:$0xff]
      %v791 = vld [vmem:[%s1 + $0x7d0] sm:$0xff]
      %v792 = vld [vmem:[%s1 + $0x7d8] sm:$0xff]
      %v793 = vld [vmem:[%s1 + $0x7e0] sm:$0xff]
      %v794 = vld [vmem:[%s1 + $0x7e8] sm:$0xff]
      %v795 = vld [vmem:[%s1 + $0x7f0] sm:$0xff]
      %v796 = vld [vmem:[%s1 + $0x7f8] sm:$0xff]
      %v797 = vld [vmem:[%s2] sm:$0x3]
      %v799 = vlaneseq
      %v800 = vshrl.u32 %v799, 7
      %v801 = vsub.s32 0, %v800
      %v802 = vrot.slane %v797, %v801
      %v803 = vlaneseq
      %v804 = vshrl.u32 %v803, 7
      %v805 = vsub.s32 1, %v804
      %v806 = vrot.slane %v797, %v805
      %v1065 = vunpack.c.l.b16 %v285
      %v1066 = vunpack.c.h.b16 %v285
      %v1067 = vunpack.c.l.b16 %v286
      %v1068 = vunpack.c.h.b16 %v286
      %v1069 = vunpack.c.l.b16 %v287
      %v1070 = vunpack.c.h.b16 %v287
      %v1071 = vunpack.c.l.b16 %v288
      %v1072 = vunpack.c.h.b16 %v288
      %v1073 = vunpack.c.l.b16 %v289
      %v1074 = vunpack.c.h.b16 %v289
      %v1075 = vunpack.c.l.b16 %v290
      %v1076 = vunpack.c.h.b16 %v290
      %v1077 = vunpack.c.l.b16 %v291
      %v1078 = vunpack.c.h.b16 %v291
      %v1079 = vunpack.c.l.b16 %v292
      %v1080 = vunpack.c.h.b16 %v292
      %v1081 = vunpack.c.l.b16 %v293
      %v1082 = vunpack.c.h.b16 %v293
      %v1083 = vunpack.c.l.b16 %v294
      %v1084 = vunpack.c.h.b16 %v294
      %v1085 = vunpack.c.l.b16 %v295
      %v1086 = vunpack.c.h.b16 %v295
      %v1087 = vunpack.c.l.b16 %v296
      %v1088 = vunpack.c.h.b16 %v296
      %v1089 = vunpack.c.l.b16 %v297
      %v1090 = vunpack.c.h.b16 %v297
      %v1091 = vunpack.c.l.b16 %v298
      %v1092 = vunpack.c.h.b16 %v298
      %v1093 = vunpack.c.l.b16 %v299
      %v1094 = vunpack.c.h.b16 %v299
      %v1095 = vunpack.c.l.b16 %v300
      %v1096 = vunpack.c.h.b16 %v300
      %v1097 = vunpack.c.l.b16 %v301
      %v1098 = vunpack.c.h.b16 %v301
      %v1099 = vunpack.c.l.b16 %v302
      %v1100 = vunpack.c.h.b16 %v302
      %v1101 = vunpack.c.l.b16 %v303
      %v1102 = vunpack.c.h.b16 %v303
      %v1103 = vunpack.c.l.b16 %v304
      %v1104 = vunpack.c.h.b16 %v304
      %v1105 = vunpack.c.l.b16 %v305
      %v1106 = vunpack.c.h.b16 %v305
      %v1107 = vunpack.c.l.b16 %v306
      %v1108 = vunpack.c.h.b16 %v306
      %v1109 = vunpack.c.l.b16 %v307
      %v1110 = vunpack.c.h.b16 %v307
      %v1111 = vunpack.c.l.b16 %v308
      %v1112 = vunpack.c.h.b16 %v308
      %v1113 = vunpack.c.l.b16 %v309
      %v1114 = vunpack.c.h.b16 %v309
      %v1115 = vunpack.c.l.b16 %v310
      %v1116 = vunpack.c.h.b16 %v310
      %v1117 = vunpack.c.l.b16 %v311
      %v1118 = vunpack.c.h.b16 %v311
      %v1119 = vunpack.c.l.b16 %v312
      %v1120 = vunpack.c.h.b16 %v312
      %v1121 = vunpack.c.l.b16 %v313
      %v1122 = vunpack.c.h.b16 %v313
      %v1123 = vunpack.c.l.b16 %v314
      %v1124 = vunpack.c.h.b16 %v314
      %v1125 = vunpack.c.l.b16 %v315
      %v1126 = vunpack.c.h.b16 %v315
      %v1127 = vunpack.c.l.b16 %v316
      %v1128 = vunpack.c.h.b16 %v316
      %v1129 = vunpack.c.l.b16 %v317
      %v1130 = vunpack.c.h.b16 %v317
      %v1131 = vunpack.c.l.b16 %v318
      %v1132 = vunpack.c.h.b16 %v318
      %v1133 = vunpack.c.l.b16 %v319
      %v1134 = vunpack.c.h.b16 %v319
      %v1135 = vunpack.c.l.b16 %v320
      %v1136 = vunpack.c.h.b16 %v320
      %v1137 = vunpack.c.l.b16 %v321
      %v1138 = vunpack.c.h.b16 %v321
      %v1139 = vunpack.c.l.b16 %v322
      %v1140 = vunpack.c.h.b16 %v322
      %v1141 = vunpack.c.l.b16 %v323
      %v1142 = vunpack.c.h.b16 %v323
      %v1143 = vunpack.c.l.b16 %v324
      %v1144 = vunpack.c.h.b16 %v324
      %v1145 = vunpack.c.l.b16 %v325
      %v1146 = vunpack.c.h.b16 %v325
      %v1147 = vunpack.c.l.b16 %v326
      %v1148 = vunpack.c.h.b16 %v326
      %v1149 = vunpack.c.l.b16 %v327
      %v1150 = vunpack.c.h.b16 %v327
      %v1151 = vunpack.c.l.b16 %v328
      %v1152 = vunpack.c.h.b16 %v328
      %v1153 = vunpack.c.l.b16 %v329
      %v1154 = vunpack.c.h.b16 %v329
      %v1155 = vunpack.c.l.b16 %v330
      %v1156 = vunpack.c.h.b16 %v330
      %v1157 = vunpack.c.l.b16 %v331
      %v1158 = vunpack.c.h.b16 %v331
      %v1159 = vunpack.c.l.b16 %v332
      %v1160 = vunpack.c.h.b16 %v332
      %v1161 = vunpack.c.l.b16 %v333
      %v1162 = vunpack.c.h.b16 %v333
      %v1163 = vunpack.c.l.b16 %v334
      %v1164 = vunpack.c.h.b16 %v334
      %v1165 = vunpack.c.l.b16 %v335
      %v1166 = vunpack.c.h.b16 %v335
      %v1167 = vunpack.c.l.b16 %v336
      %v1168 = vunpack.c.h.b16 %v336
      %v1169 = vunpack.c.l.b16 %v337
      %v1170 = vunpack.c.h.b16 %v337
      %v1171 = vunpack.c.l.b16 %v338
      %v1172 = vunpack.c.h.b16 %v338
      %v1173 = vunpack.c.l.b16 %v339
      %v1174 = vunpack.c.h.b16 %v339
      %v1175 = vunpack.c.l.b16 %v340
      %v1176 = vunpack.c.h.b16 %v340
      %v1177 = vunpack.c.l.b16 %v341
      %v1178 = vunpack.c.h.b16 %v341
      %v1179 = vunpack.c.l.b16 %v342
      %v1180 = vunpack.c.h.b16 %v342
      %v1181 = vunpack.c.l.b16 %v343
      %v1182 = vunpack.c.h.b16 %v343
      %v1183 = vunpack.c.l.b16 %v344
      %v1184 = vunpack.c.h.b16 %v344
      %v1185 = vunpack.c.l.b16 %v345
      %v1186 = vunpack.c.h.b16 %v345
      %v1187 = vunpack.c.l.b16 %v346
      %v1188 = vunpack.c.h.b16 %v346
      %v1189 = vunpack.c.l.b16 %v347
      %v1190 = vunpack.c.h.b16 %v347
      %v1191 = vunpack.c.l.b16 %v348
      %v1192 = vunpack.c.h.b16 %v348
      %v1193 = vunpack.c.l.b16 %v349
      %v1194 = vunpack.c.h.b16 %v349
      %v1195 = vunpack.c.l.b16 %v350
      %v1196 = vunpack.c.h.b16 %v350
      %v1197 = vunpack.c.l.b16 %v351
      %v1198 = vunpack.c.h.b16 %v351
      %v1199 = vunpack.c.l.b16 %v352
      %v1200 = vunpack.c.h.b16 %v352
      %v1201 = vunpack.c.l.b16 %v353
      %v1202 = vunpack.c.h.b16 %v353
      %v1203 = vunpack.c.l.b16 %v354
      %v1204 = vunpack.c.h.b16 %v354
      %v1205 = vunpack.c.l.b16 %v355
      %v1206 = vunpack.c.h.b16 %v355
      %v1207 = vunpack.c.l.b16 %v356
      %v1208 = vunpack.c.h.b16 %v356
      %v1209 = vunpack.c.l.b16 %v357
      %v1210 = vunpack.c.h.b16 %v357
      %v1211 = vunpack.c.l.b16 %v358
      %v1212 = vunpack.c.h.b16 %v358
      %v1213 = vunpack.c.l.b16 %v359
      %v1214 = vunpack.c.h.b16 %v359
      %v1215 = vunpack.c.l.b16 %v360
      %v1216 = vunpack.c.h.b16 %v360
      %v1217 = vunpack.c.l.b16 %v361
      %v1218 = vunpack.c.h.b16 %v361
      %v1219 = vunpack.c.l.b16 %v362
      %v1220 = vunpack.c.h.b16 %v362
      %v1221 = vunpack.c.l.b16 %v363
      %v1222 = vunpack.c.h.b16 %v363
      %v1223 = vunpack.c.l.b16 %v364
      %v1224 = vunpack.c.h.b16 %v364
      %v1225 = vunpack.c.l.b16 %v365
      %v1226 = vunpack.c.h.b16 %v365
      %v1227 = vunpack.c.l.b16 %v366
      %v1228 = vunpack.c.h.b16 %v366
      %v1229 = vunpack.c.l.b16 %v367
      %v1230 = vunpack.c.h.b16 %v367
      %v1231 = vunpack.c.l.b16 %v368
      %v1232 = vunpack.c.h.b16 %v368
      %v1233 = vunpack.c.l.b16 %v369
      %v1234 = vunpack.c.h.b16 %v369
      %v1235 = vunpack.c.l.b16 %v370
      %v1236 = vunpack.c.h.b16 %v370
      %v1237 = vunpack.c.l.b16 %v371
      %v1238 = vunpack.c.h.b16 %v371
      %v1239 = vunpack.c.l.b16 %v372
      %v1240 = vunpack.c.h.b16 %v372
      %v1241 = vunpack.c.l.b16 %v373
      %v1242 = vunpack.c.h.b16 %v373
      %v1243 = vunpack.c.l.b16 %v374
      %v1244 = vunpack.c.h.b16 %v374
      %v1245 = vunpack.c.l.b16 %v375
      %v1246 = vunpack.c.h.b16 %v375
      %v1247 = vunpack.c.l.b16 %v376
      %v1248 = vunpack.c.h.b16 %v376
      %v1249 = vunpack.c.l.b16 %v377
      %v1250 = vunpack.c.h.b16 %v377
      %v1251 = vunpack.c.l.b16 %v378
      %v1252 = vunpack.c.h.b16 %v378
      %v1253 = vunpack.c.l.b16 %v379
      %v1254 = vunpack.c.h.b16 %v379
      %v1255 = vunpack.c.l.b16 %v380
      %v1256 = vunpack.c.h.b16 %v380
      %v1257 = vunpack.c.l.b16 %v381
      %v1258 = vunpack.c.h.b16 %v381
      %v1259 = vunpack.c.l.b16 %v382
      %v1260 = vunpack.c.h.b16 %v382
      %v1261 = vunpack.c.l.b16 %v383
      %v1262 = vunpack.c.h.b16 %v383
      %v1263 = vunpack.c.l.b16 %v384
      %v1264 = vunpack.c.h.b16 %v384
      %v1265 = vunpack.c.l.b16 %v385
      %v1266 = vunpack.c.h.b16 %v385
      %v1267 = vunpack.c.l.b16 %v386
      %v1268 = vunpack.c.h.b16 %v386
      %v1269 = vunpack.c.l.b16 %v387
      %v1270 = vunpack.c.h.b16 %v387
      %v1271 = vunpack.c.l.b16 %v388
      %v1272 = vunpack.c.h.b16 %v388
      %v1273 = vunpack.c.l.b16 %v389
      %v1274 = vunpack.c.h.b16 %v389
      %v1275 = vunpack.c.l.b16 %v390
      %v1276 = vunpack.c.h.b16 %v390
      %v1277 = vunpack.c.l.b16 %v391
      %v1278 = vunpack.c.h.b16 %v391
      %v1279 = vunpack.c.l.b16 %v392
      %v1280 = vunpack.c.h.b16 %v392
      %v1281 = vunpack.c.l.b16 %v393
      %v1282 = vunpack.c.h.b16 %v393
      %v1283 = vunpack.c.l.b16 %v394
      %v1284 = vunpack.c.h.b16 %v394
      %v1285 = vunpack.c.l.b16 %v395
      %v1286 = vunpack.c.h.b16 %v395
      %v1287 = vunpack.c.l.b16 %v396
      %v1288 = vunpack.c.h.b16 %v396
      %v1289 = vunpack.c.l.b16 %v397
      %v1290 = vunpack.c.h.b16 %v397
      %v1291 = vunpack.c.l.b16 %v398
      %v1292 = vunpack.c.h.b16 %v398
      %v1293 = vunpack.c.l.b16 %v399
      %v1294 = vunpack.c.h.b16 %v399
      %v1295 = vunpack.c.l.b16 %v400
      %v1296 = vunpack.c.h.b16 %v400
      %v1297 = vunpack.c.l.b16 %v401
      %v1298 = vunpack.c.h.b16 %v401
      %v1299 = vunpack.c.l.b16 %v402
      %v1300 = vunpack.c.h.b16 %v402
      %v1301 = vunpack.c.l.b16 %v403
      %v1302 = vunpack.c.h.b16 %v403
      %v1303 = vunpack.c.l.b16 %v404
      %v1304 = vunpack.c.h.b16 %v404
      %v1305 = vunpack.c.l.b16 %v405
      %v1306 = vunpack.c.h.b16 %v405
      %v1307 = vunpack.c.l.b16 %v406
      %v1308 = vunpack.c.h.b16 %v406
      %v1309 = vunpack.c.l.b16 %v407
      %v1310 = vunpack.c.h.b16 %v407
      %v1311 = vunpack.c.l.b16 %v408
      %v1312 = vunpack.c.h.b16 %v408
      %v1313 = vunpack.c.l.b16 %v409
      %v1314 = vunpack.c.h.b16 %v409
      %v1315 = vunpack.c.l.b16 %v410
      %v1316 = vunpack.c.h.b16 %v410
      %v1317 = vunpack.c.l.b16 %v411
      %v1318 = vunpack.c.h.b16 %v411
      %v1319 = vunpack.c.l.b16 %v412
      %v1320 = vunpack.c.h.b16 %v412
      %v1321 = vunpack.c.l.b16 %v413
      %v1322 = vunpack.c.h.b16 %v413
      %v1323 = vunpack.c.l.b16 %v414
      %v1324 = vunpack.c.h.b16 %v414
      %v1325 = vunpack.c.l.b16 %v415
      %v1326 = vunpack.c.h.b16 %v415
      %v1327 = vunpack.c.l.b16 %v416
      %v1328 = vunpack.c.h.b16 %v416
      %v1329 = vunpack.c.l.b16 %v417
      %v1330 = vunpack.c.h.b16 %v417
      %v1331 = vunpack.c.l.b16 %v418
      %v1332 = vunpack.c.h.b16 %v418
      %v1333 = vunpack.c.l.b16 %v419
      %v1334 = vunpack.c.h.b16 %v419
      %v1335 = vunpack.c.l.b16 %v420
      %v1336 = vunpack.c.h.b16 %v420
      %v1337 = vunpack.c.l.b16 %v421
      %v1338 = vunpack.c.h.b16 %v421
      %v1339 = vunpack.c.l.b16 %v422
      %v1340 = vunpack.c.h.b16 %v422
      %v1341 = vunpack.c.l.b16 %v423
      %v1342 = vunpack.c.h.b16 %v423
      %v1343 = vunpack.c.l.b16 %v424
      %v1344 = vunpack.c.h.b16 %v424
      %v1345 = vunpack.c.l.b16 %v425
      %v1346 = vunpack.c.h.b16 %v425
      %v1347 = vunpack.c.l.b16 %v426
      %v1348 = vunpack.c.h.b16 %v426
      %v1349 = vunpack.c.l.b16 %v427
      %v1350 = vunpack.c.h.b16 %v427
      %v1351 = vunpack.c.l.b16 %v428
      %v1352 = vunpack.c.h.b16 %v428
      %v1353 = vunpack.c.l.b16 %v429
      %v1354 = vunpack.c.h.b16 %v429
      %v1355 = vunpack.c.l.b16 %v430
      %v1356 = vunpack.c.h.b16 %v430
      %v1357 = vunpack.c.l.b16 %v431
      %v1358 = vunpack.c.h.b16 %v431
      %v1359 = vunpack.c.l.b16 %v432
      %v1360 = vunpack.c.h.b16 %v432
      %v1361 = vunpack.c.l.b16 %v433
      %v1362 = vunpack.c.h.b16 %v433
      %v1363 = vunpack.c.l.b16 %v434
      %v1364 = vunpack.c.h.b16 %v434
      %v1365 = vunpack.c.l.b16 %v435
      %v1366 = vunpack.c.h.b16 %v435
      %v1367 = vunpack.c.l.b16 %v436
      %v1368 = vunpack.c.h.b16 %v436
      %v1369 = vunpack.c.l.b16 %v437
      %v1370 = vunpack.c.h.b16 %v437
      %v1371 = vunpack.c.l.b16 %v438
      %v1372 = vunpack.c.h.b16 %v438
      %v1373 = vunpack.c.l.b16 %v439
      %v1374 = vunpack.c.h.b16 %v439
      %v1375 = vunpack.c.l.b16 %v440
      %v1376 = vunpack.c.h.b16 %v440
      %v1377 = vunpack.c.l.b16 %v441
      %v1378 = vunpack.c.h.b16 %v441
      %v1379 = vunpack.c.l.b16 %v442
      %v1380 = vunpack.c.h.b16 %v442
      %v1381 = vunpack.c.l.b16 %v443
      %v1382 = vunpack.c.h.b16 %v443
      %v1383 = vunpack.c.l.b16 %v444
      %v1384 = vunpack.c.h.b16 %v444
      %v1385 = vunpack.c.l.b16 %v445
      %v1386 = vunpack.c.h.b16 %v445
      %v1387 = vunpack.c.l.b16 %v446
      %v1388 = vunpack.c.h.b16 %v446
      %v1389 = vunpack.c.l.b16 %v447
      %v1390 = vunpack.c.h.b16 %v447
      %v1391 = vunpack.c.l.b16 %v448
      %v1392 = vunpack.c.h.b16 %v448
      %v1393 = vunpack.c.l.b16 %v449
      %v1394 = vunpack.c.h.b16 %v449
      %v1395 = vunpack.c.l.b16 %v450
      %v1396 = vunpack.c.h.b16 %v450
      %v1397 = vunpack.c.l.b16 %v451
      %v1398 = vunpack.c.h.b16 %v451
      %v1399 = vunpack.c.l.b16 %v452
      %v1400 = vunpack.c.h.b16 %v452
      %v1401 = vunpack.c.l.b16 %v453
      %v1402 = vunpack.c.h.b16 %v453
      %v1403 = vunpack.c.l.b16 %v454
      %v1404 = vunpack.c.h.b16 %v454
      %v1405 = vunpack.c.l.b16 %v455
      %v1406 = vunpack.c.h.b16 %v455
      %v1407 = vunpack.c.l.b16 %v456
      %v1408 = vunpack.c.h.b16 %v456
      %v1409 = vunpack.c.l.b16 %v457
      %v1410 = vunpack.c.h.b16 %v457
      %v1411 = vunpack.c.l.b16 %v458
      %v1412 = vunpack.c.h.b16 %v458
      %v1413 = vunpack.c.l.b16 %v459
      %v1414 = vunpack.c.h.b16 %v459
      %v1415 = vunpack.c.l.b16 %v460
      %v1416 = vunpack.c.h.b16 %v460
      %v1417 = vunpack.c.l.b16 %v461
      %v1418 = vunpack.c.h.b16 %v461
      %v1419 = vunpack.c.l.b16 %v462
      %v1420 = vunpack.c.h.b16 %v462
      %v1421 = vunpack.c.l.b16 %v463
      %v1422 = vunpack.c.h.b16 %v463
      %v1423 = vunpack.c.l.b16 %v464
      %v1424 = vunpack.c.h.b16 %v464
      %v1425 = vunpack.c.l.b16 %v465
      %v1426 = vunpack.c.h.b16 %v465
      %v1427 = vunpack.c.l.b16 %v466
      %v1428 = vunpack.c.h.b16 %v466
      %v1429 = vunpack.c.l.b16 %v467
      %v1430 = vunpack.c.h.b16 %v467
      %v1431 = vunpack.c.l.b16 %v468
      %v1432 = vunpack.c.h.b16 %v468
      %v1433 = vunpack.c.l.b16 %v469
      %v1434 = vunpack.c.h.b16 %v469
      %v1435 = vunpack.c.l.b16 %v470
      %v1436 = vunpack.c.h.b16 %v470
      %v1437 = vunpack.c.l.b16 %v471
      %v1438 = vunpack.c.h.b16 %v471
      %v1439 = vunpack.c.l.b16 %v472
      %v1440 = vunpack.c.h.b16 %v472
      %v1441 = vunpack.c.l.b16 %v473
      %v1442 = vunpack.c.h.b16 %v473
      %v1443 = vunpack.c.l.b16 %v474
      %v1444 = vunpack.c.h.b16 %v474
      %v1445 = vunpack.c.l.b16 %v475
      %v1446 = vunpack.c.h.b16 %v475
      %v1447 = vunpack.c.l.b16 %v476
      %v1448 = vunpack.c.h.b16 %v476
      %v1449 = vunpack.c.l.b16 %v477
      %v1450 = vunpack.c.h.b16 %v477
      %v1451 = vunpack.c.l.b16 %v478
      %v1452 = vunpack.c.h.b16 %v478
      %v1453 = vunpack.c.l.b16 %v479
      %v1454 = vunpack.c.h.b16 %v479
      %v1455 = vunpack.c.l.b16 %v480
      %v1456 = vunpack.c.h.b16 %v480
      %v1457 = vunpack.c.l.b16 %v481
      %v1458 = vunpack.c.h.b16 %v481
      %v1459 = vunpack.c.l.b16 %v482
      %v1460 = vunpack.c.h.b16 %v482
      %v1461 = vunpack.c.l.b16 %v483
      %v1462 = vunpack.c.h.b16 %v483
      %v1463 = vunpack.c.l.b16 %v484
      %v1464 = vunpack.c.h.b16 %v484
      %v1465 = vunpack.c.l.b16 %v485
      %v1466 = vunpack.c.h.b16 %v485
      %v1467 = vunpack.c.l.b16 %v486
      %v1468 = vunpack.c.h.b16 %v486
      %v1469 = vunpack.c.l.b16 %v487
      %v1470 = vunpack.c.h.b16 %v487
      %v1471 = vunpack.c.l.b16 %v488
      %v1472 = vunpack.c.h.b16 %v488
      %v1473 = vunpack.c.l.b16 %v489
      %v1474 = vunpack.c.h.b16 %v489
      %v1475 = vunpack.c.l.b16 %v490
      %v1476 = vunpack.c.h.b16 %v490
      %v1477 = vunpack.c.l.b16 %v491
      %v1478 = vunpack.c.h.b16 %v491
      %v1479 = vunpack.c.l.b16 %v492
      %v1480 = vunpack.c.h.b16 %v492
      %v1481 = vunpack.c.l.b16 %v493
      %v1482 = vunpack.c.h.b16 %v493
      %v1483 = vunpack.c.l.b16 %v494
      %v1484 = vunpack.c.h.b16 %v494
      %v1485 = vunpack.c.l.b16 %v495
      %v1486 = vunpack.c.h.b16 %v495
      %v1487 = vunpack.c.l.b16 %v496
      %v1488 = vunpack.c.h.b16 %v496
      %v1489 = vunpack.c.l.b16 %v497
      %v1490 = vunpack.c.h.b16 %v497
      %v1491 = vunpack.c.l.b16 %v498
      %v1492 = vunpack.c.h.b16 %v498
      %v1493 = vunpack.c.l.b16 %v499
      %v1494 = vunpack.c.h.b16 %v499
      %v1495 = vunpack.c.l.b16 %v500
      %v1496 = vunpack.c.h.b16 %v500
      %v1497 = vunpack.c.l.b16 %v501
      %v1498 = vunpack.c.h.b16 %v501
      %v1499 = vunpack.c.l.b16 %v502
      %v1500 = vunpack.c.h.b16 %v502
      %v1501 = vunpack.c.l.b16 %v503
      %v1502 = vunpack.c.h.b16 %v503
      %v1503 = vunpack.c.l.b16 %v504
      %v1504 = vunpack.c.h.b16 %v504
      %v1505 = vunpack.c.l.b16 %v505
      %v1506 = vunpack.c.h.b16 %v505
      %v1507 = vunpack.c.l.b16 %v506
      %v1508 = vunpack.c.h.b16 %v506
      %v1509 = vunpack.c.l.b16 %v507
      %v1510 = vunpack.c.h.b16 %v507
      %v1511 = vunpack.c.l.b16 %v508
      %v1512 = vunpack.c.h.b16 %v508
      %v1513 = vunpack.c.l.b16 %v509
      %v1514 = vunpack.c.h.b16 %v509
      %v1515 = vunpack.c.l.b16 %v510
      %v1516 = vunpack.c.h.b16 %v510
      %v1517 = vunpack.c.l.b16 %v511
      %v1518 = vunpack.c.h.b16 %v511
      %v1519 = vunpack.c.l.b16 %v512
      %v1520 = vunpack.c.h.b16 %v512
      %v1521 = vunpack.c.l.b16 %v513
      %v1522 = vunpack.c.h.b16 %v513
      %v1523 = vunpack.c.l.b16 %v514
      %v1524 = vunpack.c.h.b16 %v514
      %v1525 = vunpack.c.l.b16 %v515
      %v1526 = vunpack.c.h.b16 %v515
      %v1527 = vunpack.c.l.b16 %v516
      %v1528 = vunpack.c.h.b16 %v516
      %v1529 = vunpack.c.l.b16 %v517
      %v1530 = vunpack.c.h.b16 %v517
      %v1531 = vunpack.c.l.b16 %v518
      %v1532 = vunpack.c.h.b16 %v518
      %v1533 = vunpack.c.l.b16 %v519
      %v1534 = vunpack.c.h.b16 %v519
      %v1535 = vunpack.c.l.b16 %v520
      %v1536 = vunpack.c.h.b16 %v520
      %v1537 = vunpack.c.l.b16 %v521
      %v1538 = vunpack.c.h.b16 %v521
      %v1539 = vunpack.c.l.b16 %v522
      %v1540 = vunpack.c.h.b16 %v522
      %v1541 = vunpack.c.l.b16 %v523
      %v1542 = vunpack.c.h.b16 %v523
      %v1543 = vunpack.c.l.b16 %v524
      %v1544 = vunpack.c.h.b16 %v524
      %v1545 = vunpack.c.l.b16 %v525
      %v1546 = vunpack.c.h.b16 %v525
      %v1547 = vunpack.c.l.b16 %v526
      %v1548 = vunpack.c.h.b16 %v526
      %v1549 = vunpack.c.l.b16 %v527
      %v1550 = vunpack.c.h.b16 %v527
      %v1551 = vunpack.c.l.b16 %v528
      %v1552 = vunpack.c.h.b16 %v528
      %v1553 = vunpack.c.l.b16 %v529
      %v1554 = vunpack.c.h.b16 %v529
      %v1555 = vunpack.c.l.b16 %v530
      %v1556 = vunpack.c.h.b16 %v530
      %v1557 = vunpack.c.l.b16 %v531
      %v1558 = vunpack.c.h.b16 %v531
      %v1559 = vunpack.c.l.b16 %v532
      %v1560 = vunpack.c.h.b16 %v532
      %v1561 = vunpack.c.l.b16 %v533
      %v1562 = vunpack.c.h.b16 %v533
      %v1563 = vunpack.c.l.b16 %v534
      %v1564 = vunpack.c.h.b16 %v534
      %v1565 = vunpack.c.l.b16 %v535
      %v1566 = vunpack.c.h.b16 %v535
      %v1567 = vunpack.c.l.b16 %v536
      %v1568 = vunpack.c.h.b16 %v536
      %v1569 = vunpack.c.l.b16 %v537
      %v1570 = vunpack.c.h.b16 %v537
      %v1571 = vunpack.c.l.b16 %v538
      %v1572 = vunpack.c.h.b16 %v538
      %v1573 = vunpack.c.l.b16 %v539
      %v1574 = vunpack.c.h.b16 %v539
      %v1575 = vunpack.c.l.b16 %v540
      %v1576 = vunpack.c.h.b16 %v540
      %v1577 = vpack.c.b16 %v1081, %v1065
      %v1578 = vpack.c.b16 %v1082, %v1066
      %v1579 = vpack.c.b16 %v1083, %v1067
      %v1580 = vpack.c.b16 %v1084, %v1068
      %v1581 = vpack.c.b16 %v1085, %v1069
      %v1582 = vpack.c.b16 %v1086, %v1070
      %v1583 = vpack.c.b16 %v1087, %v1071
      %v1584 = vpack.c.b16 %v1088, %v1072
      %v1585 = vpack.c.b16 %v1089, %v1073
      %v1586 = vpack.c.b16 %v1090, %v1074
      %v1587 = vpack.c.b16 %v1091, %v1075
      %v1588 = vpack.c.b16 %v1092, %v1076
      %v1589 = vpack.c.b16 %v1093, %v1077
      %v1590 = vpack.c.b16 %v1094, %v1078
      %v1591 = vpack.c.b16 %v1095, %v1079
      %v1592 = vpack.c.b16 %v1096, %v1080
      %v1593 = vpack.c.b16 %v1113, %v1097
      %v1594 = vpack.c.b16 %v1114, %v1098
      %v1595 = vpack.c.b16 %v1115, %v1099
      %v1596 = vpack.c.b16 %v1116, %v1100
      %v1597 = vpack.c.b16 %v1117, %v1101
      %v1598 = vpack.c.b16 %v1118, %v1102
      %v1599 = vpack.c.b16 %v1119, %v1103
      %v1600 = vpack.c.b16 %v1120, %v1104
      %v1601 = vpack.c.b16 %v1121, %v1105
      %v1602 = vpack.c.b16 %v1122, %v1106
      %v1603 = vpack.c.b16 %v1123, %v1107
      %v1604 = vpack.c.b16 %v1124, %v1108
      %v1605 = vpack.c.b16 %v1125, %v1109
      %v1606 = vpack.c.b16 %v1126, %v1110
      %v1607 = vpack.c.b16 %v1127, %v1111
      %v1608 = vpack.c.b16 %v1128, %v1112
      %v1609 = vpack.c.b16 %v1145, %v1129
      %v1610 = vpack.c.b16 %v1146, %v1130
      %v1611 = vpack.c.b16 %v1147, %v1131
      %v1612 = vpack.c.b16 %v1148, %v1132
      %v1613 = vpack.c.b16 %v1149, %v1133
      %v1614 = vpack.c.b16 %v1150, %v1134
      %v1615 = vpack.c.b16 %v1151, %v1135
      %v1616 = vpack.c.b16 %v1152, %v1136
      %v1617 = vpack.c.b16 %v1153, %v1137
      %v1618 = vpack.c.b16 %v1154, %v1138
      %v1619 = vpack.c.b16 %v1155, %v1139
      %v1620 = vpack.c.b16 %v1156, %v1140
      %v1621 = vpack.c.b16 %v1157, %v1141
      %v1622 = vpack.c.b16 %v1158, %v1142
      %v1623 = vpack.c.b16 %v1159, %v1143
      %v1624 = vpack.c.b16 %v1160, %v1144
      %v1625 = vpack.c.b16 %v1177, %v1161
      %v1626 = vpack.c.b16 %v1178, %v1162
      %v1627 = vpack.c.b16 %v1179, %v1163
      %v1628 = vpack.c.b16 %v1180, %v1164
      %v1629 = vpack.c.b16 %v1181, %v1165
      %v1630 = vpack.c.b16 %v1182, %v1166
      %v1631 = vpack.c.b16 %v1183, %v1167
      %v1632 = vpack.c.b16 %v1184, %v1168
      %v1633 = vpack.c.b16 %v1185, %v1169
      %v1634 = vpack.c.b16 %v1186, %v1170
      %v1635 = vpack.c.b16 %v1187, %v1171
      %v1636 = vpack.c.b16 %v1188, %v1172
      %v1637 = vpack.c.b16 %v1189, %v1173
      %v1638 = vpack.c.b16 %v1190, %v1174
      %v1639 = vpack.c.b16 %v1191, %v1175
      %v1640 = vpack.c.b16 %v1192, %v1176
      %v1641 = vpack.c.b16 %v1209, %v1193
      %v1642 = vpack.c.b16 %v1210, %v1194
      %v1643 = vpack.c.b16 %v1211, %v1195
      %v1644 = vpack.c.b16 %v1212, %v1196
      %v1645 = vpack.c.b16 %v1213, %v1197
      %v1646 = vpack.c.b16 %v1214, %v1198
      %v1647 = vpack.c.b16 %v1215, %v1199
      %v1648 = vpack.c.b16 %v1216, %v1200
      %v1649 = vpack.c.b16 %v1217, %v1201
      %v1650 = vpack.c.b16 %v1218, %v1202
      %v1651 = vpack.c.b16 %v1219, %v1203
      %v1652 = vpack.c.b16 %v1220, %v1204
      %v1653 = vpack.c.b16 %v1221, %v1205
      %v1654 = vpack.c.b16 %v1222, %v1206
      %v1655 = vpack.c.b16 %v1223, %v1207
      %v1656 = vpack.c.b16 %v1224, %v1208
      %v1657 = vpack.c.b16 %v1241, %v1225
      %v1658 = vpack.c.b16 %v1242, %v1226
      %v1659 = vpack.c.b16 %v1243, %v1227
      %v1660 = vpack.c.b16 %v1244, %v1228
      %v1661 = vpack.c.b16 %v1245, %v1229
      %v1662 = vpack.c.b16 %v1246, %v1230
      %v1663 = vpack.c.b16 %v1247, %v1231
      %v1664 = vpack.c.b16 %v1248, %v1232
      %v1665 = vpack.c.b16 %v1249, %v1233
      %v1666 = vpack.c.b16 %v1250, %v1234
      %v1667 = vpack.c.b16 %v1251, %v1235
      %v1668 = vpack.c.b16 %v1252, %v1236
      %v1669 = vpack.c.b16 %v1253, %v1237
      %v1670 = vpack.c.b16 %v1254, %v1238
      %v1671 = vpack.c.b16 %v1255, %v1239
      %v1672 = vpack.c.b16 %v1256, %v1240
      %v1673 = vpack.c.b16 %v1273, %v1257
      %v1674 = vpack.c.b16 %v1274, %v1258
      %v1675 = vpack.c.b16 %v1275, %v1259
      %v1676 = vpack.c.b16 %v1276, %v1260
      %v1677 = vpack.c.b16 %v1277, %v1261
      %v1678 = vpack.c.b16 %v1278, %v1262
      %v1679 = vpack.c.b16 %v1279, %v1263
      %v1680 = vpack.c.b16 %v1280, %v1264
      %v1681 = vpack.c.b16 %v1281, %v1265
      %v1682 = vpack.c.b16 %v1282, %v1266
      %v1683 = vpack.c.b16 %v1283, %v1267
      %v1684 = vpack.c.b16 %v1284, %v1268
      %v1685 = vpack.c.b16 %v1285, %v1269
      %v1686 = vpack.c.b16 %v1286, %v1270
      %v1687 = vpack.c.b16 %v1287, %v1271
      %v1688 = vpack.c.b16 %v1288, %v1272
      %v1689 = vpack.c.b16 %v1305, %v1289
      %v1690 = vpack.c.b16 %v1306, %v1290
      %v1691 = vpack.c.b16 %v1307, %v1291
      %v1692 = vpack.c.b16 %v1308, %v1292
      %v1693 = vpack.c.b16 %v1309, %v1293
      %v1694 = vpack.c.b16 %v1310, %v1294
      %v1695 = vpack.c.b16 %v1311, %v1295
      %v1696 = vpack.c.b16 %v1312, %v1296
      %v1697 = vpack.c.b16 %v1313, %v1297
      %v1698 = vpack.c.b16 %v1314, %v1298
      %v1699 = vpack.c.b16 %v1315, %v1299
      %v1700 = vpack.c.b16 %v1316, %v1300
      %v1701 = vpack.c.b16 %v1317, %v1301
      %v1702 = vpack.c.b16 %v1318, %v1302
      %v1703 = vpack.c.b16 %v1319, %v1303
      %v1704 = vpack.c.b16 %v1320, %v1304
      %v1705 = vpack.c.b16 %v1337, %v1321
      %v1706 = vpack.c.b16 %v1338, %v1322
      %v1707 = vpack.c.b16 %v1339, %v1323
      %v1708 = vpack.c.b16 %v1340, %v1324
      %v1709 = vpack.c.b16 %v1341, %v1325
      %v1710 = vpack.c.b16 %v1342, %v1326
      %v1711 = vpack.c.b16 %v1343, %v1327
      %v1712 = vpack.c.b16 %v1344, %v1328
      %v1713 = vpack.c.b16 %v1345, %v1329
      %v1714 = vpack.c.b16 %v1346, %v1330
      %v1715 = vpack.c.b16 %v1347, %v1331
      %v1716 = vpack.c.b16 %v1348, %v1332
      %v1717 = vpack.c.b16 %v1349, %v1333
      %v1718 = vpack.c.b16 %v1350, %v1334
      %v1719 = vpack.c.b16 %v1351, %v1335
      %v1720 = vpack.c.b16 %v1352, %v1336
      %v1721 = vpack.c.b16 %v1369, %v1353
      %v1722 = vpack.c.b16 %v1370, %v1354
      %v1723 = vpack.c.b16 %v1371, %v1355
      %v1724 = vpack.c.b16 %v1372, %v1356
      %v1725 = vpack.c.b16 %v1373, %v1357
      %v1726 = vpack.c.b16 %v1374, %v1358
      %v1727 = vpack.c.b16 %v1375, %v1359
      %v1728 = vpack.c.b16 %v1376, %v1360
      %v1729 = vpack.c.b16 %v1377, %v1361
      %v1730 = vpack.c.b16 %v1378, %v1362
      %v1731 = vpack.c.b16 %v1379, %v1363
      %v1732 = vpack.c.b16 %v1380, %v1364
      %v1733 = vpack.c.b16 %v1381, %v1365
      %v1734 = vpack.c.b16 %v1382, %v1366
      %v1735 = vpack.c.b16 %v1383, %v1367
      %v1736 = vpack.c.b16 %v1384, %v1368
      %v1737 = vpack.c.b16 %v1401, %v1385
      %v1738 = vpack.c.b16 %v1402, %v1386
      %v1739 = vpack.c.b16 %v1403, %v1387
      %v1740 = vpack.c.b16 %v1404, %v1388
      %v1741 = vpack.c.b16 %v1405, %v1389
      %v1742 = vpack.c.b16 %v1406, %v1390
      %v1743 = vpack.c.b16 %v1407, %v1391
      %v1744 = vpack.c.b16 %v1408, %v1392
      %v1745 = vpack.c.b16 %v1409, %v1393
      %v1746 = vpack.c.b16 %v1410, %v1394
      %v1747 = vpack.c.b16 %v1411, %v1395
      %v1748 = vpack.c.b16 %v1412, %v1396
      %v1749 = vpack.c.b16 %v1413, %v1397
      %v1750 = vpack.c.b16 %v1414, %v1398
      %v1751 = vpack.c.b16 %v1415, %v1399
      %v1752 = vpack.c.b16 %v1416, %v1400
      %v1753 = vpack.c.b16 %v1433, %v1417
      %v1754 = vpack.c.b16 %v1434, %v1418
      %v1755 = vpack.c.b16 %v1435, %v1419
      %v1756 = vpack.c.b16 %v1436, %v1420
      %v1757 = vpack.c.b16 %v1437, %v1421
      %v1758 = vpack.c.b16 %v1438, %v1422
      %v1759 = vpack.c.b16 %v1439, %v1423
      %v1760 = vpack.c.b16 %v1440, %v1424
      %v1761 = vpack.c.b16 %v1441, %v1425
      %v1762 = vpack.c.b16 %v1442, %v1426
      %v1763 = vpack.c.b16 %v1443, %v1427
      %v1764 = vpack.c.b16 %v1444, %v1428
      %v1765 = vpack.c.b16 %v1445, %v1429
      %v1766 = vpack.c.b16 %v1446, %v1430
      %v1767 = vpack.c.b16 %v1447, %v1431
      %v1768 = vpack.c.b16 %v1448, %v1432
      %v1769 = vpack.c.b16 %v1465, %v1449
      %v1770 = vpack.c.b16 %v1466, %v1450
      %v1771 = vpack.c.b16 %v1467, %v1451
      %v1772 = vpack.c.b16 %v1468, %v1452
      %v1773 = vpack.c.b16 %v1469, %v1453
      %v1774 = vpack.c.b16 %v1470, %v1454
      %v1775 = vpack.c.b16 %v1471, %v1455
      %v1776 = vpack.c.b16 %v1472, %v1456
      %v1777 = vpack.c.b16 %v1473, %v1457
      %v1778 = vpack.c.b16 %v1474, %v1458
      %v1779 = vpack.c.b16 %v1475, %v1459
      %v1780 = vpack.c.b16 %v1476, %v1460
      %v1781 = vpack.c.b16 %v1477, %v1461
      %v1782 = vpack.c.b16 %v1478, %v1462
      %v1783 = vpack.c.b16 %v1479, %v1463
      %v1784 = vpack.c.b16 %v1480, %v1464
      %v1785 = vpack.c.b16 %v1497, %v1481
      %v1786 = vpack.c.b16 %v1498, %v1482
      %v1787 = vpack.c.b16 %v1499, %v1483
      %v1788 = vpack.c.b16 %v1500, %v1484
      %v1789 = vpack.c.b16 %v1501, %v1485
      %v1790 = vpack.c.b16 %v1502, %v1486
      %v1791 = vpack.c.b16 %v1503, %v1487
      %v1792 = vpack.c.b16 %v1504, %v1488
      %v1793 = vpack.c.b16 %v1505, %v1489
      %v1794 = vpack.c.b16 %v1506, %v1490
      %v1795 = vpack.c.b16 %v1507, %v1491
      %v1796 = vpack.c.b16 %v1508, %v1492
      %v1797 = vpack.c.b16 %v1509, %v1493
      %v1798 = vpack.c.b16 %v1510, %v1494
      %v1799 = vpack.c.b16 %v1511, %v1495
      %v1800 = vpack.c.b16 %v1512, %v1496
      %v1801 = vpack.c.b16 %v1529, %v1513
      %v1802 = vpack.c.b16 %v1530, %v1514
      %v1803 = vpack.c.b16 %v1531, %v1515
      %v1804 = vpack.c.b16 %v1532, %v1516
      %v1805 = vpack.c.b16 %v1533, %v1517
      %v1806 = vpack.c.b16 %v1534, %v1518
      %v1807 = vpack.c.b16 %v1535, %v1519
      %v1808 = vpack.c.b16 %v1536, %v1520
      %v1809 = vpack.c.b16 %v1537, %v1521
      %v1810 = vpack.c.b16 %v1538, %v1522
      %v1811 = vpack.c.b16 %v1539, %v1523
      %v1812 = vpack.c.b16 %v1540, %v1524
      %v1813 = vpack.c.b16 %v1541, %v1525
      %v1814 = vpack.c.b16 %v1542, %v1526
      %v1815 = vpack.c.b16 %v1543, %v1527
      %v1816 = vpack.c.b16 %v1544, %v1528
      %v1817 = vpack.c.b16 %v1561, %v1545
      %v1818 = vpack.c.b16 %v1562, %v1546
      %v1819 = vpack.c.b16 %v1563, %v1547
      %v1820 = vpack.c.b16 %v1564, %v1548
      %v1821 = vpack.c.b16 %v1565, %v1549
      %v1822 = vpack.c.b16 %v1566, %v1550
      %v1823 = vpack.c.b16 %v1567, %v1551
      %v1824 = vpack.c.b16 %v1568, %v1552
      %v1825 = vpack.c.b16 %v1569, %v1553
      %v1826 = vpack.c.b16 %v1570, %v1554
      %v1827 = vpack.c.b16 %v1571, %v1555
      %v1828 = vpack.c.b16 %v1572, %v1556
      %v1829 = vpack.c.b16 %v1573, %v1557
      %v1830 = vpack.c.b16 %v1574, %v1558
      %v1831 = vpack.c.b16 %v1575, %v1559
      %v1832 = vpack.c.b16 %v1576, %v1560
      %v2345 = vunpack.c.l.b16 %v541
      %v2346 = vunpack.c.h.b16 %v541
      %v2347 = vunpack.c.l.b16 %v542
      %v2348 = vunpack.c.h.b16 %v542
      %v2349 = vunpack.c.l.b16 %v543
      %v2350 = vunpack.c.h.b16 %v543
      %v2351 = vunpack.c.l.b16 %v544
      %v2352 = vunpack.c.h.b16 %v544
      %v2353 = vunpack.c.l.b16 %v545
      %v2354 = vunpack.c.h.b16 %v545
      %v2355 = vunpack.c.l.b16 %v546
      %v2356 = vunpack.c.h.b16 %v546
      %v2357 = vunpack.c.l.b16 %v547
      %v2358 = vunpack.c.h.b16 %v547
      %v2359 = vunpack.c.l.b16 %v548
      %v2360 = vunpack.c.h.b16 %v548
      %v2361 = vunpack.c.l.b16 %v549
      %v2362 = vunpack.c.h.b16 %v549
      %v2363 = vunpack.c.l.b16 %v550
      %v2364 = vunpack.c.h.b16 %v550
      %v2365 = vunpack.c.l.b16 %v551
      %v2366 = vunpack.c.h.b16 %v551
      %v2367 = vunpack.c.l.b16 %v552
      %v2368 = vunpack.c.h.b16 %v552
      %v2369 = vunpack.c.l.b16 %v553
      %v2370 = vunpack.c.h.b16 %v553
      %v2371 = vunpack.c.l.b16 %v554
      %v2372 = vunpack.c.h.b16 %v554
      %v2373 = vunpack.c.l.b16 %v555
      %v2374 = vunpack.c.h.b16 %v555
      %v2375 = vunpack.c.l.b16 %v556
      %v2376 = vunpack.c.h.b16 %v556
      %v2377 = vunpack.c.l.b16 %v557
      %v2378 = vunpack.c.h.b16 %v557
      %v2379 = vunpack.c.l.b16 %v558
      %v2380 = vunpack.c.h.b16 %v558
      %v2381 = vunpack.c.l.b16 %v559
      %v2382 = vunpack.c.h.b16 %v559
      %v2383 = vunpack.c.l.b16 %v560
      %v2384 = vunpack.c.h.b16 %v560
      %v2385 = vunpack.c.l.b16 %v561
      %v2386 = vunpack.c.h.b16 %v561
      %v2387 = vunpack.c.l.b16 %v562
      %v2388 = vunpack.c.h.b16 %v562
      %v2389 = vunpack.c.l.b16 %v563
      %v2390 = vunpack.c.h.b16 %v563
      %v2391 = vunpack.c.l.b16 %v564
      %v2392 = vunpack.c.h.b16 %v564
      %v2393 = vunpack.c.l.b16 %v565
      %v2394 = vunpack.c.h.b16 %v565
      %v2395 = vunpack.c.l.b16 %v566
      %v2396 = vunpack.c.h.b16 %v566
      %v2397 = vunpack.c.l.b16 %v567
      %v2398 = vunpack.c.h.b16 %v567
      %v2399 = vunpack.c.l.b16 %v568
      %v2400 = vunpack.c.h.b16 %v568
      %v2401 = vunpack.c.l.b16 %v569
      %v2402 = vunpack.c.h.b16 %v569
      %v2403 = vunpack.c.l.b16 %v570
      %v2404 = vunpack.c.h.b16 %v570
      %v2405 = vunpack.c.l.b16 %v571
      %v2406 = vunpack.c.h.b16 %v571
      %v2407 = vunpack.c.l.b16 %v572
      %v2408 = vunpack.c.h.b16 %v572
      %v2409 = vunpack.c.l.b16 %v573
      %v2410 = vunpack.c.h.b16 %v573
      %v2411 = vunpack.c.l.b16 %v574
      %v2412 = vunpack.c.h.b16 %v574
      %v2413 = vunpack.c.l.b16 %v575
      %v2414 = vunpack.c.h.b16 %v575
      %v2415 = vunpack.c.l.b16 %v576
      %v2416 = vunpack.c.h.b16 %v576
      %v2417 = vunpack.c.l.b16 %v577
      %v2418 = vunpack.c.h.b16 %v577
      %v2419 = vunpack.c.l.b16 %v578
      %v2420 = vunpack.c.h.b16 %v578
      %v2421 = vunpack.c.l.b16 %v579
      %v2422 = vunpack.c.h.b16 %v579
      %v2423 = vunpack.c.l.b16 %v580
      %v2424 = vunpack.c.h.b16 %v580
      %v2425 = vunpack.c.l.b16 %v581
      %v2426 = vunpack.c.h.b16 %v581
      %v2427 = vunpack.c.l.b16 %v582
      %v2428 = vunpack.c.h.b16 %v582
      %v2429 = vunpack.c.l.b16 %v583
      %v2430 = vunpack.c.h.b16 %v583
      %v2431 = vunpack.c.l.b16 %v584
      %v2432 = vunpack.c.h.b16 %v584
      %v2433 = vunpack.c.l.b16 %v585
      %v2434 = vunpack.c.h.b16 %v585
      %v2435 = vunpack.c.l.b16 %v586
      %v2436 = vunpack.c.h.b16 %v586
      %v2437 = vunpack.c.l.b16 %v587
      %v2438 = vunpack.c.h.b16 %v587
      %v2439 = vunpack.c.l.b16 %v588
      %v2440 = vunpack.c.h.b16 %v588
      %v2441 = vunpack.c.l.b16 %v589
      %v2442 = vunpack.c.h.b16 %v589
      %v2443 = vunpack.c.l.b16 %v590
      %v2444 = vunpack.c.h.b16 %v590
      %v2445 = vunpack.c.l.b16 %v591
      %v2446 = vunpack.c.h.b16 %v591
      %v2447 = vunpack.c.l.b16 %v592
      %v2448 = vunpack.c.h.b16 %v592
      %v2449 = vunpack.c.l.b16 %v593
      %v2450 = vunpack.c.h.b16 %v593
      %v2451 = vunpack.c.l.b16 %v594
      %v2452 = vunpack.c.h.b16 %v594
      %v2453 = vunpack.c.l.b16 %v595
      %v2454 = vunpack.c.h.b16 %v595
      %v2455 = vunpack.c.l.b16 %v596
      %v2456 = vunpack.c.h.b16 %v596
      %v2457 = vunpack.c.l.b16 %v597
      %v2458 = vunpack.c.h.b16 %v597
      %v2459 = vunpack.c.l.b16 %v598
      %v2460 = vunpack.c.h.b16 %v598
      %v2461 = vunpack.c.l.b16 %v599
      %v2462 = vunpack.c.h.b16 %v599
      %v2463 = vunpack.c.l.b16 %v600
      %v2464 = vunpack.c.h.b16 %v600
      %v2465 = vunpack.c.l.b16 %v601
      %v2466 = vunpack.c.h.b16 %v601
      %v2467 = vunpack.c.l.b16 %v602
      %v2468 = vunpack.c.h.b16 %v602
      %v2469 = vunpack.c.l.b16 %v603
      %v2470 = vunpack.c.h.b16 %v603
      %v2471 = vunpack.c.l.b16 %v604
      %v2472 = vunpack.c.h.b16 %v604
      %v2473 = vunpack.c.l.b16 %v605
      %v2474 = vunpack.c.h.b16 %v605
      %v2475 = vunpack.c.l.b16 %v606
      %v2476 = vunpack.c.h.b16 %v606
      %v2477 = vunpack.c.l.b16 %v607
      %v2478 = vunpack.c.h.b16 %v607
      %v2479 = vunpack.c.l.b16 %v608
      %v2480 = vunpack.c.h.b16 %v608
      %v2481 = vunpack.c.l.b16 %v609
      %v2482 = vunpack.c.h.b16 %v609
      %v2483 = vunpack.c.l.b16 %v610
      %v2484 = vunpack.c.h.b16 %v610
      %v2485 = vunpack.c.l.b16 %v611
      %v2486 = vunpack.c.h.b16 %v611
      %v2487 = vunpack.c.l.b16 %v612
      %v2488 = vunpack.c.h.b16 %v612
      %v2489 = vunpack.c.l.b16 %v613
      %v2490 = vunpack.c.h.b16 %v613
      %v2491 = vunpack.c.l.b16 %v614
      %v2492 = vunpack.c.h.b16 %v614
      %v2493 = vunpack.c.l.b16 %v615
      %v2494 = vunpack.c.h.b16 %v615
      %v2495 = vunpack.c.l.b16 %v616
      %v2496 = vunpack.c.h.b16 %v616
      %v2497 = vunpack.c.l.b16 %v617
      %v2498 = vunpack.c.h.b16 %v617
      %v2499 = vunpack.c.l.b16 %v618
      %v2500 = vunpack.c.h.b16 %v618
      %v2501 = vunpack.c.l.b16 %v619
      %v2502 = vunpack.c.h.b16 %v619
      %v2503 = vunpack.c.l.b16 %v620
      %v2504 = vunpack.c.h.b16 %v620
      %v2505 = vunpack.c.l.b16 %v621
      %v2506 = vunpack.c.h.b16 %v621
      %v2507 = vunpack.c.l.b16 %v622
      %v2508 = vunpack.c.h.b16 %v622
      %v2509 = vunpack.c.l.b16 %v623
      %v2510 = vunpack.c.h.b16 %v623
      %v2511 = vunpack.c.l.b16 %v624
      %v2512 = vunpack.c.h.b16 %v624
      %v2513 = vunpack.c.l.b16 %v625
      %v2514 = vunpack.c.h.b16 %v625
      %v2515 = vunpack.c.l.b16 %v626
      %v2516 = vunpack.c.h.b16 %v626
      %v2517 = vunpack.c.l.b16 %v627
      %v2518 = vunpack.c.h.b16 %v627
      %v2519 = vunpack.c.l.b16 %v628
      %v2520 = vunpack.c.h.b16 %v628
      %v2521 = vunpack.c.l.b16 %v629
      %v2522 = vunpack.c.h.b16 %v629
      %v2523 = vunpack.c.l.b16 %v630
      %v2524 = vunpack.c.h.b16 %v630
      %v2525 = vunpack.c.l.b16 %v631
      %v2526 = vunpack.c.h.b16 %v631
      %v2527 = vunpack.c.l.b16 %v632
      %v2528 = vunpack.c.h.b16 %v632
      %v2529 = vunpack.c.l.b16 %v633
      %v2530 = vunpack.c.h.b16 %v633
      %v2531 = vunpack.c.l.b16 %v634
      %v2532 = vunpack.c.h.b16 %v634
      %v2533 = vunpack.c.l.b16 %v635
      %v2534 = vunpack.c.h.b16 %v635
      %v2535 = vunpack.c.l.b16 %v636
      %v2536 = vunpack.c.h.b16 %v636
      %v2537 = vunpack.c.l.b16 %v637
      %v2538 = vunpack.c.h.b16 %v637
      %v2539 = vunpack.c.l.b16 %v638
      %v2540 = vunpack.c.h.b16 %v638
      %v2541 = vunpack.c.l.b16 %v639
      %v2542 = vunpack.c.h.b16 %v639
      %v2543 = vunpack.c.l.b16 %v640
      %v2544 = vunpack.c.h.b16 %v640
      %v2545 = vunpack.c.l.b16 %v641
      %v2546 = vunpack.c.h.b16 %v641
      %v2547 = vunpack.c.l.b16 %v642
      %v2548 = vunpack.c.h.b16 %v642
      %v2549 = vunpack.c.l.b16 %v643
      %v2550 = vunpack.c.h.b16 %v643
      %v2551 = vunpack.c.l.b16 %v644
      %v2552 = vunpack.c.h.b16 %v644
      %v2553 = vunpack.c.l.b16 %v645
      %v2554 = vunpack.c.h.b16 %v645
      %v2555 = vunpack.c.l.b16 %v646
      %v2556 = vunpack.c.h.b16 %v646
      %v2557 = vunpack.c.l.b16 %v647
      %v2558 = vunpack.c.h.b16 %v647
      %v2559 = vunpack.c.l.b16 %v648
      %v2560 = vunpack.c.h.b16 %v648
      %v2561 = vunpack.c.l.b16 %v649
      %v2562 = vunpack.c.h.b16 %v649
      %v2563 = vunpack.c.l.b16 %v650
      %v2564 = vunpack.c.h.b16 %v650
      %v2565 = vunpack.c.l.b16 %v651
      %v2566 = vunpack.c.h.b16 %v651
      %v2567 = vunpack.c.l.b16 %v652
      %v2568 = vunpack.c.h.b16 %v652
      %v2569 = vunpack.c.l.b16 %v653
      %v2570 = vunpack.c.h.b16 %v653
      %v2571 = vunpack.c.l.b16 %v654
      %v2572 = vunpack.c.h.b16 %v654
      %v2573 = vunpack.c.l.b16 %v655
      %v2574 = vunpack.c.h.b16 %v655
      %v2575 = vunpack.c.l.b16 %v656
      %v2576 = vunpack.c.h.b16 %v656
      %v2577 = vunpack.c.l.b16 %v657
      %v2578 = vunpack.c.h.b16 %v657
      %v2579 = vunpack.c.l.b16 %v658
      %v2580 = vunpack.c.h.b16 %v658
      %v2581 = vunpack.c.l.b16 %v659
      %v2582 = vunpack.c.h.b16 %v659
      %v2583 = vunpack.c.l.b16 %v660
      %v2584 = vunpack.c.h.b16 %v660
      %v2585 = vunpack.c.l.b16 %v661
      %v2586 = vunpack.c.h.b16 %v661
      %v2587 = vunpack.c.l.b16 %v662
      %v2588 = vunpack.c.h.b16 %v662
      %v2589 = vunpack.c.l.b16 %v663
      %v2590 = vunpack.c.h.b16 %v663
      %v2591 = vunpack.c.l.b16 %v664
      %v2592 = vunpack.c.h.b16 %v664
      %v2593 = vunpack.c.l.b16 %v665
      %v2594 = vunpack.c.h.b16 %v665
      %v2595 = vunpack.c.l.b16 %v666
      %v2596 = vunpack.c.h.b16 %v666
      %v2597 = vunpack.c.l.b16 %v667
      %v2598 = vunpack.c.h.b16 %v667
      %v2599 = vunpack.c.l.b16 %v668
      %v2600 = vunpack.c.h.b16 %v668
      %v2601 = vunpack.c.l.b16 %v669
      %v2602 = vunpack.c.h.b16 %v669
      %v2603 = vunpack.c.l.b16 %v670
      %v2604 = vunpack.c.h.b16 %v670
      %v2605 = vunpack.c.l.b16 %v671
      %v2606 = vunpack.c.h.b16 %v671
      %v2607 = vunpack.c.l.b16 %v672
      %v2608 = vunpack.c.h.b16 %v672
      %v2609 = vunpack.c.l.b16 %v673
      %v2610 = vunpack.c.h.b16 %v673
      %v2611 = vunpack.c.l.b16 %v674
      %v2612 = vunpack.c.h.b16 %v674
      %v2613 = vunpack.c.l.b16 %v675
      %v2614 = vunpack.c.h.b16 %v675
      %v2615 = vunpack.c.l.b16 %v676
      %v2616 = vunpack.c.h.b16 %v676
      %v2617 = vunpack.c.l.b16 %v677
      %v2618 = vunpack.c.h.b16 %v677
      %v2619 = vunpack.c.l.b16 %v678
      %v2620 = vunpack.c.h.b16 %v678
      %v2621 = vunpack.c.l.b16 %v679
      %v2622 = vunpack.c.h.b16 %v679
      %v2623 = vunpack.c.l.b16 %v680
      %v2624 = vunpack.c.h.b16 %v680
      %v2625 = vunpack.c.l.b16 %v681
      %v2626 = vunpack.c.h.b16 %v681
      %v2627 = vunpack.c.l.b16 %v682
      %v2628 = vunpack.c.h.b16 %v682
      %v2629 = vunpack.c.l.b16 %v683
      %v2630 = vunpack.c.h.b16 %v683
      %v2631 = vunpack.c.l.b16 %v684
      %v2632 = vunpack.c.h.b16 %v684
      %v2633 = vunpack.c.l.b16 %v685
      %v2634 = vunpack.c.h.b16 %v685
      %v2635 = vunpack.c.l.b16 %v686
      %v2636 = vunpack.c.h.b16 %v686
      %v2637 = vunpack.c.l.b16 %v687
      %v2638 = vunpack.c.h.b16 %v687
      %v2639 = vunpack.c.l.b16 %v688
      %v2640 = vunpack.c.h.b16 %v688
      %v2641 = vunpack.c.l.b16 %v689
      %v2642 = vunpack.c.h.b16 %v689
      %v2643 = vunpack.c.l.b16 %v690
      %v2644 = vunpack.c.h.b16 %v690
      %v2645 = vunpack.c.l.b16 %v691
      %v2646 = vunpack.c.h.b16 %v691
      %v2647 = vunpack.c.l.b16 %v692
      %v2648 = vunpack.c.h.b16 %v692
      %v2649 = vunpack.c.l.b16 %v693
      %v2650 = vunpack.c.h.b16 %v693
      %v2651 = vunpack.c.l.b16 %v694
      %v2652 = vunpack.c.h.b16 %v694
      %v2653 = vunpack.c.l.b16 %v695
      %v2654 = vunpack.c.h.b16 %v695
      %v2655 = vunpack.c.l.b16 %v696
      %v2656 = vunpack.c.h.b16 %v696
      %v2657 = vunpack.c.l.b16 %v697
      %v2658 = vunpack.c.h.b16 %v697
      %v2659 = vunpack.c.l.b16 %v698
      %v2660 = vunpack.c.h.b16 %v698
      %v2661 = vunpack.c.l.b16 %v699
      %v2662 = vunpack.c.h.b16 %v699
      %v2663 = vunpack.c.l.b16 %v700
      %v2664 = vunpack.c.h.b16 %v700
      %v2665 = vunpack.c.l.b16 %v701
      %v2666 = vunpack.c.h.b16 %v701
      %v2667 = vunpack.c.l.b16 %v702
      %v2668 = vunpack.c.h.b16 %v702
      %v2669 = vunpack.c.l.b16 %v703
      %v2670 = vunpack.c.h.b16 %v703
      %v2671 = vunpack.c.l.b16 %v704
      %v2672 = vunpack.c.h.b16 %v704
      %v2673 = vunpack.c.l.b16 %v705
      %v2674 = vunpack.c.h.b16 %v705
      %v2675 = vunpack.c.l.b16 %v706
      %v2676 = vunpack.c.h.b16 %v706
      %v2677 = vunpack.c.l.b16 %v707
      %v2678 = vunpack.c.h.b16 %v707
      %v2679 = vunpack.c.l.b16 %v708
      %v2680 = vunpack.c.h.b16 %v708
      %v2681 = vunpack.c.l.b16 %v709
      %v2682 = vunpack.c.h.b16 %v709
      %v2683 = vunpack.c.l.b16 %v710
      %v2684 = vunpack.c.h.b16 %v710
      %v2685 = vunpack.c.l.b16 %v711
      %v2686 = vunpack.c.h.b16 %v711
      %v2687 = vunpack.c.l.b16 %v712
      %v2688 = vunpack.c.h.b16 %v712
      %v2689 = vunpack.c.l.b16 %v713
      %v2690 = vunpack.c.h.b16 %v713
      %v2691 = vunpack.c.l.b16 %v714
      %v2692 = vunpack.c.h.b16 %v714
      %v2693 = vunpack.c.l.b16 %v715
      %v2694 = vunpack.c.h.b16 %v715
      %v2695 = vunpack.c.l.b16 %v716
      %v2696 = vunpack.c.h.b16 %v716
      %v2697 = vunpack.c.l.b16 %v717
      %v2698 = vunpack.c.h.b16 %v717
      %v2699 = vunpack.c.l.b16 %v718
      %v2700 = vunpack.c.h.b16 %v718
      %v2701 = vunpack.c.l.b16 %v719
      %v2702 = vunpack.c.h.b16 %v719
      %v2703 = vunpack.c.l.b16 %v720
      %v2704 = vunpack.c.h.b16 %v720
      %v2705 = vunpack.c.l.b16 %v721
      %v2706 = vunpack.c.h.b16 %v721
      %v2707 = vunpack.c.l.b16 %v722
      %v2708 = vunpack.c.h.b16 %v722
      %v2709 = vunpack.c.l.b16 %v723
      %v2710 = vunpack.c.h.b16 %v723
      %v2711 = vunpack.c.l.b16 %v724
      %v2712 = vunpack.c.h.b16 %v724
      %v2713 = vunpack.c.l.b16 %v725
      %v2714 = vunpack.c.h.b16 %v725
      %v2715 = vunpack.c.l.b16 %v726
      %v2716 = vunpack.c.h.b16 %v726
      %v2717 = vunpack.c.l.b16 %v727
      %v2718 = vunpack.c.h.b16 %v727
      %v2719 = vunpack.c.l.b16 %v728
      %v2720 = vunpack.c.h.b16 %v728
      %v2721 = vunpack.c.l.b16 %v729
      %v2722 = vunpack.c.h.b16 %v729
      %v2723 = vunpack.c.l.b16 %v730
      %v2724 = vunpack.c.h.b16 %v730
      %v2725 = vunpack.c.l.b16 %v731
      %v2726 = vunpack.c.h.b16 %v731
      %v2727 = vunpack.c.l.b16 %v732
      %v2728 = vunpack.c.h.b16 %v732
      %v2729 = vunpack.c.l.b16 %v733
      %v2730 = vunpack.c.h.b16 %v733
      %v2731 = vunpack.c.l.b16 %v734
      %v2732 = vunpack.c.h.b16 %v734
      %v2733 = vunpack.c.l.b16 %v735
      %v2734 = vunpack.c.h.b16 %v735
      %v2735 = vunpack.c.l.b16 %v736
      %v2736 = vunpack.c.h.b16 %v736
      %v2737 = vunpack.c.l.b16 %v737
      %v2738 = vunpack.c.h.b16 %v737
      %v2739 = vunpack.c.l.b16 %v738
      %v2740 = vunpack.c.h.b16 %v738
      %v2741 = vunpack.c.l.b16 %v739
      %v2742 = vunpack.c.h.b16 %v739
      %v2743 = vunpack.c.l.b16 %v740
      %v2744 = vunpack.c.h.b16 %v740
      %v2745 = vunpack.c.l.b16 %v741
      %v2746 = vunpack.c.h.b16 %v741
      %v2747 = vunpack.c.l.b16 %v742
      %v2748 = vunpack.c.h.b16 %v742
      %v2749 = vunpack.c.l.b16 %v743
      %v2750 = vunpack.c.h.b16 %v743
      %v2751 = vunpack.c.l.b16 %v744
      %v2752 = vunpack.c.h.b16 %v744
      %v2753 = vunpack.c.l.b16 %v745
      %v2754 = vunpack.c.h.b16 %v745
      %v2755 = vunpack.c.l.b16 %v746
      %v2756 = vunpack.c.h.b16 %v746
      %v2757 = vunpack.c.l.b16 %v747
      %v2758 = vunpack.c.h.b16 %v747
      %v2759 = vunpack.c.l.b16 %v748
      %v2760 = vunpack.c.h.b16 %v748
      %v2761 = vunpack.c.l.b16 %v749
      %v2762 = vunpack.c.h.b16 %v749
      %v2763 = vunpack.c.l.b16 %v750
      %v2764 = vunpack.c.h.b16 %v750
      %v2765 = vunpack.c.l.b16 %v751
      %v2766 = vunpack.c.h.b16 %v751
      %v2767 = vunpack.c.l.b16 %v752
      %v2768 = vunpack.c.h.b16 %v752
      %v2769 = vunpack.c.l.b16 %v753
      %v2770 = vunpack.c.h.b16 %v753
      %v2771 = vunpack.c.l.b16 %v754
      %v2772 = vunpack.c.h.b16 %v754
      %v2773 = vunpack.c.l.b16 %v755
      %v2774 = vunpack.c.h.b16 %v755
      %v2775 = vunpack.c.l.b16 %v756
      %v2776 = vunpack.c.h.b16 %v756
      %v2777 = vunpack.c.l.b16 %v757
      %v2778 = vunpack.c.h.b16 %v757
      %v2779 = vunpack.c.l.b16 %v758
      %v2780 = vunpack.c.h.b16 %v758
      %v2781 = vunpack.c.l.b16 %v759
      %v2782 = vunpack.c.h.b16 %v759
      %v2783 = vunpack.c.l.b16 %v760
      %v2784 = vunpack.c.h.b16 %v760
      %v2785 = vunpack.c.l.b16 %v761
      %v2786 = vunpack.c.h.b16 %v761
      %v2787 = vunpack.c.l.b16 %v762
      %v2788 = vunpack.c.h.b16 %v762
      %v2789 = vunpack.c.l.b16 %v763
      %v2790 = vunpack.c.h.b16 %v763
      %v2791 = vunpack.c.l.b16 %v764
      %v2792 = vunpack.c.h.b16 %v764
      %v2793 = vunpack.c.l.b16 %v765
      %v2794 = vunpack.c.h.b16 %v765
      %v2795 = vunpack.c.l.b16 %v766
      %v2796 = vunpack.c.h.b16 %v766
      %v2797 = vunpack.c.l.b16 %v767
      %v2798 = vunpack.c.h.b16 %v767
      %v2799 = vunpack.c.l.b16 %v768
      %v2800 = vunpack.c.h.b16 %v768
      %v2801 = vunpack.c.l.b16 %v769
      %v2802 = vunpack.c.h.b16 %v769
      %v2803 = vunpack.c.l.b16 %v770
      %v2804 = vunpack.c.h.b16 %v770
      %v2805 = vunpack.c.l.b16 %v771
      %v2806 = vunpack.c.h.b16 %v771
      %v2807 = vunpack.c.l.b16 %v772
      %v2808 = vunpack.c.h.b16 %v772
      %v2809 = vunpack.c.l.b16 %v773
      %v2810 = vunpack.c.h.b16 %v773
      %v2811 = vunpack.c.l.b16 %v774
      %v2812 = vunpack.c.h.b16 %v774
      %v2813 = vunpack.c.l.b16 %v775
      %v2814 = vunpack.c.h.b16 %v775
      %v2815 = vunpack.c.l.b16 %v776
      %v2816 = vunpack.c.h.b16 %v776
      %v2817 = vunpack.c.l.b16 %v777
      %v2818 = vunpack.c.h.b16 %v777
      %v2819 = vunpack.c.l.b16 %v778
      %v2820 = vunpack.c.h.b16 %v778
      %v2821 = vunpack.c.l.b16 %v779
      %v2822 = vunpack.c.h.b16 %v779
      %v2823 = vunpack.c.l.b16 %v780
      %v2824 = vunpack.c.h.b16 %v780
      %v2825 = vunpack.c.l.b16 %v781
      %v2826 = vunpack.c.h.b16 %v781
      %v2827 = vunpack.c.l.b16 %v782
      %v2828 = vunpack.c.h.b16 %v782
      %v2829 = vunpack.c.l.b16 %v783
      %v2830 = vunpack.c.h.b16 %v783
      %v2831 = vunpack.c.l.b16 %v784
      %v2832 = vunpack.c.h.b16 %v784
      %v2833 = vunpack.c.l.b16 %v785
      %v2834 = vunpack.c.h.b16 %v785
      %v2835 = vunpack.c.l.b16 %v786
      %v2836 = vunpack.c.h.b16 %v786
      %v2837 = vunpack.c.l.b16 %v787
      %v2838 = vunpack.c.h.b16 %v787
      %v2839 = vunpack.c.l.b16 %v788
      %v2840 = vunpack.c.h.b16 %v788
      %v2841 = vunpack.c.l.b16 %v789
      %v2842 = vunpack.c.h.b16 %v789
      %v2843 = vunpack.c.l.b16 %v790
      %v2844 = vunpack.c.h.b16 %v790
      %v2845 = vunpack.c.l.b16 %v791
      %v2846 = vunpack.c.h.b16 %v791
      %v2847 = vunpack.c.l.b16 %v792
      %v2848 = vunpack.c.h.b16 %v792
      %v2849 = vunpack.c.l.b16 %v793
      %v2850 = vunpack.c.h.b16 %v793
      %v2851 = vunpack.c.l.b16 %v794
      %v2852 = vunpack.c.h.b16 %v794
      %v2853 = vunpack.c.l.b16 %v795
      %v2854 = vunpack.c.h.b16 %v795
      %v2855 = vunpack.c.l.b16 %v796
      %v2856 = vunpack.c.h.b16 %v796
      %v2857 = vpack.c.b16 %v2347, %v2345
      %v2858 = vpack.c.b16 %v2348, %v2346
      %v2859 = vpack.c.b16 %v2351, %v2349
      %v2860 = vpack.c.b16 %v2352, %v2350
      %v2861 = vpack.c.b16 %v2355, %v2353
      %v2862 = vpack.c.b16 %v2356, %v2354
      %v2863 = vpack.c.b16 %v2359, %v2357
      %v2864 = vpack.c.b16 %v2360, %v2358
      %v2865 = vpack.c.b16 %v2363, %v2361
      %v2866 = vpack.c.b16 %v2364, %v2362
      %v2867 = vpack.c.b16 %v2367, %v2365
      %v2868 = vpack.c.b16 %v2368, %v2366
      %v2869 = vpack.c.b16 %v2371, %v2369
      %v2870 = vpack.c.b16 %v2372, %v2370
      %v2871 = vpack.c.b16 %v2375, %v2373
      %v2872 = vpack.c.b16 %v2376, %v2374
      %v2873 = vpack.c.b16 %v2379, %v2377
      %v2874 = vpack.c.b16 %v2380, %v2378
      %v2875 = vpack.c.b16 %v2383, %v2381
      %v2876 = vpack.c.b16 %v2384, %v2382
      %v2877 = vpack.c.b16 %v2387, %v2385
      %v2878 = vpack.c.b16 %v2388, %v2386
      %v2879 = vpack.c.b16 %v2391, %v2389
      %v2880 = vpack.c.b16 %v2392, %v2390
      %v2881 = vpack.c.b16 %v2395, %v2393
      %v2882 = vpack.c.b16 %v2396, %v2394
      %v2883 = vpack.c.b16 %v2399, %v2397
      %v2884 = vpack.c.b16 %v2400, %v2398
      %v2885 = vpack.c.b16 %v2403, %v2401
      %v2886 = vpack.c.b16 %v2404, %v2402
      %v2887 = vpack.c.b16 %v2407, %v2405
      %v2888 = vpack.c.b16 %v2408, %v2406
      %v2889 = vpack.c.b16 %v2411, %v2409
      %v2890 = vpack.c.b16 %v2412, %v2410
      %v2891 = vpack.c.b16 %v2415, %v2413
      %v2892 = vpack.c.b16 %v2416, %v2414
      %v2893 = vpack.c.b16 %v2419, %v2417
      %v2894 = vpack.c.b16 %v2420, %v2418
      %v2895 = vpack.c.b16 %v2423, %v2421
      %v2896 = vpack.c.b16 %v2424, %v2422
      %v2897 = vpack.c.b16 %v2427, %v2425
      %v2898 = vpack.c.b16 %v2428, %v2426
      %v2899 = vpack.c.b16 %v2431, %v2429
      %v2900 = vpack.c.b16 %v2432, %v2430
      %v2901 = vpack.c.b16 %v2435, %v2433
      %v2902 = vpack.c.b16 %v2436, %v2434
      %v2903 = vpack.c.b16 %v2439, %v2437
      %v2904 = vpack.c.b16 %v2440, %v2438
      %v2905 = vpack.c.b16 %v2443, %v2441
      %v2906 = vpack.c.b16 %v2444, %v2442
      %v2907 = vpack.c.b16 %v2447, %v2445
      %v2908 = vpack.c.b16 %v2448, %v2446
      %v2909 = vpack.c.b16 %v2451, %v2449
      %v2910 = vpack.c.b16 %v2452, %v2450
      %v2911 = vpack.c.b16 %v2455, %v2453
      %v2912 = vpack.c.b16 %v2456, %v2454
      %v2913 = vpack.c.b16 %v2459, %v2457
      %v2914 = vpack.c.b16 %v2460, %v2458
      %v2915 = vpack.c.b16 %v2463, %v2461
      %v2916 = vpack.c.b16 %v2464, %v2462
      %v2917 = vpack.c.b16 %v2467, %v2465
      %v2918 = vpack.c.b16 %v2468, %v2466
      %v2919 = vpack.c.b16 %v2471, %v2469
      %v2920 = vpack.c.b16 %v2472, %v2470
      %v2921 = vpack.c.b16 %v2475, %v2473
      %v2922 = vpack.c.b16 %v2476, %v2474
      %v2923 = vpack.c.b16 %v2479, %v2477
      %v2924 = vpack.c.b16 %v2480, %v2478
      %v2925 = vpack.c.b16 %v2483, %v2481
      %v2926 = vpack.c.b16 %v2484, %v2482
      %v2927 = vpack.c.b16 %v2487, %v2485
      %v2928 = vpack.c.b16 %v2488, %v2486
      %v2929 = vpack.c.b16 %v2491, %v2489
      %v2930 = vpack.c.b16 %v2492, %v2490
      %v2931 = vpack.c.b16 %v2495, %v2493
      %v2932 = vpack.c.b16 %v2496, %v2494
      %v2933 = vpack.c.b16 %v2499, %v2497
      %v2934 = vpack.c.b16 %v2500, %v2498
      %v2935 = vpack.c.b16 %v2503, %v2501
      %v2936 = vpack.c.b16 %v2504, %v2502
      %v2937 = vpack.c.b16 %v2507, %v2505
      %v2938 = vpack.c.b16 %v2508, %v2506
      %v2939 = vpack.c.b16 %v2511, %v2509
      %v2940 = vpack.c.b16 %v2512, %v2510
      %v2941 = vpack.c.b16 %v2515, %v2513
      %v2942 = vpack.c.b16 %v2516, %v2514
      %v2943 = vpack.c.b16 %v2519, %v2517
      %v2944 = vpack.c.b16 %v2520, %v2518
      %v2945 = vpack.c.b16 %v2523, %v2521
      %v2946 = vpack.c.b16 %v2524, %v2522
      %v2947 = vpack.c.b16 %v2527, %v2525
      %v2948 = vpack.c.b16 %v2528, %v2526
      %v2949 = vpack.c.b16 %v2531, %v2529
      %v2950 = vpack.c.b16 %v2532, %v2530
      %v2951 = vpack.c.b16 %v2535, %v2533
      %v2952 = vpack.c.b16 %v2536, %v2534
      %v2953 = vpack.c.b16 %v2539, %v2537
      %v2954 = vpack.c.b16 %v2540, %v2538
      %v2955 = vpack.c.b16 %v2543, %v2541
      %v2956 = vpack.c.b16 %v2544, %v2542
      %v2957 = vpack.c.b16 %v2547, %v2545
      %v2958 = vpack.c.b16 %v2548, %v2546
      %v2959 = vpack.c.b16 %v2551, %v2549
      %v2960 = vpack.c.b16 %v2552, %v2550
      %v2961 = vpack.c.b16 %v2555, %v2553
      %v2962 = vpack.c.b16 %v2556, %v2554
      %v2963 = vpack.c.b16 %v2559, %v2557
      %v2964 = vpack.c.b16 %v2560, %v2558
      %v2965 = vpack.c.b16 %v2563, %v2561
      %v2966 = vpack.c.b16 %v2564, %v2562
      %v2967 = vpack.c.b16 %v2567, %v2565
      %v2968 = vpack.c.b16 %v2568, %v2566
      %v2969 = vpack.c.b16 %v2571, %v2569
      %v2970 = vpack.c.b16 %v2572, %v2570
      %v2971 = vpack.c.b16 %v2575, %v2573
      %v2972 = vpack.c.b16 %v2576, %v2574
      %v2973 = vpack.c.b16 %v2579, %v2577
      %v2974 = vpack.c.b16 %v2580, %v2578
      %v2975 = vpack.c.b16 %v2583, %v2581
      %v2976 = vpack.c.b16 %v2584, %v2582
      %v2977 = vpack.c.b16 %v2587, %v2585
      %v2978 = vpack.c.b16 %v2588, %v2586
      %v2979 = vpack.c.b16 %v2591, %v2589
      %v2980 = vpack.c.b16 %v2592, %v2590
      %v2981 = vpack.c.b16 %v2595, %v2593
      %v2982 = vpack.c.b16 %v2596, %v2594
      %v2983 = vpack.c.b16 %v2599, %v2597
      %v2984 = vpack.c.b16 %v2600, %v2598
      %v2985 = vpack.c.b16 %v2603, %v2601
      %v2986 = vpack.c.b16 %v2604, %v2602
      %v2987 = vpack.c.b16 %v2607, %v2605
      %v2988 = vpack.c.b16 %v2608, %v2606
      %v2989 = vpack.c.b16 %v2611, %v2609
      %v2990 = vpack.c.b16 %v2612, %v2610
      %v2991 = vpack.c.b16 %v2615, %v2613
      %v2992 = vpack.c.b16 %v2616, %v2614
      %v2993 = vpack.c.b16 %v2619, %v2617
      %v2994 = vpack.c.b16 %v2620, %v2618
      %v2995 = vpack.c.b16 %v2623, %v2621
      %v2996 = vpack.c.b16 %v2624, %v2622
      %v2997 = vpack.c.b16 %v2627, %v2625
      %v2998 = vpack.c.b16 %v2628, %v2626
      %v2999 = vpack.c.b16 %v2631, %v2629
      %v3000 = vpack.c.b16 %v2632, %v2630
      %v3001 = vpack.c.b16 %v2635, %v2633
      %v3002 = vpack.c.b16 %v2636, %v2634
      %v3003 = vpack.c.b16 %v2639, %v2637
      %v3004 = vpack.c.b16 %v2640, %v2638
      %v3005 = vpack.c.b16 %v2643, %v2641
      %v3006 = vpack.c.b16 %v2644, %v2642
      %v3007 = vpack.c.b16 %v2647, %v2645
      %v3008 = vpack.c.b16 %v2648, %v2646
      %v3009 = vpack.c.b16 %v2651, %v2649
      %v3010 = vpack.c.b16 %v2652, %v2650
      %v3011 = vpack.c.b16 %v2655, %v2653
      %v3012 = vpack.c.b16 %v2656, %v2654
      %v3013 = vpack.c.b16 %v2659, %v2657
      %v3014 = vpack.c.b16 %v2660, %v2658
      %v3015 = vpack.c.b16 %v2663, %v2661
      %v3016 = vpack.c.b16 %v2664, %v2662
      %v3017 = vpack.c.b16 %v2667, %v2665
      %v3018 = vpack.c.b16 %v2668, %v2666
      %v3019 = vpack.c.b16 %v2671, %v2669
      %v3020 = vpack.c.b16 %v2672, %v2670
      %v3021 = vpack.c.b16 %v2675, %v2673
      %v3022 = vpack.c.b16 %v2676, %v2674
      %v3023 = vpack.c.b16 %v2679, %v2677
      %v3024 = vpack.c.b16 %v2680, %v2678
      %v3025 = vpack.c.b16 %v2683, %v2681
      %v3026 = vpack.c.b16 %v2684, %v2682
      %v3027 = vpack.c.b16 %v2687, %v2685
      %v3028 = vpack.c.b16 %v2688, %v2686
      %v3029 = vpack.c.b16 %v2691, %v2689
      %v3030 = vpack.c.b16 %v2692, %v2690
      %v3031 = vpack.c.b16 %v2695, %v2693
      %v3032 = vpack.c.b16 %v2696, %v2694
      %v3033 = vpack.c.b16 %v2699, %v2697
      %v3034 = vpack.c.b16 %v2700, %v2698
      %v3035 = vpack.c.b16 %v2703, %v2701
      %v3036 = vpack.c.b16 %v2704, %v2702
      %v3037 = vpack.c.b16 %v2707, %v2705
      %v3038 = vpack.c.b16 %v2708, %v2706
      %v3039 = vpack.c.b16 %v2711, %v2709
      %v3040 = vpack.c.b16 %v2712, %v2710
      %v3041 = vpack.c.b16 %v2715, %v2713
      %v3042 = vpack.c.b16 %v2716, %v2714
      %v3043 = vpack.c.b16 %v2719, %v2717
      %v3044 = vpack.c.b16 %v2720, %v2718
      %v3045 = vpack.c.b16 %v2723, %v2721
      %v3046 = vpack.c.b16 %v2724, %v2722
      %v3047 = vpack.c.b16 %v2727, %v2725
      %v3048 = vpack.c.b16 %v2728, %v2726
      %v3049 = vpack.c.b16 %v2731, %v2729
      %v3050 = vpack.c.b16 %v2732, %v2730
      %v3051 = vpack.c.b16 %v2735, %v2733
      %v3052 = vpack.c.b16 %v2736, %v2734
      %v3053 = vpack.c.b16 %v2739, %v2737
      %v3054 = vpack.c.b16 %v2740, %v2738
      %v3055 = vpack.c.b16 %v2743, %v2741
      %v3056 = vpack.c.b16 %v2744, %v2742
      %v3057 = vpack.c.b16 %v2747, %v2745
      %v3058 = vpack.c.b16 %v2748, %v2746
      %v3059 = vpack.c.b16 %v2751, %v2749
      %v3060 = vpack.c.b16 %v2752, %v2750
      %v3061 = vpack.c.b16 %v2755, %v2753
      %v3062 = vpack.c.b16 %v2756, %v2754
      %v3063 = vpack.c.b16 %v2759, %v2757
      %v3064 = vpack.c.b16 %v2760, %v2758
      %v3065 = vpack.c.b16 %v2763, %v2761
      %v3066 = vpack.c.b16 %v2764, %v2762
      %v3067 = vpack.c.b16 %v2767, %v2765
      %v3068 = vpack.c.b16 %v2768, %v2766
      %v3069 = vpack.c.b16 %v2771, %v2769
      %v3070 = vpack.c.b16 %v2772, %v2770
      %v3071 = vpack.c.b16 %v2775, %v2773
      %v3072 = vpack.c.b16 %v2776, %v2774
      %v3073 = vpack.c.b16 %v2779, %v2777
      %v3074 = vpack.c.b16 %v2780, %v2778
      %v3075 = vpack.c.b16 %v2783, %v2781
      %v3076 = vpack.c.b16 %v2784, %v2782
      %v3077 = vpack.c.b16 %v2787, %v2785
      %v3078 = vpack.c.b16 %v2788, %v2786
      %v3079 = vpack.c.b16 %v2791, %v2789
      %v3080 = vpack.c.b16 %v2792, %v2790
      %v3081 = vpack.c.b16 %v2795, %v2793
      %v3082 = vpack.c.b16 %v2796, %v2794
      %v3083 = vpack.c.b16 %v2799, %v2797
      %v3084 = vpack.c.b16 %v2800, %v2798
      %v3085 = vpack.c.b16 %v2803, %v2801
      %v3086 = vpack.c.b16 %v2804, %v2802
      %v3087 = vpack.c.b16 %v2807, %v2805
      %v3088 = vpack.c.b16 %v2808, %v2806
      %v3089 = vpack.c.b16 %v2811, %v2809
      %v3090 = vpack.c.b16 %v2812, %v2810
      %v3091 = vpack.c.b16 %v2815, %v2813
      %v3092 = vpack.c.b16 %v2816, %v2814
      %v3093 = vpack.c.b16 %v2819, %v2817
      %v3094 = vpack.c.b16 %v2820, %v2818
      %v3095 = vpack.c.b16 %v2823, %v2821
      %v3096 = vpack.c.b16 %v2824, %v2822
      %v3097 = vpack.c.b16 %v2827, %v2825
      %v3098 = vpack.c.b16 %v2828, %v2826
      %v3099 = vpack.c.b16 %v2831, %v2829
      %v3100 = vpack.c.b16 %v2832, %v2830
      %v3101 = vpack.c.b16 %v2835, %v2833
      %v3102 = vpack.c.b16 %v2836, %v2834
      %v3103 = vpack.c.b16 %v2839, %v2837
      %v3104 = vpack.c.b16 %v2840, %v2838
      %v3105 = vpack.c.b16 %v2843, %v2841
      %v3106 = vpack.c.b16 %v2844, %v2842
      %v3107 = vpack.c.b16 %v2847, %v2845
      %v3108 = vpack.c.b16 %v2848, %v2846
      %v3109 = vpack.c.b16 %v2851, %v2849
      %v3110 = vpack.c.b16 %v2852, %v2850
      %v3111 = vpack.c.b16 %v2855, %v2853
      %v3112 = vpack.c.b16 %v2856, %v2854
      %3369 = vmatprep.subr.bf16.mxu0 %v2872
      %3370 = vmatpush1.bf16.msra.mxu0 %v2871
      %3371 = vmatprep.subr.bf16.mxu0 %v2870
      %3372 = vmatpush1.bf16.msra.mxu0 %v2869
      %3373 = vmatprep.subr.bf16.mxu0 %v2868
      %3374 = vmatpush1.bf16.msra.mxu0 %v2867
      %3375 = vmatprep.subr.bf16.mxu0 %v2866
      %3376 = vmatpush1.bf16.msra.mxu0 %v2865
      %3377 = vmatprep.subr.bf16.mxu0 %v2864
      %3378 = vmatpush1.bf16.msra.mxu0 %v2863
      %3379 = vmatprep.subr.bf16.mxu0 %v2862
      %3380 = vmatpush1.bf16.msra.mxu0 %v2861
      %3381 = vmatprep.subr.bf16.mxu0 %v2860
      %3382 = vmatpush1.bf16.msra.mxu0 %v2859
      %3383 = vmatprep.subr.bf16.mxu0 %v2858
      %3384 = vmatpush1.bf16.msra.mxu0 %v2857
      %3385 = vmatprep.subr.bf16.mxu0 %v2888
      %3386 = vmatpush2.bf16.msra.mxu0 %v2887
      %3387 = vmatprep.subr.bf16.mxu0 %v2886
      %3388 = vmatpush2.bf16.msra.mxu0 %v2885
      %3389 = vmatprep.subr.bf16.mxu0 %v2884
      %3390 = vmatpush2.bf16.msra.mxu0 %v2883
      %3391 = vmatprep.subr.bf16.mxu0 %v2882
      %3392 = vmatpush2.bf16.msra.mxu0 %v2881
      %3393 = vmatprep.subr.bf16.mxu0 %v2880
      %3394 = vmatpush2.bf16.msra.mxu0 %v2879
      %3395 = vmatprep.subr.bf16.mxu0 %v2878
      %3396 = vmatpush2.bf16.msra.mxu0 %v2877
      %3397 = vmatprep.subr.bf16.mxu0 %v2876
      %3398 = vmatpush2.bf16.msra.mxu0 %v2875
      %3399 = vmatprep.subr.bf16.mxu0 %v2874
      %3400 = vmatpush2.bf16.msra.mxu0 %v2873
      %3401 = vmatprep.mubr.bf16.mxu0 %v1578
      %3402 = vmatmul.mubr.bf16.gmra.mxu0 %v1577
      %v3403 = vpop.f32.mrf.mxu0
      %v3404 = vadd.f32 %v802, %v3403
      %v3405 = vpop.f32.mrf.mxu0
      %v3406 = vadd.f32 %v806, %v3405
      %v3407 = vpop.f32.mrf.mxu0
      %v3408 = vadd.f32 %v802, %v3407
      %v3409 = vpop.f32.mrf.mxu0
      %v3410 = vadd.f32 %v806, %v3409
      %3411 = vmatprep.mubr.bf16.mxu0 %v1594
      %3412 = vmatmul.mubr.bf16.gmra.mxu0 %v1593
      %v3413 = vpop.f32.mrf.mxu0
      %v3414 = vadd.f32 %v802, %v3413
      %v3415 = vpop.f32.mrf.mxu0
      %v3416 = vadd.f32 %v806, %v3415
      %v3417 = vpop.f32.mrf.mxu0
      %v3418 = vadd.f32 %v802, %v3417
      %v3419 = vpop.f32.mrf.mxu0
      %v3420 = vadd.f32 %v806, %v3419
      %3421 = vmatprep.mubr.bf16.mxu0 %v1610
      %3422 = vmatmul.mubr.bf16.gmra.mxu0 %v1609
      %v3423 = vpop.f32.mrf.mxu0
      %v3424 = vadd.f32 %v802, %v3423
      %v3425 = vpop.f32.mrf.mxu0
      %v3426 = vadd.f32 %v806, %v3425
      %v3427 = vpop.f32.mrf.mxu0
      %v3428 = vadd.f32 %v802, %v3427
      %v3429 = vpop.f32.mrf.mxu0
      %v3430 = vadd.f32 %v806, %v3429
      %3431 = vmatprep.mubr.bf16.mxu0 %v1626
      %3432 = vmatmul.mubr.bf16.gmra.mxu0 %v1625
      %v3433 = vpop.f32.mrf.mxu0
      %v3434 = vadd.f32 %v802, %v3433
      %v3435 = vpop.f32.mrf.mxu0
      %v3436 = vadd.f32 %v806, %v3435
      %v3437 = vpop.f32.mrf.mxu0
      %v3438 = vadd.f32 %v802, %v3437
      %v3439 = vpop.f32.mrf.mxu0
      %v3440 = vadd.f32 %v806, %v3439
      %3441 = vmatprep.mubr.bf16.mxu0 %v1642
      %3442 = vmatmul.mubr.bf16.gmra.mxu0 %v1641
      %v3443 = vpop.f32.mrf.mxu0
      %v3444 = vadd.f32 %v802, %v3443
      %v3445 = vpop.f32.mrf.mxu0
      %v3446 = vadd.f32 %v806, %v3445
      %v3447 = vpop.f32.mrf.mxu0
      %v3448 = vadd.f32 %v802, %v3447
      %v3449 = vpop.f32.mrf.mxu0
      %v3450 = vadd.f32 %v806, %v3449
      %3451 = vmatprep.mubr.bf16.mxu0 %v1658
      %3452 = vmatmul.mubr.bf16.gmra.mxu0 %v1657
      %v3453 = vpop.f32.mrf.mxu0
      %v3454 = vadd.f32 %v802, %v3453
      %v3455 = vpop.f32.mrf.mxu0
      %v3456 = vadd.f32 %v806, %v3455
      %v3457 = vpop.f32.mrf.mxu0
      %v3458 = vadd.f32 %v802, %v3457
      %v3459 = vpop.f32.mrf.mxu0
      %v3460 = vadd.f32 %v806, %v3459
      %3461 = vmatprep.mubr.bf16.mxu0 %v1674
      %3462 = vmatmul.mubr.bf16.gmra.mxu0 %v1673
      %v3463 = vpop.f32.mrf.mxu0
      %v3464 = vadd.f32 %v802, %v3463
      %v3465 = vpop.f32.mrf.mxu0
      %v3466 = vadd.f32 %v806, %v3465
      %v3467 = vpop.f32.mrf.mxu0
      %v3468 = vadd.f32 %v802, %v3467
      %v3469 = vpop.f32.mrf.mxu0
      %v3470 = vadd.f32 %v806, %v3469
      %3471 = vmatprep.mubr.bf16.mxu0 %v1690
      %3472 = vmatmul.mubr.bf16.gmra.mxu0 %v1689
      %v3473 = vpop.f32.mrf.mxu0
      %v3474 = vadd.f32 %v802, %v3473
      %v3475 = vpop.f32.mrf.mxu0
      %v3476 = vadd.f32 %v806, %v3475
      %v3477 = vpop.f32.mrf.mxu0
      %v3478 = vadd.f32 %v802, %v3477
      %v3479 = vpop.f32.mrf.mxu0
      %v3480 = vadd.f32 %v806, %v3479
      %3481 = vmatprep.mubr.bf16.mxu0 %v1706
      %3482 = vmatmul.mubr.bf16.gmra.mxu0 %v1705
      %v3483 = vpop.f32.mrf.mxu0
      %v3484 = vadd.f32 %v802, %v3483
      %v3485 = vpop.f32.mrf.mxu0
      %v3486 = vadd.f32 %v806, %v3485
      %v3487 = vpop.f32.mrf.mxu0
      %v3488 = vadd.f32 %v802, %v3487
      %v3489 = vpop.f32.mrf.mxu0
      %v3490 = vadd.f32 %v806, %v3489
      %3491 = vmatprep.mubr.bf16.mxu0 %v1722
      %3492 = vmatmul.mubr.bf16.gmra.mxu0 %v1721
      %v3493 = vpop.f32.mrf.mxu0
      %v3494 = vadd.f32 %v802, %v3493
      %v3495 = vpop.f32.mrf.mxu0
      %v3496 = vadd.f32 %v806, %v3495
      %v3497 = vpop.f32.mrf.mxu0
      %v3498 = vadd.f32 %v802, %v3497
      %v3499 = vpop.f32.mrf.mxu0
      %v3500 = vadd.f32 %v806, %v3499
      %3501 = vmatprep.mubr.bf16.mxu0 %v1738
      %3502 = vmatmul.mubr.bf16.gmra.mxu0 %v1737
      %v3503 = vpop.f32.mrf.mxu0
      %v3504 = vadd.f32 %v802, %v3503
      %v3505 = vpop.f32.mrf.mxu0
      %v3506 = vadd.f32 %v806, %v3505
      %v3507 = vpop.f32.mrf.mxu0
      %v3508 = vadd.f32 %v802, %v3507
      %v3509 = vpop.f32.mrf.mxu0
      %v3510 = vadd.f32 %v806, %v3509
      %3511 = vmatprep.mubr.bf16.mxu0 %v1754
      %3512 = vmatmul.mubr.bf16.gmra.mxu0 %v1753
      %v3513 = vpop.f32.mrf.mxu0
      %v3514 = vadd.f32 %v802, %v3513
      %v3515 = vpop.f32.mrf.mxu0
      %v3516 = vadd.f32 %v806, %v3515
      %v3517 = vpop.f32.mrf.mxu0
      %v3518 = vadd.f32 %v802, %v3517
      %v3519 = vpop.f32.mrf.mxu0
      %v3520 = vadd.f32 %v806, %v3519
      %3521 = vmatprep.mubr.bf16.mxu0 %v1770
      %3522 = vmatmul.mubr.bf16.gmra.mxu0 %v1769
      %v3523 = vpop.f32.mrf.mxu0
      %v3524 = vadd.f32 %v802, %v3523
      %v3525 = vpop.f32.mrf.mxu0
      %v3526 = vadd.f32 %v806, %v3525
      %v3527 = vpop.f32.mrf.mxu0
      %v3528 = vadd.f32 %v802, %v3527
      %v3529 = vpop.f32.mrf.mxu0
      %v3530 = vadd.f32 %v806, %v3529
      %3531 = vmatprep.mubr.bf16.mxu0 %v1786
      %3532 = vmatmul.mubr.bf16.gmra.mxu0 %v1785
      %v3533 = vpop.f32.mrf.mxu0
      %v3534 = vadd.f32 %v802, %v3533
      %v3535 = vpop.f32.mrf.mxu0
      %v3536 = vadd.f32 %v806, %v3535
      %v3537 = vpop.f32.mrf.mxu0
      %v3538 = vadd.f32 %v802, %v3537
      %v3539 = vpop.f32.mrf.mxu0
      %v3540 = vadd.f32 %v806, %v3539
      %3541 = vmatprep.mubr.bf16.mxu0 %v1802
      %3542 = vmatmul.mubr.bf16.gmra.mxu0 %v1801
      %v3543 = vpop.f32.mrf.mxu0
      %v3544 = vadd.f32 %v802, %v3543
      %v3545 = vpop.f32.mrf.mxu0
      %v3546 = vadd.f32 %v806, %v3545
      %v3547 = vpop.f32.mrf.mxu0
      %v3548 = vadd.f32 %v802, %v3547
      %v3549 = vpop.f32.mrf.mxu0
      %v3550 = vadd.f32 %v806, %v3549
      %3551 = vmatprep.mubr.bf16.mxu0 %v1818
      %3552 = vmatmul.mubr.bf16.gmra.mxu0 %v1817
      %v3553 = vpop.f32.mrf.mxu0
      %v3554 = vadd.f32 %v802, %v3553
      %v3555 = vpop.f32.mrf.mxu0
      %v3556 = vadd.f32 %v806, %v3555
      %v3557 = vpop.f32.mrf.mxu0
      %v3558 = vadd.f32 %v802, %v3557
      %v3559 = vpop.f32.mrf.mxu0
      %v3560 = vadd.f32 %v806, %v3559
      %3561 = vdwg.mxu0
      %3562 = vmatprep.subr.bf16.mxu0 %v2904
      %3563 = vmatpush1.bf16.msra.mxu0 %v2903
      %3564 = vmatprep.subr.bf16.mxu0 %v2902
      %3565 = vmatpush1.bf16.msra.mxu0 %v2901
      %3566 = vmatprep.subr.bf16.mxu0 %v2900
      %3567 = vmatpush1.bf16.msra.mxu0 %v2899
      %3568 = vmatprep.subr.bf16.mxu0 %v2898
      %3569 = vmatpush1.bf16.msra.mxu0 %v2897
      %3570 = vmatprep.subr.bf16.mxu0 %v2896
      %3571 = vmatpush1.bf16.msra.mxu0 %v2895
      %3572 = vmatprep.subr.bf16.mxu0 %v2894
      %3573 = vmatpush1.bf16.msra.mxu0 %v2893
      %3574 = vmatprep.subr.bf16.mxu0 %v2892
      %3575 = vmatpush1.bf16.msra.mxu0 %v2891
      %3576 = vmatprep.subr.bf16.mxu0 %v2890
      %3577 = vmatpush1.bf16.msra.mxu0 %v2889
      %3578 = vmatprep.subr.bf16.mxu0 %v2920
      %3579 = vmatpush2.bf16.msra.mxu0 %v2919
      %3580 = vmatprep.subr.bf16.mxu0 %v2918
      %3581 = vmatpush2.bf16.msra.mxu0 %v2917
      %3582 = vmatprep.subr.bf16.mxu0 %v2916
      %3583 = vmatpush2.bf16.msra.mxu0 %v2915
      %3584 = vmatprep.subr.bf16.mxu0 %v2914
      %3585 = vmatpush2.bf16.msra.mxu0 %v2913
      %3586 = vmatprep.subr.bf16.mxu0 %v2912
      %3587 = vmatpush2.bf16.msra.mxu0 %v2911
      %3588 = vmatprep.subr.bf16.mxu0 %v2910
      %3589 = vmatpush2.bf16.msra.mxu0 %v2909
      %3590 = vmatprep.subr.bf16.mxu0 %v2908
      %3591 = vmatpush2.bf16.msra.mxu0 %v2907
      %3592 = vmatprep.subr.bf16.mxu0 %v2906
      %3593 = vmatpush2.bf16.msra.mxu0 %v2905
      %3594 = vmatprep.mubr.bf16.mxu0 %v1580
      %3595 = vmatmul.mubr.bf16.gmra.mxu0 %v1579
      %v3596 = vpop.f32.mrf.mxu0
      %v3597 = vadd.f32 %v3404, %v3596
      %v3598 = vpop.f32.mrf.mxu0
      %v3599 = vadd.f32 %v3406, %v3598
      %v3600 = vpop.f32.mrf.mxu0
      %v3601 = vadd.f32 %v3408, %v3600
      %v3602 = vpop.f32.mrf.mxu0
      %v3603 = vadd.f32 %v3410, %v3602
      %3604 = vmatprep.mubr.bf16.mxu0 %v1596
      %3605 = vmatmul.mubr.bf16.gmra.mxu0 %v1595
      %v3606 = vpop.f32.mrf.mxu0
      %v3607 = vadd.f32 %v3414, %v3606
      %v3608 = vpop.f32.mrf.mxu0
      %v3609 = vadd.f32 %v3416, %v3608
      %v3610 = vpop.f32.mrf.mxu0
      %v3611 = vadd.f32 %v3418, %v3610
      %v3612 = vpop.f32.mrf.mxu0
      %v3613 = vadd.f32 %v3420, %v3612
      %3614 = vmatprep.mubr.bf16.mxu0 %v1612
      %3615 = vmatmul.mubr.bf16.gmra.mxu0 %v1611
      %v3616 = vpop.f32.mrf.mxu0
      %v3617 = vadd.f32 %v3424, %v3616
      %v3618 = vpop.f32.mrf.mxu0
      %v3619 = vadd.f32 %v3426, %v3618
      %v3620 = vpop.f32.mrf.mxu0
      %v3621 = vadd.f32 %v3428, %v3620
      %v3622 = vpop.f32.mrf.mxu0
      %v3623 = vadd.f32 %v3430, %v3622
      %3624 = vmatprep.mubr.bf16.mxu0 %v1628
      %3625 = vmatmul.mubr.bf16.gmra.mxu0 %v1627
      %v3626 = vpop.f32.mrf.mxu0
      %v3627 = vadd.f32 %v3434, %v3626
      %v3628 = vpop.f32.mrf.mxu0
      %v3629 = vadd.f32 %v3436, %v3628
      %v3630 = vpop.f32.mrf.mxu0
      %v3631 = vadd.f32 %v3438, %v3630
      %v3632 = vpop.f32.mrf.mxu0
      %v3633 = vadd.f32 %v3440, %v3632
      %3634 = vmatprep.mubr.bf16.mxu0 %v1644
      %3635 = vmatmul.mubr.bf16.gmra.mxu0 %v1643
      %v3636 = vpop.f32.mrf.mxu0
      %v3637 = vadd.f32 %v3444, %v3636
      %v3638 = vpop.f32.mrf.mxu0
      %v3639 = vadd.f32 %v3446, %v3638
      %v3640 = vpop.f32.mrf.mxu0
      %v3641 = vadd.f32 %v3448, %v3640
      %v3642 = vpop.f32.mrf.mxu0
      %v3643 = vadd.f32 %v3450, %v3642
      %3644 = vmatprep.mubr.bf16.mxu0 %v1660
      %3645 = vmatmul.mubr.bf16.gmra.mxu0 %v1659
      %v3646 = vpop.f32.mrf.mxu0
      %v3647 = vadd.f32 %v3454, %v3646
      %v3648 = vpop.f32.mrf.mxu0
      %v3649 = vadd.f32 %v3456, %v3648
      %v3650 = vpop.f32.mrf.mxu0
      %v3651 = vadd.f32 %v3458, %v3650
      %v3652 = vpop.f32.mrf.mxu0
      %v3653 = vadd.f32 %v3460, %v3652
      %3654 = vmatprep.mubr.bf16.mxu0 %v1676
      %3655 = vmatmul.mubr.bf16.gmra.mxu0 %v1675
      %v3656 = vpop.f32.mrf.mxu0
      %v3657 = vadd.f32 %v3464, %v3656
      %v3658 = vpop.f32.mrf.mxu0
      %v3659 = vadd.f32 %v3466, %v3658
      %v3660 = vpop.f32.mrf.mxu0
      %v3661 = vadd.f32 %v3468, %v3660
      %v3662 = vpop.f32.mrf.mxu0
      %v3663 = vadd.f32 %v3470, %v3662
      %3664 = vmatprep.mubr.bf16.mxu0 %v1692
      %3665 = vmatmul.mubr.bf16.gmra.mxu0 %v1691
      %v3666 = vpop.f32.mrf.mxu0
      %v3667 = vadd.f32 %v3474, %v3666
      %v3668 = vpop.f32.mrf.mxu0
      %v3669 = vadd.f32 %v3476, %v3668
      %v3670 = vpop.f32.mrf.mxu0
      %v3671 = vadd.f32 %v3478, %v3670
      %v3672 = vpop.f32.mrf.mxu0
      %v3673 = vadd.f32 %v3480, %v3672
      %3674 = vmatprep.mubr.bf16.mxu0 %v1708
      %3675 = vmatmul.mubr.bf16.gmra.mxu0 %v1707
      %v3676 = vpop.f32.mrf.mxu0
      %v3677 = vadd.f32 %v3484, %v3676
      %v3678 = vpop.f32.mrf.mxu0
      %v3679 = vadd.f32 %v3486, %v3678
      %v3680 = vpop.f32.mrf.mxu0
      %v3681 = vadd.f32 %v3488, %v3680
      %v3682 = vpop.f32.mrf.mxu0
      %v3683 = vadd.f32 %v3490, %v3682
      %3684 = vmatprep.mubr.bf16.mxu0 %v1724
      %3685 = vmatmul.mubr.bf16.gmra.mxu0 %v1723
      %v3686 = vpop.f32.mrf.mxu0
      %v3687 = vadd.f32 %v3494, %v3686
      %v3688 = vpop.f32.mrf.mxu0
      %v3689 = vadd.f32 %v3496, %v3688
      %v3690 = vpop.f32.mrf.mxu0
      %v3691 = vadd.f32 %v3498, %v3690
      %v3692 = vpop.f32.mrf.mxu0
      %v3693 = vadd.f32 %v3500, %v3692
      %3694 = vmatprep.mubr.bf16.mxu0 %v1740
      %3695 = vmatmul.mubr.bf16.gmra.mxu0 %v1739
      %v3696 = vpop.f32.mrf.mxu0
      %v3697 = vadd.f32 %v3504, %v3696
      %v3698 = vpop.f32.mrf.mxu0
      %v3699 = vadd.f32 %v3506, %v3698
      %v3700 = vpop.f32.mrf.mxu0
      %v3701 = vadd.f32 %v3508, %v3700
      %v3702 = vpop.f32.mrf.mxu0
      %v3703 = vadd.f32 %v3510, %v3702
      %3704 = vmatprep.mubr.bf16.mxu0 %v1756
      %3705 = vmatmul.mubr.bf16.gmra.mxu0 %v1755
      %v3706 = vpop.f32.mrf.mxu0
      %v3707 = vadd.f32 %v3514, %v3706
      %v3708 = vpop.f32.mrf.mxu0
      %v3709 = vadd.f32 %v3516, %v3708
      %v3710 = vpop.f32.mrf.mxu0
      %v3711 = vadd.f32 %v3518, %v3710
      %v3712 = vpop.f32.mrf.mxu0
      %v3713 = vadd.f32 %v3520, %v3712
      %3714 = vmatprep.mubr.bf16.mxu0 %v1772
      %3715 = vmatmul.mubr.bf16.gmra.mxu0 %v1771
      %v3716 = vpop.f32.mrf.mxu0
      %v3717 = vadd.f32 %v3524, %v3716
      %v3718 = vpop.f32.mrf.mxu0
      %v3719 = vadd.f32 %v3526, %v3718
      %v3720 = vpop.f32.mrf.mxu0
      %v3721 = vadd.f32 %v3528, %v3720
      %v3722 = vpop.f32.mrf.mxu0
      %v3723 = vadd.f32 %v3530, %v3722
      %3724 = vmatprep.mubr.bf16.mxu0 %v1788
      %3725 = vmatmul.mubr.bf16.gmra.mxu0 %v1787
      %v3726 = vpop.f32.mrf.mxu0
      %v3727 = vadd.f32 %v3534, %v3726
      %v3728 = vpop.f32.mrf.mxu0
      %v3729 = vadd.f32 %v3536, %v3728
      %v3730 = vpop.f32.mrf.mxu0
      %v3731 = vadd.f32 %v3538, %v3730
      %v3732 = vpop.f32.mrf.mxu0
      %v3733 = vadd.f32 %v3540, %v3732
      %3734 = vmatprep.mubr.bf16.mxu0 %v1804
      %3735 = vmatmul.mubr.bf16.gmra.mxu0 %v1803
      %v3736 = vpop.f32.mrf.mxu0
      %v3737 = vadd.f32 %v3544, %v3736
      %v3738 = vpop.f32.mrf.mxu0
      %v3739 = vadd.f32 %v3546, %v3738
      %v3740 = vpop.f32.mrf.mxu0
      %v3741 = vadd.f32 %v3548, %v3740
      %v3742 = vpop.f32.mrf.mxu0
      %v3743 = vadd.f32 %v3550, %v3742
      %3744 = vmatprep.mubr.bf16.mxu0 %v1820
      %3745 = vmatmul.mubr.bf16.gmra.mxu0 %v1819
      %v3746 = vpop.f32.mrf.mxu0
      %v3747 = vadd.f32 %v3554, %v3746
      %v3748 = vpop.f32.mrf.mxu0
      %v3749 = vadd.f32 %v3556, %v3748
      %v3750 = vpop.f32.mrf.mxu0
      %v3751 = vadd.f32 %v3558, %v3750
      %v3752 = vpop.f32.mrf.mxu0
      %v3753 = vadd.f32 %v3560, %v3752
      %3754 = vdwg.mxu0
      %3755 = vmatprep.subr.bf16.mxu0 %v2936
      %3756 = vmatpush1.bf16.msra.mxu0 %v2935
      %3757 = vmatprep.subr.bf16.mxu0 %v2934
      %3758 = vmatpush1.bf16.msra.mxu0 %v2933
      %3759 = vmatprep.subr.bf16.mxu0 %v2932
      %3760 = vmatpush1.bf16.msra.mxu0 %v2931
      %3761 = vmatprep.subr.bf16.mxu0 %v2930
      %3762 = vmatpush1.bf16.msra.mxu0 %v2929
      %3763 = vmatprep.subr.bf16.mxu0 %v2928
      %3764 = vmatpush1.bf16.msra.mxu0 %v2927
      %3765 = vmatprep.subr.bf16.mxu0 %v2926
      %3766 = vmatpush1.bf16.msra.mxu0 %v2925
      %3767 = vmatprep.subr.bf16.mxu0 %v2924
      %3768 = vmatpush1.bf16.msra.mxu0 %v2923
      %3769 = vmatprep.subr.bf16.mxu0 %v2922
      %3770 = vmatpush1.bf16.msra.mxu0 %v2921
      %3771 = vmatprep.subr.bf16.mxu0 %v2952
      %3772 = vmatpush2.bf16.msra.mxu0 %v2951
      %3773 = vmatprep.subr.bf16.mxu0 %v2950
      %3774 = vmatpush2.bf16.msra.mxu0 %v2949
      %3775 = vmatprep.subr.bf16.mxu0 %v2948
      %3776 = vmatpush2.bf16.msra.mxu0 %v2947
      %3777 = vmatprep.subr.bf16.mxu0 %v2946
      %3778 = vmatpush2.bf16.msra.mxu0 %v2945
      %3779 = vmatprep.subr.bf16.mxu0 %v2944
      %3780 = vmatpush2.bf16.msra.mxu0 %v2943
      %3781 = vmatprep.subr.bf16.mxu0 %v2942
      %3782 = vmatpush2.bf16.msra.mxu0 %v2941
      %3783 = vmatprep.subr.bf16.mxu0 %v2940
      %3784 = vmatpush2.bf16.msra.mxu0 %v2939
      %3785 = vmatprep.subr.bf16.mxu0 %v2938
      %3786 = vmatpush2.bf16.msra.mxu0 %v2937
      %3787 = vmatprep.mubr.bf16.mxu0 %v1582
      %3788 = vmatmul.mubr.bf16.gmra.mxu0 %v1581
      %v3789 = vpop.f32.mrf.mxu0
      %v3790 = vadd.f32 %v3597, %v3789
      %v3791 = vpop.f32.mrf.mxu0
      %v3792 = vadd.f32 %v3599, %v3791
      %v3793 = vpop.f32.mrf.mxu0
      %v3794 = vadd.f32 %v3601, %v3793
      %v3795 = vpop.f32.mrf.mxu0
      %v3796 = vadd.f32 %v3603, %v3795
      %3797 = vmatprep.mubr.bf16.mxu0 %v1598
      %3798 = vmatmul.mubr.bf16.gmra.mxu0 %v1597
      %v3799 = vpop.f32.mrf.mxu0
      %v3800 = vadd.f32 %v3607, %v3799
      %v3801 = vpop.f32.mrf.mxu0
      %v3802 = vadd.f32 %v3609, %v3801
      %v3803 = vpop.f32.mrf.mxu0
      %v3804 = vadd.f32 %v3611, %v3803
      %v3805 = vpop.f32.mrf.mxu0
      %v3806 = vadd.f32 %v3613, %v3805
      %3807 = vmatprep.mubr.bf16.mxu0 %v1614
      %3808 = vmatmul.mubr.bf16.gmra.mxu0 %v1613
      %v3809 = vpop.f32.mrf.mxu0
      %v3810 = vadd.f32 %v3617, %v3809
      %v3811 = vpop.f32.mrf.mxu0
      %v3812 = vadd.f32 %v3619, %v3811
      %v3813 = vpop.f32.mrf.mxu0
      %v3814 = vadd.f32 %v3621, %v3813
      %v3815 = vpop.f32.mrf.mxu0
      %v3816 = vadd.f32 %v3623, %v3815
      %3817 = vmatprep.mubr.bf16.mxu0 %v1630
      %3818 = vmatmul.mubr.bf16.gmra.mxu0 %v1629
      %v3819 = vpop.f32.mrf.mxu0
      %v3820 = vadd.f32 %v3627, %v3819
      %v3821 = vpop.f32.mrf.mxu0
      %v3822 = vadd.f32 %v3629, %v3821
      %v3823 = vpop.f32.mrf.mxu0
      %v3824 = vadd.f32 %v3631, %v3823
      %v3825 = vpop.f32.mrf.mxu0
      %v3826 = vadd.f32 %v3633, %v3825
      %3827 = vmatprep.mubr.bf16.mxu0 %v1646
      %3828 = vmatmul.mubr.bf16.gmra.mxu0 %v1645
      %v3829 = vpop.f32.mrf.mxu0
      %v3830 = vadd.f32 %v3637, %v3829
      %v3831 = vpop.f32.mrf.mxu0
      %v3832 = vadd.f32 %v3639, %v3831
      %v3833 = vpop.f32.mrf.mxu0
      %v3834 = vadd.f32 %v3641, %v3833
      %v3835 = vpop.f32.mrf.mxu0
      %v3836 = vadd.f32 %v3643, %v3835
      %3837 = vmatprep.mubr.bf16.mxu0 %v1662
      %3838 = vmatmul.mubr.bf16.gmra.mxu0 %v1661
      %v3839 = vpop.f32.mrf.mxu0
      %v3840 = vadd.f32 %v3647, %v3839
      %v3841 = vpop.f32.mrf.mxu0
      %v3842 = vadd.f32 %v3649, %v3841
      %v3843 = vpop.f32.mrf.mxu0
      %v3844 = vadd.f32 %v3651, %v3843
      %v3845 = vpop.f32.mrf.mxu0
      %v3846 = vadd.f32 %v3653, %v3845
      %3847 = vmatprep.mubr.bf16.mxu0 %v1678
      %3848 = vmatmul.mubr.bf16.gmra.mxu0 %v1677
      %v3849 = vpop.f32.mrf.mxu0
      %v3850 = vadd.f32 %v3657, %v3849
      %v3851 = vpop.f32.mrf.mxu0
      %v3852 = vadd.f32 %v3659, %v3851
      %v3853 = vpop.f32.mrf.mxu0
      %v3854 = vadd.f32 %v3661, %v3853
      %v3855 = vpop.f32.mrf.mxu0
      %v3856 = vadd.f32 %v3663, %v3855
      %3857 = vmatprep.mubr.bf16.mxu0 %v1694
      %3858 = vmatmul.mubr.bf16.gmra.mxu0 %v1693
      %v3859 = vpop.f32.mrf.mxu0
      %v3860 = vadd.f32 %v3667, %v3859
      %v3861 = vpop.f32.mrf.mxu0
      %v3862 = vadd.f32 %v3669, %v3861
      %v3863 = vpop.f32.mrf.mxu0
      %v3864 = vadd.f32 %v3671, %v3863
      %v3865 = vpop.f32.mrf.mxu0
      %v3866 = vadd.f32 %v3673, %v3865
      %3867 = vmatprep.mubr.bf16.mxu0 %v1710
      %3868 = vmatmul.mubr.bf16.gmra.mxu0 %v1709
      %v3869 = vpop.f32.mrf.mxu0
      %v3870 = vadd.f32 %v3677, %v3869
      %v3871 = vpop.f32.mrf.mxu0
      %v3872 = vadd.f32 %v3679, %v3871
      %v3873 = vpop.f32.mrf.mxu0
      %v3874 = vadd.f32 %v3681, %v3873
      %v3875 = vpop.f32.mrf.mxu0
      %v3876 = vadd.f32 %v3683, %v3875
      %3877 = vmatprep.mubr.bf16.mxu0 %v1726
      %3878 = vmatmul.mubr.bf16.gmra.mxu0 %v1725
      %v3879 = vpop.f32.mrf.mxu0
      %v3880 = vadd.f32 %v3687, %v3879
      %v3881 = vpop.f32.mrf.mxu0
      %v3882 = vadd.f32 %v3689, %v3881
      %v3883 = vpop.f32.mrf.mxu0
      %v3884 = vadd.f32 %v3691, %v3883
      %v3885 = vpop.f32.mrf.mxu0
      %v3886 = vadd.f32 %v3693, %v3885
      %3887 = vmatprep.mubr.bf16.mxu0 %v1742
      %3888 = vmatmul.mubr.bf16.gmra.mxu0 %v1741
      %v3889 = vpop.f32.mrf.mxu0
      %v3890 = vadd.f32 %v3697, %v3889
      %v3891 = vpop.f32.mrf.mxu0
      %v3892 = vadd.f32 %v3699, %v3891
      %v3893 = vpop.f32.mrf.mxu0
      %v3894 = vadd.f32 %v3701, %v3893
      %v3895 = vpop.f32.mrf.mxu0
      %v3896 = vadd.f32 %v3703, %v3895
      %3897 = vmatprep.mubr.bf16.mxu0 %v1758
      %3898 = vmatmul.mubr.bf16.gmra.mxu0 %v1757
      %v3899 = vpop.f32.mrf.mxu0
      %v3900 = vadd.f32 %v3707, %v3899
      %v3901 = vpop.f32.mrf.mxu0
      %v3902 = vadd.f32 %v3709, %v3901
      %v3903 = vpop.f32.mrf.mxu0
      %v3904 = vadd.f32 %v3711, %v3903
      %v3905 = vpop.f32.mrf.mxu0
      %v3906 = vadd.f32 %v3713, %v3905
      %3907 = vmatprep.mubr.bf16.mxu0 %v1774
      %3908 = vmatmul.mubr.bf16.gmra.mxu0 %v1773
      %v3909 = vpop.f32.mrf.mxu0
      %v3910 = vadd.f32 %v3717, %v3909
      %v3911 = vpop.f32.mrf.mxu0
      %v3912 = vadd.f32 %v3719, %v3911
      %v3913 = vpop.f32.mrf.mxu0
      %v3914 = vadd.f32 %v3721, %v3913
      %v3915 = vpop.f32.mrf.mxu0
      %v3916 = vadd.f32 %v3723, %v3915
      %3917 = vmatprep.mubr.bf16.mxu0 %v1790
      %3918 = vmatmul.mubr.bf16.gmra.mxu0 %v1789
      %v3919 = vpop.f32.mrf.mxu0
      %v3920 = vadd.f32 %v3727, %v3919
      %v3921 = vpop.f32.mrf.mxu0
      %v3922 = vadd.f32 %v3729, %v3921
      %v3923 = vpop.f32.mrf.mxu0
      %v3924 = vadd.f32 %v3731, %v3923
      %v3925 = vpop.f32.mrf.mxu0
      %v3926 = vadd.f32 %v3733, %v3925
      %3927 = vmatprep.mubr.bf16.mxu0 %v1806
      %3928 = vmatmul.mubr.bf16.gmra.mxu0 %v1805
      %v3929 = vpop.f32.mrf.mxu0
      %v3930 = vadd.f32 %v3737, %v3929
      %v3931 = vpop.f32.mrf.mxu0
      %v3932 = vadd.f32 %v3739, %v3931
      %v3933 = vpop.f32.mrf.mxu0
      %v3934 = vadd.f32 %v3741, %v3933
      %v3935 = vpop.f32.mrf.mxu0
      %v3936 = vadd.f32 %v3743, %v3935
      %3937 = vmatprep.mubr.bf16.mxu0 %v1822
      %3938 = vmatmul.mubr.bf16.gmra.mxu0 %v1821
      %v3939 = vpop.f32.mrf.mxu0
      %v3940 = vadd.f32 %v3747, %v3939
      %v3941 = vpop.f32.mrf.mxu0
      %v3942 = vadd.f32 %v3749, %v3941
      %v3943 = vpop.f32.mrf.mxu0
      %v3944 = vadd.f32 %v3751, %v3943
      %v3945 = vpop.f32.mrf.mxu0
      %v3946 = vadd.f32 %v3753, %v3945
      %3947 = vdwg.mxu0
      %3948 = vmatprep.subr.bf16.mxu0 %v2968
      %3949 = vmatpush1.bf16.msra.mxu0 %v2967
      %3950 = vmatprep.subr.bf16.mxu0 %v2966
      %3951 = vmatpush1.bf16.msra.mxu0 %v2965
      %3952 = vmatprep.subr.bf16.mxu0 %v2964
      %3953 = vmatpush1.bf16.msra.mxu0 %v2963
      %3954 = vmatprep.subr.bf16.mxu0 %v2962
      %3955 = vmatpush1.bf16.msra.mxu0 %v2961
      %3956 = vmatprep.subr.bf16.mxu0 %v2960
      %3957 = vmatpush1.bf16.msra.mxu0 %v2959
      %3958 = vmatprep.subr.bf16.mxu0 %v2958
      %3959 = vmatpush1.bf16.msra.mxu0 %v2957
      %3960 = vmatprep.subr.bf16.mxu0 %v2956
      %3961 = vmatpush1.bf16.msra.mxu0 %v2955
      %3962 = vmatprep.subr.bf16.mxu0 %v2954
      %3963 = vmatpush1.bf16.msra.mxu0 %v2953
      %3964 = vmatprep.subr.bf16.mxu0 %v2984
      %3965 = vmatpush2.bf16.msra.mxu0 %v2983
      %3966 = vmatprep.subr.bf16.mxu0 %v2982
      %3967 = vmatpush2.bf16.msra.mxu0 %v2981
      %3968 = vmatprep.subr.bf16.mxu0 %v2980
      %3969 = vmatpush2.bf16.msra.mxu0 %v2979
      %3970 = vmatprep.subr.bf16.mxu0 %v2978
      %3971 = vmatpush2.bf16.msra.mxu0 %v2977
      %3972 = vmatprep.subr.bf16.mxu0 %v2976
      %3973 = vmatpush2.bf16.msra.mxu0 %v2975
      %3974 = vmatprep.subr.bf16.mxu0 %v2974
      %3975 = vmatpush2.bf16.msra.mxu0 %v2973
      %3976 = vmatprep.subr.bf16.mxu0 %v2972
      %3977 = vmatpush2.bf16.msra.mxu0 %v2971
      %3978 = vmatprep.subr.bf16.mxu0 %v2970
      %3979 = vmatpush2.bf16.msra.mxu0 %v2969
      %3980 = vmatprep.mubr.bf16.mxu0 %v1584
      %3981 = vmatmul.mubr.bf16.gmra.mxu0 %v1583
      %v3982 = vpop.f32.mrf.mxu0
      %v3983 = vadd.f32 %v3790, %v3982
      %v3984 = vpop.f32.mrf.mxu0
      %v3985 = vadd.f32 %v3792, %v3984
      %v3986 = vpop.f32.mrf.mxu0
      %v3987 = vadd.f32 %v3794, %v3986
      %v3988 = vpop.f32.mrf.mxu0
      %v3989 = vadd.f32 %v3796, %v3988
      %3990 = vmatprep.mubr.bf16.mxu0 %v1600
      %3991 = vmatmul.mubr.bf16.gmra.mxu0 %v1599
      %v3992 = vpop.f32.mrf.mxu0
      %v3993 = vadd.f32 %v3800, %v3992
      %v3994 = vpop.f32.mrf.mxu0
      %v3995 = vadd.f32 %v3802, %v3994
      %v3996 = vpop.f32.mrf.mxu0
      %v3997 = vadd.f32 %v3804, %v3996
      %v3998 = vpop.f32.mrf.mxu0
      %v3999 = vadd.f32 %v3806, %v3998
      %4000 = vmatprep.mubr.bf16.mxu0 %v1616
      %4001 = vmatmul.mubr.bf16.gmra.mxu0 %v1615
      %v4002 = vpop.f32.mrf.mxu0
      %v4003 = vadd.f32 %v3810, %v4002
      %v4004 = vpop.f32.mrf.mxu0
      %v4005 = vadd.f32 %v3812, %v4004
      %v4006 = vpop.f32.mrf.mxu0
      %v4007 = vadd.f32 %v3814, %v4006
      %v4008 = vpop.f32.mrf.mxu0
      %v4009 = vadd.f32 %v3816, %v4008
      %4010 = vmatprep.mubr.bf16.mxu0 %v1632
      %4011 = vmatmul.mubr.bf16.gmra.mxu0 %v1631
      %v4012 = vpop.f32.mrf.mxu0
      %v4013 = vadd.f32 %v3820, %v4012
      %v4014 = vpop.f32.mrf.mxu0
      %v4015 = vadd.f32 %v3822, %v4014
      %v4016 = vpop.f32.mrf.mxu0
      %v4017 = vadd.f32 %v3824, %v4016
      %v4018 = vpop.f32.mrf.mxu0
      %v4019 = vadd.f32 %v3826, %v4018
      %4020 = vmatprep.mubr.bf16.mxu0 %v1648
      %4021 = vmatmul.mubr.bf16.gmra.mxu0 %v1647
      %v4022 = vpop.f32.mrf.mxu0
      %v4023 = vadd.f32 %v3830, %v4022
      %v4024 = vpop.f32.mrf.mxu0
      %v4025 = vadd.f32 %v3832, %v4024
      %v4026 = vpop.f32.mrf.mxu0
      %v4027 = vadd.f32 %v3834, %v4026
      %v4028 = vpop.f32.mrf.mxu0
      %v4029 = vadd.f32 %v3836, %v4028
      %4030 = vmatprep.mubr.bf16.mxu0 %v1664
      %4031 = vmatmul.mubr.bf16.gmra.mxu0 %v1663
      %v4032 = vpop.f32.mrf.mxu0
      %v4033 = vadd.f32 %v3840, %v4032
      %v4034 = vpop.f32.mrf.mxu0
      %v4035 = vadd.f32 %v3842, %v4034
      %v4036 = vpop.f32.mrf.mxu0
      %v4037 = vadd.f32 %v3844, %v4036
      %v4038 = vpop.f32.mrf.mxu0
      %v4039 = vadd.f32 %v3846, %v4038
      %4040 = vmatprep.mubr.bf16.mxu0 %v1680
      %4041 = vmatmul.mubr.bf16.gmra.mxu0 %v1679
      %v4042 = vpop.f32.mrf.mxu0
      %v4043 = vadd.f32 %v3850, %v4042
      %v4044 = vpop.f32.mrf.mxu0
      %v4045 = vadd.f32 %v3852, %v4044
      %v4046 = vpop.f32.mrf.mxu0
      %v4047 = vadd.f32 %v3854, %v4046
      %v4048 = vpop.f32.mrf.mxu0
      %v4049 = vadd.f32 %v3856, %v4048
      %4050 = vmatprep.mubr.bf16.mxu0 %v1696
      %4051 = vmatmul.mubr.bf16.gmra.mxu0 %v1695
      %v4052 = vpop.f32.mrf.mxu0
      %v4053 = vadd.f32 %v3860, %v4052
      %v4054 = vpop.f32.mrf.mxu0
      %v4055 = vadd.f32 %v3862, %v4054
      %v4056 = vpop.f32.mrf.mxu0
      %v4057 = vadd.f32 %v3864, %v4056
      %v4058 = vpop.f32.mrf.mxu0
      %v4059 = vadd.f32 %v3866, %v4058
      %4060 = vmatprep.mubr.bf16.mxu0 %v1712
      %4061 = vmatmul.mubr.bf16.gmra.mxu0 %v1711
      %v4062 = vpop.f32.mrf.mxu0
      %v4063 = vadd.f32 %v3870, %v4062
      %v4064 = vpop.f32.mrf.mxu0
      %v4065 = vadd.f32 %v3872, %v4064
      %v4066 = vpop.f32.mrf.mxu0
      %v4067 = vadd.f32 %v3874, %v4066
      %v4068 = vpop.f32.mrf.mxu0
      %v4069 = vadd.f32 %v3876, %v4068
      %4070 = vmatprep.mubr.bf16.mxu0 %v1728
      %4071 = vmatmul.mubr.bf16.gmra.mxu0 %v1727
      %v4072 = vpop.f32.mrf.mxu0
      %v4073 = vadd.f32 %v3880, %v4072
      %v4074 = vpop.f32.mrf.mxu0
      %v4075 = vadd.f32 %v3882, %v4074
      %v4076 = vpop.f32.mrf.mxu0
      %v4077 = vadd.f32 %v3884, %v4076
      %v4078 = vpop.f32.mrf.mxu0
      %v4079 = vadd.f32 %v3886, %v4078
      %4080 = vmatprep.mubr.bf16.mxu0 %v1744
      %4081 = vmatmul.mubr.bf16.gmra.mxu0 %v1743
      %v4082 = vpop.f32.mrf.mxu0
      %v4083 = vadd.f32 %v3890, %v4082
      %v4084 = vpop.f32.mrf.mxu0
      %v4085 = vadd.f32 %v3892, %v4084
      %v4086 = vpop.f32.mrf.mxu0
      %v4087 = vadd.f32 %v3894, %v4086
      %v4088 = vpop.f32.mrf.mxu0
      %v4089 = vadd.f32 %v3896, %v4088
      %4090 = vmatprep.mubr.bf16.mxu0 %v1760
      %4091 = vmatmul.mubr.bf16.gmra.mxu0 %v1759
      %v4092 = vpop.f32.mrf.mxu0
      %v4093 = vadd.f32 %v3900, %v4092
      %v4094 = vpop.f32.mrf.mxu0
      %v4095 = vadd.f32 %v3902, %v4094
      %v4096 = vpop.f32.mrf.mxu0
      %v4097 = vadd.f32 %v3904, %v4096
      %v4098 = vpop.f32.mrf.mxu0
      %v4099 = vadd.f32 %v3906, %v4098
      %4100 = vmatprep.mubr.bf16.mxu0 %v1776
      %4101 = vmatmul.mubr.bf16.gmra.mxu0 %v1775
      %v4102 = vpop.f32.mrf.mxu0
      %v4103 = vadd.f32 %v3910, %v4102
      %v4104 = vpop.f32.mrf.mxu0
      %v4105 = vadd.f32 %v3912, %v4104
      %v4106 = vpop.f32.mrf.mxu0
      %v4107 = vadd.f32 %v3914, %v4106
      %v4108 = vpop.f32.mrf.mxu0
      %v4109 = vadd.f32 %v3916, %v4108
      %4110 = vmatprep.mubr.bf16.mxu0 %v1792
      %4111 = vmatmul.mubr.bf16.gmra.mxu0 %v1791
      %v4112 = vpop.f32.mrf.mxu0
      %v4113 = vadd.f32 %v3920, %v4112
      %v4114 = vpop.f32.mrf.mxu0
      %v4115 = vadd.f32 %v3922, %v4114
      %v4116 = vpop.f32.mrf.mxu0
      %v4117 = vadd.f32 %v3924, %v4116
      %v4118 = vpop.f32.mrf.mxu0
      %v4119 = vadd.f32 %v3926, %v4118
      %4120 = vmatprep.mubr.bf16.mxu0 %v1808
      %4121 = vmatmul.mubr.bf16.gmra.mxu0 %v1807
      %v4122 = vpop.f32.mrf.mxu0
      %v4123 = vadd.f32 %v3930, %v4122
      %v4124 = vpop.f32.mrf.mxu0
      %v4125 = vadd.f32 %v3932, %v4124
      %v4126 = vpop.f32.mrf.mxu0
      %v4127 = vadd.f32 %v3934, %v4126
      %v4128 = vpop.f32.mrf.mxu0
      %v4129 = vadd.f32 %v3936, %v4128
      %4130 = vmatprep.mubr.bf16.mxu0 %v1824
      %4131 = vmatmul.mubr.bf16.gmra.mxu0 %v1823
      %v4132 = vpop.f32.mrf.mxu0
      %v4133 = vadd.f32 %v3940, %v4132
      %v4134 = vpop.f32.mrf.mxu0
      %v4135 = vadd.f32 %v3942, %v4134
      %v4136 = vpop.f32.mrf.mxu0
      %v4137 = vadd.f32 %v3944, %v4136
      %v4138 = vpop.f32.mrf.mxu0
      %v4139 = vadd.f32 %v3946, %v4138
      %4140 = vdwg.mxu0
      %4141 = vmatprep.subr.bf16.mxu0 %v3000
      %4142 = vmatpush1.bf16.msra.mxu0 %v2999
      %4143 = vmatprep.subr.bf16.mxu0 %v2998
      %4144 = vmatpush1.bf16.msra.mxu0 %v2997
      %4145 = vmatprep.subr.bf16.mxu0 %v2996
      %4146 = vmatpush1.bf16.msra.mxu0 %v2995
      %4147 = vmatprep.subr.bf16.mxu0 %v2994
      %4148 = vmatpush1.bf16.msra.mxu0 %v2993
      %4149 = vmatprep.subr.bf16.mxu0 %v2992
      %4150 = vmatpush1.bf16.msra.mxu0 %v2991
      %4151 = vmatprep.subr.bf16.mxu0 %v2990
      %4152 = vmatpush1.bf16.msra.mxu0 %v2989
      %4153 = vmatprep.subr.bf16.mxu0 %v2988
      %4154 = vmatpush1.bf16.msra.mxu0 %v2987
      %4155 = vmatprep.subr.bf16.mxu0 %v2986
      %4156 = vmatpush1.bf16.msra.mxu0 %v2985
      %4157 = vmatprep.subr.bf16.mxu0 %v3016
      %4158 = vmatpush2.bf16.msra.mxu0 %v3015
      %4159 = vmatprep.subr.bf16.mxu0 %v3014
      %4160 = vmatpush2.bf16.msra.mxu0 %v3013
      %4161 = vmatprep.subr.bf16.mxu0 %v3012
      %4162 = vmatpush2.bf16.msra.mxu0 %v3011
      %4163 = vmatprep.subr.bf16.mxu0 %v3010
      %4164 = vmatpush2.bf16.msra.mxu0 %v3009
      %4165 = vmatprep.subr.bf16.mxu0 %v3008
      %4166 = vmatpush2.bf16.msra.mxu0 %v3007
      %4167 = vmatprep.subr.bf16.mxu0 %v3006
      %4168 = vmatpush2.bf16.msra.mxu0 %v3005
      %4169 = vmatprep.subr.bf16.mxu0 %v3004
      %4170 = vmatpush2.bf16.msra.mxu0 %v3003
      %4171 = vmatprep.subr.bf16.mxu0 %v3002
      %4172 = vmatpush2.bf16.msra.mxu0 %v3001
      %4173 = vmatprep.mubr.bf16.mxu0 %v1586
      %4174 = vmatmul.mubr.bf16.gmra.mxu0 %v1585
      %v4175 = vpop.f32.mrf.mxu0
      %v4176 = vadd.f32 %v3983, %v4175
      %v4177 = vpop.f32.mrf.mxu0
      %v4178 = vadd.f32 %v3985, %v4177
      %v4179 = vpop.f32.mrf.mxu0
      %v4180 = vadd.f32 %v3987, %v4179
      %v4181 = vpop.f32.mrf.mxu0
      %v4182 = vadd.f32 %v3989, %v4181
      %4183 = vmatprep.mubr.bf16.mxu0 %v1602
      %4184 = vmatmul.mubr.bf16.gmra.mxu0 %v1601
      %v4185 = vpop.f32.mrf.mxu0
      %v4186 = vadd.f32 %v3993, %v4185
      %v4187 = vpop.f32.mrf.mxu0
      %v4188 = vadd.f32 %v3995, %v4187
      %v4189 = vpop.f32.mrf.mxu0
      %v4190 = vadd.f32 %v3997, %v4189
      %v4191 = vpop.f32.mrf.mxu0
      %v4192 = vadd.f32 %v3999, %v4191
      %4193 = vmatprep.mubr.bf16.mxu0 %v1618
      %4194 = vmatmul.mubr.bf16.gmra.mxu0 %v1617
      %v4195 = vpop.f32.mrf.mxu0
      %v4196 = vadd.f32 %v4003, %v4195
      %v4197 = vpop.f32.mrf.mxu0
      %v4198 = vadd.f32 %v4005, %v4197
      %v4199 = vpop.f32.mrf.mxu0
      %v4200 = vadd.f32 %v4007, %v4199
      %v4201 = vpop.f32.mrf.mxu0
      %v4202 = vadd.f32 %v4009, %v4201
      %4203 = vmatprep.mubr.bf16.mxu0 %v1634
      %4204 = vmatmul.mubr.bf16.gmra.mxu0 %v1633
      %v4205 = vpop.f32.mrf.mxu0
      %v4206 = vadd.f32 %v4013, %v4205
      %v4207 = vpop.f32.mrf.mxu0
      %v4208 = vadd.f32 %v4015, %v4207
      %v4209 = vpop.f32.mrf.mxu0
      %v4210 = vadd.f32 %v4017, %v4209
      %v4211 = vpop.f32.mrf.mxu0
      %v4212 = vadd.f32 %v4019, %v4211
      %4213 = vmatprep.mubr.bf16.mxu0 %v1650
      %4214 = vmatmul.mubr.bf16.gmra.mxu0 %v1649
      %v4215 = vpop.f32.mrf.mxu0
      %v4216 = vadd.f32 %v4023, %v4215
      %v4217 = vpop.f32.mrf.mxu0
      %v4218 = vadd.f32 %v4025, %v4217
      %v4219 = vpop.f32.mrf.mxu0
      %v4220 = vadd.f32 %v4027, %v4219
      %v4221 = vpop.f32.mrf.mxu0
      %v4222 = vadd.f32 %v4029, %v4221
      %4223 = vmatprep.mubr.bf16.mxu0 %v1666
      %4224 = vmatmul.mubr.bf16.gmra.mxu0 %v1665
      %v4225 = vpop.f32.mrf.mxu0
      %v4226 = vadd.f32 %v4033, %v4225
      %v4227 = vpop.f32.mrf.mxu0
      %v4228 = vadd.f32 %v4035, %v4227
      %v4229 = vpop.f32.mrf.mxu0
      %v4230 = vadd.f32 %v4037, %v4229
      %v4231 = vpop.f32.mrf.mxu0
      %v4232 = vadd.f32 %v4039, %v4231
      %4233 = vmatprep.mubr.bf16.mxu0 %v1682
      %4234 = vmatmul.mubr.bf16.gmra.mxu0 %v1681
      %v4235 = vpop.f32.mrf.mxu0
      %v4236 = vadd.f32 %v4043, %v4235
      %v4237 = vpop.f32.mrf.mxu0
      %v4238 = vadd.f32 %v4045, %v4237
      %v4239 = vpop.f32.mrf.mxu0
      %v4240 = vadd.f32 %v4047, %v4239
      %v4241 = vpop.f32.mrf.mxu0
      %v4242 = vadd.f32 %v4049, %v4241
      %4243 = vmatprep.mubr.bf16.mxu0 %v1698
      %4244 = vmatmul.mubr.bf16.gmra.mxu0 %v1697
      %v4245 = vpop.f32.mrf.mxu0
      %v4246 = vadd.f32 %v4053, %v4245
      %v4247 = vpop.f32.mrf.mxu0
      %v4248 = vadd.f32 %v4055, %v4247
      %v4249 = vpop.f32.mrf.mxu0
      %v4250 = vadd.f32 %v4057, %v4249
      %v4251 = vpop.f32.mrf.mxu0
      %v4252 = vadd.f32 %v4059, %v4251
      %4253 = vmatprep.mubr.bf16.mxu0 %v1714
      %4254 = vmatmul.mubr.bf16.gmra.mxu0 %v1713
      %v4255 = vpop.f32.mrf.mxu0
      %v4256 = vadd.f32 %v4063, %v4255
      %v4257 = vpop.f32.mrf.mxu0
      %v4258 = vadd.f32 %v4065, %v4257
      %v4259 = vpop.f32.mrf.mxu0
      %v4260 = vadd.f32 %v4067, %v4259
      %v4261 = vpop.f32.mrf.mxu0
      %v4262 = vadd.f32 %v4069, %v4261
      %4263 = vmatprep.mubr.bf16.mxu0 %v1730
      %4264 = vmatmul.mubr.bf16.gmra.mxu0 %v1729
      %v4265 = vpop.f32.mrf.mxu0
      %v4266 = vadd.f32 %v4073, %v4265
      %v4267 = vpop.f32.mrf.mxu0
      %v4268 = vadd.f32 %v4075, %v4267
      %v4269 = vpop.f32.mrf.mxu0
      %v4270 = vadd.f32 %v4077, %v4269
      %v4271 = vpop.f32.mrf.mxu0
      %v4272 = vadd.f32 %v4079, %v4271
      %4273 = vmatprep.mubr.bf16.mxu0 %v1746
      %4274 = vmatmul.mubr.bf16.gmra.mxu0 %v1745
      %v4275 = vpop.f32.mrf.mxu0
      %v4276 = vadd.f32 %v4083, %v4275
      %v4277 = vpop.f32.mrf.mxu0
      %v4278 = vadd.f32 %v4085, %v4277
      %v4279 = vpop.f32.mrf.mxu0
      %v4280 = vadd.f32 %v4087, %v4279
      %v4281 = vpop.f32.mrf.mxu0
      %v4282 = vadd.f32 %v4089, %v4281
      %4283 = vmatprep.mubr.bf16.mxu0 %v1762
      %4284 = vmatmul.mubr.bf16.gmra.mxu0 %v1761
      %v4285 = vpop.f32.mrf.mxu0
      %v4286 = vadd.f32 %v4093, %v4285
      %v4287 = vpop.f32.mrf.mxu0
      %v4288 = vadd.f32 %v4095, %v4287
      %v4289 = vpop.f32.mrf.mxu0
      %v4290 = vadd.f32 %v4097, %v4289
      %v4291 = vpop.f32.mrf.mxu0
      %v4292 = vadd.f32 %v4099, %v4291
      %4293 = vmatprep.mubr.bf16.mxu0 %v1778
      %4294 = vmatmul.mubr.bf16.gmra.mxu0 %v1777
      %v4295 = vpop.f32.mrf.mxu0
      %v4296 = vadd.f32 %v4103, %v4295
      %v4297 = vpop.f32.mrf.mxu0
      %v4298 = vadd.f32 %v4105, %v4297
      %v4299 = vpop.f32.mrf.mxu0
      %v4300 = vadd.f32 %v4107, %v4299
      %v4301 = vpop.f32.mrf.mxu0
      %v4302 = vadd.f32 %v4109, %v4301
      %4303 = vmatprep.mubr.bf16.mxu0 %v1794
      %4304 = vmatmul.mubr.bf16.gmra.mxu0 %v1793
      %v4305 = vpop.f32.mrf.mxu0
      %v4306 = vadd.f32 %v4113, %v4305
      %v4307 = vpop.f32.mrf.mxu0
      %v4308 = vadd.f32 %v4115, %v4307
      %v4309 = vpop.f32.mrf.mxu0
      %v4310 = vadd.f32 %v4117, %v4309
      %v4311 = vpop.f32.mrf.mxu0
      %v4312 = vadd.f32 %v4119, %v4311
      %4313 = vmatprep.mubr.bf16.mxu0 %v1810
      %4314 = vmatmul.mubr.bf16.gmra.mxu0 %v1809
      %v4315 = vpop.f32.mrf.mxu0
      %v4316 = vadd.f32 %v4123, %v4315
      %v4317 = vpop.f32.mrf.mxu0
      %v4318 = vadd.f32 %v4125, %v4317
      %v4319 = vpop.f32.mrf.mxu0
      %v4320 = vadd.f32 %v4127, %v4319
      %v4321 = vpop.f32.mrf.mxu0
      %v4322 = vadd.f32 %v4129, %v4321
      %4323 = vmatprep.mubr.bf16.mxu0 %v1826
      %4324 = vmatmul.mubr.bf16.gmra.mxu0 %v1825
      %v4325 = vpop.f32.mrf.mxu0
      %v4326 = vadd.f32 %v4133, %v4325
      %v4327 = vpop.f32.mrf.mxu0
      %v4328 = vadd.f32 %v4135, %v4327
      %v4329 = vpop.f32.mrf.mxu0
      %v4330 = vadd.f32 %v4137, %v4329
      %v4331 = vpop.f32.mrf.mxu0
      %v4332 = vadd.f32 %v4139, %v4331
      %4333 = vdwg.mxu0
      %4334 = vmatprep.subr.bf16.mxu0 %v3032
      %4335 = vmatpush1.bf16.msra.mxu0 %v3031
      %4336 = vmatprep.subr.bf16.mxu0 %v3030
      %4337 = vmatpush1.bf16.msra.mxu0 %v3029
      %4338 = vmatprep.subr.bf16.mxu0 %v3028
      %4339 = vmatpush1.bf16.msra.mxu0 %v3027
      %4340 = vmatprep.subr.bf16.mxu0 %v3026
      %4341 = vmatpush1.bf16.msra.mxu0 %v3025
      %4342 = vmatprep.subr.bf16.mxu0 %v3024
      %4343 = vmatpush1.bf16.msra.mxu0 %v3023
      %4344 = vmatprep.subr.bf16.mxu0 %v3022
      %4345 = vmatpush1.bf16.msra.mxu0 %v3021
      %4346 = vmatprep.subr.bf16.mxu0 %v3020
      %4347 = vmatpush1.bf16.msra.mxu0 %v3019
      %4348 = vmatprep.subr.bf16.mxu0 %v3018
      %4349 = vmatpush1.bf16.msra.mxu0 %v3017
      %4350 = vmatprep.subr.bf16.mxu0 %v3048
      %4351 = vmatpush2.bf16.msra.mxu0 %v3047
      %4352 = vmatprep.subr.bf16.mxu0 %v3046
      %4353 = vmatpush2.bf16.msra.mxu0 %v3045
      %4354 = vmatprep.subr.bf16.mxu0 %v3044
      %4355 = vmatpush2.bf16.msra.mxu0 %v3043
      %4356 = vmatprep.subr.bf16.mxu0 %v3042
      %4357 = vmatpush2.bf16.msra.mxu0 %v3041
      %4358 = vmatprep.subr.bf16.mxu0 %v3040
      %4359 = vmatpush2.bf16.msra.mxu0 %v3039
      %4360 = vmatprep.subr.bf16.mxu0 %v3038
      %4361 = vmatpush2.bf16.msra.mxu0 %v3037
      %4362 = vmatprep.subr.bf16.mxu0 %v3036
      %4363 = vmatpush2.bf16.msra.mxu0 %v3035
      %4364 = vmatprep.subr.bf16.mxu0 %v3034
      %4365 = vmatpush2.bf16.msra.mxu0 %v3033
      %4366 = vmatprep.mubr.bf16.mxu0 %v1588
      %4367 = vmatmul.mubr.bf16.gmra.mxu0 %v1587
      %v4368 = vpop.f32.mrf.mxu0
      %v4369 = vadd.f32 %v4176, %v4368
      %v4370 = vpop.f32.mrf.mxu0
      %v4371 = vadd.f32 %v4178, %v4370
      %v4372 = vpop.f32.mrf.mxu0
      %v4373 = vadd.f32 %v4180, %v4372
      %v4374 = vpop.f32.mrf.mxu0
      %v4375 = vadd.f32 %v4182, %v4374
      %4376 = vmatprep.mubr.bf16.mxu0 %v1604
      %4377 = vmatmul.mubr.bf16.gmra.mxu0 %v1603
      %v4378 = vpop.f32.mrf.mxu0
      %v4379 = vadd.f32 %v4186, %v4378
      %v4380 = vpop.f32.mrf.mxu0
      %v4381 = vadd.f32 %v4188, %v4380
      %v4382 = vpop.f32.mrf.mxu0
      %v4383 = vadd.f32 %v4190, %v4382
      %v4384 = vpop.f32.mrf.mxu0
      %v4385 = vadd.f32 %v4192, %v4384
      %4386 = vmatprep.mubr.bf16.mxu0 %v1620
      %4387 = vmatmul.mubr.bf16.gmra.mxu0 %v1619
      %v4388 = vpop.f32.mrf.mxu0
      %v4389 = vadd.f32 %v4196, %v4388
      %v4390 = vpop.f32.mrf.mxu0
      %v4391 = vadd.f32 %v4198, %v4390
      %v4392 = vpop.f32.mrf.mxu0
      %v4393 = vadd.f32 %v4200, %v4392
      %v4394 = vpop.f32.mrf.mxu0
      %v4395 = vadd.f32 %v4202, %v4394
      %4396 = vmatprep.mubr.bf16.mxu0 %v1636
      %4397 = vmatmul.mubr.bf16.gmra.mxu0 %v1635
      %v4398 = vpop.f32.mrf.mxu0
      %v4399 = vadd.f32 %v4206, %v4398
      %v4400 = vpop.f32.mrf.mxu0
      %v4401 = vadd.f32 %v4208, %v4400
      %v4402 = vpop.f32.mrf.mxu0
      %v4403 = vadd.f32 %v4210, %v4402
      %v4404 = vpop.f32.mrf.mxu0
      %v4405 = vadd.f32 %v4212, %v4404
      %4406 = vmatprep.mubr.bf16.mxu0 %v1652
      %4407 = vmatmul.mubr.bf16.gmra.mxu0 %v1651
      %v4408 = vpop.f32.mrf.mxu0
      %v4409 = vadd.f32 %v4216, %v4408
      %v4410 = vpop.f32.mrf.mxu0
      %v4411 = vadd.f32 %v4218, %v4410
      %v4412 = vpop.f32.mrf.mxu0
      %v4413 = vadd.f32 %v4220, %v4412
      %v4414 = vpop.f32.mrf.mxu0
      %v4415 = vadd.f32 %v4222, %v4414
      %4416 = vmatprep.mubr.bf16.mxu0 %v1668
      %4417 = vmatmul.mubr.bf16.gmra.mxu0 %v1667
      %v4418 = vpop.f32.mrf.mxu0
      %v4419 = vadd.f32 %v4226, %v4418
      %v4420 = vpop.f32.mrf.mxu0
      %v4421 = vadd.f32 %v4228, %v4420
      %v4422 = vpop.f32.mrf.mxu0
      %v4423 = vadd.f32 %v4230, %v4422
      %v4424 = vpop.f32.mrf.mxu0
      %v4425 = vadd.f32 %v4232, %v4424
      %4426 = vmatprep.mubr.bf16.mxu0 %v1684
      %4427 = vmatmul.mubr.bf16.gmra.mxu0 %v1683
      %v4428 = vpop.f32.mrf.mxu0
      %v4429 = vadd.f32 %v4236, %v4428
      %v4430 = vpop.f32.mrf.mxu0
      %v4431 = vadd.f32 %v4238, %v4430
      %v4432 = vpop.f32.mrf.mxu0
      %v4433 = vadd.f32 %v4240, %v4432
      %v4434 = vpop.f32.mrf.mxu0
      %v4435 = vadd.f32 %v4242, %v4434
      %4436 = vmatprep.mubr.bf16.mxu0 %v1700
      %4437 = vmatmul.mubr.bf16.gmra.mxu0 %v1699
      %v4438 = vpop.f32.mrf.mxu0
      %v4439 = vadd.f32 %v4246, %v4438
      %v4440 = vpop.f32.mrf.mxu0
      %v4441 = vadd.f32 %v4248, %v4440
      %v4442 = vpop.f32.mrf.mxu0
      %v4443 = vadd.f32 %v4250, %v4442
      %v4444 = vpop.f32.mrf.mxu0
      %v4445 = vadd.f32 %v4252, %v4444
      %4446 = vmatprep.mubr.bf16.mxu0 %v1716
      %4447 = vmatmul.mubr.bf16.gmra.mxu0 %v1715
      %v4448 = vpop.f32.mrf.mxu0
      %v4449 = vadd.f32 %v4256, %v4448
      %v4450 = vpop.f32.mrf.mxu0
      %v4451 = vadd.f32 %v4258, %v4450
      %v4452 = vpop.f32.mrf.mxu0
      %v4453 = vadd.f32 %v4260, %v4452
      %v4454 = vpop.f32.mrf.mxu0
      %v4455 = vadd.f32 %v4262, %v4454
      %4456 = vmatprep.mubr.bf16.mxu0 %v1732
      %4457 = vmatmul.mubr.bf16.gmra.mxu0 %v1731
      %v4458 = vpop.f32.mrf.mxu0
      %v4459 = vadd.f32 %v4266, %v4458
      %v4460 = vpop.f32.mrf.mxu0
      %v4461 = vadd.f32 %v4268, %v4460
      %v4462 = vpop.f32.mrf.mxu0
      %v4463 = vadd.f32 %v4270, %v4462
      %v4464 = vpop.f32.mrf.mxu0
      %v4465 = vadd.f32 %v4272, %v4464
      %4466 = vmatprep.mubr.bf16.mxu0 %v1748
      %4467 = vmatmul.mubr.bf16.gmra.mxu0 %v1747
      %v4468 = vpop.f32.mrf.mxu0
      %v4469 = vadd.f32 %v4276, %v4468
      %v4470 = vpop.f32.mrf.mxu0
      %v4471 = vadd.f32 %v4278, %v4470
      %v4472 = vpop.f32.mrf.mxu0
      %v4473 = vadd.f32 %v4280, %v4472
      %v4474 = vpop.f32.mrf.mxu0
      %v4475 = vadd.f32 %v4282, %v4474
      %4476 = vmatprep.mubr.bf16.mxu0 %v1764
      %4477 = vmatmul.mubr.bf16.gmra.mxu0 %v1763
      %v4478 = vpop.f32.mrf.mxu0
      %v4479 = vadd.f32 %v4286, %v4478
      %v4480 = vpop.f32.mrf.mxu0
      %v4481 = vadd.f32 %v4288, %v4480
      %v4482 = vpop.f32.mrf.mxu0
      %v4483 = vadd.f32 %v4290, %v4482
      %v4484 = vpop.f32.mrf.mxu0
      %v4485 = vadd.f32 %v4292, %v4484
      %4486 = vmatprep.mubr.bf16.mxu0 %v1780
      %4487 = vmatmul.mubr.bf16.gmra.mxu0 %v1779
      %v4488 = vpop.f32.mrf.mxu0
      %v4489 = vadd.f32 %v4296, %v4488
      %v4490 = vpop.f32.mrf.mxu0
      %v4491 = vadd.f32 %v4298, %v4490
      %v4492 = vpop.f32.mrf.mxu0
      %v4493 = vadd.f32 %v4300, %v4492
      %v4494 = vpop.f32.mrf.mxu0
      %v4495 = vadd.f32 %v4302, %v4494
      %4496 = vmatprep.mubr.bf16.mxu0 %v1796
      %4497 = vmatmul.mubr.bf16.gmra.mxu0 %v1795
      %v4498 = vpop.f32.mrf.mxu0
      %v4499 = vadd.f32 %v4306, %v4498
      %v4500 = vpop.f32.mrf.mxu0
      %v4501 = vadd.f32 %v4308, %v4500
      %v4502 = vpop.f32.mrf.mxu0
      %v4503 = vadd.f32 %v4310, %v4502
      %v4504 = vpop.f32.mrf.mxu0
      %v4505 = vadd.f32 %v4312, %v4504
      %4506 = vmatprep.mubr.bf16.mxu0 %v1812
      %4507 = vmatmul.mubr.bf16.gmra.mxu0 %v1811
      %v4508 = vpop.f32.mrf.mxu0
      %v4509 = vadd.f32 %v4316, %v4508
      %v4510 = vpop.f32.mrf.mxu0
      %v4511 = vadd.f32 %v4318, %v4510
      %v4512 = vpop.f32.mrf.mxu0
      %v4513 = vadd.f32 %v4320, %v4512
      %v4514 = vpop.f32.mrf.mxu0
      %v4515 = vadd.f32 %v4322, %v4514
      %4516 = vmatprep.mubr.bf16.mxu0 %v1828
      %4517 = vmatmul.mubr.bf16.gmra.mxu0 %v1827
      %v4518 = vpop.f32.mrf.mxu0
      %v4519 = vadd.f32 %v4326, %v4518
      %v4520 = vpop.f32.mrf.mxu0
      %v4521 = vadd.f32 %v4328, %v4520
      %v4522 = vpop.f32.mrf.mxu0
      %v4523 = vadd.f32 %v4330, %v4522
      %v4524 = vpop.f32.mrf.mxu0
      %v4525 = vadd.f32 %v4332, %v4524
      %4526 = vdwg.mxu0
      %4527 = vmatprep.subr.bf16.mxu0 %v3064
      %4528 = vmatpush1.bf16.msra.mxu0 %v3063
      %4529 = vmatprep.subr.bf16.mxu0 %v3062
      %4530 = vmatpush1.bf16.msra.mxu0 %v3061
      %4531 = vmatprep.subr.bf16.mxu0 %v3060
      %4532 = vmatpush1.bf16.msra.mxu0 %v3059
      %4533 = vmatprep.subr.bf16.mxu0 %v3058
      %4534 = vmatpush1.bf16.msra.mxu0 %v3057
      %4535 = vmatprep.subr.bf16.mxu0 %v3056
      %4536 = vmatpush1.bf16.msra.mxu0 %v3055
      %4537 = vmatprep.subr.bf16.mxu0 %v3054
      %4538 = vmatpush1.bf16.msra.mxu0 %v3053
      %4539 = vmatprep.subr.bf16.mxu0 %v3052
      %4540 = vmatpush1.bf16.msra.mxu0 %v3051
      %4541 = vmatprep.subr.bf16.mxu0 %v3050
      %4542 = vmatpush1.bf16.msra.mxu0 %v3049
      %4543 = vmatprep.subr.bf16.mxu0 %v3080
      %4544 = vmatpush2.bf16.msra.mxu0 %v3079
      %4545 = vmatprep.subr.bf16.mxu0 %v3078
      %4546 = vmatpush2.bf16.msra.mxu0 %v3077
      %4547 = vmatprep.subr.bf16.mxu0 %v3076
      %4548 = vmatpush2.bf16.msra.mxu0 %v3075
      %4549 = vmatprep.subr.bf16.mxu0 %v3074
      %4550 = vmatpush2.bf16.msra.mxu0 %v3073
      %4551 = vmatprep.subr.bf16.mxu0 %v3072
      %4552 = vmatpush2.bf16.msra.mxu0 %v3071
      %4553 = vmatprep.subr.bf16.mxu0 %v3070
      %4554 = vmatpush2.bf16.msra.mxu0 %v3069
      %4555 = vmatprep.subr.bf16.mxu0 %v3068
      %4556 = vmatpush2.bf16.msra.mxu0 %v3067
      %4557 = vmatprep.subr.bf16.mxu0 %v3066
      %4558 = vmatpush2.bf16.msra.mxu0 %v3065
      %4559 = vmatprep.mubr.bf16.mxu0 %v1590
      %4560 = vmatmul.mubr.bf16.gmra.mxu0 %v1589
      %v4561 = vpop.f32.mrf.mxu0
      %v4562 = vadd.f32 %v4369, %v4561
      %v4563 = vpop.f32.mrf.mxu0
      %v4564 = vadd.f32 %v4371, %v4563
      %v4565 = vpop.f32.mrf.mxu0
      %v4566 = vadd.f32 %v4373, %v4565
      %v4567 = vpop.f32.mrf.mxu0
      %v4568 = vadd.f32 %v4375, %v4567
      %4569 = vmatprep.mubr.bf16.mxu0 %v1606
      %4570 = vmatmul.mubr.bf16.gmra.mxu0 %v1605
      %v4571 = vpop.f32.mrf.mxu0
      %v4572 = vadd.f32 %v4379, %v4571
      %v4573 = vpop.f32.mrf.mxu0
      %v4574 = vadd.f32 %v4381, %v4573
      %v4575 = vpop.f32.mrf.mxu0
      %v4576 = vadd.f32 %v4383, %v4575
      %v4577 = vpop.f32.mrf.mxu0
      %v4578 = vadd.f32 %v4385, %v4577
      %4579 = vmatprep.mubr.bf16.mxu0 %v1622
      %4580 = vmatmul.mubr.bf16.gmra.mxu0 %v1621
      %v4581 = vpop.f32.mrf.mxu0
      %v4582 = vadd.f32 %v4389, %v4581
      %v4583 = vpop.f32.mrf.mxu0
      %v4584 = vadd.f32 %v4391, %v4583
      %v4585 = vpop.f32.mrf.mxu0
      %v4586 = vadd.f32 %v4393, %v4585
      %v4587 = vpop.f32.mrf.mxu0
      %v4588 = vadd.f32 %v4395, %v4587
      %4589 = vmatprep.mubr.bf16.mxu0 %v1638
      %4590 = vmatmul.mubr.bf16.gmra.mxu0 %v1637
      %v4591 = vpop.f32.mrf.mxu0
      %v4592 = vadd.f32 %v4399, %v4591
      %v4593 = vpop.f32.mrf.mxu0
      %v4594 = vadd.f32 %v4401, %v4593
      %v4595 = vpop.f32.mrf.mxu0
      %v4596 = vadd.f32 %v4403, %v4595
      %v4597 = vpop.f32.mrf.mxu0
      %v4598 = vadd.f32 %v4405, %v4597
      %4599 = vmatprep.mubr.bf16.mxu0 %v1654
      %4600 = vmatmul.mubr.bf16.gmra.mxu0 %v1653
      %v4601 = vpop.f32.mrf.mxu0
      %v4602 = vadd.f32 %v4409, %v4601
      %v4603 = vpop.f32.mrf.mxu0
      %v4604 = vadd.f32 %v4411, %v4603
      %v4605 = vpop.f32.mrf.mxu0
      %v4606 = vadd.f32 %v4413, %v4605
      %v4607 = vpop.f32.mrf.mxu0
      %v4608 = vadd.f32 %v4415, %v4607
      %4609 = vmatprep.mubr.bf16.mxu0 %v1670
      %4610 = vmatmul.mubr.bf16.gmra.mxu0 %v1669
      %v4611 = vpop.f32.mrf.mxu0
      %v4612 = vadd.f32 %v4419, %v4611
      %v4613 = vpop.f32.mrf.mxu0
      %v4614 = vadd.f32 %v4421, %v4613
      %v4615 = vpop.f32.mrf.mxu0
      %v4616 = vadd.f32 %v4423, %v4615
      %v4617 = vpop.f32.mrf.mxu0
      %v4618 = vadd.f32 %v4425, %v4617
      %4619 = vmatprep.mubr.bf16.mxu0 %v1686
      %4620 = vmatmul.mubr.bf16.gmra.mxu0 %v1685
      %v4621 = vpop.f32.mrf.mxu0
      %v4622 = vadd.f32 %v4429, %v4621
      %v4623 = vpop.f32.mrf.mxu0
      %v4624 = vadd.f32 %v4431, %v4623
      %v4625 = vpop.f32.mrf.mxu0
      %v4626 = vadd.f32 %v4433, %v4625
      %v4627 = vpop.f32.mrf.mxu0
      %v4628 = vadd.f32 %v4435, %v4627
      %4629 = vmatprep.mubr.bf16.mxu0 %v1702
      %4630 = vmatmul.mubr.bf16.gmra.mxu0 %v1701
      %v4631 = vpop.f32.mrf.mxu0
      %v4632 = vadd.f32 %v4439, %v4631
      %v4633 = vpop.f32.mrf.mxu0
      %v4634 = vadd.f32 %v4441, %v4633
      %v4635 = vpop.f32.mrf.mxu0
      %v4636 = vadd.f32 %v4443, %v4635
      %v4637 = vpop.f32.mrf.mxu0
      %v4638 = vadd.f32 %v4445, %v4637
      %4639 = vmatprep.mubr.bf16.mxu0 %v1718
      %4640 = vmatmul.mubr.bf16.gmra.mxu0 %v1717
      %v4641 = vpop.f32.mrf.mxu0
      %v4642 = vadd.f32 %v4449, %v4641
      %v4643 = vpop.f32.mrf.mxu0
      %v4644 = vadd.f32 %v4451, %v4643
      %v4645 = vpop.f32.mrf.mxu0
      %v4646 = vadd.f32 %v4453, %v4645
      %v4647 = vpop.f32.mrf.mxu0
      %v4648 = vadd.f32 %v4455, %v4647
      %4649 = vmatprep.mubr.bf16.mxu0 %v1734
      %4650 = vmatmul.mubr.bf16.gmra.mxu0 %v1733
      %v4651 = vpop.f32.mrf.mxu0
      %v4652 = vadd.f32 %v4459, %v4651
      %v4653 = vpop.f32.mrf.mxu0
      %v4654 = vadd.f32 %v4461, %v4653
      %v4655 = vpop.f32.mrf.mxu0
      %v4656 = vadd.f32 %v4463, %v4655
      %v4657 = vpop.f32.mrf.mxu0
      %v4658 = vadd.f32 %v4465, %v4657
      %4659 = vmatprep.mubr.bf16.mxu0 %v1750
      %4660 = vmatmul.mubr.bf16.gmra.mxu0 %v1749
      %v4661 = vpop.f32.mrf.mxu0
      %v4662 = vadd.f32 %v4469, %v4661
      %v4663 = vpop.f32.mrf.mxu0
      %v4664 = vadd.f32 %v4471, %v4663
      %v4665 = vpop.f32.mrf.mxu0
      %v4666 = vadd.f32 %v4473, %v4665
      %v4667 = vpop.f32.mrf.mxu0
      %v4668 = vadd.f32 %v4475, %v4667
      %4669 = vmatprep.mubr.bf16.mxu0 %v1766
      %4670 = vmatmul.mubr.bf16.gmra.mxu0 %v1765
      %v4671 = vpop.f32.mrf.mxu0
      %v4672 = vadd.f32 %v4479, %v4671
      %v4673 = vpop.f32.mrf.mxu0
      %v4674 = vadd.f32 %v4481, %v4673
      %v4675 = vpop.f32.mrf.mxu0
      %v4676 = vadd.f32 %v4483, %v4675
      %v4677 = vpop.f32.mrf.mxu0
      %v4678 = vadd.f32 %v4485, %v4677
      %4679 = vmatprep.mubr.bf16.mxu0 %v1782
      %4680 = vmatmul.mubr.bf16.gmra.mxu0 %v1781
      %v4681 = vpop.f32.mrf.mxu0
      %v4682 = vadd.f32 %v4489, %v4681
      %v4683 = vpop.f32.mrf.mxu0
      %v4684 = vadd.f32 %v4491, %v4683
      %v4685 = vpop.f32.mrf.mxu0
      %v4686 = vadd.f32 %v4493, %v4685
      %v4687 = vpop.f32.mrf.mxu0
      %v4688 = vadd.f32 %v4495, %v4687
      %4689 = vmatprep.mubr.bf16.mxu0 %v1798
      %4690 = vmatmul.mubr.bf16.gmra.mxu0 %v1797
      %v4691 = vpop.f32.mrf.mxu0
      %v4692 = vadd.f32 %v4499, %v4691
      %v4693 = vpop.f32.mrf.mxu0
      %v4694 = vadd.f32 %v4501, %v4693
      %v4695 = vpop.f32.mrf.mxu0
      %v4696 = vadd.f32 %v4503, %v4695
      %v4697 = vpop.f32.mrf.mxu0
      %v4698 = vadd.f32 %v4505, %v4697
      %4699 = vmatprep.mubr.bf16.mxu0 %v1814
      %4700 = vmatmul.mubr.bf16.gmra.mxu0 %v1813
      %v4701 = vpop.f32.mrf.mxu0
      %v4702 = vadd.f32 %v4509, %v4701
      %v4703 = vpop.f32.mrf.mxu0
      %v4704 = vadd.f32 %v4511, %v4703
      %v4705 = vpop.f32.mrf.mxu0
      %v4706 = vadd.f32 %v4513, %v4705
      %v4707 = vpop.f32.mrf.mxu0
      %v4708 = vadd.f32 %v4515, %v4707
      %4709 = vmatprep.mubr.bf16.mxu0 %v1830
      %4710 = vmatmul.mubr.bf16.gmra.mxu0 %v1829
      %v4711 = vpop.f32.mrf.mxu0
      %v4712 = vadd.f32 %v4519, %v4711
      %v4713 = vpop.f32.mrf.mxu0
      %v4714 = vadd.f32 %v4521, %v4713
      %v4715 = vpop.f32.mrf.mxu0
      %v4716 = vadd.f32 %v4523, %v4715
      %v4717 = vpop.f32.mrf.mxu0
      %v4718 = vadd.f32 %v4525, %v4717
      %4719 = vdwg.mxu0
      %4720 = vmatprep.subr.bf16.mxu0 %v3096
      %4721 = vmatpush1.bf16.msra.mxu0 %v3095
      %4722 = vmatprep.subr.bf16.mxu0 %v3094
      %4723 = vmatpush1.bf16.msra.mxu0 %v3093
      %4724 = vmatprep.subr.bf16.mxu0 %v3092
      %4725 = vmatpush1.bf16.msra.mxu0 %v3091
      %4726 = vmatprep.subr.bf16.mxu0 %v3090
      %4727 = vmatpush1.bf16.msra.mxu0 %v3089
      %4728 = vmatprep.subr.bf16.mxu0 %v3088
      %4729 = vmatpush1.bf16.msra.mxu0 %v3087
      %4730 = vmatprep.subr.bf16.mxu0 %v3086
      %4731 = vmatpush1.bf16.msra.mxu0 %v3085
      %4732 = vmatprep.subr.bf16.mxu0 %v3084
      %4733 = vmatpush1.bf16.msra.mxu0 %v3083
      %4734 = vmatprep.subr.bf16.mxu0 %v3082
      %4735 = vmatpush1.bf16.msra.mxu0 %v3081
      %4736 = vmatprep.subr.bf16.mxu0 %v3112
      %4737 = vmatpush2.bf16.msra.mxu0 %v3111
      %4738 = vmatprep.subr.bf16.mxu0 %v3110
      %4739 = vmatpush2.bf16.msra.mxu0 %v3109
      %4740 = vmatprep.subr.bf16.mxu0 %v3108
      %4741 = vmatpush2.bf16.msra.mxu0 %v3107
      %4742 = vmatprep.subr.bf16.mxu0 %v3106
      %4743 = vmatpush2.bf16.msra.mxu0 %v3105
      %4744 = vmatprep.subr.bf16.mxu0 %v3104
      %4745 = vmatpush2.bf16.msra.mxu0 %v3103
      %4746 = vmatprep.subr.bf16.mxu0 %v3102
      %4747 = vmatpush2.bf16.msra.mxu0 %v3101
      %4748 = vmatprep.subr.bf16.mxu0 %v3100
      %4749 = vmatpush2.bf16.msra.mxu0 %v3099
      %4750 = vmatprep.subr.bf16.mxu0 %v3098
      %4751 = vmatpush2.bf16.msra.mxu0 %v3097
      %4752 = vmatprep.mubr.bf16.mxu0 %v1592
      %4753 = vmatmul.mubr.bf16.gmra.mxu0 %v1591
      %v4754 = vpop.f32.mrf.mxu0
      %v4755 = vadd.f32 %v4562, %v4754
      %v4756 = vpop.f32.mrf.mxu0
      %v4757 = vadd.f32 %v4564, %v4756
      %v4758 = vpop.f32.mrf.mxu0
      %v4759 = vadd.f32 %v4566, %v4758
      %v4760 = vpop.f32.mrf.mxu0
      %v4761 = vadd.f32 %v4568, %v4760
      %4762 = vmatprep.mubr.bf16.mxu0 %v1608
      %4763 = vmatmul.mubr.bf16.gmra.mxu0 %v1607
      %v4764 = vpop.f32.mrf.mxu0
      %v4765 = vadd.f32 %v4572, %v4764
      %v4766 = vpop.f32.mrf.mxu0
      %v4767 = vadd.f32 %v4574, %v4766
      %v4768 = vpop.f32.mrf.mxu0
      %v4769 = vadd.f32 %v4576, %v4768
      %v4770 = vpop.f32.mrf.mxu0
      %v4771 = vadd.f32 %v4578, %v4770
      %4772 = vmatprep.mubr.bf16.mxu0 %v1624
      %4773 = vmatmul.mubr.bf16.gmra.mxu0 %v1623
      %v4774 = vpop.f32.mrf.mxu0
      %v4775 = vadd.f32 %v4582, %v4774
      %v4776 = vpop.f32.mrf.mxu0
      %v4777 = vadd.f32 %v4584, %v4776
      %v4778 = vpop.f32.mrf.mxu0
      %v4779 = vadd.f32 %v4586, %v4778
      %v4780 = vpop.f32.mrf.mxu0
      %v4781 = vadd.f32 %v4588, %v4780
      %4782 = vmatprep.mubr.bf16.mxu0 %v1640
      %4783 = vmatmul.mubr.bf16.gmra.mxu0 %v1639
      %v4784 = vpop.f32.mrf.mxu0
      %v4785 = vadd.f32 %v4592, %v4784
      %v4786 = vpop.f32.mrf.mxu0
      %v4787 = vadd.f32 %v4594, %v4786
      %v4788 = vpop.f32.mrf.mxu0
      %v4789 = vadd.f32 %v4596, %v4788
      %v4790 = vpop.f32.mrf.mxu0
      %v4791 = vadd.f32 %v4598, %v4790
      %4792 = vmatprep.mubr.bf16.mxu0 %v1656
      %4793 = vmatmul.mubr.bf16.gmra.mxu0 %v1655
      %v4794 = vpop.f32.mrf.mxu0
      %v4795 = vadd.f32 %v4602, %v4794
      %v4796 = vpop.f32.mrf.mxu0
      %v4797 = vadd.f32 %v4604, %v4796
      %v4798 = vpop.f32.mrf.mxu0
      %v4799 = vadd.f32 %v4606, %v4798
      %v4800 = vpop.f32.mrf.mxu0
      %v4801 = vadd.f32 %v4608, %v4800
      %4802 = vmatprep.mubr.bf16.mxu0 %v1672
      %4803 = vmatmul.mubr.bf16.gmra.mxu0 %v1671
      %v4804 = vpop.f32.mrf.mxu0
      %v4805 = vadd.f32 %v4612, %v4804
      %v4806 = vpop.f32.mrf.mxu0
      %v4807 = vadd.f32 %v4614, %v4806
      %v4808 = vpop.f32.mrf.mxu0
      %v4809 = vadd.f32 %v4616, %v4808
      %v4810 = vpop.f32.mrf.mxu0
      %v4811 = vadd.f32 %v4618, %v4810
      %4812 = vmatprep.mubr.bf16.mxu0 %v1688
      %4813 = vmatmul.mubr.bf16.gmra.mxu0 %v1687
      %v4814 = vpop.f32.mrf.mxu0
      %v4815 = vadd.f32 %v4622, %v4814
      %v4816 = vpop.f32.mrf.mxu0
      %v4817 = vadd.f32 %v4624, %v4816
      %v4818 = vpop.f32.mrf.mxu0
      %v4819 = vadd.f32 %v4626, %v4818
      %v4820 = vpop.f32.mrf.mxu0
      %v4821 = vadd.f32 %v4628, %v4820
      %4822 = vmatprep.mubr.bf16.mxu0 %v1704
      %4823 = vmatmul.mubr.bf16.gmra.mxu0 %v1703
      %v4824 = vpop.f32.mrf.mxu0
      %v4825 = vadd.f32 %v4632, %v4824
      %v4826 = vpop.f32.mrf.mxu0
      %v4827 = vadd.f32 %v4634, %v4826
      %v4828 = vpop.f32.mrf.mxu0
      %v4829 = vadd.f32 %v4636, %v4828
      %v4830 = vpop.f32.mrf.mxu0
      %v4831 = vadd.f32 %v4638, %v4830
      %4832 = vmatprep.mubr.bf16.mxu0 %v1720
      %4833 = vmatmul.mubr.bf16.gmra.mxu0 %v1719
      %v4834 = vpop.f32.mrf.mxu0
      %v4835 = vadd.f32 %v4642, %v4834
      %v4836 = vpop.f32.mrf.mxu0
      %v4837 = vadd.f32 %v4644, %v4836
      %v4838 = vpop.f32.mrf.mxu0
      %v4839 = vadd.f32 %v4646, %v4838
      %v4840 = vpop.f32.mrf.mxu0
      %v4841 = vadd.f32 %v4648, %v4840
      %4842 = vmatprep.mubr.bf16.mxu0 %v1736
      %4843 = vmatmul.mubr.bf16.gmra.mxu0 %v1735
      %v4844 = vpop.f32.mrf.mxu0
      %v4845 = vadd.f32 %v4652, %v4844
      %v4846 = vpop.f32.mrf.mxu0
      %v4847 = vadd.f32 %v4654, %v4846
      %v4848 = vpop.f32.mrf.mxu0
      %v4849 = vadd.f32 %v4656, %v4848
      %v4850 = vpop.f32.mrf.mxu0
      %v4851 = vadd.f32 %v4658, %v4850
      %4852 = vmatprep.mubr.bf16.mxu0 %v1752
      %4853 = vmatmul.mubr.bf16.gmra.mxu0 %v1751
      %v4854 = vpop.f32.mrf.mxu0
      %v4855 = vadd.f32 %v4662, %v4854
      %v4856 = vpop.f32.mrf.mxu0
      %v4857 = vadd.f32 %v4664, %v4856
      %v4858 = vpop.f32.mrf.mxu0
      %v4859 = vadd.f32 %v4666, %v4858
      %v4860 = vpop.f32.mrf.mxu0
      %v4861 = vadd.f32 %v4668, %v4860
      %4862 = vmatprep.mubr.bf16.mxu0 %v1768
      %4863 = vmatmul.mubr.bf16.gmra.mxu0 %v1767
      %v4864 = vpop.f32.mrf.mxu0
      %v4865 = vadd.f32 %v4672, %v4864
      %v4866 = vpop.f32.mrf.mxu0
      %v4867 = vadd.f32 %v4674, %v4866
      %v4868 = vpop.f32.mrf.mxu0
      %v4869 = vadd.f32 %v4676, %v4868
      %v4870 = vpop.f32.mrf.mxu0
      %v4871 = vadd.f32 %v4678, %v4870
      %4872 = vmatprep.mubr.bf16.mxu0 %v1784
      %4873 = vmatmul.mubr.bf16.gmra.mxu0 %v1783
      %v4874 = vpop.f32.mrf.mxu0
      %v4875 = vadd.f32 %v4682, %v4874
      %v4876 = vpop.f32.mrf.mxu0
      %v4877 = vadd.f32 %v4684, %v4876
      %v4878 = vpop.f32.mrf.mxu0
      %v4879 = vadd.f32 %v4686, %v4878
      %v4880 = vpop.f32.mrf.mxu0
      %v4881 = vadd.f32 %v4688, %v4880
      %4882 = vmatprep.mubr.bf16.mxu0 %v1800
      %4883 = vmatmul.mubr.bf16.gmra.mxu0 %v1799
      %v4884 = vpop.f32.mrf.mxu0
      %v4885 = vadd.f32 %v4692, %v4884
      %v4886 = vpop.f32.mrf.mxu0
      %v4887 = vadd.f32 %v4694, %v4886
      %v4888 = vpop.f32.mrf.mxu0
      %v4889 = vadd.f32 %v4696, %v4888
      %v4890 = vpop.f32.mrf.mxu0
      %v4891 = vadd.f32 %v4698, %v4890
      %4892 = vmatprep.mubr.bf16.mxu0 %v1816
      %4893 = vmatmul.mubr.bf16.gmra.mxu0 %v1815
      %v4894 = vpop.f32.mrf.mxu0
      %v4895 = vadd.f32 %v4702, %v4894
      %v4896 = vpop.f32.mrf.mxu0
      %v4897 = vadd.f32 %v4704, %v4896
      %v4898 = vpop.f32.mrf.mxu0
      %v4899 = vadd.f32 %v4706, %v4898
      %v4900 = vpop.f32.mrf.mxu0
      %v4901 = vadd.f32 %v4708, %v4900
      %4902 = vmatprep.mubr.bf16.mxu0 %v1832
      %4903 = vmatmul.mubr.bf16.gmra.mxu0 %v1831
      %v4904 = vpop.f32.mrf.mxu0
      %v4905 = vadd.f32 %v4712, %v4904
      %v4906 = vpop.f32.mrf.mxu0
      %v4907 = vadd.f32 %v4714, %v4906
      %v4908 = vpop.f32.mrf.mxu0
      %v4909 = vadd.f32 %v4716, %v4908
      %v4910 = vpop.f32.mrf.mxu0
      %v4911 = vadd.f32 %v4718, %v4910
      %4912 = vdwg.mxu0
      %v4913 = vld [vmem:[%s3] sm:$0xff]
      %v4914 = vld [vmem:[%s3 + $0x8] sm:$0xff]
      %v4915 = vld [vmem:[%s3 + $0x10] sm:$0xff]
      %v4916 = vld [vmem:[%s3 + $0x18] sm:$0xff]
      %v4917 = vld [vmem:[%s3 + $0x20] sm:$0xff]
      %v4918 = vld [vmem:[%s3 + $0x28] sm:$0xff]
      %v4919 = vld [vmem:[%s3 + $0x30] sm:$0xff]
      %v4920 = vld [vmem:[%s3 + $0x38] sm:$0xff]
      %v4921 = vld [vmem:[%s3 + $0x40] sm:$0xff]
      %v4922 = vld [vmem:[%s3 + $0x48] sm:$0xff]
      %v4923 = vld [vmem:[%s3 + $0x50] sm:$0xff]
      %v4924 = vld [vmem:[%s3 + $0x58] sm:$0xff]
      %v4925 = vld [vmem:[%s3 + $0x60] sm:$0xff]
      %v4926 = vld [vmem:[%s3 + $0x68] sm:$0xff]
      %v4927 = vld [vmem:[%s3 + $0x70] sm:$0xff]
      %v4928 = vld [vmem:[%s3 + $0x78] sm:$0xff]
      %v4929 = vld [vmem:[%s3 + $0x80] sm:$0xff]
      %v4930 = vld [vmem:[%s3 + $0x88] sm:$0xff]
      %v4931 = vld [vmem:[%s3 + $0x90] sm:$0xff]
      %v4932 = vld [vmem:[%s3 + $0x98] sm:$0xff]
      %v4933 = vld [vmem:[%s3 + $0xa0] sm:$0xff]
      %v4934 = vld [vmem:[%s3 + $0xa8] sm:$0xff]
      %v4935 = vld [vmem:[%s3 + $0xb0] sm:$0xff]
      %v4936 = vld [vmem:[%s3 + $0xb8] sm:$0xff]
      %v4937 = vld [vmem:[%s3 + $0xc0] sm:$0xff]
      %v4938 = vld [vmem:[%s3 + $0xc8] sm:$0xff]
      %v4939 = vld [vmem:[%s3 + $0xd0] sm:$0xff]
      %v4940 = vld [vmem:[%s3 + $0xd8] sm:$0xff]
      %v4941 = vld [vmem:[%s3 + $0xe0] sm:$0xff]
      %v4942 = vld [vmem:[%s3 + $0xe8] sm:$0xff]
      %v4943 = vld [vmem:[%s3 + $0xf0] sm:$0xff]
      %v4944 = vld [vmem:[%s3 + $0xf8] sm:$0xff]
      %v4945 = vld [vmem:[%s3 + $0x100] sm:$0xff]
      %v4946 = vld [vmem:[%s3 + $0x108] sm:$0xff]
      %v4947 = vld [vmem:[%s3 + $0x110] sm:$0xff]
      %v4948 = vld [vmem:[%s3 + $0x118] sm:$0xff]
      %v4949 = vld [vmem:[%s3 + $0x120] sm:$0xff]
      %v4950 = vld [vmem:[%s3 + $0x128] sm:$0xff]
      %v4951 = vld [vmem:[%s3 + $0x130] sm:$0xff]
      %v4952 = vld [vmem:[%s3 + $0x138] sm:$0xff]
      %v4953 = vld [vmem:[%s3 + $0x140] sm:$0xff]
      %v4954 = vld [vmem:[%s3 + $0x148] sm:$0xff]
      %v4955 = vld [vmem:[%s3 + $0x150] sm:$0xff]
      %v4956 = vld [vmem:[%s3 + $0x158] sm:$0xff]
      %v4957 = vld [vmem:[%s3 + $0x160] sm:$0xff]
      %v4958 = vld [vmem:[%s3 + $0x168] sm:$0xff]
      %v4959 = vld [vmem:[%s3 + $0x170] sm:$0xff]
      %v4960 = vld [vmem:[%s3 + $0x178] sm:$0xff]
      %v4961 = vld [vmem:[%s3 + $0x180] sm:$0xff]
      %v4962 = vld [vmem:[%s3 + $0x188] sm:$0xff]
      %v4963 = vld [vmem:[%s3 + $0x190] sm:$0xff]
      %v4964 = vld [vmem:[%s3 + $0x198] sm:$0xff]
      %v4965 = vld [vmem:[%s3 + $0x1a0] sm:$0xff]
      %v4966 = vld [vmem:[%s3 + $0x1a8] sm:$0xff]
      %v4967 = vld [vmem:[%s3 + $0x1b0] sm:$0xff]
      %v4968 = vld [vmem:[%s3 + $0x1b8] sm:$0xff]
      %v4969 = vld [vmem:[%s3 + $0x1c0] sm:$0xff]
      %v4970 = vld [vmem:[%s3 + $0x1c8] sm:$0xff]
      %v4971 = vld [vmem:[%s3 + $0x1d0] sm:$0xff]
      %v4972 = vld [vmem:[%s3 + $0x1d8] sm:$0xff]
      %v4973 = vld [vmem:[%s3 + $0x1e0] sm:$0xff]
      %v4974 = vld [vmem:[%s3 + $0x1e8] sm:$0xff]
      %v4975 = vld [vmem:[%s3 + $0x1f0] sm:$0xff]
      %v4976 = vld [vmem:[%s3 + $0x1f8] sm:$0xff]
      %v4977 = vld [vmem:[%s3 + $0x200] sm:$0xff]
      %v4978 = vld [vmem:[%s3 + $0x208] sm:$0xff]
      %v4979 = vld [vmem:[%s3 + $0x210] sm:$0xff]
      %v4980 = vld [vmem:[%s3 + $0x218] sm:$0xff]
      %v4981 = vld [vmem:[%s3 + $0x220] sm:$0xff]
      %v4982 = vld [vmem:[%s3 + $0x228] sm:$0xff]
      %v4983 = vld [vmem:[%s3 + $0x230] sm:$0xff]
      %v4984 = vld [vmem:[%s3 + $0x238] sm:$0xff]
      %v4985 = vld [vmem:[%s3 + $0x240] sm:$0xff]
      %v4986 = vld [vmem:[%s3 + $0x248] sm:$0xff]
      %v4987 = vld [vmem:[%s3 + $0x250] sm:$0xff]
      %v4988 = vld [vmem:[%s3 + $0x258] sm:$0xff]
      %v4989 = vld [vmem:[%s3 + $0x260] sm:$0xff]
      %v4990 = vld [vmem:[%s3 + $0x268] sm:$0xff]
      %v4991 = vld [vmem:[%s3 + $0x270] sm:$0xff]
      %v4992 = vld [vmem:[%s3 + $0x278] sm:$0xff]
      %v4993 = vld [vmem:[%s3 + $0x280] sm:$0xff]
      %v4994 = vld [vmem:[%s3 + $0x288] sm:$0xff]
      %v4995 = vld [vmem:[%s3 + $0x290] sm:$0xff]
      %v4996 = vld [vmem:[%s3 + $0x298] sm:$0xff]
      %v4997 = vld [vmem:[%s3 + $0x2a0] sm:$0xff]
      %v4998 = vld [vmem:[%s3 + $0x2a8] sm:$0xff]
      %v4999 = vld [vmem:[%s3 + $0x2b0] sm:$0xff]
      %v5000 = vld [vmem:[%s3 + $0x2b8] sm:$0xff]
      %v5001 = vld [vmem:[%s3 + $0x2c0] sm:$0xff]
      %v5002 = vld [vmem:[%s3 + $0x2c8] sm:$0xff]
      %v5003 = vld [vmem:[%s3 + $0x2d0] sm:$0xff]
      %v5004 = vld [vmem:[%s3 + $0x2d8] sm:$0xff]
      %v5005 = vld [vmem:[%s3 + $0x2e0] sm:$0xff]
      %v5006 = vld [vmem:[%s3 + $0x2e8] sm:$0xff]
      %v5007 = vld [vmem:[%s3 + $0x2f0] sm:$0xff]
      %v5008 = vld [vmem:[%s3 + $0x2f8] sm:$0xff]
      %v5009 = vld [vmem:[%s3 + $0x300] sm:$0xff]
      %v5010 = vld [vmem:[%s3 + $0x308] sm:$0xff]
      %v5011 = vld [vmem:[%s3 + $0x310] sm:$0xff]
      %v5012 = vld [vmem:[%s3 + $0x318] sm:$0xff]
      %v5013 = vld [vmem:[%s3 + $0x320] sm:$0xff]
      %v5014 = vld [vmem:[%s3 + $0x328] sm:$0xff]
      %v5015 = vld [vmem:[%s3 + $0x330] sm:$0xff]
      %v5016 = vld [vmem:[%s3 + $0x338] sm:$0xff]
      %v5017 = vld [vmem:[%s3 + $0x340] sm:$0xff]
      %v5018 = vld [vmem:[%s3 + $0x348] sm:$0xff]
      %v5019 = vld [vmem:[%s3 + $0x350] sm:$0xff]
      %v5020 = vld [vmem:[%s3 + $0x358] sm:$0xff]
      %v5021 = vld [vmem:[%s3 + $0x360] sm:$0xff]
      %v5022 = vld [vmem:[%s3 + $0x368] sm:$0xff]
      %v5023 = vld [vmem:[%s3 + $0x370] sm:$0xff]
      %v5024 = vld [vmem:[%s3 + $0x378] sm:$0xff]
      %v5025 = vld [vmem:[%s3 + $0x380] sm:$0xff]
      %v5026 = vld [vmem:[%s3 + $0x388] sm:$0xff]
      %v5027 = vld [vmem:[%s3 + $0x390] sm:$0xff]
      %v5028 = vld [vmem:[%s3 + $0x398] sm:$0xff]
      %v5029 = vld [vmem:[%s3 + $0x3a0] sm:$0xff]
      %v5030 = vld [vmem:[%s3 + $0x3a8] sm:$0xff]
      %v5031 = vld [vmem:[%s3 + $0x3b0] sm:$0xff]
      %v5032 = vld [vmem:[%s3 + $0x3b8] sm:$0xff]
      %v5033 = vld [vmem:[%s3 + $0x3c0] sm:$0xff]
      %v5034 = vld [vmem:[%s3 + $0x3c8] sm:$0xff]
      %v5035 = vld [vmem:[%s3 + $0x3d0] sm:$0xff]
      %v5036 = vld [vmem:[%s3 + $0x3d8] sm:$0xff]
      %v5037 = vld [vmem:[%s3 + $0x3e0] sm:$0xff]
      %v5038 = vld [vmem:[%s3 + $0x3e8] sm:$0xff]
      %v5039 = vld [vmem:[%s3 + $0x3f0] sm:$0xff]
      %v5040 = vld [vmem:[%s3 + $0x3f8] sm:$0xff]
      %v5041 = vld [vmem:[%s3 + $0x400] sm:$0xff]
      %v5042 = vld [vmem:[%s3 + $0x408] sm:$0xff]
      %v5043 = vld [vmem:[%s3 + $0x410] sm:$0xff]
      %v5044 = vld [vmem:[%s3 + $0x418] sm:$0xff]
      %v5045 = vld [vmem:[%s3 + $0x420] sm:$0xff]
      %v5046 = vld [vmem:[%s3 + $0x428] sm:$0xff]
      %v5047 = vld [vmem:[%s3 + $0x430] sm:$0xff]
      %v5048 = vld [vmem:[%s3 + $0x438] sm:$0xff]
      %v5049 = vld [vmem:[%s3 + $0x440] sm:$0xff]
      %v5050 = vld [vmem:[%s3 + $0x448] sm:$0xff]
      %v5051 = vld [vmem:[%s3 + $0x450] sm:$0xff]
      %v5052 = vld [vmem:[%s3 + $0x458] sm:$0xff]
      %v5053 = vld [vmem:[%s3 + $0x460] sm:$0xff]
      %v5054 = vld [vmem:[%s3 + $0x468] sm:$0xff]
      %v5055 = vld [vmem:[%s3 + $0x470] sm:$0xff]
      %v5056 = vld [vmem:[%s3 + $0x478] sm:$0xff]
      %v5057 = vld [vmem:[%s3 + $0x480] sm:$0xff]
      %v5058 = vld [vmem:[%s3 + $0x488] sm:$0xff]
      %v5059 = vld [vmem:[%s3 + $0x490] sm:$0xff]
      %v5060 = vld [vmem:[%s3 + $0x498] sm:$0xff]
      %v5061 = vld [vmem:[%s3 + $0x4a0] sm:$0xff]
      %v5062 = vld [vmem:[%s3 + $0x4a8] sm:$0xff]
      %v5063 = vld [vmem:[%s3 + $0x4b0] sm:$0xff]
      %v5064 = vld [vmem:[%s3 + $0x4b8] sm:$0xff]
      %v5065 = vld [vmem:[%s3 + $0x4c0] sm:$0xff]
      %v5066 = vld [vmem:[%s3 + $0x4c8] sm:$0xff]
      %v5067 = vld [vmem:[%s3 + $0x4d0] sm:$0xff]
      %v5068 = vld [vmem:[%s3 + $0x4d8] sm:$0xff]
      %v5069 = vld [vmem:[%s3 + $0x4e0] sm:$0xff]
      %v5070 = vld [vmem:[%s3 + $0x4e8] sm:$0xff]
      %v5071 = vld [vmem:[%s3 + $0x4f0] sm:$0xff]
      %v5072 = vld [vmem:[%s3 + $0x4f8] sm:$0xff]
      %v5073 = vld [vmem:[%s3 + $0x500] sm:$0xff]
      %v5074 = vld [vmem:[%s3 + $0x508] sm:$0xff]
      %v5075 = vld [vmem:[%s3 + $0x510] sm:$0xff]
      %v5076 = vld [vmem:[%s3 + $0x518] sm:$0xff]
      %v5077 = vld [vmem:[%s3 + $0x520] sm:$0xff]
      %v5078 = vld [vmem:[%s3 + $0x528] sm:$0xff]
      %v5079 = vld [vmem:[%s3 + $0x530] sm:$0xff]
      %v5080 = vld [vmem:[%s3 + $0x538] sm:$0xff]
      %v5081 = vld [vmem:[%s3 + $0x540] sm:$0xff]
      %v5082 = vld [vmem:[%s3 + $0x548] sm:$0xff]
      %v5083 = vld [vmem:[%s3 + $0x550] sm:$0xff]
      %v5084 = vld [vmem:[%s3 + $0x558] sm:$0xff]
      %v5085 = vld [vmem:[%s3 + $0x560] sm:$0xff]
      %v5086 = vld [vmem:[%s3 + $0x568] sm:$0xff]
      %v5087 = vld [vmem:[%s3 + $0x570] sm:$0xff]
      %v5088 = vld [vmem:[%s3 + $0x578] sm:$0xff]
      %v5089 = vld [vmem:[%s3 + $0x580] sm:$0xff]
      %v5090 = vld [vmem:[%s3 + $0x588] sm:$0xff]
      %v5091 = vld [vmem:[%s3 + $0x590] sm:$0xff]
      %v5092 = vld [vmem:[%s3 + $0x598] sm:$0xff]
      %v5093 = vld [vmem:[%s3 + $0x5a0] sm:$0xff]
      %v5094 = vld [vmem:[%s3 + $0x5a8] sm:$0xff]
      %v5095 = vld [vmem:[%s3 + $0x5b0] sm:$0xff]
      %v5096 = vld [vmem:[%s3 + $0x5b8] sm:$0xff]
      %v5097 = vld [vmem:[%s3 + $0x5c0] sm:$0xff]
      %v5098 = vld [vmem:[%s3 + $0x5c8] sm:$0xff]
      %v5099 = vld [vmem:[%s3 + $0x5d0] sm:$0xff]
      %v5100 = vld [vmem:[%s3 + $0x5d8] sm:$0xff]
      %v5101 = vld [vmem:[%s3 + $0x5e0] sm:$0xff]
      %v5102 = vld [vmem:[%s3 + $0x5e8] sm:$0xff]
      %v5103 = vld [vmem:[%s3 + $0x5f0] sm:$0xff]
      %v5104 = vld [vmem:[%s3 + $0x5f8] sm:$0xff]
      %v5105 = vld [vmem:[%s3 + $0x600] sm:$0xff]
      %v5106 = vld [vmem:[%s3 + $0x608] sm:$0xff]
      %v5107 = vld [vmem:[%s3 + $0x610] sm:$0xff]
      %v5108 = vld [vmem:[%s3 + $0x618] sm:$0xff]
      %v5109 = vld [vmem:[%s3 + $0x620] sm:$0xff]
      %v5110 = vld [vmem:[%s3 + $0x628] sm:$0xff]
      %v5111 = vld [vmem:[%s3 + $0x630] sm:$0xff]
      %v5112 = vld [vmem:[%s3 + $0x638] sm:$0xff]
      %v5113 = vld [vmem:[%s3 + $0x640] sm:$0xff]
      %v5114 = vld [vmem:[%s3 + $0x648] sm:$0xff]
      %v5115 = vld [vmem:[%s3 + $0x650] sm:$0xff]
      %v5116 = vld [vmem:[%s3 + $0x658] sm:$0xff]
      %v5117 = vld [vmem:[%s3 + $0x660] sm:$0xff]
      %v5118 = vld [vmem:[%s3 + $0x668] sm:$0xff]
      %v5119 = vld [vmem:[%s3 + $0x670] sm:$0xff]
      %v5120 = vld [vmem:[%s3 + $0x678] sm:$0xff]
      %v5121 = vld [vmem:[%s3 + $0x680] sm:$0xff]
      %v5122 = vld [vmem:[%s3 + $0x688] sm:$0xff]
      %v5123 = vld [vmem:[%s3 + $0x690] sm:$0xff]
      %v5124 = vld [vmem:[%s3 + $0x698] sm:$0xff]
      %v5125 = vld [vmem:[%s3 + $0x6a0] sm:$0xff]
      %v5126 = vld [vmem:[%s3 + $0x6a8] sm:$0xff]
      %v5127 = vld [vmem:[%s3 + $0x6b0] sm:$0xff]
      %v5128 = vld [vmem:[%s3 + $0x6b8] sm:$0xff]
      %v5129 = vld [vmem:[%s3 + $0x6c0] sm:$0xff]
      %v5130 = vld [vmem:[%s3 + $0x6c8] sm:$0xff]
      %v5131 = vld [vmem:[%s3 + $0x6d0] sm:$0xff]
      %v5132 = vld [vmem:[%s3 + $0x6d8] sm:$0xff]
      %v5133 = vld [vmem:[%s3 + $0x6e0] sm:$0xff]
      %v5134 = vld [vmem:[%s3 + $0x6e8] sm:$0xff]
      %v5135 = vld [vmem:[%s3 + $0x6f0] sm:$0xff]
      %v5136 = vld [vmem:[%s3 + $0x6f8] sm:$0xff]
      %v5137 = vld [vmem:[%s3 + $0x700] sm:$0xff]
      %v5138 = vld [vmem:[%s3 + $0x708] sm:$0xff]
      %v5139 = vld [vmem:[%s3 + $0x710] sm:$0xff]
      %v5140 = vld [vmem:[%s3 + $0x718] sm:$0xff]
      %v5141 = vld [vmem:[%s3 + $0x720] sm:$0xff]
      %v5142 = vld [vmem:[%s3 + $0x728] sm:$0xff]
      %v5143 = vld [vmem:[%s3 + $0x730] sm:$0xff]
      %v5144 = vld [vmem:[%s3 + $0x738] sm:$0xff]
      %v5145 = vld [vmem:[%s3 + $0x740] sm:$0xff]
      %v5146 = vld [vmem:[%s3 + $0x748] sm:$0xff]
      %v5147 = vld [vmem:[%s3 + $0x750] sm:$0xff]
      %v5148 = vld [vmem:[%s3 + $0x758] sm:$0xff]
      %v5149 = vld [vmem:[%s3 + $0x760] sm:$0xff]
      %v5150 = vld [vmem:[%s3 + $0x768] sm:$0xff]
      %v5151 = vld [vmem:[%s3 + $0x770] sm:$0xff]
      %v5152 = vld [vmem:[%s3 + $0x778] sm:$0xff]
      %v5153 = vld [vmem:[%s3 + $0x780] sm:$0xff]
      %v5154 = vld [vmem:[%s3 + $0x788] sm:$0xff]
      %v5155 = vld [vmem:[%s3 + $0x790] sm:$0xff]
      %v5156 = vld [vmem:[%s3 + $0x798] sm:$0xff]
      %v5157 = vld [vmem:[%s3 + $0x7a0] sm:$0xff]
      %v5158 = vld [vmem:[%s3 + $0x7a8] sm:$0xff]
      %v5159 = vld [vmem:[%s3 + $0x7b0] sm:$0xff]
      %v5160 = vld [vmem:[%s3 + $0x7b8] sm:$0xff]
      %v5161 = vld [vmem:[%s3 + $0x7c0] sm:$0xff]
      %v5162 = vld [vmem:[%s3 + $0x7c8] sm:$0xff]
      %v5163 = vld [vmem:[%s3 + $0x7d0] sm:$0xff]
      %v5164 = vld [vmem:[%s3 + $0x7d8] sm:$0xff]
      %v5165 = vld [vmem:[%s3 + $0x7e0] sm:$0xff]
      %v5166 = vld [vmem:[%s3 + $0x7e8] sm:$0xff]
      %v5167 = vld [vmem:[%s3 + $0x7f0] sm:$0xff]
      %v5168 = vld [vmem:[%s3 + $0x7f8] sm:$0xff]
      %v5169 = vld [vmem:[%s4] sm:$0x3]
      %v5171 = vlaneseq
      %v5172 = vshrl.u32 %v5171, 7
      %v5173 = vsub.s32 0, %v5172
      %v5174 = vrot.slane %v5169, %v5173
      %v5175 = vlaneseq
      %v5176 = vshrl.u32 %v5175, 7
      %v5177 = vsub.s32 1, %v5176
      %v5178 = vrot.slane %v5169, %v5177
      %v5437 = vunpack.c.l.b16 %v4913
      %v5438 = vunpack.c.h.b16 %v4913
      %v5439 = vunpack.c.l.b16 %v4914
      %v5440 = vunpack.c.h.b16 %v4914
      %v5441 = vunpack.c.l.b16 %v4915
      %v5442 = vunpack.c.h.b16 %v4915
      %v5443 = vunpack.c.l.b16 %v4916
      %v5444 = vunpack.c.h.b16 %v4916
      %v5445 = vunpack.c.l.b16 %v4917
      %v5446 = vunpack.c.h.b16 %v4917
      %v5447 = vunpack.c.l.b16 %v4918
      %v5448 = vunpack.c.h.b16 %v4918
      %v5449 = vunpack.c.l.b16 %v4919
      %v5450 = vunpack.c.h.b16 %v4919
      %v5451 = vunpack.c.l.b16 %v4920
      %v5452 = vunpack.c.h.b16 %v4920
      %v5453 = vunpack.c.l.b16 %v4921
      %v5454 = vunpack.c.h.b16 %v4921
      %v5455 = vunpack.c.l.b16 %v4922
      %v5456 = vunpack.c.h.b16 %v4922
      %v5457 = vunpack.c.l.b16 %v4923
      %v5458 = vunpack.c.h.b16 %v4923
      %v5459 = vunpack.c.l.b16 %v4924
      %v5460 = vunpack.c.h.b16 %v4924
      %v5461 = vunpack.c.l.b16 %v4925
      %v5462 = vunpack.c.h.b16 %v4925
      %v5463 = vunpack.c.l.b16 %v4926
      %v5464 = vunpack.c.h.b16 %v4926
      %v5465 = vunpack.c.l.b16 %v4927
      %v5466 = vunpack.c.h.b16 %v4927
      %v5467 = vunpack.c.l.b16 %v4928
      %v5468 = vunpack.c.h.b16 %v4928
      %v5469 = vunpack.c.l.b16 %v4929
      %v5470 = vunpack.c.h.b16 %v4929
      %v5471 = vunpack.c.l.b16 %v4930
      %v5472 = vunpack.c.h.b16 %v4930
      %v5473 = vunpack.c.l.b16 %v4931
      %v5474 = vunpack.c.h.b16 %v4931
      %v5475 = vunpack.c.l.b16 %v4932
      %v5476 = vunpack.c.h.b16 %v4932
      %v5477 = vunpack.c.l.b16 %v4933
      %v5478 = vunpack.c.h.b16 %v4933
      %v5479 = vunpack.c.l.b16 %v4934
      %v5480 = vunpack.c.h.b16 %v4934
      %v5481 = vunpack.c.l.b16 %v4935
      %v5482 = vunpack.c.h.b16 %v4935
      %v5483 = vunpack.c.l.b16 %v4936
      %v5484 = vunpack.c.h.b16 %v4936
      %v5485 = vunpack.c.l.b16 %v4937
      %v5486 = vunpack.c.h.b16 %v4937
      %v5487 = vunpack.c.l.b16 %v4938
      %v5488 = vunpack.c.h.b16 %v4938
      %v5489 = vunpack.c.l.b16 %v4939
      %v5490 = vunpack.c.h.b16 %v4939
      %v5491 = vunpack.c.l.b16 %v4940
      %v5492 = vunpack.c.h.b16 %v4940
      %v5493 = vunpack.c.l.b16 %v4941
      %v5494 = vunpack.c.h.b16 %v4941
      %v5495 = vunpack.c.l.b16 %v4942
      %v5496 = vunpack.c.h.b16 %v4942
      %v5497 = vunpack.c.l.b16 %v4943
      %v5498 = vunpack.c.h.b16 %v4943
      %v5499 = vunpack.c.l.b16 %v4944
      %v5500 = vunpack.c.h.b16 %v4944
      %v5501 = vunpack.c.l.b16 %v4945
      %v5502 = vunpack.c.h.b16 %v4945
      %v5503 = vunpack.c.l.b16 %v4946
      %v5504 = vunpack.c.h.b16 %v4946
      %v5505 = vunpack.c.l.b16 %v4947
      %v5506 = vunpack.c.h.b16 %v4947
      %v5507 = vunpack.c.l.b16 %v4948
      %v5508 = vunpack.c.h.b16 %v4948
      %v5509 = vunpack.c.l.b16 %v4949
      %v5510 = vunpack.c.h.b16 %v4949
      %v5511 = vunpack.c.l.b16 %v4950
      %v5512 = vunpack.c.h.b16 %v4950
      %v5513 = vunpack.c.l.b16 %v4951
      %v5514 = vunpack.c.h.b16 %v4951
      %v5515 = vunpack.c.l.b16 %v4952
      %v5516 = vunpack.c.h.b16 %v4952
      %v5517 = vunpack.c.l.b16 %v4953
      %v5518 = vunpack.c.h.b16 %v4953
      %v5519 = vunpack.c.l.b16 %v4954
      %v5520 = vunpack.c.h.b16 %v4954
      %v5521 = vunpack.c.l.b16 %v4955
      %v5522 = vunpack.c.h.b16 %v4955
      %v5523 = vunpack.c.l.b16 %v4956
      %v5524 = vunpack.c.h.b16 %v4956
      %v5525 = vunpack.c.l.b16 %v4957
      %v5526 = vunpack.c.h.b16 %v4957
      %v5527 = vunpack.c.l.b16 %v4958
      %v5528 = vunpack.c.h.b16 %v4958
      %v5529 = vunpack.c.l.b16 %v4959
      %v5530 = vunpack.c.h.b16 %v4959
      %v5531 = vunpack.c.l.b16 %v4960
      %v5532 = vunpack.c.h.b16 %v4960
      %v5533 = vunpack.c.l.b16 %v4961
      %v5534 = vunpack.c.h.b16 %v4961
      %v5535 = vunpack.c.l.b16 %v4962
      %v5536 = vunpack.c.h.b16 %v4962
      %v5537 = vunpack.c.l.b16 %v4963
      %v5538 = vunpack.c.h.b16 %v4963
      %v5539 = vunpack.c.l.b16 %v4964
      %v5540 = vunpack.c.h.b16 %v4964
      %v5541 = vunpack.c.l.b16 %v4965
      %v5542 = vunpack.c.h.b16 %v4965
      %v5543 = vunpack.c.l.b16 %v4966
      %v5544 = vunpack.c.h.b16 %v4966
      %v5545 = vunpack.c.l.b16 %v4967
      %v5546 = vunpack.c.h.b16 %v4967
      %v5547 = vunpack.c.l.b16 %v4968
      %v5548 = vunpack.c.h.b16 %v4968
      %v5549 = vunpack.c.l.b16 %v4969
      %v5550 = vunpack.c.h.b16 %v4969
      %v5551 = vunpack.c.l.b16 %v4970
      %v5552 = vunpack.c.h.b16 %v4970
      %v5553 = vunpack.c.l.b16 %v4971
      %v5554 = vunpack.c.h.b16 %v4971
      %v5555 = vunpack.c.l.b16 %v4972
      %v5556 = vunpack.c.h.b16 %v4972
      %v5557 = vunpack.c.l.b16 %v4973
      %v5558 = vunpack.c.h.b16 %v4973
      %v5559 = vunpack.c.l.b16 %v4974
      %v5560 = vunpack.c.h.b16 %v4974
      %v5561 = vunpack.c.l.b16 %v4975
      %v5562 = vunpack.c.h.b16 %v4975
      %v5563 = vunpack.c.l.b16 %v4976
      %v5564 = vunpack.c.h.b16 %v4976
      %v5565 = vunpack.c.l.b16 %v4977
      %v5566 = vunpack.c.h.b16 %v4977
      %v5567 = vunpack.c.l.b16 %v4978
      %v5568 = vunpack.c.h.b16 %v4978
      %v5569 = vunpack.c.l.b16 %v4979
      %v5570 = vunpack.c.h.b16 %v4979
      %v5571 = vunpack.c.l.b16 %v4980
      %v5572 = vunpack.c.h.b16 %v4980
      %v5573 = vunpack.c.l.b16 %v4981
      %v5574 = vunpack.c.h.b16 %v4981
      %v5575 = vunpack.c.l.b16 %v4982
      %v5576 = vunpack.c.h.b16 %v4982
      %v5577 = vunpack.c.l.b16 %v4983
      %v5578 = vunpack.c.h.b16 %v4983
      %v5579 = vunpack.c.l.b16 %v4984
      %v5580 = vunpack.c.h.b16 %v4984
      %v5581 = vunpack.c.l.b16 %v4985
      %v5582 = vunpack.c.h.b16 %v4985
      %v5583 = vunpack.c.l.b16 %v4986
      %v5584 = vunpack.c.h.b16 %v4986
      %v5585 = vunpack.c.l.b16 %v4987
      %v5586 = vunpack.c.h.b16 %v4987
      %v5587 = vunpack.c.l.b16 %v4988
      %v5588 = vunpack.c.h.b16 %v4988
      %v5589 = vunpack.c.l.b16 %v4989
      %v5590 = vunpack.c.h.b16 %v4989
      %v5591 = vunpack.c.l.b16 %v4990
      %v5592 = vunpack.c.h.b16 %v4990
      %v5593 = vunpack.c.l.b16 %v4991
      %v5594 = vunpack.c.h.b16 %v4991
      %v5595 = vunpack.c.l.b16 %v4992
      %v5596 = vunpack.c.h.b16 %v4992
      %v5597 = vunpack.c.l.b16 %v4993
      %v5598 = vunpack.c.h.b16 %v4993
      %v5599 = vunpack.c.l.b16 %v4994
      %v5600 = vunpack.c.h.b16 %v4994
      %v5601 = vunpack.c.l.b16 %v4995
      %v5602 = vunpack.c.h.b16 %v4995
      %v5603 = vunpack.c.l.b16 %v4996
      %v5604 = vunpack.c.h.b16 %v4996
      %v5605 = vunpack.c.l.b16 %v4997
      %v5606 = vunpack.c.h.b16 %v4997
      %v5607 = vunpack.c.l.b16 %v4998
      %v5608 = vunpack.c.h.b16 %v4998
      %v5609 = vunpack.c.l.b16 %v4999
      %v5610 = vunpack.c.h.b16 %v4999
      %v5611 = vunpack.c.l.b16 %v5000
      %v5612 = vunpack.c.h.b16 %v5000
      %v5613 = vunpack.c.l.b16 %v5001
      %v5614 = vunpack.c.h.b16 %v5001
      %v5615 = vunpack.c.l.b16 %v5002
      %v5616 = vunpack.c.h.b16 %v5002
      %v5617 = vunpack.c.l.b16 %v5003
      %v5618 = vunpack.c.h.b16 %v5003
      %v5619 = vunpack.c.l.b16 %v5004
      %v5620 = vunpack.c.h.b16 %v5004
      %v5621 = vunpack.c.l.b16 %v5005
      %v5622 = vunpack.c.h.b16 %v5005
      %v5623 = vunpack.c.l.b16 %v5006
      %v5624 = vunpack.c.h.b16 %v5006
      %v5625 = vunpack.c.l.b16 %v5007
      %v5626 = vunpack.c.h.b16 %v5007
      %v5627 = vunpack.c.l.b16 %v5008
      %v5628 = vunpack.c.h.b16 %v5008
      %v5629 = vunpack.c.l.b16 %v5009
      %v5630 = vunpack.c.h.b16 %v5009
      %v5631 = vunpack.c.l.b16 %v5010
      %v5632 = vunpack.c.h.b16 %v5010
      %v5633 = vunpack.c.l.b16 %v5011
      %v5634 = vunpack.c.h.b16 %v5011
      %v5635 = vunpack.c.l.b16 %v5012
      %v5636 = vunpack.c.h.b16 %v5012
      %v5637 = vunpack.c.l.b16 %v5013
      %v5638 = vunpack.c.h.b16 %v5013
      %v5639 = vunpack.c.l.b16 %v5014
      %v5640 = vunpack.c.h.b16 %v5014
      %v5641 = vunpack.c.l.b16 %v5015
      %v5642 = vunpack.c.h.b16 %v5015
      %v5643 = vunpack.c.l.b16 %v5016
      %v5644 = vunpack.c.h.b16 %v5016
      %v5645 = vunpack.c.l.b16 %v5017
      %v5646 = vunpack.c.h.b16 %v5017
      %v5647 = vunpack.c.l.b16 %v5018
      %v5648 = vunpack.c.h.b16 %v5018
      %v5649 = vunpack.c.l.b16 %v5019
      %v5650 = vunpack.c.h.b16 %v5019
      %v5651 = vunpack.c.l.b16 %v5020
      %v5652 = vunpack.c.h.b16 %v5020
      %v5653 = vunpack.c.l.b16 %v5021
      %v5654 = vunpack.c.h.b16 %v5021
      %v5655 = vunpack.c.l.b16 %v5022
      %v5656 = vunpack.c.h.b16 %v5022
      %v5657 = vunpack.c.l.b16 %v5023
      %v5658 = vunpack.c.h.b16 %v5023
      %v5659 = vunpack.c.l.b16 %v5024
      %v5660 = vunpack.c.h.b16 %v5024
      %v5661 = vunpack.c.l.b16 %v5025
      %v5662 = vunpack.c.h.b16 %v5025
      %v5663 = vunpack.c.l.b16 %v5026
      %v5664 = vunpack.c.h.b16 %v5026
      %v5665 = vunpack.c.l.b16 %v5027
      %v5666 = vunpack.c.h.b16 %v5027
      %v5667 = vunpack.c.l.b16 %v5028
      %v5668 = vunpack.c.h.b16 %v5028
      %v5669 = vunpack.c.l.b16 %v5029
      %v5670 = vunpack.c.h.b16 %v5029
      %v5671 = vunpack.c.l.b16 %v5030
      %v5672 = vunpack.c.h.b16 %v5030
      %v5673 = vunpack.c.l.b16 %v5031
      %v5674 = vunpack.c.h.b16 %v5031
      %v5675 = vunpack.c.l.b16 %v5032
      %v5676 = vunpack.c.h.b16 %v5032
      %v5677 = vunpack.c.l.b16 %v5033
      %v5678 = vunpack.c.h.b16 %v5033
      %v5679 = vunpack.c.l.b16 %v5034
      %v5680 = vunpack.c.h.b16 %v5034
      %v5681 = vunpack.c.l.b16 %v5035
      %v5682 = vunpack.c.h.b16 %v5035
      %v5683 = vunpack.c.l.b16 %v5036
      %v5684 = vunpack.c.h.b16 %v5036
      %v5685 = vunpack.c.l.b16 %v5037
      %v5686 = vunpack.c.h.b16 %v5037
      %v5687 = vunpack.c.l.b16 %v5038
      %v5688 = vunpack.c.h.b16 %v5038
      %v5689 = vunpack.c.l.b16 %v5039
      %v5690 = vunpack.c.h.b16 %v5039
      %v5691 = vunpack.c.l.b16 %v5040
      %v5692 = vunpack.c.h.b16 %v5040
      %v5693 = vunpack.c.l.b16 %v5041
      %v5694 = vunpack.c.h.b16 %v5041
      %v5695 = vunpack.c.l.b16 %v5042
      %v5696 = vunpack.c.h.b16 %v5042
      %v5697 = vunpack.c.l.b16 %v5043
      %v5698 = vunpack.c.h.b16 %v5043
      %v5699 = vunpack.c.l.b16 %v5044
      %v5700 = vunpack.c.h.b16 %v5044
      %v5701 = vunpack.c.l.b16 %v5045
      %v5702 = vunpack.c.h.b16 %v5045
      %v5703 = vunpack.c.l.b16 %v5046
      %v5704 = vunpack.c.h.b16 %v5046
      %v5705 = vunpack.c.l.b16 %v5047
      %v5706 = vunpack.c.h.b16 %v5047
      %v5707 = vunpack.c.l.b16 %v5048
      %v5708 = vunpack.c.h.b16 %v5048
      %v5709 = vunpack.c.l.b16 %v5049
      %v5710 = vunpack.c.h.b16 %v5049
      %v5711 = vunpack.c.l.b16 %v5050
      %v5712 = vunpack.c.h.b16 %v5050
      %v5713 = vunpack.c.l.b16 %v5051
      %v5714 = vunpack.c.h.b16 %v5051
      %v5715 = vunpack.c.l.b16 %v5052
      %v5716 = vunpack.c.h.b16 %v5052
      %v5717 = vunpack.c.l.b16 %v5053
      %v5718 = vunpack.c.h.b16 %v5053
      %v5719 = vunpack.c.l.b16 %v5054
      %v5720 = vunpack.c.h.b16 %v5054
      %v5721 = vunpack.c.l.b16 %v5055
      %v5722 = vunpack.c.h.b16 %v5055
      %v5723 = vunpack.c.l.b16 %v5056
      %v5724 = vunpack.c.h.b16 %v5056
      %v5725 = vunpack.c.l.b16 %v5057
      %v5726 = vunpack.c.h.b16 %v5057
      %v5727 = vunpack.c.l.b16 %v5058
      %v5728 = vunpack.c.h.b16 %v5058
      %v5729 = vunpack.c.l.b16 %v5059
      %v5730 = vunpack.c.h.b16 %v5059
      %v5731 = vunpack.c.l.b16 %v5060
      %v5732 = vunpack.c.h.b16 %v5060
      %v5733 = vunpack.c.l.b16 %v5061
      %v5734 = vunpack.c.h.b16 %v5061
      %v5735 = vunpack.c.l.b16 %v5062
      %v5736 = vunpack.c.h.b16 %v5062
      %v5737 = vunpack.c.l.b16 %v5063
      %v5738 = vunpack.c.h.b16 %v5063
      %v5739 = vunpack.c.l.b16 %v5064
      %v5740 = vunpack.c.h.b16 %v5064
      %v5741 = vunpack.c.l.b16 %v5065
      %v5742 = vunpack.c.h.b16 %v5065
      %v5743 = vunpack.c.l.b16 %v5066
      %v5744 = vunpack.c.h.b16 %v5066
      %v5745 = vunpack.c.l.b16 %v5067
      %v5746 = vunpack.c.h.b16 %v5067
      %v5747 = vunpack.c.l.b16 %v5068
      %v5748 = vunpack.c.h.b16 %v5068
      %v5749 = vunpack.c.l.b16 %v5069
      %v5750 = vunpack.c.h.b16 %v5069
      %v5751 = vunpack.c.l.b16 %v5070
      %v5752 = vunpack.c.h.b16 %v5070
      %v5753 = vunpack.c.l.b16 %v5071
      %v5754 = vunpack.c.h.b16 %v5071
      %v5755 = vunpack.c.l.b16 %v5072
      %v5756 = vunpack.c.h.b16 %v5072
      %v5757 = vunpack.c.l.b16 %v5073
      %v5758 = vunpack.c.h.b16 %v5073
      %v5759 = vunpack.c.l.b16 %v5074
      %v5760 = vunpack.c.h.b16 %v5074
      %v5761 = vunpack.c.l.b16 %v5075
      %v5762 = vunpack.c.h.b16 %v5075
      %v5763 = vunpack.c.l.b16 %v5076
      %v5764 = vunpack.c.h.b16 %v5076
      %v5765 = vunpack.c.l.b16 %v5077
      %v5766 = vunpack.c.h.b16 %v5077
      %v5767 = vunpack.c.l.b16 %v5078
      %v5768 = vunpack.c.h.b16 %v5078
      %v5769 = vunpack.c.l.b16 %v5079
      %v5770 = vunpack.c.h.b16 %v5079
      %v5771 = vunpack.c.l.b16 %v5080
      %v5772 = vunpack.c.h.b16 %v5080
      %v5773 = vunpack.c.l.b16 %v5081
      %v5774 = vunpack.c.h.b16 %v5081
      %v5775 = vunpack.c.l.b16 %v5082
      %v5776 = vunpack.c.h.b16 %v5082
      %v5777 = vunpack.c.l.b16 %v5083
      %v5778 = vunpack.c.h.b16 %v5083
      %v5779 = vunpack.c.l.b16 %v5084
      %v5780 = vunpack.c.h.b16 %v5084
      %v5781 = vunpack.c.l.b16 %v5085
      %v5782 = vunpack.c.h.b16 %v5085
      %v5783 = vunpack.c.l.b16 %v5086
      %v5784 = vunpack.c.h.b16 %v5086
      %v5785 = vunpack.c.l.b16 %v5087
      %v5786 = vunpack.c.h.b16 %v5087
      %v5787 = vunpack.c.l.b16 %v5088
      %v5788 = vunpack.c.h.b16 %v5088
      %v5789 = vunpack.c.l.b16 %v5089
      %v5790 = vunpack.c.h.b16 %v5089
      %v5791 = vunpack.c.l.b16 %v5090
      %v5792 = vunpack.c.h.b16 %v5090
      %v5793 = vunpack.c.l.b16 %v5091
      %v5794 = vunpack.c.h.b16 %v5091
      %v5795 = vunpack.c.l.b16 %v5092
      %v5796 = vunpack.c.h.b16 %v5092
      %v5797 = vunpack.c.l.b16 %v5093
      %v5798 = vunpack.c.h.b16 %v5093
      %v5799 = vunpack.c.l.b16 %v5094
      %v5800 = vunpack.c.h.b16 %v5094
      %v5801 = vunpack.c.l.b16 %v5095
      %v5802 = vunpack.c.h.b16 %v5095
      %v5803 = vunpack.c.l.b16 %v5096
      %v5804 = vunpack.c.h.b16 %v5096
      %v5805 = vunpack.c.l.b16 %v5097
      %v5806 = vunpack.c.h.b16 %v5097
      %v5807 = vunpack.c.l.b16 %v5098
      %v5808 = vunpack.c.h.b16 %v5098
      %v5809 = vunpack.c.l.b16 %v5099
      %v5810 = vunpack.c.h.b16 %v5099
      %v5811 = vunpack.c.l.b16 %v5100
      %v5812 = vunpack.c.h.b16 %v5100
      %v5813 = vunpack.c.l.b16 %v5101
      %v5814 = vunpack.c.h.b16 %v5101
      %v5815 = vunpack.c.l.b16 %v5102
      %v5816 = vunpack.c.h.b16 %v5102
      %v5817 = vunpack.c.l.b16 %v5103
      %v5818 = vunpack.c.h.b16 %v5103
      %v5819 = vunpack.c.l.b16 %v5104
      %v5820 = vunpack.c.h.b16 %v5104
      %v5821 = vunpack.c.l.b16 %v5105
      %v5822 = vunpack.c.h.b16 %v5105
      %v5823 = vunpack.c.l.b16 %v5106
      %v5824 = vunpack.c.h.b16 %v5106
      %v5825 = vunpack.c.l.b16 %v5107
      %v5826 = vunpack.c.h.b16 %v5107
      %v5827 = vunpack.c.l.b16 %v5108
      %v5828 = vunpack.c.h.b16 %v5108
      %v5829 = vunpack.c.l.b16 %v5109
      %v5830 = vunpack.c.h.b16 %v5109
      %v5831 = vunpack.c.l.b16 %v5110
      %v5832 = vunpack.c.h.b16 %v5110
      %v5833 = vunpack.c.l.b16 %v5111
      %v5834 = vunpack.c.h.b16 %v5111
      %v5835 = vunpack.c.l.b16 %v5112
      %v5836 = vunpack.c.h.b16 %v5112
      %v5837 = vunpack.c.l.b16 %v5113
      %v5838 = vunpack.c.h.b16 %v5113
      %v5839 = vunpack.c.l.b16 %v5114
      %v5840 = vunpack.c.h.b16 %v5114
      %v5841 = vunpack.c.l.b16 %v5115
      %v5842 = vunpack.c.h.b16 %v5115
      %v5843 = vunpack.c.l.b16 %v5116
      %v5844 = vunpack.c.h.b16 %v5116
      %v5845 = vunpack.c.l.b16 %v5117
      %v5846 = vunpack.c.h.b16 %v5117
      %v5847 = vunpack.c.l.b16 %v5118
      %v5848 = vunpack.c.h.b16 %v5118
      %v5849 = vunpack.c.l.b16 %v5119
      %v5850 = vunpack.c.h.b16 %v5119
      %v5851 = vunpack.c.l.b16 %v5120
      %v5852 = vunpack.c.h.b16 %v5120
      %v5853 = vunpack.c.l.b16 %v5121
      %v5854 = vunpack.c.h.b16 %v5121
      %v5855 = vunpack.c.l.b16 %v5122
      %v5856 = vunpack.c.h.b16 %v5122
      %v5857 = vunpack.c.l.b16 %v5123
      %v5858 = vunpack.c.h.b16 %v5123
      %v5859 = vunpack.c.l.b16 %v5124
      %v5860 = vunpack.c.h.b16 %v5124
      %v5861 = vunpack.c.l.b16 %v5125
      %v5862 = vunpack.c.h.b16 %v5125
      %v5863 = vunpack.c.l.b16 %v5126
      %v5864 = vunpack.c.h.b16 %v5126
      %v5865 = vunpack.c.l.b16 %v5127
      %v5866 = vunpack.c.h.b16 %v5127
      %v5867 = vunpack.c.l.b16 %v5128
      %v5868 = vunpack.c.h.b16 %v5128
      %v5869 = vunpack.c.l.b16 %v5129
      %v5870 = vunpack.c.h.b16 %v5129
      %v5871 = vunpack.c.l.b16 %v5130
      %v5872 = vunpack.c.h.b16 %v5130
      %v5873 = vunpack.c.l.b16 %v5131
      %v5874 = vunpack.c.h.b16 %v5131
      %v5875 = vunpack.c.l.b16 %v5132
      %v5876 = vunpack.c.h.b16 %v5132
      %v5877 = vunpack.c.l.b16 %v5133
      %v5878 = vunpack.c.h.b16 %v5133
      %v5879 = vunpack.c.l.b16 %v5134
      %v5880 = vunpack.c.h.b16 %v5134
      %v5881 = vunpack.c.l.b16 %v5135
      %v5882 = vunpack.c.h.b16 %v5135
      %v5883 = vunpack.c.l.b16 %v5136
      %v5884 = vunpack.c.h.b16 %v5136
      %v5885 = vunpack.c.l.b16 %v5137
      %v5886 = vunpack.c.h.b16 %v5137
      %v5887 = vunpack.c.l.b16 %v5138
      %v5888 = vunpack.c.h.b16 %v5138
      %v5889 = vunpack.c.l.b16 %v5139
      %v5890 = vunpack.c.h.b16 %v5139
      %v5891 = vunpack.c.l.b16 %v5140
      %v5892 = vunpack.c.h.b16 %v5140
      %v5893 = vunpack.c.l.b16 %v5141
      %v5894 = vunpack.c.h.b16 %v5141
      %v5895 = vunpack.c.l.b16 %v5142
      %v5896 = vunpack.c.h.b16 %v5142
      %v5897 = vunpack.c.l.b16 %v5143
      %v5898 = vunpack.c.h.b16 %v5143
      %v5899 = vunpack.c.l.b16 %v5144
      %v5900 = vunpack.c.h.b16 %v5144
      %v5901 = vunpack.c.l.b16 %v5145
      %v5902 = vunpack.c.h.b16 %v5145
      %v5903 = vunpack.c.l.b16 %v5146
      %v5904 = vunpack.c.h.b16 %v5146
      %v5905 = vunpack.c.l.b16 %v5147
      %v5906 = vunpack.c.h.b16 %v5147
      %v5907 = vunpack.c.l.b16 %v5148
      %v5908 = vunpack.c.h.b16 %v5148
      %v5909 = vunpack.c.l.b16 %v5149
      %v5910 = vunpack.c.h.b16 %v5149
      %v5911 = vunpack.c.l.b16 %v5150
      %v5912 = vunpack.c.h.b16 %v5150
      %v5913 = vunpack.c.l.b16 %v5151
      %v5914 = vunpack.c.h.b16 %v5151
      %v5915 = vunpack.c.l.b16 %v5152
      %v5916 = vunpack.c.h.b16 %v5152
      %v5917 = vunpack.c.l.b16 %v5153
      %v5918 = vunpack.c.h.b16 %v5153
      %v5919 = vunpack.c.l.b16 %v5154
      %v5920 = vunpack.c.h.b16 %v5154
      %v5921 = vunpack.c.l.b16 %v5155
      %v5922 = vunpack.c.h.b16 %v5155
      %v5923 = vunpack.c.l.b16 %v5156
      %v5924 = vunpack.c.h.b16 %v5156
      %v5925 = vunpack.c.l.b16 %v5157
      %v5926 = vunpack.c.h.b16 %v5157
      %v5927 = vunpack.c.l.b16 %v5158
      %v5928 = vunpack.c.h.b16 %v5158
      %v5929 = vunpack.c.l.b16 %v5159
      %v5930 = vunpack.c.h.b16 %v5159
      %v5931 = vunpack.c.l.b16 %v5160
      %v5932 = vunpack.c.h.b16 %v5160
      %v5933 = vunpack.c.l.b16 %v5161
      %v5934 = vunpack.c.h.b16 %v5161
      %v5935 = vunpack.c.l.b16 %v5162
      %v5936 = vunpack.c.h.b16 %v5162
      %v5937 = vunpack.c.l.b16 %v5163
      %v5938 = vunpack.c.h.b16 %v5163
      %v5939 = vunpack.c.l.b16 %v5164
      %v5940 = vunpack.c.h.b16 %v5164
      %v5941 = vunpack.c.l.b16 %v5165
      %v5942 = vunpack.c.h.b16 %v5165
      %v5943 = vunpack.c.l.b16 %v5166
      %v5944 = vunpack.c.h.b16 %v5166
      %v5945 = vunpack.c.l.b16 %v5167
      %v5946 = vunpack.c.h.b16 %v5167
      %v5947 = vunpack.c.l.b16 %v5168
      %v5948 = vunpack.c.h.b16 %v5168
      %v5949 = vpack.c.b16 %v5439, %v5437
      %v5950 = vpack.c.b16 %v5440, %v5438
      %v5951 = vpack.c.b16 %v5443, %v5441
      %v5952 = vpack.c.b16 %v5444, %v5442
      %v5953 = vpack.c.b16 %v5447, %v5445
      %v5954 = vpack.c.b16 %v5448, %v5446
      %v5955 = vpack.c.b16 %v5451, %v5449
      %v5956 = vpack.c.b16 %v5452, %v5450
      %v5957 = vpack.c.b16 %v5455, %v5453
      %v5958 = vpack.c.b16 %v5456, %v5454
      %v5959 = vpack.c.b16 %v5459, %v5457
      %v5960 = vpack.c.b16 %v5460, %v5458
      %v5961 = vpack.c.b16 %v5463, %v5461
      %v5962 = vpack.c.b16 %v5464, %v5462
      %v5963 = vpack.c.b16 %v5467, %v5465
      %v5964 = vpack.c.b16 %v5468, %v5466
      %v5965 = vpack.c.b16 %v5471, %v5469
      %v5966 = vpack.c.b16 %v5472, %v5470
      %v5967 = vpack.c.b16 %v5475, %v5473
      %v5968 = vpack.c.b16 %v5476, %v5474
      %v5969 = vpack.c.b16 %v5479, %v5477
      %v5970 = vpack.c.b16 %v5480, %v5478
      %v5971 = vpack.c.b16 %v5483, %v5481
      %v5972 = vpack.c.b16 %v5484, %v5482
      %v5973 = vpack.c.b16 %v5487, %v5485
      %v5974 = vpack.c.b16 %v5488, %v5486
      %v5975 = vpack.c.b16 %v5491, %v5489
      %v5976 = vpack.c.b16 %v5492, %v5490
      %v5977 = vpack.c.b16 %v5495, %v5493
      %v5978 = vpack.c.b16 %v5496, %v5494
      %v5979 = vpack.c.b16 %v5499, %v5497
      %v5980 = vpack.c.b16 %v5500, %v5498
      %v5981 = vpack.c.b16 %v5503, %v5501
      %v5982 = vpack.c.b16 %v5504, %v5502
      %v5983 = vpack.c.b16 %v5507, %v5505
      %v5984 = vpack.c.b16 %v5508, %v5506
      %v5985 = vpack.c.b16 %v5511, %v5509
      %v5986 = vpack.c.b16 %v5512, %v5510
      %v5987 = vpack.c.b16 %v5515, %v5513
      %v5988 = vpack.c.b16 %v5516, %v5514
      %v5989 = vpack.c.b16 %v5519, %v5517
      %v5990 = vpack.c.b16 %v5520, %v5518
      %v5991 = vpack.c.b16 %v5523, %v5521
      %v5992 = vpack.c.b16 %v5524, %v5522
      %v5993 = vpack.c.b16 %v5527, %v5525
      %v5994 = vpack.c.b16 %v5528, %v5526
      %v5995 = vpack.c.b16 %v5531, %v5529
      %v5996 = vpack.c.b16 %v5532, %v5530
      %v5997 = vpack.c.b16 %v5535, %v5533
      %v5998 = vpack.c.b16 %v5536, %v5534
      %v5999 = vpack.c.b16 %v5539, %v5537
      %v6000 = vpack.c.b16 %v5540, %v5538
      %v6001 = vpack.c.b16 %v5543, %v5541
      %v6002 = vpack.c.b16 %v5544, %v5542
      %v6003 = vpack.c.b16 %v5547, %v5545
      %v6004 = vpack.c.b16 %v5548, %v5546
      %v6005 = vpack.c.b16 %v5551, %v5549
      %v6006 = vpack.c.b16 %v5552, %v5550
      %v6007 = vpack.c.b16 %v5555, %v5553
      %v6008 = vpack.c.b16 %v5556, %v5554
      %v6009 = vpack.c.b16 %v5559, %v5557
      %v6010 = vpack.c.b16 %v5560, %v5558
      %v6011 = vpack.c.b16 %v5563, %v5561
      %v6012 = vpack.c.b16 %v5564, %v5562
      %v6013 = vpack.c.b16 %v5567, %v5565
      %v6014 = vpack.c.b16 %v5568, %v5566
      %v6015 = vpack.c.b16 %v5571, %v5569
      %v6016 = vpack.c.b16 %v5572, %v5570
      %v6017 = vpack.c.b16 %v5575, %v5573
      %v6018 = vpack.c.b16 %v5576, %v5574
      %v6019 = vpack.c.b16 %v5579, %v5577
      %v6020 = vpack.c.b16 %v5580, %v5578
      %v6021 = vpack.c.b16 %v5583, %v5581
      %v6022 = vpack.c.b16 %v5584, %v5582
      %v6023 = vpack.c.b16 %v5587, %v5585
      %v6024 = vpack.c.b16 %v5588, %v5586
      %v6025 = vpack.c.b16 %v5591, %v5589
      %v6026 = vpack.c.b16 %v5592, %v5590
      %v6027 = vpack.c.b16 %v5595, %v5593
      %v6028 = vpack.c.b16 %v5596, %v5594
      %v6029 = vpack.c.b16 %v5599, %v5597
      %v6030 = vpack.c.b16 %v5600, %v5598
      %v6031 = vpack.c.b16 %v5603, %v5601
      %v6032 = vpack.c.b16 %v5604, %v5602
      %v6033 = vpack.c.b16 %v5607, %v5605
      %v6034 = vpack.c.b16 %v5608, %v5606
      %v6035 = vpack.c.b16 %v5611, %v5609
      %v6036 = vpack.c.b16 %v5612, %v5610
      %v6037 = vpack.c.b16 %v5615, %v5613
      %v6038 = vpack.c.b16 %v5616, %v5614
      %v6039 = vpack.c.b16 %v5619, %v5617
      %v6040 = vpack.c.b16 %v5620, %v5618
      %v6041 = vpack.c.b16 %v5623, %v5621
      %v6042 = vpack.c.b16 %v5624, %v5622
      %v6043 = vpack.c.b16 %v5627, %v5625
      %v6044 = vpack.c.b16 %v5628, %v5626
      %v6045 = vpack.c.b16 %v5631, %v5629
      %v6046 = vpack.c.b16 %v5632, %v5630
      %v6047 = vpack.c.b16 %v5635, %v5633
      %v6048 = vpack.c.b16 %v5636, %v5634
      %v6049 = vpack.c.b16 %v5639, %v5637
      %v6050 = vpack.c.b16 %v5640, %v5638
      %v6051 = vpack.c.b16 %v5643, %v5641
      %v6052 = vpack.c.b16 %v5644, %v5642
      %v6053 = vpack.c.b16 %v5647, %v5645
      %v6054 = vpack.c.b16 %v5648, %v5646
      %v6055 = vpack.c.b16 %v5651, %v5649
      %v6056 = vpack.c.b16 %v5652, %v5650
      %v6057 = vpack.c.b16 %v5655, %v5653
      %v6058 = vpack.c.b16 %v5656, %v5654
      %v6059 = vpack.c.b16 %v5659, %v5657
      %v6060 = vpack.c.b16 %v5660, %v5658
      %v6061 = vpack.c.b16 %v5663, %v5661
      %v6062 = vpack.c.b16 %v5664, %v5662
      %v6063 = vpack.c.b16 %v5667, %v5665
      %v6064 = vpack.c.b16 %v5668, %v5666
      %v6065 = vpack.c.b16 %v5671, %v5669
      %v6066 = vpack.c.b16 %v5672, %v5670
      %v6067 = vpack.c.b16 %v5675, %v5673
      %v6068 = vpack.c.b16 %v5676, %v5674
      %v6069 = vpack.c.b16 %v5679, %v5677
      %v6070 = vpack.c.b16 %v5680, %v5678
      %v6071 = vpack.c.b16 %v5683, %v5681
      %v6072 = vpack.c.b16 %v5684, %v5682
      %v6073 = vpack.c.b16 %v5687, %v5685
      %v6074 = vpack.c.b16 %v5688, %v5686
      %v6075 = vpack.c.b16 %v5691, %v5689
      %v6076 = vpack.c.b16 %v5692, %v5690
      %v6077 = vpack.c.b16 %v5695, %v5693
      %v6078 = vpack.c.b16 %v5696, %v5694
      %v6079 = vpack.c.b16 %v5699, %v5697
      %v6080 = vpack.c.b16 %v5700, %v5698
      %v6081 = vpack.c.b16 %v5703, %v5701
      %v6082 = vpack.c.b16 %v5704, %v5702
      %v6083 = vpack.c.b16 %v5707, %v5705
      %v6084 = vpack.c.b16 %v5708, %v5706
      %v6085 = vpack.c.b16 %v5711, %v5709
      %v6086 = vpack.c.b16 %v5712, %v5710
      %v6087 = vpack.c.b16 %v5715, %v5713
      %v6088 = vpack.c.b16 %v5716, %v5714
      %v6089 = vpack.c.b16 %v5719, %v5717
      %v6090 = vpack.c.b16 %v5720, %v5718
      %v6091 = vpack.c.b16 %v5723, %v5721
      %v6092 = vpack.c.b16 %v5724, %v5722
      %v6093 = vpack.c.b16 %v5727, %v5725
      %v6094 = vpack.c.b16 %v5728, %v5726
      %v6095 = vpack.c.b16 %v5731, %v5729
      %v6096 = vpack.c.b16 %v5732, %v5730
      %v6097 = vpack.c.b16 %v5735, %v5733
      %v6098 = vpack.c.b16 %v5736, %v5734
      %v6099 = vpack.c.b16 %v5739, %v5737
      %v6100 = vpack.c.b16 %v5740, %v5738
      %v6101 = vpack.c.b16 %v5743, %v5741
      %v6102 = vpack.c.b16 %v5744, %v5742
      %v6103 = vpack.c.b16 %v5747, %v5745
      %v6104 = vpack.c.b16 %v5748, %v5746
      %v6105 = vpack.c.b16 %v5751, %v5749
      %v6106 = vpack.c.b16 %v5752, %v5750
      %v6107 = vpack.c.b16 %v5755, %v5753
      %v6108 = vpack.c.b16 %v5756, %v5754
      %v6109 = vpack.c.b16 %v5759, %v5757
      %v6110 = vpack.c.b16 %v5760, %v5758
      %v6111 = vpack.c.b16 %v5763, %v5761
      %v6112 = vpack.c.b16 %v5764, %v5762
      %v6113 = vpack.c.b16 %v5767, %v5765
      %v6114 = vpack.c.b16 %v5768, %v5766
      %v6115 = vpack.c.b16 %v5771, %v5769
      %v6116 = vpack.c.b16 %v5772, %v5770
      %v6117 = vpack.c.b16 %v5775, %v5773
      %v6118 = vpack.c.b16 %v5776, %v5774
      %v6119 = vpack.c.b16 %v5779, %v5777
      %v6120 = vpack.c.b16 %v5780, %v5778
      %v6121 = vpack.c.b16 %v5783, %v5781
      %v6122 = vpack.c.b16 %v5784, %v5782
      %v6123 = vpack.c.b16 %v5787, %v5785
      %v6124 = vpack.c.b16 %v5788, %v5786
      %v6125 = vpack.c.b16 %v5791, %v5789
      %v6126 = vpack.c.b16 %v5792, %v5790
      %v6127 = vpack.c.b16 %v5795, %v5793
      %v6128 = vpack.c.b16 %v5796, %v5794
      %v6129 = vpack.c.b16 %v5799, %v5797
      %v6130 = vpack.c.b16 %v5800, %v5798
      %v6131 = vpack.c.b16 %v5803, %v5801
      %v6132 = vpack.c.b16 %v5804, %v5802
      %v6133 = vpack.c.b16 %v5807, %v5805
      %v6134 = vpack.c.b16 %v5808, %v5806
      %v6135 = vpack.c.b16 %v5811, %v5809
      %v6136 = vpack.c.b16 %v5812, %v5810
      %v6137 = vpack.c.b16 %v5815, %v5813
      %v6138 = vpack.c.b16 %v5816, %v5814
      %v6139 = vpack.c.b16 %v5819, %v5817
      %v6140 = vpack.c.b16 %v5820, %v5818
      %v6141 = vpack.c.b16 %v5823, %v5821
      %v6142 = vpack.c.b16 %v5824, %v5822
      %v6143 = vpack.c.b16 %v5827, %v5825
      %v6144 = vpack.c.b16 %v5828, %v5826
      %v6145 = vpack.c.b16 %v5831, %v5829
      %v6146 = vpack.c.b16 %v5832, %v5830
      %v6147 = vpack.c.b16 %v5835, %v5833
      %v6148 = vpack.c.b16 %v5836, %v5834
      %v6149 = vpack.c.b16 %v5839, %v5837
      %v6150 = vpack.c.b16 %v5840, %v5838
      %v6151 = vpack.c.b16 %v5843, %v5841
      %v6152 = vpack.c.b16 %v5844, %v5842
      %v6153 = vpack.c.b16 %v5847, %v5845
      %v6154 = vpack.c.b16 %v5848, %v5846
      %v6155 = vpack.c.b16 %v5851, %v5849
      %v6156 = vpack.c.b16 %v5852, %v5850
      %v6157 = vpack.c.b16 %v5855, %v5853
      %v6158 = vpack.c.b16 %v5856, %v5854
      %v6159 = vpack.c.b16 %v5859, %v5857
      %v6160 = vpack.c.b16 %v5860, %v5858
      %v6161 = vpack.c.b16 %v5863, %v5861
      %v6162 = vpack.c.b16 %v5864, %v5862
      %v6163 = vpack.c.b16 %v5867, %v5865
      %v6164 = vpack.c.b16 %v5868, %v5866
      %v6165 = vpack.c.b16 %v5871, %v5869
      %v6166 = vpack.c.b16 %v5872, %v5870
      %v6167 = vpack.c.b16 %v5875, %v5873
      %v6168 = vpack.c.b16 %v5876, %v5874
      %v6169 = vpack.c.b16 %v5879, %v5877
      %v6170 = vpack.c.b16 %v5880, %v5878
      %v6171 = vpack.c.b16 %v5883, %v5881
      %v6172 = vpack.c.b16 %v5884, %v5882
      %v6173 = vpack.c.b16 %v5887, %v5885
      %v6174 = vpack.c.b16 %v5888, %v5886
      %v6175 = vpack.c.b16 %v5891, %v5889
      %v6176 = vpack.c.b16 %v5892, %v5890
      %v6177 = vpack.c.b16 %v5895, %v5893
      %v6178 = vpack.c.b16 %v5896, %v5894
      %v6179 = vpack.c.b16 %v5899, %v5897
      %v6180 = vpack.c.b16 %v5900, %v5898
      %v6181 = vpack.c.b16 %v5903, %v5901
      %v6182 = vpack.c.b16 %v5904, %v5902
      %v6183 = vpack.c.b16 %v5907, %v5905
      %v6184 = vpack.c.b16 %v5908, %v5906
      %v6185 = vpack.c.b16 %v5911, %v5909
      %v6186 = vpack.c.b16 %v5912, %v5910
      %v6187 = vpack.c.b16 %v5915, %v5913
      %v6188 = vpack.c.b16 %v5916, %v5914
      %v6189 = vpack.c.b16 %v5919, %v5917
      %v6190 = vpack.c.b16 %v5920, %v5918
      %v6191 = vpack.c.b16 %v5923, %v5921
      %v6192 = vpack.c.b16 %v5924, %v5922
      %v6193 = vpack.c.b16 %v5927, %v5925
      %v6194 = vpack.c.b16 %v5928, %v5926
      %v6195 = vpack.c.b16 %v5931, %v5929
      %v6196 = vpack.c.b16 %v5932, %v5930
      %v6197 = vpack.c.b16 %v5935, %v5933
      %v6198 = vpack.c.b16 %v5936, %v5934
      %v6199 = vpack.c.b16 %v5939, %v5937
      %v6200 = vpack.c.b16 %v5940, %v5938
      %v6201 = vpack.c.b16 %v5943, %v5941
      %v6202 = vpack.c.b16 %v5944, %v5942
      %v6203 = vpack.c.b16 %v5947, %v5945
      %v6204 = vpack.c.b16 %v5948, %v5946
      %6461 = vmatprep.subr.bf16.mxu0 %v5964
      %6462 = vmatpush1.bf16.msra.mxu0 %v5963
      %6463 = vmatprep.subr.bf16.mxu0 %v5962
      %6464 = vmatpush1.bf16.msra.mxu0 %v5961
      %6465 = vmatprep.subr.bf16.mxu0 %v5960
      %6466 = vmatpush1.bf16.msra.mxu0 %v5959
      %6467 = vmatprep.subr.bf16.mxu0 %v5958
      %6468 = vmatpush1.bf16.msra.mxu0 %v5957
      %6469 = vmatprep.subr.bf16.mxu0 %v5956
      %6470 = vmatpush1.bf16.msra.mxu0 %v5955
      %6471 = vmatprep.subr.bf16.mxu0 %v5954
      %6472 = vmatpush1.bf16.msra.mxu0 %v5953
      %6473 = vmatprep.subr.bf16.mxu0 %v5952
      %6474 = vmatpush1.bf16.msra.mxu0 %v5951
      %6475 = vmatprep.subr.bf16.mxu0 %v5950
      %6476 = vmatpush1.bf16.msra.mxu0 %v5949
      %6477 = vmatprep.subr.bf16.mxu0 %v5980
      %6478 = vmatpush2.bf16.msra.mxu0 %v5979
      %6479 = vmatprep.subr.bf16.mxu0 %v5978
      %6480 = vmatpush2.bf16.msra.mxu0 %v5977
      %6481 = vmatprep.subr.bf16.mxu0 %v5976
      %6482 = vmatpush2.bf16.msra.mxu0 %v5975
      %6483 = vmatprep.subr.bf16.mxu0 %v5974
      %6484 = vmatpush2.bf16.msra.mxu0 %v5973
      %6485 = vmatprep.subr.bf16.mxu0 %v5972
      %6486 = vmatpush2.bf16.msra.mxu0 %v5971
      %6487 = vmatprep.subr.bf16.mxu0 %v5970
      %6488 = vmatpush2.bf16.msra.mxu0 %v5969
      %6489 = vmatprep.subr.bf16.mxu0 %v5968
      %6490 = vmatpush2.bf16.msra.mxu0 %v5967
      %6491 = vmatprep.subr.bf16.mxu0 %v5966
      %6492 = vmatpush2.bf16.msra.mxu0 %v5965
      %6493 = vmatprep.mubr.bf16.mxu0 %v1578
      %6494 = vmatmul.mubr.bf16.gmra.mxu0 %v1577
      %v6495 = vpop.f32.mrf.mxu0
      %v6496 = vadd.f32 %v5174, %v6495
      %v6497 = vpop.f32.mrf.mxu0
      %v6498 = vadd.f32 %v5178, %v6497
      %v6499 = vpop.f32.mrf.mxu0
      %v6500 = vadd.f32 %v5174, %v6499
      %v6501 = vpop.f32.mrf.mxu0
      %v6502 = vadd.f32 %v5178, %v6501
      %6503 = vmatprep.mubr.bf16.mxu0 %v1594
      %6504 = vmatmul.mubr.bf16.gmra.mxu0 %v1593
      %v6505 = vpop.f32.mrf.mxu0
      %v6506 = vadd.f32 %v5174, %v6505
      %v6507 = vpop.f32.mrf.mxu0
      %v6508 = vadd.f32 %v5178, %v6507
      %v6509 = vpop.f32.mrf.mxu0
      %v6510 = vadd.f32 %v5174, %v6509
      %v6511 = vpop.f32.mrf.mxu0
      %v6512 = vadd.f32 %v5178, %v6511
      %6513 = vmatprep.mubr.bf16.mxu0 %v1610
      %6514 = vmatmul.mubr.bf16.gmra.mxu0 %v1609
      %v6515 = vpop.f32.mrf.mxu0
      %v6516 = vadd.f32 %v5174, %v6515
      %v6517 = vpop.f32.mrf.mxu0
      %v6518 = vadd.f32 %v5178, %v6517
      %v6519 = vpop.f32.mrf.mxu0
      %v6520 = vadd.f32 %v5174, %v6519
      %v6521 = vpop.f32.mrf.mxu0
      %v6522 = vadd.f32 %v5178, %v6521
      %6523 = vmatprep.mubr.bf16.mxu0 %v1626
      %6524 = vmatmul.mubr.bf16.gmra.mxu0 %v1625
      %v6525 = vpop.f32.mrf.mxu0
      %v6526 = vadd.f32 %v5174, %v6525
      %v6527 = vpop.f32.mrf.mxu0
      %v6528 = vadd.f32 %v5178, %v6527
      %v6529 = vpop.f32.mrf.mxu0
      %v6530 = vadd.f32 %v5174, %v6529
      %v6531 = vpop.f32.mrf.mxu0
      %v6532 = vadd.f32 %v5178, %v6531
      %6533 = vmatprep.mubr.bf16.mxu0 %v1642
      %6534 = vmatmul.mubr.bf16.gmra.mxu0 %v1641
      %v6535 = vpop.f32.mrf.mxu0
      %v6536 = vadd.f32 %v5174, %v6535
      %v6537 = vpop.f32.mrf.mxu0
      %v6538 = vadd.f32 %v5178, %v6537
      %v6539 = vpop.f32.mrf.mxu0
      %v6540 = vadd.f32 %v5174, %v6539
      %v6541 = vpop.f32.mrf.mxu0
      %v6542 = vadd.f32 %v5178, %v6541
      %6543 = vmatprep.mubr.bf16.mxu0 %v1658
      %6544 = vmatmul.mubr.bf16.gmra.mxu0 %v1657
      %v6545 = vpop.f32.mrf.mxu0
      %v6546 = vadd.f32 %v5174, %v6545
      %v6547 = vpop.f32.mrf.mxu0
      %v6548 = vadd.f32 %v5178, %v6547
      %v6549 = vpop.f32.mrf.mxu0
      %v6550 = vadd.f32 %v5174, %v6549
      %v6551 = vpop.f32.mrf.mxu0
      %v6552 = vadd.f32 %v5178, %v6551
      %6553 = vmatprep.mubr.bf16.mxu0 %v1674
      %6554 = vmatmul.mubr.bf16.gmra.mxu0 %v1673
      %v6555 = vpop.f32.mrf.mxu0
      %v6556 = vadd.f32 %v5174, %v6555
      %v6557 = vpop.f32.mrf.mxu0
      %v6558 = vadd.f32 %v5178, %v6557
      %v6559 = vpop.f32.mrf.mxu0
      %v6560 = vadd.f32 %v5174, %v6559
      %v6561 = vpop.f32.mrf.mxu0
      %v6562 = vadd.f32 %v5178, %v6561
      %6563 = vmatprep.mubr.bf16.mxu0 %v1690
      %6564 = vmatmul.mubr.bf16.gmra.mxu0 %v1689
      %v6565 = vpop.f32.mrf.mxu0
      %v6566 = vadd.f32 %v5174, %v6565
      %v6567 = vpop.f32.mrf.mxu0
      %v6568 = vadd.f32 %v5178, %v6567
      %v6569 = vpop.f32.mrf.mxu0
      %v6570 = vadd.f32 %v5174, %v6569
      %v6571 = vpop.f32.mrf.mxu0
      %v6572 = vadd.f32 %v5178, %v6571
      %6573 = vmatprep.mubr.bf16.mxu0 %v1706
      %6574 = vmatmul.mubr.bf16.gmra.mxu0 %v1705
      %v6575 = vpop.f32.mrf.mxu0
      %v6576 = vadd.f32 %v5174, %v6575
      %v6577 = vpop.f32.mrf.mxu0
      %v6578 = vadd.f32 %v5178, %v6577
      %v6579 = vpop.f32.mrf.mxu0
      %v6580 = vadd.f32 %v5174, %v6579
      %v6581 = vpop.f32.mrf.mxu0
      %v6582 = vadd.f32 %v5178, %v6581
      %6583 = vmatprep.mubr.bf16.mxu0 %v1722
      %6584 = vmatmul.mubr.bf16.gmra.mxu0 %v1721
      %v6585 = vpop.f32.mrf.mxu0
      %v6586 = vadd.f32 %v5174, %v6585
      %v6587 = vpop.f32.mrf.mxu0
      %v6588 = vadd.f32 %v5178, %v6587
      %v6589 = vpop.f32.mrf.mxu0
      %v6590 = vadd.f32 %v5174, %v6589
      %v6591 = vpop.f32.mrf.mxu0
      %v6592 = vadd.f32 %v5178, %v6591
      %6593 = vmatprep.mubr.bf16.mxu0 %v1738
      %6594 = vmatmul.mubr.bf16.gmra.mxu0 %v1737
      %v6595 = vpop.f32.mrf.mxu0
      %v6596 = vadd.f32 %v5174, %v6595
      %v6597 = vpop.f32.mrf.mxu0
      %v6598 = vadd.f32 %v5178, %v6597
      %v6599 = vpop.f32.mrf.mxu0
      %v6600 = vadd.f32 %v5174, %v6599
      %v6601 = vpop.f32.mrf.mxu0
      %v6602 = vadd.f32 %v5178, %v6601
      %6603 = vmatprep.mubr.bf16.mxu0 %v1754
      %6604 = vmatmul.mubr.bf16.gmra.mxu0 %v1753
      %v6605 = vpop.f32.mrf.mxu0
      %v6606 = vadd.f32 %v5174, %v6605
      %v6607 = vpop.f32.mrf.mxu0
      %v6608 = vadd.f32 %v5178, %v6607
      %v6609 = vpop.f32.mrf.mxu0
      %v6610 = vadd.f32 %v5174, %v6609
      %v6611 = vpop.f32.mrf.mxu0
      %v6612 = vadd.f32 %v5178, %v6611
      %6613 = vmatprep.mubr.bf16.mxu0 %v1770
      %6614 = vmatmul.mubr.bf16.gmra.mxu0 %v1769
      %v6615 = vpop.f32.mrf.mxu0
      %v6616 = vadd.f32 %v5174, %v6615
      %v6617 = vpop.f32.mrf.mxu0
      %v6618 = vadd.f32 %v5178, %v6617
      %v6619 = vpop.f32.mrf.mxu0
      %v6620 = vadd.f32 %v5174, %v6619
      %v6621 = vpop.f32.mrf.mxu0
      %v6622 = vadd.f32 %v5178, %v6621
      %6623 = vmatprep.mubr.bf16.mxu0 %v1786
      %6624 = vmatmul.mubr.bf16.gmra.mxu0 %v1785
      %v6625 = vpop.f32.mrf.mxu0
      %v6626 = vadd.f32 %v5174, %v6625
      %v6627 = vpop.f32.mrf.mxu0
      %v6628 = vadd.f32 %v5178, %v6627
      %v6629 = vpop.f32.mrf.mxu0
      %v6630 = vadd.f32 %v5174, %v6629
      %v6631 = vpop.f32.mrf.mxu0
      %v6632 = vadd.f32 %v5178, %v6631
      %6633 = vmatprep.mubr.bf16.mxu0 %v1802
      %6634 = vmatmul.mubr.bf16.gmra.mxu0 %v1801
      %v6635 = vpop.f32.mrf.mxu0
      %v6636 = vadd.f32 %v5174, %v6635
      %v6637 = vpop.f32.mrf.mxu0
      %v6638 = vadd.f32 %v5178, %v6637
      %v6639 = vpop.f32.mrf.mxu0
      %v6640 = vadd.f32 %v5174, %v6639
      %v6641 = vpop.f32.mrf.mxu0
      %v6642 = vadd.f32 %v5178, %v6641
      %6643 = vmatprep.mubr.bf16.mxu0 %v1818
      %6644 = vmatmul.mubr.bf16.gmra.mxu0 %v1817
      %v6645 = vpop.f32.mrf.mxu0
      %v6646 = vadd.f32 %v5174, %v6645
      %v6647 = vpop.f32.mrf.mxu0
      %v6648 = vadd.f32 %v5178, %v6647
      %v6649 = vpop.f32.mrf.mxu0
      %v6650 = vadd.f32 %v5174, %v6649
      %v6651 = vpop.f32.mrf.mxu0
      %v6652 = vadd.f32 %v5178, %v6651
      %6653 = vdwg.mxu0
      %6654 = vmatprep.subr.bf16.mxu0 %v5996
      %6655 = vmatpush1.bf16.msra.mxu0 %v5995
      %6656 = vmatprep.subr.bf16.mxu0 %v5994
      %6657 = vmatpush1.bf16.msra.mxu0 %v5993
      %6658 = vmatprep.subr.bf16.mxu0 %v5992
      %6659 = vmatpush1.bf16.msra.mxu0 %v5991
      %6660 = vmatprep.subr.bf16.mxu0 %v5990
      %6661 = vmatpush1.bf16.msra.mxu0 %v5989
      %6662 = vmatprep.subr.bf16.mxu0 %v5988
      %6663 = vmatpush1.bf16.msra.mxu0 %v5987
      %6664 = vmatprep.subr.bf16.mxu0 %v5986
      %6665 = vmatpush1.bf16.msra.mxu0 %v5985
      %6666 = vmatprep.subr.bf16.mxu0 %v5984
      %6667 = vmatpush1.bf16.msra.mxu0 %v5983
      %6668 = vmatprep.subr.bf16.mxu0 %v5982
      %6669 = vmatpush1.bf16.msra.mxu0 %v5981
      %6670 = vmatprep.subr.bf16.mxu0 %v6012
      %6671 = vmatpush2.bf16.msra.mxu0 %v6011
      %6672 = vmatprep.subr.bf16.mxu0 %v6010
      %6673 = vmatpush2.bf16.msra.mxu0 %v6009
      %6674 = vmatprep.subr.bf16.mxu0 %v6008
      %6675 = vmatpush2.bf16.msra.mxu0 %v6007
      %6676 = vmatprep.subr.bf16.mxu0 %v6006
      %6677 = vmatpush2.bf16.msra.mxu0 %v6005
      %6678 = vmatprep.subr.bf16.mxu0 %v6004
      %6679 = vmatpush2.bf16.msra.mxu0 %v6003
      %6680 = vmatprep.subr.bf16.mxu0 %v6002
      %6681 = vmatpush2.bf16.msra.mxu0 %v6001
      %6682 = vmatprep.subr.bf16.mxu0 %v6000
      %6683 = vmatpush2.bf16.msra.mxu0 %v5999
      %6684 = vmatprep.subr.bf16.mxu0 %v5998
      %6685 = vmatpush2.bf16.msra.mxu0 %v5997
      %6686 = vmatprep.mubr.bf16.mxu0 %v1580
      %6687 = vmatmul.mubr.bf16.gmra.mxu0 %v1579
      %v6688 = vpop.f32.mrf.mxu0
      %v6689 = vadd.f32 %v6496, %v6688
      %v6690 = vpop.f32.mrf.mxu0
      %v6691 = vadd.f32 %v6498, %v6690
      %v6692 = vpop.f32.mrf.mxu0
      %v6693 = vadd.f32 %v6500, %v6692
      %v6694 = vpop.f32.mrf.mxu0
      %v6695 = vadd.f32 %v6502, %v6694
      %6696 = vmatprep.mubr.bf16.mxu0 %v1596
      %6697 = vmatmul.mubr.bf16.gmra.mxu0 %v1595
      %v6698 = vpop.f32.mrf.mxu0
      %v6699 = vadd.f32 %v6506, %v6698
      %v6700 = vpop.f32.mrf.mxu0
      %v6701 = vadd.f32 %v6508, %v6700
      %v6702 = vpop.f32.mrf.mxu0
      %v6703 = vadd.f32 %v6510, %v6702
      %v6704 = vpop.f32.mrf.mxu0
      %v6705 = vadd.f32 %v6512, %v6704
      %6706 = vmatprep.mubr.bf16.mxu0 %v1612
      %6707 = vmatmul.mubr.bf16.gmra.mxu0 %v1611
      %v6708 = vpop.f32.mrf.mxu0
      %v6709 = vadd.f32 %v6516, %v6708
      %v6710 = vpop.f32.mrf.mxu0
      %v6711 = vadd.f32 %v6518, %v6710
      %v6712 = vpop.f32.mrf.mxu0
      %v6713 = vadd.f32 %v6520, %v6712
      %v6714 = vpop.f32.mrf.mxu0
      %v6715 = vadd.f32 %v6522, %v6714
      %6716 = vmatprep.mubr.bf16.mxu0 %v1628
      %6717 = vmatmul.mubr.bf16.gmra.mxu0 %v1627
      %v6718 = vpop.f32.mrf.mxu0
      %v6719 = vadd.f32 %v6526, %v6718
      %v6720 = vpop.f32.mrf.mxu0
      %v6721 = vadd.f32 %v6528, %v6720
      %v6722 = vpop.f32.mrf.mxu0
      %v6723 = vadd.f32 %v6530, %v6722
      %v6724 = vpop.f32.mrf.mxu0
      %v6725 = vadd.f32 %v6532, %v6724
      %6726 = vmatprep.mubr.bf16.mxu0 %v1644
      %6727 = vmatmul.mubr.bf16.gmra.mxu0 %v1643
      %v6728 = vpop.f32.mrf.mxu0
      %v6729 = vadd.f32 %v6536, %v6728
      %v6730 = vpop.f32.mrf.mxu0
      %v6731 = vadd.f32 %v6538, %v6730
      %v6732 = vpop.f32.mrf.mxu0
      %v6733 = vadd.f32 %v6540, %v6732
      %v6734 = vpop.f32.mrf.mxu0
      %v6735 = vadd.f32 %v6542, %v6734
      %6736 = vmatprep.mubr.bf16.mxu0 %v1660
      %6737 = vmatmul.mubr.bf16.gmra.mxu0 %v1659
      %v6738 = vpop.f32.mrf.mxu0
      %v6739 = vadd.f32 %v6546, %v6738
      %v6740 = vpop.f32.mrf.mxu0
      %v6741 = vadd.f32 %v6548, %v6740
      %v6742 = vpop.f32.mrf.mxu0
      %v6743 = vadd.f32 %v6550, %v6742
      %v6744 = vpop.f32.mrf.mxu0
      %v6745 = vadd.f32 %v6552, %v6744
      %6746 = vmatprep.mubr.bf16.mxu0 %v1676
      %6747 = vmatmul.mubr.bf16.gmra.mxu0 %v1675
      %v6748 = vpop.f32.mrf.mxu0
      %v6749 = vadd.f32 %v6556, %v6748
      %v6750 = vpop.f32.mrf.mxu0
      %v6751 = vadd.f32 %v6558, %v6750
      %v6752 = vpop.f32.mrf.mxu0
      %v6753 = vadd.f32 %v6560, %v6752
      %v6754 = vpop.f32.mrf.mxu0
      %v6755 = vadd.f32 %v6562, %v6754
      %6756 = vmatprep.mubr.bf16.mxu0 %v1692
      %6757 = vmatmul.mubr.bf16.gmra.mxu0 %v1691
      %v6758 = vpop.f32.mrf.mxu0
      %v6759 = vadd.f32 %v6566, %v6758
      %v6760 = vpop.f32.mrf.mxu0
      %v6761 = vadd.f32 %v6568, %v6760
      %v6762 = vpop.f32.mrf.mxu0
      %v6763 = vadd.f32 %v6570, %v6762
      %v6764 = vpop.f32.mrf.mxu0
      %v6765 = vadd.f32 %v6572, %v6764
      %6766 = vmatprep.mubr.bf16.mxu0 %v1708
      %6767 = vmatmul.mubr.bf16.gmra.mxu0 %v1707
      %v6768 = vpop.f32.mrf.mxu0
      %v6769 = vadd.f32 %v6576, %v6768
      %v6770 = vpop.f32.mrf.mxu0
      %v6771 = vadd.f32 %v6578, %v6770
      %v6772 = vpop.f32.mrf.mxu0
      %v6773 = vadd.f32 %v6580, %v6772
      %v6774 = vpop.f32.mrf.mxu0
      %v6775 = vadd.f32 %v6582, %v6774
      %6776 = vmatprep.mubr.bf16.mxu0 %v1724
      %6777 = vmatmul.mubr.bf16.gmra.mxu0 %v1723
      %v6778 = vpop.f32.mrf.mxu0
      %v6779 = vadd.f32 %v6586, %v6778
      %v6780 = vpop.f32.mrf.mxu0
      %v6781 = vadd.f32 %v6588, %v6780
      %v6782 = vpop.f32.mrf.mxu0
      %v6783 = vadd.f32 %v6590, %v6782
      %v6784 = vpop.f32.mrf.mxu0
      %v6785 = vadd.f32 %v6592, %v6784
      %6786 = vmatprep.mubr.bf16.mxu0 %v1740
      %6787 = vmatmul.mubr.bf16.gmra.mxu0 %v1739
      %v6788 = vpop.f32.mrf.mxu0
      %v6789 = vadd.f32 %v6596, %v6788
      %v6790 = vpop.f32.mrf.mxu0
      %v6791 = vadd.f32 %v6598, %v6790
      %v6792 = vpop.f32.mrf.mxu0
      %v6793 = vadd.f32 %v6600, %v6792
      %v6794 = vpop.f32.mrf.mxu0
      %v6795 = vadd.f32 %v6602, %v6794
      %6796 = vmatprep.mubr.bf16.mxu0 %v1756
      %6797 = vmatmul.mubr.bf16.gmra.mxu0 %v1755
      %v6798 = vpop.f32.mrf.mxu0
      %v6799 = vadd.f32 %v6606, %v6798
      %v6800 = vpop.f32.mrf.mxu0
      %v6801 = vadd.f32 %v6608, %v6800
      %v6802 = vpop.f32.mrf.mxu0
      %v6803 = vadd.f32 %v6610, %v6802
      %v6804 = vpop.f32.mrf.mxu0
      %v6805 = vadd.f32 %v6612, %v6804
      %6806 = vmatprep.mubr.bf16.mxu0 %v1772
      %6807 = vmatmul.mubr.bf16.gmra.mxu0 %v1771
      %v6808 = vpop.f32.mrf.mxu0
      %v6809 = vadd.f32 %v6616, %v6808
      %v6810 = vpop.f32.mrf.mxu0
      %v6811 = vadd.f32 %v6618, %v6810
      %v6812 = vpop.f32.mrf.mxu0
      %v6813 = vadd.f32 %v6620, %v6812
      %v6814 = vpop.f32.mrf.mxu0
      %v6815 = vadd.f32 %v6622, %v6814
      %6816 = vmatprep.mubr.bf16.mxu0 %v1788
      %6817 = vmatmul.mubr.bf16.gmra.mxu0 %v1787
      %v6818 = vpop.f32.mrf.mxu0
      %v6819 = vadd.f32 %v6626, %v6818
      %v6820 = vpop.f32.mrf.mxu0
      %v6821 = vadd.f32 %v6628, %v6820
      %v6822 = vpop.f32.mrf.mxu0
      %v6823 = vadd.f32 %v6630, %v6822
      %v6824 = vpop.f32.mrf.mxu0
      %v6825 = vadd.f32 %v6632, %v6824
      %6826 = vmatprep.mubr.bf16.mxu0 %v1804
      %6827 = vmatmul.mubr.bf16.gmra.mxu0 %v1803
      %v6828 = vpop.f32.mrf.mxu0
      %v6829 = vadd.f32 %v6636, %v6828
      %v6830 = vpop.f32.mrf.mxu0
      %v6831 = vadd.f32 %v6638, %v6830
      %v6832 = vpop.f32.mrf.mxu0
      %v6833 = vadd.f32 %v6640, %v6832
      %v6834 = vpop.f32.mrf.mxu0
      %v6835 = vadd.f32 %v6642, %v6834
      %6836 = vmatprep.mubr.bf16.mxu0 %v1820
      %6837 = vmatmul.mubr.bf16.gmra.mxu0 %v1819
      %v6838 = vpop.f32.mrf.mxu0
      %v6839 = vadd.f32 %v6646, %v6838
      %v6840 = vpop.f32.mrf.mxu0
      %v6841 = vadd.f32 %v6648, %v6840
      %v6842 = vpop.f32.mrf.mxu0
      %v6843 = vadd.f32 %v6650, %v6842
      %v6844 = vpop.f32.mrf.mxu0
      %v6845 = vadd.f32 %v6652, %v6844
      %6846 = vdwg.mxu0
      %6847 = vmatprep.subr.bf16.mxu0 %v6028
      %6848 = vmatpush1.bf16.msra.mxu0 %v6027
      %6849 = vmatprep.subr.bf16.mxu0 %v6026
      %6850 = vmatpush1.bf16.msra.mxu0 %v6025
      %6851 = vmatprep.subr.bf16.mxu0 %v6024
      %6852 = vmatpush1.bf16.msra.mxu0 %v6023
      %6853 = vmatprep.subr.bf16.mxu0 %v6022
      %6854 = vmatpush1.bf16.msra.mxu0 %v6021
      %6855 = vmatprep.subr.bf16.mxu0 %v6020
      %6856 = vmatpush1.bf16.msra.mxu0 %v6019
      %6857 = vmatprep.subr.bf16.mxu0 %v6018
      %6858 = vmatpush1.bf16.msra.mxu0 %v6017
      %6859 = vmatprep.subr.bf16.mxu0 %v6016
      %6860 = vmatpush1.bf16.msra.mxu0 %v6015
      %6861 = vmatprep.subr.bf16.mxu0 %v6014
      %6862 = vmatpush1.bf16.msra.mxu0 %v6013
      %6863 = vmatprep.subr.bf16.mxu0 %v6044
      %6864 = vmatpush2.bf16.msra.mxu0 %v6043
      %6865 = vmatprep.subr.bf16.mxu0 %v6042
      %6866 = vmatpush2.bf16.msra.mxu0 %v6041
      %6867 = vmatprep.subr.bf16.mxu0 %v6040
      %6868 = vmatpush2.bf16.msra.mxu0 %v6039
      %6869 = vmatprep.subr.bf16.mxu0 %v6038
      %6870 = vmatpush2.bf16.msra.mxu0 %v6037
      %6871 = vmatprep.subr.bf16.mxu0 %v6036
      %6872 = vmatpush2.bf16.msra.mxu0 %v6035
      %6873 = vmatprep.subr.bf16.mxu0 %v6034
      %6874 = vmatpush2.bf16.msra.mxu0 %v6033
      %6875 = vmatprep.subr.bf16.mxu0 %v6032
      %6876 = vmatpush2.bf16.msra.mxu0 %v6031
      %6877 = vmatprep.subr.bf16.mxu0 %v6030
      %6878 = vmatpush2.bf16.msra.mxu0 %v6029
      %6879 = vmatprep.mubr.bf16.mxu0 %v1582
      %6880 = vmatmul.mubr.bf16.gmra.mxu0 %v1581
      %v6881 = vpop.f32.mrf.mxu0
      %v6882 = vadd.f32 %v6689, %v6881
      %v6883 = vpop.f32.mrf.mxu0
      %v6884 = vadd.f32 %v6691, %v6883
      %v6885 = vpop.f32.mrf.mxu0
      %v6886 = vadd.f32 %v6693, %v6885
      %v6887 = vpop.f32.mrf.mxu0
      %v6888 = vadd.f32 %v6695, %v6887
      %6889 = vmatprep.mubr.bf16.mxu0 %v1598
      %6890 = vmatmul.mubr.bf16.gmra.mxu0 %v1597
      %v6891 = vpop.f32.mrf.mxu0
      %v6892 = vadd.f32 %v6699, %v6891
      %v6893 = vpop.f32.mrf.mxu0
      %v6894 = vadd.f32 %v6701, %v6893
      %v6895 = vpop.f32.mrf.mxu0
      %v6896 = vadd.f32 %v6703, %v6895
      %v6897 = vpop.f32.mrf.mxu0
      %v6898 = vadd.f32 %v6705, %v6897
      %6899 = vmatprep.mubr.bf16.mxu0 %v1614
      %6900 = vmatmul.mubr.bf16.gmra.mxu0 %v1613
      %v6901 = vpop.f32.mrf.mxu0
      %v6902 = vadd.f32 %v6709, %v6901
      %v6903 = vpop.f32.mrf.mxu0
      %v6904 = vadd.f32 %v6711, %v6903
      %v6905 = vpop.f32.mrf.mxu0
      %v6906 = vadd.f32 %v6713, %v6905
      %v6907 = vpop.f32.mrf.mxu0
      %v6908 = vadd.f32 %v6715, %v6907
      %6909 = vmatprep.mubr.bf16.mxu0 %v1630
      %6910 = vmatmul.mubr.bf16.gmra.mxu0 %v1629
      %v6911 = vpop.f32.mrf.mxu0
      %v6912 = vadd.f32 %v6719, %v6911
      %v6913 = vpop.f32.mrf.mxu0
      %v6914 = vadd.f32 %v6721, %v6913
      %v6915 = vpop.f32.mrf.mxu0
      %v6916 = vadd.f32 %v6723, %v6915
      %v6917 = vpop.f32.mrf.mxu0
      %v6918 = vadd.f32 %v6725, %v6917
      %6919 = vmatprep.mubr.bf16.mxu0 %v1646
      %6920 = vmatmul.mubr.bf16.gmra.mxu0 %v1645
      %v6921 = vpop.f32.mrf.mxu0
      %v6922 = vadd.f32 %v6729, %v6921
      %v6923 = vpop.f32.mrf.mxu0
      %v6924 = vadd.f32 %v6731, %v6923
      %v6925 = vpop.f32.mrf.mxu0
      %v6926 = vadd.f32 %v6733, %v6925
      %v6927 = vpop.f32.mrf.mxu0
      %v6928 = vadd.f32 %v6735, %v6927
      %6929 = vmatprep.mubr.bf16.mxu0 %v1662
      %6930 = vmatmul.mubr.bf16.gmra.mxu0 %v1661
      %v6931 = vpop.f32.mrf.mxu0
      %v6932 = vadd.f32 %v6739, %v6931
      %v6933 = vpop.f32.mrf.mxu0
      %v6934 = vadd.f32 %v6741, %v6933
      %v6935 = vpop.f32.mrf.mxu0
      %v6936 = vadd.f32 %v6743, %v6935
      %v6937 = vpop.f32.mrf.mxu0
      %v6938 = vadd.f32 %v6745, %v6937
      %6939 = vmatprep.mubr.bf16.mxu0 %v1678
      %6940 = vmatmul.mubr.bf16.gmra.mxu0 %v1677
      %v6941 = vpop.f32.mrf.mxu0
      %v6942 = vadd.f32 %v6749, %v6941
      %v6943 = vpop.f32.mrf.mxu0
      %v6944 = vadd.f32 %v6751, %v6943
      %v6945 = vpop.f32.mrf.mxu0
      %v6946 = vadd.f32 %v6753, %v6945
      %v6947 = vpop.f32.mrf.mxu0
      %v6948 = vadd.f32 %v6755, %v6947
      %6949 = vmatprep.mubr.bf16.mxu0 %v1694
      %6950 = vmatmul.mubr.bf16.gmra.mxu0 %v1693
      %v6951 = vpop.f32.mrf.mxu0
      %v6952 = vadd.f32 %v6759, %v6951
      %v6953 = vpop.f32.mrf.mxu0
      %v6954 = vadd.f32 %v6761, %v6953
      %v6955 = vpop.f32.mrf.mxu0
      %v6956 = vadd.f32 %v6763, %v6955
      %v6957 = vpop.f32.mrf.mxu0
      %v6958 = vadd.f32 %v6765, %v6957
      %6959 = vmatprep.mubr.bf16.mxu0 %v1710
      %6960 = vmatmul.mubr.bf16.gmra.mxu0 %v1709
      %v6961 = vpop.f32.mrf.mxu0
      %v6962 = vadd.f32 %v6769, %v6961
      %v6963 = vpop.f32.mrf.mxu0
      %v6964 = vadd.f32 %v6771, %v6963
      %v6965 = vpop.f32.mrf.mxu0
      %v6966 = vadd.f32 %v6773, %v6965
      %v6967 = vpop.f32.mrf.mxu0
      %v6968 = vadd.f32 %v6775, %v6967
      %6969 = vmatprep.mubr.bf16.mxu0 %v1726
      %6970 = vmatmul.mubr.bf16.gmra.mxu0 %v1725
      %v6971 = vpop.f32.mrf.mxu0
      %v6972 = vadd.f32 %v6779, %v6971
      %v6973 = vpop.f32.mrf.mxu0
      %v6974 = vadd.f32 %v6781, %v6973
      %v6975 = vpop.f32.mrf.mxu0
      %v6976 = vadd.f32 %v6783, %v6975
      %v6977 = vpop.f32.mrf.mxu0
      %v6978 = vadd.f32 %v6785, %v6977
      %6979 = vmatprep.mubr.bf16.mxu0 %v1742
      %6980 = vmatmul.mubr.bf16.gmra.mxu0 %v1741
      %v6981 = vpop.f32.mrf.mxu0
      %v6982 = vadd.f32 %v6789, %v6981
      %v6983 = vpop.f32.mrf.mxu0
      %v6984 = vadd.f32 %v6791, %v6983
      %v6985 = vpop.f32.mrf.mxu0
      %v6986 = vadd.f32 %v6793, %v6985
      %v6987 = vpop.f32.mrf.mxu0
      %v6988 = vadd.f32 %v6795, %v6987
      %6989 = vmatprep.mubr.bf16.mxu0 %v1758
      %6990 = vmatmul.mubr.bf16.gmra.mxu0 %v1757
      %v6991 = vpop.f32.mrf.mxu0
      %v6992 = vadd.f32 %v6799, %v6991
      %v6993 = vpop.f32.mrf.mxu0
      %v6994 = vadd.f32 %v6801, %v6993
      %v6995 = vpop.f32.mrf.mxu0
      %v6996 = vadd.f32 %v6803, %v6995
      %v6997 = vpop.f32.mrf.mxu0
      %v6998 = vadd.f32 %v6805, %v6997
      %6999 = vmatprep.mubr.bf16.mxu0 %v1774
      %7000 = vmatmul.mubr.bf16.gmra.mxu0 %v1773
      %v7001 = vpop.f32.mrf.mxu0
      %v7002 = vadd.f32 %v6809, %v7001
      %v7003 = vpop.f32.mrf.mxu0
      %v7004 = vadd.f32 %v6811, %v7003
      %v7005 = vpop.f32.mrf.mxu0
      %v7006 = vadd.f32 %v6813, %v7005
      %v7007 = vpop.f32.mrf.mxu0
      %v7008 = vadd.f32 %v6815, %v7007
      %7009 = vmatprep.mubr.bf16.mxu0 %v1790
      %7010 = vmatmul.mubr.bf16.gmra.mxu0 %v1789
      %v7011 = vpop.f32.mrf.mxu0
      %v7012 = vadd.f32 %v6819, %v7011
      %v7013 = vpop.f32.mrf.mxu0
      %v7014 = vadd.f32 %v6821, %v7013
      %v7015 = vpop.f32.mrf.mxu0
      %v7016 = vadd.f32 %v6823, %v7015
      %v7017 = vpop.f32.mrf.mxu0
      %v7018 = vadd.f32 %v6825, %v7017
      %7019 = vmatprep.mubr.bf16.mxu0 %v1806
      %7020 = vmatmul.mubr.bf16.gmra.mxu0 %v1805
      %v7021 = vpop.f32.mrf.mxu0
      %v7022 = vadd.f32 %v6829, %v7021
      %v7023 = vpop.f32.mrf.mxu0
      %v7024 = vadd.f32 %v6831, %v7023
      %v7025 = vpop.f32.mrf.mxu0
      %v7026 = vadd.f32 %v6833, %v7025
      %v7027 = vpop.f32.mrf.mxu0
      %v7028 = vadd.f32 %v6835, %v7027
      %7029 = vmatprep.mubr.bf16.mxu0 %v1822
      %7030 = vmatmul.mubr.bf16.gmra.mxu0 %v1821
      %v7031 = vpop.f32.mrf.mxu0
      %v7032 = vadd.f32 %v6839, %v7031
      %v7033 = vpop.f32.mrf.mxu0
      %v7034 = vadd.f32 %v6841, %v7033
      %v7035 = vpop.f32.mrf.mxu0
      %v7036 = vadd.f32 %v6843, %v7035
      %v7037 = vpop.f32.mrf.mxu0
      %v7038 = vadd.f32 %v6845, %v7037
      %7039 = vdwg.mxu0
      %7040 = vmatprep.subr.bf16.mxu0 %v6060
      %7041 = vmatpush1.bf16.msra.mxu0 %v6059
      %7042 = vmatprep.subr.bf16.mxu0 %v6058
      %7043 = vmatpush1.bf16.msra.mxu0 %v6057
      %7044 = vmatprep.subr.bf16.mxu0 %v6056
      %7045 = vmatpush1.bf16.msra.mxu0 %v6055
      %7046 = vmatprep.subr.bf16.mxu0 %v6054
      %7047 = vmatpush1.bf16.msra.mxu0 %v6053
      %7048 = vmatprep.subr.bf16.mxu0 %v6052
      %7049 = vmatpush1.bf16.msra.mxu0 %v6051
      %7050 = vmatprep.subr.bf16.mxu0 %v6050
      %7051 = vmatpush1.bf16.msra.mxu0 %v6049
      %7052 = vmatprep.subr.bf16.mxu0 %v6048
      %7053 = vmatpush1.bf16.msra.mxu0 %v6047
      %7054 = vmatprep.subr.bf16.mxu0 %v6046
      %7055 = vmatpush1.bf16.msra.mxu0 %v6045
      %7056 = vmatprep.subr.bf16.mxu0 %v6076
      %7057 = vmatpush2.bf16.msra.mxu0 %v6075
      %7058 = vmatprep.subr.bf16.mxu0 %v6074
      %7059 = vmatpush2.bf16.msra.mxu0 %v6073
      %7060 = vmatprep.subr.bf16.mxu0 %v6072
      %7061 = vmatpush2.bf16.msra.mxu0 %v6071
      %7062 = vmatprep.subr.bf16.mxu0 %v6070
      %7063 = vmatpush2.bf16.msra.mxu0 %v6069
      %7064 = vmatprep.subr.bf16.mxu0 %v6068
      %7065 = vmatpush2.bf16.msra.mxu0 %v6067
      %7066 = vmatprep.subr.bf16.mxu0 %v6066
      %7067 = vmatpush2.bf16.msra.mxu0 %v6065
      %7068 = vmatprep.subr.bf16.mxu0 %v6064
      %7069 = vmatpush2.bf16.msra.mxu0 %v6063
      %7070 = vmatprep.subr.bf16.mxu0 %v6062
      %7071 = vmatpush2.bf16.msra.mxu0 %v6061
      %7072 = vmatprep.mubr.bf16.mxu0 %v1584
      %7073 = vmatmul.mubr.bf16.gmra.mxu0 %v1583
      %v7074 = vpop.f32.mrf.mxu0
      %v7075 = vadd.f32 %v6882, %v7074
      %v7076 = vpop.f32.mrf.mxu0
      %v7077 = vadd.f32 %v6884, %v7076
      %v7078 = vpop.f32.mrf.mxu0
      %v7079 = vadd.f32 %v6886, %v7078
      %v7080 = vpop.f32.mrf.mxu0
      %v7081 = vadd.f32 %v6888, %v7080
      %7082 = vmatprep.mubr.bf16.mxu0 %v1600
      %7083 = vmatmul.mubr.bf16.gmra.mxu0 %v1599
      %v7084 = vpop.f32.mrf.mxu0
      %v7085 = vadd.f32 %v6892, %v7084
      %v7086 = vpop.f32.mrf.mxu0
      %v7087 = vadd.f32 %v6894, %v7086
      %v7088 = vpop.f32.mrf.mxu0
      %v7089 = vadd.f32 %v6896, %v7088
      %v7090 = vpop.f32.mrf.mxu0
      %v7091 = vadd.f32 %v6898, %v7090
      %7092 = vmatprep.mubr.bf16.mxu0 %v1616
      %7093 = vmatmul.mubr.bf16.gmra.mxu0 %v1615
      %v7094 = vpop.f32.mrf.mxu0
      %v7095 = vadd.f32 %v6902, %v7094
      %v7096 = vpop.f32.mrf.mxu0
      %v7097 = vadd.f32 %v6904, %v7096
      %v7098 = vpop.f32.mrf.mxu0
      %v7099 = vadd.f32 %v6906, %v7098
      %v7100 = vpop.f32.mrf.mxu0
      %v7101 = vadd.f32 %v6908, %v7100
      %7102 = vmatprep.mubr.bf16.mxu0 %v1632
      %7103 = vmatmul.mubr.bf16.gmra.mxu0 %v1631
      %v7104 = vpop.f32.mrf.mxu0
      %v7105 = vadd.f32 %v6912, %v7104
      %v7106 = vpop.f32.mrf.mxu0
      %v7107 = vadd.f32 %v6914, %v7106
      %v7108 = vpop.f32.mrf.mxu0
      %v7109 = vadd.f32 %v6916, %v7108
      %v7110 = vpop.f32.mrf.mxu0
      %v7111 = vadd.f32 %v6918, %v7110
      %7112 = vmatprep.mubr.bf16.mxu0 %v1648
      %7113 = vmatmul.mubr.bf16.gmra.mxu0 %v1647
      %v7114 = vpop.f32.mrf.mxu0
      %v7115 = vadd.f32 %v6922, %v7114
      %v7116 = vpop.f32.mrf.mxu0
      %v7117 = vadd.f32 %v6924, %v7116
      %v7118 = vpop.f32.mrf.mxu0
      %v7119 = vadd.f32 %v6926, %v7118
      %v7120 = vpop.f32.mrf.mxu0
      %v7121 = vadd.f32 %v6928, %v7120
      %7122 = vmatprep.mubr.bf16.mxu0 %v1664
      %7123 = vmatmul.mubr.bf16.gmra.mxu0 %v1663
      %v7124 = vpop.f32.mrf.mxu0
      %v7125 = vadd.f32 %v6932, %v7124
      %v7126 = vpop.f32.mrf.mxu0
      %v7127 = vadd.f32 %v6934, %v7126
      %v7128 = vpop.f32.mrf.mxu0
      %v7129 = vadd.f32 %v6936, %v7128
      %v7130 = vpop.f32.mrf.mxu0
      %v7131 = vadd.f32 %v6938, %v7130
      %7132 = vmatprep.mubr.bf16.mxu0 %v1680
      %7133 = vmatmul.mubr.bf16.gmra.mxu0 %v1679
      %v7134 = vpop.f32.mrf.mxu0
      %v7135 = vadd.f32 %v6942, %v7134
      %v7136 = vpop.f32.mrf.mxu0
      %v7137 = vadd.f32 %v6944, %v7136
      %v7138 = vpop.f32.mrf.mxu0
      %v7139 = vadd.f32 %v6946, %v7138
      %v7140 = vpop.f32.mrf.mxu0
      %v7141 = vadd.f32 %v6948, %v7140
      %7142 = vmatprep.mubr.bf16.mxu0 %v1696
      %7143 = vmatmul.mubr.bf16.gmra.mxu0 %v1695
      %v7144 = vpop.f32.mrf.mxu0
      %v7145 = vadd.f32 %v6952, %v7144
      %v7146 = vpop.f32.mrf.mxu0
      %v7147 = vadd.f32 %v6954, %v7146
      %v7148 = vpop.f32.mrf.mxu0
      %v7149 = vadd.f32 %v6956, %v7148
      %v7150 = vpop.f32.mrf.mxu0
      %v7151 = vadd.f32 %v6958, %v7150
      %7152 = vmatprep.mubr.bf16.mxu0 %v1712
      %7153 = vmatmul.mubr.bf16.gmra.mxu0 %v1711
      %v7154 = vpop.f32.mrf.mxu0
      %v7155 = vadd.f32 %v6962, %v7154
      %v7156 = vpop.f32.mrf.mxu0
      %v7157 = vadd.f32 %v6964, %v7156
      %v7158 = vpop.f32.mrf.mxu0
      %v7159 = vadd.f32 %v6966, %v7158
      %v7160 = vpop.f32.mrf.mxu0
      %v7161 = vadd.f32 %v6968, %v7160
      %7162 = vmatprep.mubr.bf16.mxu0 %v1728
      %7163 = vmatmul.mubr.bf16.gmra.mxu0 %v1727
      %v7164 = vpop.f32.mrf.mxu0
      %v7165 = vadd.f32 %v6972, %v7164
      %v7166 = vpop.f32.mrf.mxu0
      %v7167 = vadd.f32 %v6974, %v7166
      %v7168 = vpop.f32.mrf.mxu0
      %v7169 = vadd.f32 %v6976, %v7168
      %v7170 = vpop.f32.mrf.mxu0
      %v7171 = vadd.f32 %v6978, %v7170
      %7172 = vmatprep.mubr.bf16.mxu0 %v1744
      %7173 = vmatmul.mubr.bf16.gmra.mxu0 %v1743
      %v7174 = vpop.f32.mrf.mxu0
      %v7175 = vadd.f32 %v6982, %v7174
      %v7176 = vpop.f32.mrf.mxu0
      %v7177 = vadd.f32 %v6984, %v7176
      %v7178 = vpop.f32.mrf.mxu0
      %v7179 = vadd.f32 %v6986, %v7178
      %v7180 = vpop.f32.mrf.mxu0
      %v7181 = vadd.f32 %v6988, %v7180
      %7182 = vmatprep.mubr.bf16.mxu0 %v1760
      %7183 = vmatmul.mubr.bf16.gmra.mxu0 %v1759
      %v7184 = vpop.f32.mrf.mxu0
      %v7185 = vadd.f32 %v6992, %v7184
      %v7186 = vpop.f32.mrf.mxu0
      %v7187 = vadd.f32 %v6994, %v7186
      %v7188 = vpop.f32.mrf.mxu0
      %v7189 = vadd.f32 %v6996, %v7188
      %v7190 = vpop.f32.mrf.mxu0
      %v7191 = vadd.f32 %v6998, %v7190
      %7192 = vmatprep.mubr.bf16.mxu0 %v1776
      %7193 = vmatmul.mubr.bf16.gmra.mxu0 %v1775
      %v7194 = vpop.f32.mrf.mxu0
      %v7195 = vadd.f32 %v7002, %v7194
      %v7196 = vpop.f32.mrf.mxu0
      %v7197 = vadd.f32 %v7004, %v7196
      %v7198 = vpop.f32.mrf.mxu0
      %v7199 = vadd.f32 %v7006, %v7198
      %v7200 = vpop.f32.mrf.mxu0
      %v7201 = vadd.f32 %v7008, %v7200
      %7202 = vmatprep.mubr.bf16.mxu0 %v1792
      %7203 = vmatmul.mubr.bf16.gmra.mxu0 %v1791
      %v7204 = vpop.f32.mrf.mxu0
      %v7205 = vadd.f32 %v7012, %v7204
      %v7206 = vpop.f32.mrf.mxu0
      %v7207 = vadd.f32 %v7014, %v7206
      %v7208 = vpop.f32.mrf.mxu0
      %v7209 = vadd.f32 %v7016, %v7208
      %v7210 = vpop.f32.mrf.mxu0
      %v7211 = vadd.f32 %v7018, %v7210
      %7212 = vmatprep.mubr.bf16.mxu0 %v1808
      %7213 = vmatmul.mubr.bf16.gmra.mxu0 %v1807
      %v7214 = vpop.f32.mrf.mxu0
      %v7215 = vadd.f32 %v7022, %v7214
      %v7216 = vpop.f32.mrf.mxu0
      %v7217 = vadd.f32 %v7024, %v7216
      %v7218 = vpop.f32.mrf.mxu0
      %v7219 = vadd.f32 %v7026, %v7218
      %v7220 = vpop.f32.mrf.mxu0
      %v7221 = vadd.f32 %v7028, %v7220
      %7222 = vmatprep.mubr.bf16.mxu0 %v1824
      %7223 = vmatmul.mubr.bf16.gmra.mxu0 %v1823
      %v7224 = vpop.f32.mrf.mxu0
      %v7225 = vadd.f32 %v7032, %v7224
      %v7226 = vpop.f32.mrf.mxu0
      %v7227 = vadd.f32 %v7034, %v7226
      %v7228 = vpop.f32.mrf.mxu0
      %v7229 = vadd.f32 %v7036, %v7228
      %v7230 = vpop.f32.mrf.mxu0
      %v7231 = vadd.f32 %v7038, %v7230
      %7232 = vdwg.mxu0
      %7233 = vmatprep.subr.bf16.mxu0 %v6092
      %7234 = vmatpush1.bf16.msra.mxu0 %v6091
      %7235 = vmatprep.subr.bf16.mxu0 %v6090
      %7236 = vmatpush1.bf16.msra.mxu0 %v6089
      %7237 = vmatprep.subr.bf16.mxu0 %v6088
      %7238 = vmatpush1.bf16.msra.mxu0 %v6087
      %7239 = vmatprep.subr.bf16.mxu0 %v6086
      %7240 = vmatpush1.bf16.msra.mxu0 %v6085
      %7241 = vmatprep.subr.bf16.mxu0 %v6084
      %7242 = vmatpush1.bf16.msra.mxu0 %v6083
      %7243 = vmatprep.subr.bf16.mxu0 %v6082
      %7244 = vmatpush1.bf16.msra.mxu0 %v6081
      %7245 = vmatprep.subr.bf16.mxu0 %v6080
      %7246 = vmatpush1.bf16.msra.mxu0 %v6079
      %7247 = vmatprep.subr.bf16.mxu0 %v6078
      %7248 = vmatpush1.bf16.msra.mxu0 %v6077
      %7249 = vmatprep.subr.bf16.mxu0 %v6108
      %7250 = vmatpush2.bf16.msra.mxu0 %v6107
      %7251 = vmatprep.subr.bf16.mxu0 %v6106
      %7252 = vmatpush2.bf16.msra.mxu0 %v6105
      %7253 = vmatprep.subr.bf16.mxu0 %v6104
      %7254 = vmatpush2.bf16.msra.mxu0 %v6103
      %7255 = vmatprep.subr.bf16.mxu0 %v6102
      %7256 = vmatpush2.bf16.msra.mxu0 %v6101
      %7257 = vmatprep.subr.bf16.mxu0 %v6100
      %7258 = vmatpush2.bf16.msra.mxu0 %v6099
      %7259 = vmatprep.subr.bf16.mxu0 %v6098
      %7260 = vmatpush2.bf16.msra.mxu0 %v6097
      %7261 = vmatprep.subr.bf16.mxu0 %v6096
      %7262 = vmatpush2.bf16.msra.mxu0 %v6095
      %7263 = vmatprep.subr.bf16.mxu0 %v6094
      %7264 = vmatpush2.bf16.msra.mxu0 %v6093
      %7265 = vmatprep.mubr.bf16.mxu0 %v1586
      %7266 = vmatmul.mubr.bf16.gmra.mxu0 %v1585
      %v7267 = vpop.f32.mrf.mxu0
      %v7268 = vadd.f32 %v7075, %v7267
      %v7269 = vpop.f32.mrf.mxu0
      %v7270 = vadd.f32 %v7077, %v7269
      %v7271 = vpop.f32.mrf.mxu0
      %v7272 = vadd.f32 %v7079, %v7271
      %v7273 = vpop.f32.mrf.mxu0
      %v7274 = vadd.f32 %v7081, %v7273
      %7275 = vmatprep.mubr.bf16.mxu0 %v1602
      %7276 = vmatmul.mubr.bf16.gmra.mxu0 %v1601
      %v7277 = vpop.f32.mrf.mxu0
      %v7278 = vadd.f32 %v7085, %v7277
      %v7279 = vpop.f32.mrf.mxu0
      %v7280 = vadd.f32 %v7087, %v7279
      %v7281 = vpop.f32.mrf.mxu0
      %v7282 = vadd.f32 %v7089, %v7281
      %v7283 = vpop.f32.mrf.mxu0
      %v7284 = vadd.f32 %v7091, %v7283
      %7285 = vmatprep.mubr.bf16.mxu0 %v1618
      %7286 = vmatmul.mubr.bf16.gmra.mxu0 %v1617
      %v7287 = vpop.f32.mrf.mxu0
      %v7288 = vadd.f32 %v7095, %v7287
      %v7289 = vpop.f32.mrf.mxu0
      %v7290 = vadd.f32 %v7097, %v7289
      %v7291 = vpop.f32.mrf.mxu0
      %v7292 = vadd.f32 %v7099, %v7291
      %v7293 = vpop.f32.mrf.mxu0
      %v7294 = vadd.f32 %v7101, %v7293
      %7295 = vmatprep.mubr.bf16.mxu0 %v1634
      %7296 = vmatmul.mubr.bf16.gmra.mxu0 %v1633
      %v7297 = vpop.f32.mrf.mxu0
      %v7298 = vadd.f32 %v7105, %v7297
      %v7299 = vpop.f32.mrf.mxu0
      %v7300 = vadd.f32 %v7107, %v7299
      %v7301 = vpop.f32.mrf.mxu0
      %v7302 = vadd.f32 %v7109, %v7301
      %v7303 = vpop.f32.mrf.mxu0
      %v7304 = vadd.f32 %v7111, %v7303
      %7305 = vmatprep.mubr.bf16.mxu0 %v1650
      %7306 = vmatmul.mubr.bf16.gmra.mxu0 %v1649
      %v7307 = vpop.f32.mrf.mxu0
      %v7308 = vadd.f32 %v7115, %v7307
      %v7309 = vpop.f32.mrf.mxu0
      %v7310 = vadd.f32 %v7117, %v7309
      %v7311 = vpop.f32.mrf.mxu0
      %v7312 = vadd.f32 %v7119, %v7311
      %v7313 = vpop.f32.mrf.mxu0
      %v7314 = vadd.f32 %v7121, %v7313
      %7315 = vmatprep.mubr.bf16.mxu0 %v1666
      %7316 = vmatmul.mubr.bf16.gmra.mxu0 %v1665
      %v7317 = vpop.f32.mrf.mxu0
      %v7318 = vadd.f32 %v7125, %v7317
      %v7319 = vpop.f32.mrf.mxu0
      %v7320 = vadd.f32 %v7127, %v7319
      %v7321 = vpop.f32.mrf.mxu0
      %v7322 = vadd.f32 %v7129, %v7321
      %v7323 = vpop.f32.mrf.mxu0
      %v7324 = vadd.f32 %v7131, %v7323
      %7325 = vmatprep.mubr.bf16.mxu0 %v1682
      %7326 = vmatmul.mubr.bf16.gmra.mxu0 %v1681
      %v7327 = vpop.f32.mrf.mxu0
      %v7328 = vadd.f32 %v7135, %v7327
      %v7329 = vpop.f32.mrf.mxu0
      %v7330 = vadd.f32 %v7137, %v7329
      %v7331 = vpop.f32.mrf.mxu0
      %v7332 = vadd.f32 %v7139, %v7331
      %v7333 = vpop.f32.mrf.mxu0
      %v7334 = vadd.f32 %v7141, %v7333
      %7335 = vmatprep.mubr.bf16.mxu0 %v1698
      %7336 = vmatmul.mubr.bf16.gmra.mxu0 %v1697
      %v7337 = vpop.f32.mrf.mxu0
      %v7338 = vadd.f32 %v7145, %v7337
      %v7339 = vpop.f32.mrf.mxu0
      %v7340 = vadd.f32 %v7147, %v7339
      %v7341 = vpop.f32.mrf.mxu0
      %v7342 = vadd.f32 %v7149, %v7341
      %v7343 = vpop.f32.mrf.mxu0
      %v7344 = vadd.f32 %v7151, %v7343
      %7345 = vmatprep.mubr.bf16.mxu0 %v1714
      %7346 = vmatmul.mubr.bf16.gmra.mxu0 %v1713
      %v7347 = vpop.f32.mrf.mxu0
      %v7348 = vadd.f32 %v7155, %v7347
      %v7349 = vpop.f32.mrf.mxu0
      %v7350 = vadd.f32 %v7157, %v7349
      %v7351 = vpop.f32.mrf.mxu0
      %v7352 = vadd.f32 %v7159, %v7351
      %v7353 = vpop.f32.mrf.mxu0
      %v7354 = vadd.f32 %v7161, %v7353
      %7355 = vmatprep.mubr.bf16.mxu0 %v1730
      %7356 = vmatmul.mubr.bf16.gmra.mxu0 %v1729
      %v7357 = vpop.f32.mrf.mxu0
      %v7358 = vadd.f32 %v7165, %v7357
      %v7359 = vpop.f32.mrf.mxu0
      %v7360 = vadd.f32 %v7167, %v7359
      %v7361 = vpop.f32.mrf.mxu0
      %v7362 = vadd.f32 %v7169, %v7361
      %v7363 = vpop.f32.mrf.mxu0
      %v7364 = vadd.f32 %v7171, %v7363
      %7365 = vmatprep.mubr.bf16.mxu0 %v1746
      %7366 = vmatmul.mubr.bf16.gmra.mxu0 %v1745
      %v7367 = vpop.f32.mrf.mxu0
      %v7368 = vadd.f32 %v7175, %v7367
      %v7369 = vpop.f32.mrf.mxu0
      %v7370 = vadd.f32 %v7177, %v7369
      %v7371 = vpop.f32.mrf.mxu0
      %v7372 = vadd.f32 %v7179, %v7371
      %v7373 = vpop.f32.mrf.mxu0
      %v7374 = vadd.f32 %v7181, %v7373
      %7375 = vmatprep.mubr.bf16.mxu0 %v1762
      %7376 = vmatmul.mubr.bf16.gmra.mxu0 %v1761
      %v7377 = vpop.f32.mrf.mxu0
      %v7378 = vadd.f32 %v7185, %v7377
      %v7379 = vpop.f32.mrf.mxu0
      %v7380 = vadd.f32 %v7187, %v7379
      %v7381 = vpop.f32.mrf.mxu0
      %v7382 = vadd.f32 %v7189, %v7381
      %v7383 = vpop.f32.mrf.mxu0
      %v7384 = vadd.f32 %v7191, %v7383
      %7385 = vmatprep.mubr.bf16.mxu0 %v1778
      %7386 = vmatmul.mubr.bf16.gmra.mxu0 %v1777
      %v7387 = vpop.f32.mrf.mxu0
      %v7388 = vadd.f32 %v7195, %v7387
      %v7389 = vpop.f32.mrf.mxu0
      %v7390 = vadd.f32 %v7197, %v7389
      %v7391 = vpop.f32.mrf.mxu0
      %v7392 = vadd.f32 %v7199, %v7391
      %v7393 = vpop.f32.mrf.mxu0
      %v7394 = vadd.f32 %v7201, %v7393
      %7395 = vmatprep.mubr.bf16.mxu0 %v1794
      %7396 = vmatmul.mubr.bf16.gmra.mxu0 %v1793
      %v7397 = vpop.f32.mrf.mxu0
      %v7398 = vadd.f32 %v7205, %v7397
      %v7399 = vpop.f32.mrf.mxu0
      %v7400 = vadd.f32 %v7207, %v7399
      %v7401 = vpop.f32.mrf.mxu0
      %v7402 = vadd.f32 %v7209, %v7401
      %v7403 = vpop.f32.mrf.mxu0
      %v7404 = vadd.f32 %v7211, %v7403
      %7405 = vmatprep.mubr.bf16.mxu0 %v1810
      %7406 = vmatmul.mubr.bf16.gmra.mxu0 %v1809
      %v7407 = vpop.f32.mrf.mxu0
      %v7408 = vadd.f32 %v7215, %v7407
      %v7409 = vpop.f32.mrf.mxu0
      %v7410 = vadd.f32 %v7217, %v7409
      %v7411 = vpop.f32.mrf.mxu0
      %v7412 = vadd.f32 %v7219, %v7411
      %v7413 = vpop.f32.mrf.mxu0
      %v7414 = vadd.f32 %v7221, %v7413
      %7415 = vmatprep.mubr.bf16.mxu0 %v1826
      %7416 = vmatmul.mubr.bf16.gmra.mxu0 %v1825
      %v7417 = vpop.f32.mrf.mxu0
      %v7418 = vadd.f32 %v7225, %v7417
      %v7419 = vpop.f32.mrf.mxu0
      %v7420 = vadd.f32 %v7227, %v7419
      %v7421 = vpop.f32.mrf.mxu0
      %v7422 = vadd.f32 %v7229, %v7421
      %v7423 = vpop.f32.mrf.mxu0
      %v7424 = vadd.f32 %v7231, %v7423
      %7425 = vdwg.mxu0
      %7426 = vmatprep.subr.bf16.mxu0 %v6124
      %7427 = vmatpush1.bf16.msra.mxu0 %v6123
      %7428 = vmatprep.subr.bf16.mxu0 %v6122
      %7429 = vmatpush1.bf16.msra.mxu0 %v6121
      %7430 = vmatprep.subr.bf16.mxu0 %v6120
      %7431 = vmatpush1.bf16.msra.mxu0 %v6119
      %7432 = vmatprep.subr.bf16.mxu0 %v6118
      %7433 = vmatpush1.bf16.msra.mxu0 %v6117
      %7434 = vmatprep.subr.bf16.mxu0 %v6116
      %7435 = vmatpush1.bf16.msra.mxu0 %v6115
      %7436 = vmatprep.subr.bf16.mxu0 %v6114
      %7437 = vmatpush1.bf16.msra.mxu0 %v6113
      %7438 = vmatprep.subr.bf16.mxu0 %v6112
      %7439 = vmatpush1.bf16.msra.mxu0 %v6111
      %7440 = vmatprep.subr.bf16.mxu0 %v6110
      %7441 = vmatpush1.bf16.msra.mxu0 %v6109
      %7442 = vmatprep.subr.bf16.mxu0 %v6140
      %7443 = vmatpush2.bf16.msra.mxu0 %v6139
      %7444 = vmatprep.subr.bf16.mxu0 %v6138
      %7445 = vmatpush2.bf16.msra.mxu0 %v6137
      %7446 = vmatprep.subr.bf16.mxu0 %v6136
      %7447 = vmatpush2.bf16.msra.mxu0 %v6135
      %7448 = vmatprep.subr.bf16.mxu0 %v6134
      %7449 = vmatpush2.bf16.msra.mxu0 %v6133
      %7450 = vmatprep.subr.bf16.mxu0 %v6132
      %7451 = vmatpush2.bf16.msra.mxu0 %v6131
      %7452 = vmatprep.subr.bf16.mxu0 %v6130
      %7453 = vmatpush2.bf16.msra.mxu0 %v6129
      %7454 = vmatprep.subr.bf16.mxu0 %v6128
      %7455 = vmatpush2.bf16.msra.mxu0 %v6127
      %7456 = vmatprep.subr.bf16.mxu0 %v6126
      %7457 = vmatpush2.bf16.msra.mxu0 %v6125
      %7458 = vmatprep.mubr.bf16.mxu0 %v1588
      %7459 = vmatmul.mubr.bf16.gmra.mxu0 %v1587
      %v7460 = vpop.f32.mrf.mxu0
      %v7461 = vadd.f32 %v7268, %v7460
      %v7462 = vpop.f32.mrf.mxu0
      %v7463 = vadd.f32 %v7270, %v7462
      %v7464 = vpop.f32.mrf.mxu0
      %v7465 = vadd.f32 %v7272, %v7464
      %v7466 = vpop.f32.mrf.mxu0
      %v7467 = vadd.f32 %v7274, %v7466
      %7468 = vmatprep.mubr.bf16.mxu0 %v1604
      %7469 = vmatmul.mubr.bf16.gmra.mxu0 %v1603
      %v7470 = vpop.f32.mrf.mxu0
      %v7471 = vadd.f32 %v7278, %v7470
      %v7472 = vpop.f32.mrf.mxu0
      %v7473 = vadd.f32 %v7280, %v7472
      %v7474 = vpop.f32.mrf.mxu0
      %v7475 = vadd.f32 %v7282, %v7474
      %v7476 = vpop.f32.mrf.mxu0
      %v7477 = vadd.f32 %v7284, %v7476
      %7478 = vmatprep.mubr.bf16.mxu0 %v1620
      %7479 = vmatmul.mubr.bf16.gmra.mxu0 %v1619
      %v7480 = vpop.f32.mrf.mxu0
      %v7481 = vadd.f32 %v7288, %v7480
      %v7482 = vpop.f32.mrf.mxu0
      %v7483 = vadd.f32 %v7290, %v7482
      %v7484 = vpop.f32.mrf.mxu0
      %v7485 = vadd.f32 %v7292, %v7484
      %v7486 = vpop.f32.mrf.mxu0
      %v7487 = vadd.f32 %v7294, %v7486
      %7488 = vmatprep.mubr.bf16.mxu0 %v1636
      %7489 = vmatmul.mubr.bf16.gmra.mxu0 %v1635
      %v7490 = vpop.f32.mrf.mxu0
      %v7491 = vadd.f32 %v7298, %v7490
      %v7492 = vpop.f32.mrf.mxu0
      %v7493 = vadd.f32 %v7300, %v7492
      %v7494 = vpop.f32.mrf.mxu0
      %v7495 = vadd.f32 %v7302, %v7494
      %v7496 = vpop.f32.mrf.mxu0
      %v7497 = vadd.f32 %v7304, %v7496
      %7498 = vmatprep.mubr.bf16.mxu0 %v1652
      %7499 = vmatmul.mubr.bf16.gmra.mxu0 %v1651
      %v7500 = vpop.f32.mrf.mxu0
      %v7501 = vadd.f32 %v7308, %v7500
      %v7502 = vpop.f32.mrf.mxu0
      %v7503 = vadd.f32 %v7310, %v7502
      %v7504 = vpop.f32.mrf.mxu0
      %v7505 = vadd.f32 %v7312, %v7504
      %v7506 = vpop.f32.mrf.mxu0
      %v7507 = vadd.f32 %v7314, %v7506
      %7508 = vmatprep.mubr.bf16.mxu0 %v1668
      %7509 = vmatmul.mubr.bf16.gmra.mxu0 %v1667
      %v7510 = vpop.f32.mrf.mxu0
      %v7511 = vadd.f32 %v7318, %v7510
      %v7512 = vpop.f32.mrf.mxu0
      %v7513 = vadd.f32 %v7320, %v7512
      %v7514 = vpop.f32.mrf.mxu0
      %v7515 = vadd.f32 %v7322, %v7514
      %v7516 = vpop.f32.mrf.mxu0
      %v7517 = vadd.f32 %v7324, %v7516
      %7518 = vmatprep.mubr.bf16.mxu0 %v1684
      %7519 = vmatmul.mubr.bf16.gmra.mxu0 %v1683
      %v7520 = vpop.f32.mrf.mxu0
      %v7521 = vadd.f32 %v7328, %v7520
      %v7522 = vpop.f32.mrf.mxu0
      %v7523 = vadd.f32 %v7330, %v7522
      %v7524 = vpop.f32.mrf.mxu0
      %v7525 = vadd.f32 %v7332, %v7524
      %v7526 = vpop.f32.mrf.mxu0
      %v7527 = vadd.f32 %v7334, %v7526
      %7528 = vmatprep.mubr.bf16.mxu0 %v1700
      %7529 = vmatmul.mubr.bf16.gmra.mxu0 %v1699
      %v7530 = vpop.f32.mrf.mxu0
      %v7531 = vadd.f32 %v7338, %v7530
      %v7532 = vpop.f32.mrf.mxu0
      %v7533 = vadd.f32 %v7340, %v7532
      %v7534 = vpop.f32.mrf.mxu0
      %v7535 = vadd.f32 %v7342, %v7534
      %v7536 = vpop.f32.mrf.mxu0
      %v7537 = vadd.f32 %v7344, %v7536
      %7538 = vmatprep.mubr.bf16.mxu0 %v1716
      %7539 = vmatmul.mubr.bf16.gmra.mxu0 %v1715
      %v7540 = vpop.f32.mrf.mxu0
      %v7541 = vadd.f32 %v7348, %v7540
      %v7542 = vpop.f32.mrf.mxu0
      %v7543 = vadd.f32 %v7350, %v7542
      %v7544 = vpop.f32.mrf.mxu0
      %v7545 = vadd.f32 %v7352, %v7544
      %v7546 = vpop.f32.mrf.mxu0
      %v7547 = vadd.f32 %v7354, %v7546
      %7548 = vmatprep.mubr.bf16.mxu0 %v1732
      %7549 = vmatmul.mubr.bf16.gmra.mxu0 %v1731
      %v7550 = vpop.f32.mrf.mxu0
      %v7551 = vadd.f32 %v7358, %v7550
      %v7552 = vpop.f32.mrf.mxu0
      %v7553 = vadd.f32 %v7360, %v7552
      %v7554 = vpop.f32.mrf.mxu0
      %v7555 = vadd.f32 %v7362, %v7554
      %v7556 = vpop.f32.mrf.mxu0
      %v7557 = vadd.f32 %v7364, %v7556
      %7558 = vmatprep.mubr.bf16.mxu0 %v1748
      %7559 = vmatmul.mubr.bf16.gmra.mxu0 %v1747
      %v7560 = vpop.f32.mrf.mxu0
      %v7561 = vadd.f32 %v7368, %v7560
      %v7562 = vpop.f32.mrf.mxu0
      %v7563 = vadd.f32 %v7370, %v7562
      %v7564 = vpop.f32.mrf.mxu0
      %v7565 = vadd.f32 %v7372, %v7564
      %v7566 = vpop.f32.mrf.mxu0
      %v7567 = vadd.f32 %v7374, %v7566
      %7568 = vmatprep.mubr.bf16.mxu0 %v1764
      %7569 = vmatmul.mubr.bf16.gmra.mxu0 %v1763
      %v7570 = vpop.f32.mrf.mxu0
      %v7571 = vadd.f32 %v7378, %v7570
      %v7572 = vpop.f32.mrf.mxu0
      %v7573 = vadd.f32 %v7380, %v7572
      %v7574 = vpop.f32.mrf.mxu0
      %v7575 = vadd.f32 %v7382, %v7574
      %v7576 = vpop.f32.mrf.mxu0
      %v7577 = vadd.f32 %v7384, %v7576
      %7578 = vmatprep.mubr.bf16.mxu0 %v1780
      %7579 = vmatmul.mubr.bf16.gmra.mxu0 %v1779
      %v7580 = vpop.f32.mrf.mxu0
      %v7581 = vadd.f32 %v7388, %v7580
      %v7582 = vpop.f32.mrf.mxu0
      %v7583 = vadd.f32 %v7390, %v7582
      %v7584 = vpop.f32.mrf.mxu0
      %v7585 = vadd.f32 %v7392, %v7584
      %v7586 = vpop.f32.mrf.mxu0
      %v7587 = vadd.f32 %v7394, %v7586
      %7588 = vmatprep.mubr.bf16.mxu0 %v1796
      %7589 = vmatmul.mubr.bf16.gmra.mxu0 %v1795
      %v7590 = vpop.f32.mrf.mxu0
      %v7591 = vadd.f32 %v7398, %v7590
      %v7592 = vpop.f32.mrf.mxu0
      %v7593 = vadd.f32 %v7400, %v7592
      %v7594 = vpop.f32.mrf.mxu0
      %v7595 = vadd.f32 %v7402, %v7594
      %v7596 = vpop.f32.mrf.mxu0
      %v7597 = vadd.f32 %v7404, %v7596
      %7598 = vmatprep.mubr.bf16.mxu0 %v1812
      %7599 = vmatmul.mubr.bf16.gmra.mxu0 %v1811
      %v7600 = vpop.f32.mrf.mxu0
      %v7601 = vadd.f32 %v7408, %v7600
      %v7602 = vpop.f32.mrf.mxu0
      %v7603 = vadd.f32 %v7410, %v7602
      %v7604 = vpop.f32.mrf.mxu0
      %v7605 = vadd.f32 %v7412, %v7604
      %v7606 = vpop.f32.mrf.mxu0
      %v7607 = vadd.f32 %v7414, %v7606
      %7608 = vmatprep.mubr.bf16.mxu0 %v1828
      %7609 = vmatmul.mubr.bf16.gmra.mxu0 %v1827
      %v7610 = vpop.f32.mrf.mxu0
      %v7611 = vadd.f32 %v7418, %v7610
      %v7612 = vpop.f32.mrf.mxu0
      %v7613 = vadd.f32 %v7420, %v7612
      %v7614 = vpop.f32.mrf.mxu0
      %v7615 = vadd.f32 %v7422, %v7614
      %v7616 = vpop.f32.mrf.mxu0
      %v7617 = vadd.f32 %v7424, %v7616
      %7618 = vdwg.mxu0
      %7619 = vmatprep.subr.bf16.mxu0 %v6156
      %7620 = vmatpush1.bf16.msra.mxu0 %v6155
      %7621 = vmatprep.subr.bf16.mxu0 %v6154
      %7622 = vmatpush1.bf16.msra.mxu0 %v6153
      %7623 = vmatprep.subr.bf16.mxu0 %v6152
      %7624 = vmatpush1.bf16.msra.mxu0 %v6151
      %7625 = vmatprep.subr.bf16.mxu0 %v6150
      %7626 = vmatpush1.bf16.msra.mxu0 %v6149
      %7627 = vmatprep.subr.bf16.mxu0 %v6148
      %7628 = vmatpush1.bf16.msra.mxu0 %v6147
      %7629 = vmatprep.subr.bf16.mxu0 %v6146
      %7630 = vmatpush1.bf16.msra.mxu0 %v6145
      %7631 = vmatprep.subr.bf16.mxu0 %v6144
      %7632 = vmatpush1.bf16.msra.mxu0 %v6143
      %7633 = vmatprep.subr.bf16.mxu0 %v6142
      %7634 = vmatpush1.bf16.msra.mxu0 %v6141
      %7635 = vmatprep.subr.bf16.mxu0 %v6172
      %7636 = vmatpush2.bf16.msra.mxu0 %v6171
      %7637 = vmatprep.subr.bf16.mxu0 %v6170
      %7638 = vmatpush2.bf16.msra.mxu0 %v6169
      %7639 = vmatprep.subr.bf16.mxu0 %v6168
      %7640 = vmatpush2.bf16.msra.mxu0 %v6167
      %7641 = vmatprep.subr.bf16.mxu0 %v6166
      %7642 = vmatpush2.bf16.msra.mxu0 %v6165
      %7643 = vmatprep.subr.bf16.mxu0 %v6164
      %7644 = vmatpush2.bf16.msra.mxu0 %v6163
      %7645 = vmatprep.subr.bf16.mxu0 %v6162
      %7646 = vmatpush2.bf16.msra.mxu0 %v6161
      %7647 = vmatprep.subr.bf16.mxu0 %v6160
      %7648 = vmatpush2.bf16.msra.mxu0 %v6159
      %7649 = vmatprep.subr.bf16.mxu0 %v6158
      %7650 = vmatpush2.bf16.msra.mxu0 %v6157
      %7651 = vmatprep.mubr.bf16.mxu0 %v1590
      %7652 = vmatmul.mubr.bf16.gmra.mxu0 %v1589
      %v7653 = vpop.f32.mrf.mxu0
      %v7654 = vadd.f32 %v7461, %v7653
      %v7655 = vpop.f32.mrf.mxu0
      %v7656 = vadd.f32 %v7463, %v7655
      %v7657 = vpop.f32.mrf.mxu0
      %v7658 = vadd.f32 %v7465, %v7657
      %v7659 = vpop.f32.mrf.mxu0
      %v7660 = vadd.f32 %v7467, %v7659
      %7661 = vmatprep.mubr.bf16.mxu0 %v1606
      %7662 = vmatmul.mubr.bf16.gmra.mxu0 %v1605
      %v7663 = vpop.f32.mrf.mxu0
      %v7664 = vadd.f32 %v7471, %v7663
      %v7665 = vpop.f32.mrf.mxu0
      %v7666 = vadd.f32 %v7473, %v7665
      %v7667 = vpop.f32.mrf.mxu0
      %v7668 = vadd.f32 %v7475, %v7667
      %v7669 = vpop.f32.mrf.mxu0
      %v7670 = vadd.f32 %v7477, %v7669
      %7671 = vmatprep.mubr.bf16.mxu0 %v1622
      %7672 = vmatmul.mubr.bf16.gmra.mxu0 %v1621
      %v7673 = vpop.f32.mrf.mxu0
      %v7674 = vadd.f32 %v7481, %v7673
      %v7675 = vpop.f32.mrf.mxu0
      %v7676 = vadd.f32 %v7483, %v7675
      %v7677 = vpop.f32.mrf.mxu0
      %v7678 = vadd.f32 %v7485, %v7677
      %v7679 = vpop.f32.mrf.mxu0
      %v7680 = vadd.f32 %v7487, %v7679
      %7681 = vmatprep.mubr.bf16.mxu0 %v1638
      %7682 = vmatmul.mubr.bf16.gmra.mxu0 %v1637
      %v7683 = vpop.f32.mrf.mxu0
      %v7684 = vadd.f32 %v7491, %v7683
      %v7685 = vpop.f32.mrf.mxu0
      %v7686 = vadd.f32 %v7493, %v7685
      %v7687 = vpop.f32.mrf.mxu0
      %v7688 = vadd.f32 %v7495, %v7687
      %v7689 = vpop.f32.mrf.mxu0
      %v7690 = vadd.f32 %v7497, %v7689
      %7691 = vmatprep.mubr.bf16.mxu0 %v1654
      %7692 = vmatmul.mubr.bf16.gmra.mxu0 %v1653
      %v7693 = vpop.f32.mrf.mxu0
      %v7694 = vadd.f32 %v7501, %v7693
      %v7695 = vpop.f32.mrf.mxu0
      %v7696 = vadd.f32 %v7503, %v7695
      %v7697 = vpop.f32.mrf.mxu0
      %v7698 = vadd.f32 %v7505, %v7697
      %v7699 = vpop.f32.mrf.mxu0
      %v7700 = vadd.f32 %v7507, %v7699
      %7701 = vmatprep.mubr.bf16.mxu0 %v1670
      %7702 = vmatmul.mubr.bf16.gmra.mxu0 %v1669
      %v7703 = vpop.f32.mrf.mxu0
      %v7704 = vadd.f32 %v7511, %v7703
      %v7705 = vpop.f32.mrf.mxu0
      %v7706 = vadd.f32 %v7513, %v7705
      %v7707 = vpop.f32.mrf.mxu0
      %v7708 = vadd.f32 %v7515, %v7707
      %v7709 = vpop.f32.mrf.mxu0
      %v7710 = vadd.f32 %v7517, %v7709
      %7711 = vmatprep.mubr.bf16.mxu0 %v1686
      %7712 = vmatmul.mubr.bf16.gmra.mxu0 %v1685
      %v7713 = vpop.f32.mrf.mxu0
      %v7714 = vadd.f32 %v7521, %v7713
      %v7715 = vpop.f32.mrf.mxu0
      %v7716 = vadd.f32 %v7523, %v7715
      %v7717 = vpop.f32.mrf.mxu0
      %v7718 = vadd.f32 %v7525, %v7717
      %v7719 = vpop.f32.mrf.mxu0
      %v7720 = vadd.f32 %v7527, %v7719
      %7721 = vmatprep.mubr.bf16.mxu0 %v1702
      %7722 = vmatmul.mubr.bf16.gmra.mxu0 %v1701
      %v7723 = vpop.f32.mrf.mxu0
      %v7724 = vadd.f32 %v7531, %v7723
      %v7725 = vpop.f32.mrf.mxu0
      %v7726 = vadd.f32 %v7533, %v7725
      %v7727 = vpop.f32.mrf.mxu0
      %v7728 = vadd.f32 %v7535, %v7727
      %v7729 = vpop.f32.mrf.mxu0
      %v7730 = vadd.f32 %v7537, %v7729
      %7731 = vmatprep.mubr.bf16.mxu0 %v1718
      %7732 = vmatmul.mubr.bf16.gmra.mxu0 %v1717
      %v7733 = vpop.f32.mrf.mxu0
      %v7734 = vadd.f32 %v7541, %v7733
      %v7735 = vpop.f32.mrf.mxu0
      %v7736 = vadd.f32 %v7543, %v7735
      %v7737 = vpop.f32.mrf.mxu0
      %v7738 = vadd.f32 %v7545, %v7737
      %v7739 = vpop.f32.mrf.mxu0
      %v7740 = vadd.f32 %v7547, %v7739
      %7741 = vmatprep.mubr.bf16.mxu0 %v1734
      %7742 = vmatmul.mubr.bf16.gmra.mxu0 %v1733
      %v7743 = vpop.f32.mrf.mxu0
      %v7744 = vadd.f32 %v7551, %v7743
      %v7745 = vpop.f32.mrf.mxu0
      %v7746 = vadd.f32 %v7553, %v7745
      %v7747 = vpop.f32.mrf.mxu0
      %v7748 = vadd.f32 %v7555, %v7747
      %v7749 = vpop.f32.mrf.mxu0
      %v7750 = vadd.f32 %v7557, %v7749
      %7751 = vmatprep.mubr.bf16.mxu0 %v1750
      %7752 = vmatmul.mubr.bf16.gmra.mxu0 %v1749
      %v7753 = vpop.f32.mrf.mxu0
      %v7754 = vadd.f32 %v7561, %v7753
      %v7755 = vpop.f32.mrf.mxu0
      %v7756 = vadd.f32 %v7563, %v7755
      %v7757 = vpop.f32.mrf.mxu0
      %v7758 = vadd.f32 %v7565, %v7757
      %v7759 = vpop.f32.mrf.mxu0
      %v7760 = vadd.f32 %v7567, %v7759
      %7761 = vmatprep.mubr.bf16.mxu0 %v1766
      %7762 = vmatmul.mubr.bf16.gmra.mxu0 %v1765
      %v7763 = vpop.f32.mrf.mxu0
      %v7764 = vadd.f32 %v7571, %v7763
      %v7765 = vpop.f32.mrf.mxu0
      %v7766 = vadd.f32 %v7573, %v7765
      %v7767 = vpop.f32.mrf.mxu0
      %v7768 = vadd.f32 %v7575, %v7767
      %v7769 = vpop.f32.mrf.mxu0
      %v7770 = vadd.f32 %v7577, %v7769
      %7771 = vmatprep.mubr.bf16.mxu0 %v1782
      %7772 = vmatmul.mubr.bf16.gmra.mxu0 %v1781
      %v7773 = vpop.f32.mrf.mxu0
      %v7774 = vadd.f32 %v7581, %v7773
      %v7775 = vpop.f32.mrf.mxu0
      %v7776 = vadd.f32 %v7583, %v7775
      %v7777 = vpop.f32.mrf.mxu0
      %v7778 = vadd.f32 %v7585, %v7777
      %v7779 = vpop.f32.mrf.mxu0
      %v7780 = vadd.f32 %v7587, %v7779
      %7781 = vmatprep.mubr.bf16.mxu0 %v1798
      %7782 = vmatmul.mubr.bf16.gmra.mxu0 %v1797
      %v7783 = vpop.f32.mrf.mxu0
      %v7784 = vadd.f32 %v7591, %v7783
      %v7785 = vpop.f32.mrf.mxu0
      %v7786 = vadd.f32 %v7593, %v7785
      %v7787 = vpop.f32.mrf.mxu0
      %v7788 = vadd.f32 %v7595, %v7787
      %v7789 = vpop.f32.mrf.mxu0
      %v7790 = vadd.f32 %v7597, %v7789
      %7791 = vmatprep.mubr.bf16.mxu0 %v1814
      %7792 = vmatmul.mubr.bf16.gmra.mxu0 %v1813
      %v7793 = vpop.f32.mrf.mxu0
      %v7794 = vadd.f32 %v7601, %v7793
      %v7795 = vpop.f32.mrf.mxu0
      %v7796 = vadd.f32 %v7603, %v7795
      %v7797 = vpop.f32.mrf.mxu0
      %v7798 = vadd.f32 %v7605, %v7797
      %v7799 = vpop.f32.mrf.mxu0
      %v7800 = vadd.f32 %v7607, %v7799
      %7801 = vmatprep.mubr.bf16.mxu0 %v1830
      %7802 = vmatmul.mubr.bf16.gmra.mxu0 %v1829
      %v7803 = vpop.f32.mrf.mxu0
      %v7804 = vadd.f32 %v7611, %v7803
      %v7805 = vpop.f32.mrf.mxu0
      %v7806 = vadd.f32 %v7613, %v7805
      %v7807 = vpop.f32.mrf.mxu0
      %v7808 = vadd.f32 %v7615, %v7807
      %v7809 = vpop.f32.mrf.mxu0
      %v7810 = vadd.f32 %v7617, %v7809
      %7811 = vdwg.mxu0
      %7812 = vmatprep.subr.bf16.mxu0 %v6188
      %7813 = vmatpush1.bf16.msra.mxu0 %v6187
      %7814 = vmatprep.subr.bf16.mxu0 %v6186
      %7815 = vmatpush1.bf16.msra.mxu0 %v6185
      %7816 = vmatprep.subr.bf16.mxu0 %v6184
      %7817 = vmatpush1.bf16.msra.mxu0 %v6183
      %7818 = vmatprep.subr.bf16.mxu0 %v6182
      %7819 = vmatpush1.bf16.msra.mxu0 %v6181
      %7820 = vmatprep.subr.bf16.mxu0 %v6180
      %7821 = vmatpush1.bf16.msra.mxu0 %v6179
      %7822 = vmatprep.subr.bf16.mxu0 %v6178
      %7823 = vmatpush1.bf16.msra.mxu0 %v6177
      %7824 = vmatprep.subr.bf16.mxu0 %v6176
      %7825 = vmatpush1.bf16.msra.mxu0 %v6175
      %7826 = vmatprep.subr.bf16.mxu0 %v6174
      %7827 = vmatpush1.bf16.msra.mxu0 %v6173
      %7828 = vmatprep.subr.bf16.mxu0 %v6204
      %7829 = vmatpush2.bf16.msra.mxu0 %v6203
      %7830 = vmatprep.subr.bf16.mxu0 %v6202
      %7831 = vmatpush2.bf16.msra.mxu0 %v6201
      %7832 = vmatprep.subr.bf16.mxu0 %v6200
      %7833 = vmatpush2.bf16.msra.mxu0 %v6199
      %7834 = vmatprep.subr.bf16.mxu0 %v6198
      %7835 = vmatpush2.bf16.msra.mxu0 %v6197
      %7836 = vmatprep.subr.bf16.mxu0 %v6196
      %7837 = vmatpush2.bf16.msra.mxu0 %v6195
      %7838 = vmatprep.subr.bf16.mxu0 %v6194
      %7839 = vmatpush2.bf16.msra.mxu0 %v6193
      %7840 = vmatprep.subr.bf16.mxu0 %v6192
      %7841 = vmatpush2.bf16.msra.mxu0 %v6191
      %7842 = vmatprep.subr.bf16.mxu0 %v6190
      %7843 = vmatpush2.bf16.msra.mxu0 %v6189
      %7844 = vmatprep.mubr.bf16.mxu0 %v1592
      %7845 = vmatmul.mubr.bf16.gmra.mxu0 %v1591
      %v7846 = vpop.f32.mrf.mxu0
      %v7847 = vadd.f32 %v7654, %v7846
      %v7848 = vpop.f32.mrf.mxu0
      %v7849 = vadd.f32 %v7656, %v7848
      %v7850 = vpop.f32.mrf.mxu0
      %v7851 = vadd.f32 %v7658, %v7850
      %v7852 = vpop.f32.mrf.mxu0
      %v7853 = vadd.f32 %v7660, %v7852
      %7854 = vmatprep.mubr.bf16.mxu0 %v1608
      %7855 = vmatmul.mubr.bf16.gmra.mxu0 %v1607
      %v7856 = vpop.f32.mrf.mxu0
      %v7857 = vadd.f32 %v7664, %v7856
      %v7858 = vpop.f32.mrf.mxu0
      %v7859 = vadd.f32 %v7666, %v7858
      %v7860 = vpop.f32.mrf.mxu0
      %v7861 = vadd.f32 %v7668, %v7860
      %v7862 = vpop.f32.mrf.mxu0
      %v7863 = vadd.f32 %v7670, %v7862
      %7864 = vmatprep.mubr.bf16.mxu0 %v1624
      %7865 = vmatmul.mubr.bf16.gmra.mxu0 %v1623
      %v7866 = vpop.f32.mrf.mxu0
      %v7867 = vadd.f32 %v7674, %v7866
      %v7868 = vpop.f32.mrf.mxu0
      %v7869 = vadd.f32 %v7676, %v7868
      %v7870 = vpop.f32.mrf.mxu0
      %v7871 = vadd.f32 %v7678, %v7870
      %v7872 = vpop.f32.mrf.mxu0
      %v7873 = vadd.f32 %v7680, %v7872
      %7874 = vmatprep.mubr.bf16.mxu0 %v1640
      %7875 = vmatmul.mubr.bf16.gmra.mxu0 %v1639
      %v7876 = vpop.f32.mrf.mxu0
      %v7877 = vadd.f32 %v7684, %v7876
      %v7878 = vpop.f32.mrf.mxu0
      %v7879 = vadd.f32 %v7686, %v7878
      %v7880 = vpop.f32.mrf.mxu0
      %v7881 = vadd.f32 %v7688, %v7880
      %v7882 = vpop.f32.mrf.mxu0
      %v7883 = vadd.f32 %v7690, %v7882
      %7884 = vmatprep.mubr.bf16.mxu0 %v1656
      %7885 = vmatmul.mubr.bf16.gmra.mxu0 %v1655
      %v7886 = vpop.f32.mrf.mxu0
      %v7887 = vadd.f32 %v7694, %v7886
      %v7888 = vpop.f32.mrf.mxu0
      %v7889 = vadd.f32 %v7696, %v7888
      %v7890 = vpop.f32.mrf.mxu0
      %v7891 = vadd.f32 %v7698, %v7890
      %v7892 = vpop.f32.mrf.mxu0
      %v7893 = vadd.f32 %v7700, %v7892
      %7894 = vmatprep.mubr.bf16.mxu0 %v1672
      %7895 = vmatmul.mubr.bf16.gmra.mxu0 %v1671
      %v7896 = vpop.f32.mrf.mxu0
      %v7897 = vadd.f32 %v7704, %v7896
      %v7898 = vpop.f32.mrf.mxu0
      %v7899 = vadd.f32 %v7706, %v7898
      %v7900 = vpop.f32.mrf.mxu0
      %v7901 = vadd.f32 %v7708, %v7900
      %v7902 = vpop.f32.mrf.mxu0
      %v7903 = vadd.f32 %v7710, %v7902
      %7904 = vmatprep.mubr.bf16.mxu0 %v1688
      %7905 = vmatmul.mubr.bf16.gmra.mxu0 %v1687
      %v7906 = vpop.f32.mrf.mxu0
      %v7907 = vadd.f32 %v7714, %v7906
      %v7908 = vpop.f32.mrf.mxu0
      %v7909 = vadd.f32 %v7716, %v7908
      %v7910 = vpop.f32.mrf.mxu0
      %v7911 = vadd.f32 %v7718, %v7910
      %v7912 = vpop.f32.mrf.mxu0
      %v7913 = vadd.f32 %v7720, %v7912
      %7914 = vmatprep.mubr.bf16.mxu0 %v1704
      %7915 = vmatmul.mubr.bf16.gmra.mxu0 %v1703
      %v7916 = vpop.f32.mrf.mxu0
      %v7917 = vadd.f32 %v7724, %v7916
      %v7918 = vpop.f32.mrf.mxu0
      %v7919 = vadd.f32 %v7726, %v7918
      %v7920 = vpop.f32.mrf.mxu0
      %v7921 = vadd.f32 %v7728, %v7920
      %v7922 = vpop.f32.mrf.mxu0
      %v7923 = vadd.f32 %v7730, %v7922
      %7924 = vmatprep.mubr.bf16.mxu0 %v1720
      %7925 = vmatmul.mubr.bf16.gmra.mxu0 %v1719
      %v7926 = vpop.f32.mrf.mxu0
      %v7927 = vadd.f32 %v7734, %v7926
      %v7928 = vpop.f32.mrf.mxu0
      %v7929 = vadd.f32 %v7736, %v7928
      %v7930 = vpop.f32.mrf.mxu0
      %v7931 = vadd.f32 %v7738, %v7930
      %v7932 = vpop.f32.mrf.mxu0
      %v7933 = vadd.f32 %v7740, %v7932
      %7934 = vmatprep.mubr.bf16.mxu0 %v1736
      %7935 = vmatmul.mubr.bf16.gmra.mxu0 %v1735
      %v7936 = vpop.f32.mrf.mxu0
      %v7937 = vadd.f32 %v7744, %v7936
      %v7938 = vpop.f32.mrf.mxu0
      %v7939 = vadd.f32 %v7746, %v7938
      %v7940 = vpop.f32.mrf.mxu0
      %v7941 = vadd.f32 %v7748, %v7940
      %v7942 = vpop.f32.mrf.mxu0
      %v7943 = vadd.f32 %v7750, %v7942
      %7944 = vmatprep.mubr.bf16.mxu0 %v1752
      %7945 = vmatmul.mubr.bf16.gmra.mxu0 %v1751
      %v7946 = vpop.f32.mrf.mxu0
      %v7947 = vadd.f32 %v7754, %v7946
      %v7948 = vpop.f32.mrf.mxu0
      %v7949 = vadd.f32 %v7756, %v7948
      %v7950 = vpop.f32.mrf.mxu0
      %v7951 = vadd.f32 %v7758, %v7950
      %v7952 = vpop.f32.mrf.mxu0
      %v7953 = vadd.f32 %v7760, %v7952
      %7954 = vmatprep.mubr.bf16.mxu0 %v1768
      %7955 = vmatmul.mubr.bf16.gmra.mxu0 %v1767
      %v7956 = vpop.f32.mrf.mxu0
      %v7957 = vadd.f32 %v7764, %v7956
      %v7958 = vpop.f32.mrf.mxu0
      %v7959 = vadd.f32 %v7766, %v7958
      %v7960 = vpop.f32.mrf.mxu0
      %v7961 = vadd.f32 %v7768, %v7960
      %v7962 = vpop.f32.mrf.mxu0
      %v7963 = vadd.f32 %v7770, %v7962
      %7964 = vmatprep.mubr.bf16.mxu0 %v1784
      %7965 = vmatmul.mubr.bf16.gmra.mxu0 %v1783
      %v7966 = vpop.f32.mrf.mxu0
      %v7967 = vadd.f32 %v7774, %v7966
      %v7968 = vpop.f32.mrf.mxu0
      %v7969 = vadd.f32 %v7776, %v7968
      %v7970 = vpop.f32.mrf.mxu0
      %v7971 = vadd.f32 %v7778, %v7970
      %v7972 = vpop.f32.mrf.mxu0
      %v7973 = vadd.f32 %v7780, %v7972
      %7974 = vmatprep.mubr.bf16.mxu0 %v1800
      %7975 = vmatmul.mubr.bf16.gmra.mxu0 %v1799
      %v7976 = vpop.f32.mrf.mxu0
      %v7977 = vadd.f32 %v7784, %v7976
      %v7978 = vpop.f32.mrf.mxu0
      %v7979 = vadd.f32 %v7786, %v7978
      %v7980 = vpop.f32.mrf.mxu0
      %v7981 = vadd.f32 %v7788, %v7980
      %v7982 = vpop.f32.mrf.mxu0
      %v7983 = vadd.f32 %v7790, %v7982
      %7984 = vmatprep.mubr.bf16.mxu0 %v1816
      %7985 = vmatmul.mubr.bf16.gmra.mxu0 %v1815
      %v7986 = vpop.f32.mrf.mxu0
      %v7987 = vadd.f32 %v7794, %v7986
      %v7988 = vpop.f32.mrf.mxu0
      %v7989 = vadd.f32 %v7796, %v7988
      %v7990 = vpop.f32.mrf.mxu0
      %v7991 = vadd.f32 %v7798, %v7990
      %v7992 = vpop.f32.mrf.mxu0
      %v7993 = vadd.f32 %v7800, %v7992
      %7994 = vmatprep.mubr.bf16.mxu0 %v1832
      %7995 = vmatmul.mubr.bf16.gmra.mxu0 %v1831
      %v7996 = vpop.f32.mrf.mxu0
      %v7997 = vadd.f32 %v7804, %v7996
      %v7998 = vpop.f32.mrf.mxu0
      %v7999 = vadd.f32 %v7806, %v7998
      %v8000 = vpop.f32.mrf.mxu0
      %v8001 = vadd.f32 %v7808, %v8000
      %v8002 = vpop.f32.mrf.mxu0
      %v8003 = vadd.f32 %v7810, %v8002
      %8004 = vdwg.mxu0
      %v8005 = vtanh.pop %v4755
      %v8006 = vtanh.pop %v4757
      %v8007 = vtanh.pop %v4759
      %v8008 = vtanh.pop %v4761
      %v8009 = vtanh.pop %v4765
      %v8010 = vtanh.pop %v4767
      %v8011 = vtanh.pop %v4769
      %v8012 = vtanh.pop %v4771
      %v8013 = vtanh.pop %v4775
      %v8014 = vtanh.pop %v4777
      %v8015 = vtanh.pop %v4779
      %v8016 = vtanh.pop %v4781
      %v8017 = vtanh.pop %v4785
      %v8018 = vtanh.pop %v4787
      %v8019 = vtanh.pop %v4789
      %v8020 = vtanh.pop %v4791
      %v8021 = vtanh.pop %v4795
      %v8022 = vtanh.pop %v4797
      %v8023 = vtanh.pop %v4799
      %v8024 = vtanh.pop %v4801
      %v8025 = vtanh.pop %v4805
      %v8026 = vtanh.pop %v4807
      %v8027 = vtanh.pop %v4809
      %v8028 = vtanh.pop %v4811
      %v8029 = vtanh.pop %v4815
      %v8030 = vtanh.pop %v4817
      %v8031 = vtanh.pop %v4819
      %v8032 = vtanh.pop %v4821
      %v8033 = vtanh.pop %v4825
      %v8034 = vtanh.pop %v4827
      %v8035 = vtanh.pop %v4829
      %v8036 = vtanh.pop %v4831
      %v8037 = vtanh.pop %v4835
      %v8038 = vtanh.pop %v4837
      %v8039 = vtanh.pop %v4839
      %v8040 = vtanh.pop %v4841
      %v8041 = vtanh.pop %v4845
      %v8042 = vtanh.pop %v4847
      %v8043 = vtanh.pop %v4849
      %v8044 = vtanh.pop %v4851
      %v8045 = vtanh.pop %v4855
      %v8046 = vtanh.pop %v4857
      %v8047 = vtanh.pop %v4859
      %v8048 = vtanh.pop %v4861
      %v8049 = vtanh.pop %v4865
      %v8050 = vtanh.pop %v4867
      %v8051 = vtanh.pop %v4869
      %v8052 = vtanh.pop %v4871
      %v8053 = vtanh.pop %v4875
      %v8054 = vtanh.pop %v4877
      %v8055 = vtanh.pop %v4879
      %v8056 = vtanh.pop %v4881
      %v8057 = vtanh.pop %v4885
      %v8058 = vtanh.pop %v4887
      %v8059 = vtanh.pop %v4889
      %v8060 = vtanh.pop %v4891
      %v8061 = vtanh.pop %v4895
      %v8062 = vtanh.pop %v4897
      %v8063 = vtanh.pop %v4899
      %v8064 = vtanh.pop %v4901
      %v8065 = vtanh.pop %v4905
      %v8066 = vtanh.pop %v4907
      %v8067 = vtanh.pop %v4909
      %v8068 = vtanh.pop %v4911
      %v8069 = vxor.u32 %v7847, 2147483648
      %v8070 = vxor.u32 %v7849, 2147483648
      %v8071 = vxor.u32 %v7851, 2147483648
      %v8072 = vxor.u32 %v7853, 2147483648
      %v8073 = vxor.u32 %v7857, 2147483648
      %v8074 = vxor.u32 %v7859, 2147483648
      %v8075 = vxor.u32 %v7861, 2147483648
      %v8076 = vxor.u32 %v7863, 2147483648
      %v8077 = vxor.u32 %v7867, 2147483648
      %v8078 = vxor.u32 %v7869, 2147483648
      %v8079 = vxor.u32 %v7871, 2147483648
      %v8080 = vxor.u32 %v7873, 2147483648
      %v8081 = vxor.u32 %v7877, 2147483648
      %v8082 = vxor.u32 %v7879, 2147483648
      %v8083 = vxor.u32 %v7881, 2147483648
      %v8084 = vxor.u32 %v7883, 2147483648
      %v8085 = vxor.u32 %v7887, 2147483648
      %v8086 = vxor.u32 %v7889, 2147483648
      %v8087 = vxor.u32 %v7891, 2147483648
      %v8088 = vxor.u32 %v7893, 2147483648
      %v8089 = vxor.u32 %v7897, 2147483648
      %v8090 = vxor.u32 %v7899, 2147483648
      %v8091 = vxor.u32 %v7901, 2147483648
      %v8092 = vxor.u32 %v7903, 2147483648
      %v8093 = vxor.u32 %v7907, 2147483648
      %v8094 = vxor.u32 %v7909, 2147483648
      %v8095 = vxor.u32 %v7911, 2147483648
      %v8096 = vxor.u32 %v7913, 2147483648
      %v8097 = vxor.u32 %v7917, 2147483648
      %v8098 = vxor.u32 %v7919, 2147483648
      %v8099 = vxor.u32 %v7921, 2147483648
      %v8100 = vxor.u32 %v7923, 2147483648
      %v8101 = vxor.u32 %v7927, 2147483648
      %v8102 = vxor.u32 %v7929, 2147483648
      %v8103 = vxor.u32 %v7931, 2147483648
      %v8104 = vxor.u32 %v7933, 2147483648
      %v8105 = vxor.u32 %v7937, 2147483648
      %v8106 = vxor.u32 %v7939, 2147483648
      %v8107 = vxor.u32 %v7941, 2147483648
      %v8108 = vxor.u32 %v7943, 2147483648
      %v8109 = vxor.u32 %v7947, 2147483648
      %v8110 = vxor.u32 %v7949, 2147483648
      %v8111 = vxor.u32 %v7951, 2147483648
      %v8112 = vxor.u32 %v7953, 2147483648
      %v8113 = vxor.u32 %v7957, 2147483648
      %v8114 = vxor.u32 %v7959, 2147483648
      %v8115 = vxor.u32 %v7961, 2147483648
      %v8116 = vxor.u32 %v7963, 2147483648
      %v8117 = vxor.u32 %v7967, 2147483648
      %v8118 = vxor.u32 %v7969, 2147483648
      %v8119 = vxor.u32 %v7971, 2147483648
      %v8120 = vxor.u32 %v7973, 2147483648
      %v8121 = vxor.u32 %v7977, 2147483648
      %v8122 = vxor.u32 %v7979, 2147483648
      %v8123 = vxor.u32 %v7981, 2147483648
      %v8124 = vxor.u32 %v7983, 2147483648
      %v8125 = vxor.u32 %v7987, 2147483648
      %v8126 = vxor.u32 %v7989, 2147483648
      %v8127 = vxor.u32 %v7991, 2147483648
      %v8128 = vxor.u32 %v7993, 2147483648
      %v8129 = vxor.u32 %v7997, 2147483648
      %v8130 = vxor.u32 %v7999, 2147483648
      %v8131 = vxor.u32 %v8001, 2147483648
      %v8132 = vxor.u32 %v8003, 2147483648
      %v8133 = vmul.f32 %v8069, 1.442695
      %v8134 = vpow.pop %v8133
      %v8135 = vmul.f32 %v8070, 1.442695
      %v8136 = vpow.pop %v8135
      %v8137 = vmul.f32 %v8071, 1.442695
      %v8138 = vpow.pop %v8137
      %v8139 = vmul.f32 %v8072, 1.442695
      %v8140 = vpow.pop %v8139
      %v8141 = vmul.f32 %v8073, 1.442695
      %v8142 = vpow.pop %v8141
      %v8143 = vmul.f32 %v8074, 1.442695
      %v8144 = vpow.pop %v8143
      %v8145 = vmul.f32 %v8075, 1.442695
      %v8146 = vpow.pop %v8145
      %v8147 = vmul.f32 %v8076, 1.442695
      %v8148 = vpow.pop %v8147
      %v8149 = vmul.f32 %v8077, 1.442695
      %v8150 = vpow.pop %v8149
      %v8151 = vmul.f32 %v8078, 1.442695
      %v8152 = vpow.pop %v8151
      %v8153 = vmul.f32 %v8079, 1.442695
      %v8154 = vpow.pop %v8153
      %v8155 = vmul.f32 %v8080, 1.442695
      %v8156 = vpow.pop %v8155
      %v8157 = vmul.f32 %v8081, 1.442695
      %v8158 = vpow.pop %v8157
      %v8159 = vmul.f32 %v8082, 1.442695
      %v8160 = vpow.pop %v8159
      %v8161 = vmul.f32 %v8083, 1.442695
      %v8162 = vpow.pop %v8161
      %v8163 = vmul.f32 %v8084, 1.442695
      %v8164 = vpow.pop %v8163
      %v8165 = vmul.f32 %v8085, 1.442695
      %v8166 = vpow.pop %v8165
      %v8167 = vmul.f32 %v8086, 1.442695
      %v8168 = vpow.pop %v8167
      %v8169 = vmul.f32 %v8087, 1.442695
      %v8170 = vpow.pop %v8169
      %v8171 = vmul.f32 %v8088, 1.442695
      %v8172 = vpow.pop %v8171
      %v8173 = vmul.f32 %v8089, 1.442695
      %v8174 = vpow.pop %v8173
      %v8175 = vmul.f32 %v8090, 1.442695
      %v8176 = vpow.pop %v8175
      %v8177 = vmul.f32 %v8091, 1.442695
      %v8178 = vpow.pop %v8177
      %v8179 = vmul.f32 %v8092, 1.442695
      %v8180 = vpow.pop %v8179
      %v8181 = vmul.f32 %v8093, 1.442695
      %v8182 = vpow.pop %v8181
      %v8183 = vmul.f32 %v8094, 1.442695
      %v8184 = vpow.pop %v8183
      %v8185 = vmul.f32 %v8095, 1.442695
      %v8186 = vpow.pop %v8185
      %v8187 = vmul.f32 %v8096, 1.442695
      %v8188 = vpow.pop %v8187
      %v8189 = vmul.f32 %v8097, 1.442695
      %v8190 = vpow.pop %v8189
      %v8191 = vmul.f32 %v8098, 1.442695
      %v8192 = vpow.pop %v8191
      %v8193 = vmul.f32 %v8099, 1.442695
      %v8194 = vpow.pop %v8193
      %v8195 = vmul.f32 %v8100, 1.442695
      %v8196 = vpow.pop %v8195
      %v8197 = vmul.f32 %v8101, 1.442695
      %v8198 = vpow.pop %v8197
      %v8199 = vmul.f32 %v8102, 1.442695
      %v8200 = vpow.pop %v8199
      %v8201 = vmul.f32 %v8103, 1.442695
      %v8202 = vpow.pop %v8201
      %v8203 = vmul.f32 %v8104, 1.442695
      %v8204 = vpow.pop %v8203
      %v8205 = vmul.f32 %v8105, 1.442695
      %v8206 = vpow.pop %v8205
      %v8207 = vmul.f32 %v8106, 1.442695
      %v8208 = vpow.pop %v8207
      %v8209 = vmul.f32 %v8107, 1.442695
      %v8210 = vpow.pop %v8209
      %v8211 = vmul.f32 %v8108, 1.442695
      %v8212 = vpow.pop %v8211
      %v8213 = vmul.f32 %v8109, 1.442695
      %v8214 = vpow.pop %v8213
      %v8215 = vmul.f32 %v8110, 1.442695
      %v8216 = vpow.pop %v8215
      %v8217 = vmul.f32 %v8111, 1.442695
      %v8218 = vpow.pop %v8217
      %v8219 = vmul.f32 %v8112, 1.442695
      %v8220 = vpow.pop %v8219
      %v8221 = vmul.f32 %v8113, 1.442695
      %v8222 = vpow.pop %v8221
      %v8223 = vmul.f32 %v8114, 1.442695
      %v8224 = vpow.pop %v8223
      %v8225 = vmul.f32 %v8115, 1.442695
      %v8226 = vpow.pop %v8225
      %v8227 = vmul.f32 %v8116, 1.442695
      %v8228 = vpow.pop %v8227
      %v8229 = vmul.f32 %v8117, 1.442695
      %v8230 = vpow.pop %v8229
      %v8231 = vmul.f32 %v8118, 1.442695
      %v8232 = vpow.pop %v8231
      %v8233 = vmul.f32 %v8119, 1.442695
      %v8234 = vpow.pop %v8233
      %v8235 = vmul.f32 %v8120, 1.442695
      %v8236 = vpow.pop %v8235
      %v8237 = vmul.f32 %v8121, 1.442695
      %v8238 = vpow.pop %v8237
      %v8239 = vmul.f32 %v8122, 1.442695
      %v8240 = vpow.pop %v8239
      %v8241 = vmul.f32 %v8123, 1.442695
      %v8242 = vpow.pop %v8241
      %v8243 = vmul.f32 %v8124, 1.442695
      %v8244 = vpow.pop %v8243
      %v8245 = vmul.f32 %v8125, 1.442695
      %v8246 = vpow.pop %v8245
      %v8247 = vmul.f32 %v8126, 1.442695
      %v8248 = vpow.pop %v8247
      %v8249 = vmul.f32 %v8127, 1.442695
      %v8250 = vpow.pop %v8249
      %v8251 = vmul.f32 %v8128, 1.442695
      %v8252 = vpow.pop %v8251
      %v8253 = vmul.f32 %v8129, 1.442695
      %v8254 = vpow.pop %v8253
      %v8255 = vmul.f32 %v8130, 1.442695
      %v8256 = vpow.pop %v8255
      %v8257 = vmul.f32 %v8131, 1.442695
      %v8258 = vpow.pop %v8257
      %v8259 = vmul.f32 %v8132, 1.442695
      %v8260 = vpow.pop %v8259
      %v8261 = vadd.f32 %v8134, 1.0
      %v8262 = vadd.f32 %v8136, 1.0
      %v8263 = vadd.f32 %v8138, 1.0
      %v8264 = vadd.f32 %v8140, 1.0
      %v8265 = vadd.f32 %v8142, 1.0
      %v8266 = vadd.f32 %v8144, 1.0
      %v8267 = vadd.f32 %v8146, 1.0
      %v8268 = vadd.f32 %v8148, 1.0
      %v8269 = vadd.f32 %v8150, 1.0
      %v8270 = vadd.f32 %v8152, 1.0
      %v8271 = vadd.f32 %v8154, 1.0
      %v8272 = vadd.f32 %v8156, 1.0
      %v8273 = vadd.f32 %v8158, 1.0
      %v8274 = vadd.f32 %v8160, 1.0
      %v8275 = vadd.f32 %v8162, 1.0
      %v8276 = vadd.f32 %v8164, 1.0
      %v8277 = vadd.f32 %v8166, 1.0
      %v8278 = vadd.f32 %v8168, 1.0
      %v8279 = vadd.f32 %v8170, 1.0
      %v8280 = vadd.f32 %v8172, 1.0
      %v8281 = vadd.f32 %v8174, 1.0
      %v8282 = vadd.f32 %v8176, 1.0
      %v8283 = vadd.f32 %v8178, 1.0
      %v8284 = vadd.f32 %v8180, 1.0
      %v8285 = vadd.f32 %v8182, 1.0
      %v8286 = vadd.f32 %v8184, 1.0
      %v8287 = vadd.f32 %v8186, 1.0
      %v8288 = vadd.f32 %v8188, 1.0
      %v8289 = vadd.f32 %v8190, 1.0
      %v8290 = vadd.f32 %v8192, 1.0
      %v8291 = vadd.f32 %v8194, 1.0
      %v8292 = vadd.f32 %v8196, 1.0
      %v8293 = vadd.f32 %v8198, 1.0
      %v8294 = vadd.f32 %v8200, 1.0
      %v8295 = vadd.f32 %v8202, 1.0
      %v8296 = vadd.f32 %v8204, 1.0
      %v8297 = vadd.f32 %v8206, 1.0
      %v8298 = vadd.f32 %v8208, 1.0
      %v8299 = vadd.f32 %v8210, 1.0
      %v8300 = vadd.f32 %v8212, 1.0
      %v8301 = vadd.f32 %v8214, 1.0
      %v8302 = vadd.f32 %v8216, 1.0
      %v8303 = vadd.f32 %v8218, 1.0
      %v8304 = vadd.f32 %v8220, 1.0
      %v8305 = vadd.f32 %v8222, 1.0
      %v8306 = vadd.f32 %v8224, 1.0
      %v8307 = vadd.f32 %v8226, 1.0
      %v8308 = vadd.f32 %v8228, 1.0
      %v8309 = vadd.f32 %v8230, 1.0
      %v8310 = vadd.f32 %v8232, 1.0
      %v8311 = vadd.f32 %v8234, 1.0
      %v8312 = vadd.f32 %v8236, 1.0
      %v8313 = vadd.f32 %v8238, 1.0
      %v8314 = vadd.f32 %v8240, 1.0
      %v8315 = vadd.f32 %v8242, 1.0
      %v8316 = vadd.f32 %v8244, 1.0
      %v8317 = vadd.f32 %v8246, 1.0
      %v8318 = vadd.f32 %v8248, 1.0
      %v8319 = vadd.f32 %v8250, 1.0
      %v8320 = vadd.f32 %v8252, 1.0
      %v8321 = vadd.f32 %v8254, 1.0
      %v8322 = vadd.f32 %v8256, 1.0
      %v8323 = vadd.f32 %v8258, 1.0
      %v8324 = vadd.f32 %v8260, 1.0
      %v8325 = vrcp.pop %v8261
      %v8326 = vmul.f32 1.0, %v8325
      %v8327 = vrcp.pop %v8262
      %v8328 = vmul.f32 1.0, %v8327
      %v8329 = vrcp.pop %v8263
      %v8330 = vmul.f32 1.0, %v8329
      %v8331 = vrcp.pop %v8264
      %v8332 = vmul.f32 1.0, %v8331
      %v8333 = vrcp.pop %v8265
      %v8334 = vmul.f32 1.0, %v8333
      %v8335 = vrcp.pop %v8266
      %v8336 = vmul.f32 1.0, %v8335
      %v8337 = vrcp.pop %v8267
      %v8338 = vmul.f32 1.0, %v8337
      %v8339 = vrcp.pop %v8268
      %v8340 = vmul.f32 1.0, %v8339
      %v8341 = vrcp.pop %v8269
      %v8342 = vmul.f32 1.0, %v8341
      %v8343 = vrcp.pop %v8270
      %v8344 = vmul.f32 1.0, %v8343
      %v8345 = vrcp.pop %v8271
      %v8346 = vmul.f32 1.0, %v8345
      %v8347 = vrcp.pop %v8272
      %v8348 = vmul.f32 1.0, %v8347
      %v8349 = vrcp.pop %v8273
      %v8350 = vmul.f32 1.0, %v8349
      %v8351 = vrcp.pop %v8274
      %v8352 = vmul.f32 1.0, %v8351
      %v8353 = vrcp.pop %v8275
      %v8354 = vmul.f32 1.0, %v8353
      %v8355 = vrcp.pop %v8276
      %v8356 = vmul.f32 1.0, %v8355
      %v8357 = vrcp.pop %v8277
      %v8358 = vmul.f32 1.0, %v8357
      %v8359 = vrcp.pop %v8278
      %v8360 = vmul.f32 1.0, %v8359
      %v8361 = vrcp.pop %v8279
      %v8362 = vmul.f32 1.0, %v8361
      %v8363 = vrcp.pop %v8280
      %v8364 = vmul.f32 1.0, %v8363
      %v8365 = vrcp.pop %v8281
      %v8366 = vmul.f32 1.0, %v8365
      %v8367 = vrcp.pop %v8282
      %v8368 = vmul.f32 1.0, %v8367
      %v8369 = vrcp.pop %v8283
      %v8370 = vmul.f32 1.0, %v8369
      %v8371 = vrcp.pop %v8284
      %v8372 = vmul.f32 1.0, %v8371
      %v8373 = vrcp.pop %v8285
      %v8374 = vmul.f32 1.0, %v8373
      %v8375 = vrcp.pop %v8286
      %v8376 = vmul.f32 1.0, %v8375
      %v8377 = vrcp.pop %v8287
      %v8378 = vmul.f32 1.0, %v8377
      %v8379 = vrcp.pop %v8288
      %v8380 = vmul.f32 1.0, %v8379
      %v8381 = vrcp.pop %v8289
      %v8382 = vmul.f32 1.0, %v8381
      %v8383 = vrcp.pop %v8290
      %v8384 = vmul.f32 1.0, %v8383
      %v8385 = vrcp.pop %v8291
      %v8386 = vmul.f32 1.0, %v8385
      %v8387 = vrcp.pop %v8292
      %v8388 = vmul.f32 1.0, %v8387
      %v8389 = vrcp.pop %v8293
      %v8390 = vmul.f32 1.0, %v8389
      %v8391 = vrcp.pop %v8294
      %v8392 = vmul.f32 1.0, %v8391
      %v8393 = vrcp.pop %v8295
      %v8394 = vmul.f32 1.0, %v8393
      %v8395 = vrcp.pop %v8296
      %v8396 = vmul.f32 1.0, %v8395
      %v8397 = vrcp.pop %v8297
      %v8398 = vmul.f32 1.0, %v8397
      %v8399 = vrcp.pop %v8298
      %v8400 = vmul.f32 1.0, %v8399
      %v8401 = vrcp.pop %v8299
      %v8402 = vmul.f32 1.0, %v8401
      %v8403 = vrcp.pop %v8300
      %v8404 = vmul.f32 1.0, %v8403
      %v8405 = vrcp.pop %v8301
      %v8406 = vmul.f32 1.0, %v8405
      %v8407 = vrcp.pop %v8302
      %v8408 = vmul.f32 1.0, %v8407
      %v8409 = vrcp.pop %v8303
      %v8410 = vmul.f32 1.0, %v8409
      %v8411 = vrcp.pop %v8304
      %v8412 = vmul.f32 1.0, %v8411
      %v8413 = vrcp.pop %v8305
      %v8414 = vmul.f32 1.0, %v8413
      %v8415 = vrcp.pop %v8306
      %v8416 = vmul.f32 1.0, %v8415
      %v8417 = vrcp.pop %v8307
      %v8418 = vmul.f32 1.0, %v8417
      %v8419 = vrcp.pop %v8308
      %v8420 = vmul.f32 1.0, %v8419
      %v8421 = vrcp.pop %v8309
      %v8422 = vmul.f32 1.0, %v8421
      %v8423 = vrcp.pop %v8310
      %v8424 = vmul.f32 1.0, %v8423
      %v8425 = vrcp.pop %v8311
      %v8426 = vmul.f32 1.0, %v8425
      %v8427 = vrcp.pop %v8312
      %v8428 = vmul.f32 1.0, %v8427
      %v8429 = vrcp.pop %v8313
      %v8430 = vmul.f32 1.0, %v8429
      %v8431 = vrcp.pop %v8314
      %v8432 = vmul.f32 1.0, %v8431
      %v8433 = vrcp.pop %v8315
      %v8434 = vmul.f32 1.0, %v8433
      %v8435 = vrcp.pop %v8316
      %v8436 = vmul.f32 1.0, %v8435
      %v8437 = vrcp.pop %v8317
      %v8438 = vmul.f32 1.0, %v8437
      %v8439 = vrcp.pop %v8318
      %v8440 = vmul.f32 1.0, %v8439
      %v8441 = vrcp.pop %v8319
      %v8442 = vmul.f32 1.0, %v8441
      %v8443 = vrcp.pop %v8320
      %v8444 = vmul.f32 1.0, %v8443
      %v8445 = vrcp.pop %v8321
      %v8446 = vmul.f32 1.0, %v8445
      %v8447 = vrcp.pop %v8322
      %v8448 = vmul.f32 1.0, %v8447
      %v8449 = vrcp.pop %v8323
      %v8450 = vmul.f32 1.0, %v8449
      %v8451 = vrcp.pop %v8324
      %v8452 = vmul.f32 1.0, %v8451
      %v8453 = vmul.f32 %v8005, %v8326
      %v8454 = vmul.f32 %v8006, %v8328
      %v8455 = vmul.f32 %v8007, %v8330
      %v8456 = vmul.f32 %v8008, %v8332
      %v8457 = vmul.f32 %v8009, %v8334
      %v8458 = vmul.f32 %v8010, %v8336
      %v8459 = vmul.f32 %v8011, %v8338
      %v8460 = vmul.f32 %v8012, %v8340
      %v8461 = vmul.f32 %v8013, %v8342
      %v8462 = vmul.f32 %v8014, %v8344
      %v8463 = vmul.f32 %v8015, %v8346
      %v8464 = vmul.f32 %v8016, %v8348
      %v8465 = vmul.f32 %v8017, %v8350
      %v8466 = vmul.f32 %v8018, %v8352
      %v8467 = vmul.f32 %v8019, %v8354
      %v8468 = vmul.f32 %v8020, %v8356
      %v8469 = vmul.f32 %v8021, %v8358
      %v8470 = vmul.f32 %v8022, %v8360
      %v8471 = vmul.f32 %v8023, %v8362
      %v8472 = vmul.f32 %v8024, %v8364
      %v8473 = vmul.f32 %v8025, %v8366
      %v8474 = vmul.f32 %v8026, %v8368
      %v8475 = vmul.f32 %v8027, %v8370
      %v8476 = vmul.f32 %v8028, %v8372
      %v8477 = vmul.f32 %v8029, %v8374
      %v8478 = vmul.f32 %v8030, %v8376
      %v8479 = vmul.f32 %v8031, %v8378
      %v8480 = vmul.f32 %v8032, %v8380
      %v8481 = vmul.f32 %v8033, %v8382
      %v8482 = vmul.f32 %v8034, %v8384
      %v8483 = vmul.f32 %v8035, %v8386
      %v8484 = vmul.f32 %v8036, %v8388
      %v8485 = vmul.f32 %v8037, %v8390
      %v8486 = vmul.f32 %v8038, %v8392
      %v8487 = vmul.f32 %v8039, %v8394
      %v8488 = vmul.f32 %v8040, %v8396
      %v8489 = vmul.f32 %v8041, %v8398
      %v8490 = vmul.f32 %v8042, %v8400
      %v8491 = vmul.f32 %v8043, %v8402
      %v8492 = vmul.f32 %v8044, %v8404
      %v8493 = vmul.f32 %v8045, %v8406
      %v8494 = vmul.f32 %v8046, %v8408
      %v8495 = vmul.f32 %v8047, %v8410
      %v8496 = vmul.f32 %v8048, %v8412
      %v8497 = vmul.f32 %v8049, %v8414
      %v8498 = vmul.f32 %v8050, %v8416
      %v8499 = vmul.f32 %v8051, %v8418
      %v8500 = vmul.f32 %v8052, %v8420
      %v8501 = vmul.f32 %v8053, %v8422
      %v8502 = vmul.f32 %v8054, %v8424
      %v8503 = vmul.f32 %v8055, %v8426
      %v8504 = vmul.f32 %v8056, %v8428
      %v8505 = vmul.f32 %v8057, %v8430
      %v8506 = vmul.f32 %v8058, %v8432
      %v8507 = vmul.f32 %v8059, %v8434
      %v8508 = vmul.f32 %v8060, %v8436
      %v8509 = vmul.f32 %v8061, %v8438
      %v8510 = vmul.f32 %v8062, %v8440
      %v8511 = vmul.f32 %v8063, %v8442
      %v8512 = vmul.f32 %v8064, %v8444
      %v8513 = vmul.f32 %v8065, %v8446
      %v8514 = vmul.f32 %v8066, %v8448
      %v8515 = vmul.f32 %v8067, %v8450
      %v8516 = vmul.f32 %v8068, %v8452
      %v8517 = vld [vmem:[%s5] sm:$0xff]
      %v8518 = vld [vmem:[%s5 + $0x8] sm:$0xff]
      %v8519 = vld [vmem:[%s5 + $0x10] sm:$0xff]
      %v8520 = vld [vmem:[%s5 + $0x18] sm:$0xff]
      %v8521 = vld [vmem:[%s5 + $0x20] sm:$0xff]
      %v8522 = vld [vmem:[%s5 + $0x28] sm:$0xff]
      %v8523 = vld [vmem:[%s5 + $0x30] sm:$0xff]
      %v8524 = vld [vmem:[%s5 + $0x38] sm:$0xff]
      %v8525 = vld [vmem:[%s5 + $0x40] sm:$0xff]
      %v8526 = vld [vmem:[%s5 + $0x48] sm:$0xff]
      %v8527 = vld [vmem:[%s5 + $0x50] sm:$0xff]
      %v8528 = vld [vmem:[%s5 + $0x58] sm:$0xff]
      %v8529 = vld [vmem:[%s5 + $0x60] sm:$0xff]
      %v8530 = vld [vmem:[%s5 + $0x68] sm:$0xff]
      %v8531 = vld [vmem:[%s5 + $0x70] sm:$0xff]
      %v8532 = vld [vmem:[%s5 + $0x78] sm:$0xff]
      %v8533 = vld [vmem:[%s5 + $0x80] sm:$0xff]
      %v8534 = vld [vmem:[%s5 + $0x88] sm:$0xff]
      %v8535 = vld [vmem:[%s5 + $0x90] sm:$0xff]
      %v8536 = vld [vmem:[%s5 + $0x98] sm:$0xff]
      %v8537 = vld [vmem:[%s5 + $0xa0] sm:$0xff]
      %v8538 = vld [vmem:[%s5 + $0xa8] sm:$0xff]
      %v8539 = vld [vmem:[%s5 + $0xb0] sm:$0xff]
      %v8540 = vld [vmem:[%s5 + $0xb8] sm:$0xff]
      %v8541 = vld [vmem:[%s5 + $0xc0] sm:$0xff]
      %v8542 = vld [vmem:[%s5 + $0xc8] sm:$0xff]
      %v8543 = vld [vmem:[%s5 + $0xd0] sm:$0xff]
      %v8544 = vld [vmem:[%s5 + $0xd8] sm:$0xff]
      %v8545 = vld [vmem:[%s5 + $0xe0] sm:$0xff]
      %v8546 = vld [vmem:[%s5 + $0xe8] sm:$0xff]
      %v8547 = vld [vmem:[%s5 + $0xf0] sm:$0xff]
      %v8548 = vld [vmem:[%s5 + $0xf8] sm:$0xff]
      %v8549 = vld [vmem:[%s6] sm:$0x1]
      %v8551 = vlaneseq
      %v8552 = vshrl.u32 %v8551, 7
      %v8553 = vsub.s32 0, %v8552
      %v8554 = vrot.slane %v8549, %v8553
      %8556 = vmatprep.subr.mxu0 0.0
      %8557 = vmatpush1.msra.mxu0 %v8532
      %8558 = vmatprep.subr.mxu0 0.0
      %8559 = vmatpush1.msra.mxu0 %v8531
      %8560 = vmatprep.subr.mxu0 0.0
      %8561 = vmatpush1.msra.mxu0 %v8530
      %8562 = vmatprep.subr.mxu0 0.0
      %8563 = vmatpush1.msra.mxu0 %v8529
      %8564 = vmatprep.subr.mxu0 0.0
      %8565 = vmatpush1.msra.mxu0 %v8528
      %8566 = vmatprep.subr.mxu0 0.0
      %8567 = vmatpush1.msra.mxu0 %v8527
      %8568 = vmatprep.subr.mxu0 0.0
      %8569 = vmatpush1.msra.mxu0 %v8526
      %8570 = vmatprep.subr.mxu0 0.0
      %8571 = vmatpush1.msra.mxu0 %v8525
      %8572 = vmatprep.subr.mxu0 0.0
      %8573 = vmatpush1.msra.mxu0 %v8524
      %8574 = vmatprep.subr.mxu0 0.0
      %8575 = vmatpush1.msra.mxu0 %v8523
      %8576 = vmatprep.subr.mxu0 0.0
      %8577 = vmatpush1.msra.mxu0 %v8522
      %8578 = vmatprep.subr.mxu0 0.0
      %8579 = vmatpush1.msra.mxu0 %v8521
      %8580 = vmatprep.subr.mxu0 0.0
      %8581 = vmatpush1.msra.mxu0 %v8520
      %8582 = vmatprep.subr.mxu0 0.0
      %8583 = vmatpush1.msra.mxu0 %v8519
      %8584 = vmatprep.subr.mxu0 0.0
      %8585 = vmatpush1.msra.mxu0 %v8518
      %8586 = vmatprep.subr.mxu0 0.0
      %8587 = vmatpush1.msra.mxu0 %v8517
      %8588 = vmatprep.subr.mxu0 0.0
      %8589 = vmatpush2.msra.mxu0 %v8548
      %8590 = vmatprep.subr.mxu0 0.0
      %8591 = vmatpush2.msra.mxu0 %v8547
      %8592 = vmatprep.subr.mxu0 0.0
      %8593 = vmatpush2.msra.mxu0 %v8546
      %8594 = vmatprep.subr.mxu0 0.0
      %8595 = vmatpush2.msra.mxu0 %v8545
      %8596 = vmatprep.subr.mxu0 0.0
      %8597 = vmatpush2.msra.mxu0 %v8544
      %8598 = vmatprep.subr.mxu0 0.0
      %8599 = vmatpush2.msra.mxu0 %v8543
      %8600 = vmatprep.subr.mxu0 0.0
      %8601 = vmatpush2.msra.mxu0 %v8542
      %8602 = vmatprep.subr.mxu0 0.0
      %8603 = vmatpush2.msra.mxu0 %v8541
      %8604 = vmatprep.subr.mxu0 0.0
      %8605 = vmatpush2.msra.mxu0 %v8540
      %8606 = vmatprep.subr.mxu0 0.0
      %8607 = vmatpush2.msra.mxu0 %v8539
      %8608 = vmatprep.subr.mxu0 0.0
      %8609 = vmatpush2.msra.mxu0 %v8538
      %8610 = vmatprep.subr.mxu0 0.0
      %8611 = vmatpush2.msra.mxu0 %v8537
      %8612 = vmatprep.subr.mxu0 0.0
      %8613 = vmatpush2.msra.mxu0 %v8536
      %8614 = vmatprep.subr.mxu0 0.0
      %8615 = vmatpush2.msra.mxu0 %v8535
      %8616 = vmatprep.subr.mxu0 0.0
      %8617 = vmatpush2.msra.mxu0 %v8534
      %8618 = vmatprep.subr.mxu0 0.0
      %8619 = vmatpush2.msra.mxu0 %v8533
      %8620 = vmatprep.mubr.f32.mxu0 %v8454
      %8621 = vmatmul.mubr.f32.gmra.mxu0 %v8453
      %v8622 = vpop.f32.mrf.mxu0
      %v8623 = vadd.f32 %v8554, %v8622
      %v8624 = vpop.f32.mrf.mxu0
      %8625 = vmatprep.mubr.f32.mxu0 %v8456
      %8626 = vmatmul.mubr.f32.gmra.mxu0 %v8455
      %v8627 = vpop.f32.mrf.mxu0
      %v8628 = vadd.f32 %v8554, %v8627
      %v8629 = vpop.f32.mrf.mxu0
      %8630 = vmatprep.mubr.f32.mxu0 %v8458
      %8631 = vmatmul.mubr.f32.gmra.mxu0 %v8457
      %v8632 = vpop.f32.mrf.mxu0
      %v8633 = vadd.f32 %v8554, %v8632
      %v8634 = vpop.f32.mrf.mxu0
      %8635 = vmatprep.mubr.f32.mxu0 %v8460
      %8636 = vmatmul.mubr.f32.gmra.mxu0 %v8459
      %v8637 = vpop.f32.mrf.mxu0
      %v8638 = vadd.f32 %v8554, %v8637
      %v8639 = vpop.f32.mrf.mxu0
      %8640 = vmatprep.mubr.f32.mxu0 %v8462
      %8641 = vmatmul.mubr.f32.gmra.mxu0 %v8461
      %v8642 = vpop.f32.mrf.mxu0
      %v8643 = vadd.f32 %v8554, %v8642
      %v8644 = vpop.f32.mrf.mxu0
      %8645 = vmatprep.mubr.f32.mxu0 %v8464
      %8646 = vmatmul.mubr.f32.gmra.mxu0 %v8463
      %v8647 = vpop.f32.mrf.mxu0
      %v8648 = vadd.f32 %v8554, %v8647
      %v8649 = vpop.f32.mrf.mxu0
      %8650 = vmatprep.mubr.f32.mxu0 %v8466
      %8651 = vmatmul.mubr.f32.gmra.mxu0 %v8465
      %v8652 = vpop.f32.mrf.mxu0
      %v8653 = vadd.f32 %v8554, %v8652
      %v8654 = vpop.f32.mrf.mxu0
      %8655 = vmatprep.mubr.f32.mxu0 %v8468
      %8656 = vmatmul.mubr.f32.gmra.mxu0 %v8467
      %v8657 = vpop.f32.mrf.mxu0
      %v8658 = vadd.f32 %v8554, %v8657
      %v8659 = vpop.f32.mrf.mxu0
      %8660 = vmatprep.mubr.f32.mxu0 %v8470
      %8661 = vmatmul.mubr.f32.gmra.mxu0 %v8469
      %v8662 = vpop.f32.mrf.mxu0
      %v8663 = vadd.f32 %v8554, %v8662
      %v8664 = vpop.f32.mrf.mxu0
      %8665 = vmatprep.mubr.f32.mxu0 %v8472
      %8666 = vmatmul.mubr.f32.gmra.mxu0 %v8471
      %v8667 = vpop.f32.mrf.mxu0
      %v8668 = vadd.f32 %v8554, %v8667
      %v8669 = vpop.f32.mrf.mxu0
      %8670 = vmatprep.mubr.f32.mxu0 %v8474
      %8671 = vmatmul.mubr.f32.gmra.mxu0 %v8473
      %v8672 = vpop.f32.mrf.mxu0
      %v8673 = vadd.f32 %v8554, %v8672
      %v8674 = vpop.f32.mrf.mxu0
      %8675 = vmatprep.mubr.f32.mxu0 %v8476
      %8676 = vmatmul.mubr.f32.gmra.mxu0 %v8475
      %v8677 = vpop.f32.mrf.mxu0
      %v8678 = vadd.f32 %v8554, %v8677
      %v8679 = vpop.f32.mrf.mxu0
      %8680 = vmatprep.mubr.f32.mxu0 %v8478
      %8681 = vmatmul.mubr.f32.gmra.mxu0 %v8477
      %v8682 = vpop.f32.mrf.mxu0
      %v8683 = vadd.f32 %v8554, %v8682
      %v8684 = vpop.f32.mrf.mxu0
      %8685 = vmatprep.mubr.f32.mxu0 %v8480
      %8686 = vmatmul.mubr.f32.gmra.mxu0 %v8479
      %v8687 = vpop.f32.mrf.mxu0
      %v8688 = vadd.f32 %v8554, %v8687
      %v8689 = vpop.f32.mrf.mxu0
      %8690 = vmatprep.mubr.f32.mxu0 %v8482
      %8691 = vmatmul.mubr.f32.gmra.mxu0 %v8481
      %v8692 = vpop.f32.mrf.mxu0
      %v8693 = vadd.f32 %v8554, %v8692
      %v8694 = vpop.f32.mrf.mxu0
      %8695 = vmatprep.mubr.f32.mxu0 %v8484
      %8696 = vmatmul.mubr.f32.gmra.mxu0 %v8483
      %v8697 = vpop.f32.mrf.mxu0
      %v8698 = vadd.f32 %v8554, %v8697
      %v8699 = vpop.f32.mrf.mxu0
      %8700 = vmatprep.mubr.f32.mxu0 %v8486
      %8701 = vmatmul.mubr.f32.gmra.mxu0 %v8485
      %v8702 = vpop.f32.mrf.mxu0
      %v8703 = vadd.f32 %v8554, %v8702
      %v8704 = vpop.f32.mrf.mxu0
      %8705 = vmatprep.mubr.f32.mxu0 %v8488
      %8706 = vmatmul.mubr.f32.gmra.mxu0 %v8487
      %v8707 = vpop.f32.mrf.mxu0
      %v8708 = vadd.f32 %v8554, %v8707
      %v8709 = vpop.f32.mrf.mxu0
      %8710 = vmatprep.mubr.f32.mxu0 %v8490
      %8711 = vmatmul.mubr.f32.gmra.mxu0 %v8489
      %v8712 = vpop.f32.mrf.mxu0
      %v8713 = vadd.f32 %v8554, %v8712
      %v8714 = vpop.f32.mrf.mxu0
      %8715 = vmatprep.mubr.f32.mxu0 %v8492
      %8716 = vmatmul.mubr.f32.gmra.mxu0 %v8491
      %v8717 = vpop.f32.mrf.mxu0
      %v8718 = vadd.f32 %v8554, %v8717
      %v8719 = vpop.f32.mrf.mxu0
      %8720 = vmatprep.mubr.f32.mxu0 %v8494
      %8721 = vmatmul.mubr.f32.gmra.mxu0 %v8493
      %v8722 = vpop.f32.mrf.mxu0
      %v8723 = vadd.f32 %v8554, %v8722
      %v8724 = vpop.f32.mrf.mxu0
      %8725 = vmatprep.mubr.f32.mxu0 %v8496
      %8726 = vmatmul.mubr.f32.gmra.mxu0 %v8495
      %v8727 = vpop.f32.mrf.mxu0
      %v8728 = vadd.f32 %v8554, %v8727
      %v8729 = vpop.f32.mrf.mxu0
      %8730 = vmatprep.mubr.f32.mxu0 %v8498
      %8731 = vmatmul.mubr.f32.gmra.mxu0 %v8497
      %v8732 = vpop.f32.mrf.mxu0
      %v8733 = vadd.f32 %v8554, %v8732
      %v8734 = vpop.f32.mrf.mxu0
      %8735 = vmatprep.mubr.f32.mxu0 %v8500
      %8736 = vmatmul.mubr.f32.gmra.mxu0 %v8499
      %v8737 = vpop.f32.mrf.mxu0
      %v8738 = vadd.f32 %v8554, %v8737
      %v8739 = vpop.f32.mrf.mxu0
      %8740 = vmatprep.mubr.f32.mxu0 %v8502
      %8741 = vmatmul.mubr.f32.gmra.mxu0 %v8501
      %v8742 = vpop.f32.mrf.mxu0
      %v8743 = vadd.f32 %v8554, %v8742
      %v8744 = vpop.f32.mrf.mxu0
      %8745 = vmatprep.mubr.f32.mxu0 %v8504
      %8746 = vmatmul.mubr.f32.gmra.mxu0 %v8503
      %v8747 = vpop.f32.mrf.mxu0
      %v8748 = vadd.f32 %v8554, %v8747
      %v8749 = vpop.f32.mrf.mxu0
      %8750 = vmatprep.mubr.f32.mxu0 %v8506
      %8751 = vmatmul.mubr.f32.gmra.mxu0 %v8505
      %v8752 = vpop.f32.mrf.mxu0
      %v8753 = vadd.f32 %v8554, %v8752
      %v8754 = vpop.f32.mrf.mxu0
      %8755 = vmatprep.mubr.f32.mxu0 %v8508
      %8756 = vmatmul.mubr.f32.gmra.mxu0 %v8507
      %v8757 = vpop.f32.mrf.mxu0
      %v8758 = vadd.f32 %v8554, %v8757
      %v8759 = vpop.f32.mrf.mxu0
      %8760 = vmatprep.mubr.f32.mxu0 %v8510
      %8761 = vmatmul.mubr.f32.gmra.mxu0 %v8509
      %v8762 = vpop.f32.mrf.mxu0
      %v8763 = vadd.f32 %v8554, %v8762
      %v8764 = vpop.f32.mrf.mxu0
      %8765 = vmatprep.mubr.f32.mxu0 %v8512
      %8766 = vmatmul.mubr.f32.gmra.mxu0 %v8511
      %v8767 = vpop.f32.mrf.mxu0
      %v8768 = vadd.f32 %v8554, %v8767
      %v8769 = vpop.f32.mrf.mxu0
      %8770 = vmatprep.mubr.f32.mxu0 %v8514
      %8771 = vmatmul.mubr.f32.gmra.mxu0 %v8513
      %v8772 = vpop.f32.mrf.mxu0
      %v8773 = vadd.f32 %v8554, %v8772
      %v8774 = vpop.f32.mrf.mxu0
      %8775 = vmatprep.mubr.f32.mxu0 %v8516
      %8776 = vmatmul.mubr.f32.gmra.mxu0 %v8515
      %v8777 = vpop.f32.mrf.mxu0
      %v8778 = vadd.f32 %v8554, %v8777
      %v8779 = vpop.f32.mrf.mxu0
      %8780 = vdwg.mxu0
      %8781 = vst [vmem:[%s283] sm:$0xff] %v8623
      %8782 = vst [vmem:[%s283 + $0x8] sm:$0xff] %v8628
      %8783 = vst [vmem:[%s283 + $0x10] sm:$0xff] %v8633
      %8784 = vst [vmem:[%s283 + $0x18] sm:$0xff] %v8638
      %8785 = vst [vmem:[%s283 + $0x20] sm:$0xff] %v8643
      %8786 = vst [vmem:[%s283 + $0x28] sm:$0xff] %v8648
      %8787 = vst [vmem:[%s283 + $0x30] sm:$0xff] %v8653
      %8788 = vst [vmem:[%s283 + $0x38] sm:$0xff] %v8658
      %8789 = vst [vmem:[%s283 + $0x40] sm:$0xff] %v8663
      %8790 = vst [vmem:[%s283 + $0x48] sm:$0xff] %v8668
      %8791 = vst [vmem:[%s283 + $0x50] sm:$0xff] %v8673
      %8792 = vst [vmem:[%s283 + $0x58] sm:$0xff] %v8678
      %8793 = vst [vmem:[%s283 + $0x60] sm:$0xff] %v8683
      %8794 = vst [vmem:[%s283 + $0x68] sm:$0xff] %v8688
      %8795 = vst [vmem:[%s283 + $0x70] sm:$0xff] %v8693
      %8796 = vst [vmem:[%s283 + $0x78] sm:$0xff] %v8698
      %8797 = vst [vmem:[%s283 + $0x80] sm:$0xff] %v8703
      %8798 = vst [vmem:[%s283 + $0x88] sm:$0xff] %v8708
      %8799 = vst [vmem:[%s283 + $0x90] sm:$0xff] %v8713
      %8800 = vst [vmem:[%s283 + $0x98] sm:$0xff] %v8718
      %8801 = vst [vmem:[%s283 + $0xa0] sm:$0xff] %v8723
      %8802 = vst [vmem:[%s283 + $0xa8] sm:$0xff] %v8728
      %8803 = vst [vmem:[%s283 + $0xb0] sm:$0xff] %v8733
      %8804 = vst [vmem:[%s283 + $0xb8] sm:$0xff] %v8738
      %8805 = vst [vmem:[%s283 + $0xc0] sm:$0xff] %v8743
      %8806 = vst [vmem:[%s283 + $0xc8] sm:$0xff] %v8748
      %8807 = vst [vmem:[%s283 + $0xd0] sm:$0xff] %v8753
      %8808 = vst [vmem:[%s283 + $0xd8] sm:$0xff] %v8758
      %8809 = vst [vmem:[%s283 + $0xe0] sm:$0xff] %v8763
      %8810 = vst [vmem:[%s283 + $0xe8] sm:$0xff] %v8768
      %8811 = vst [vmem:[%s283 + $0xf0] sm:$0xff] %v8773
      %8812 = vst [vmem:[%s283 + $0xf8] sm:$0xff] %v8778
      %s8813 = smul.u32 32, %s18
      %p8814 = scmp.lt.s32.totalorder %s8813, 63
      %s8815 = scalar_select %p8814, %s8813, 63
      %s8816 = smul.addr %s8815, 8
      %s8817 = scalar_lea.vmem %s7, %s8816
      // Predicated region
      $region49: #{attn_net_gated_forward.1} parent=47 // pred_check
        %p8818 = pneg %p188
      $region50: #{attn_net_gated_forward.1} parent=47 // pred_check_branch
        %8820 = sbr.rel (%p8818) target = $region52
      $region51: #{attn_net_gated_forward.1} parent=47 // pred_region
        %s8821 = smul.u32 32, %s18
      $region52: #{attn_net_gated_forward.1} parent=47 // pred_fallthru
        _
    $region48: #{attn_net_gated_forward.1} parent=5 // pred_fallthru
      _
    %p8822 = scmp.le.s32.totalorder 2, %s13
    // Predicated region
    $region53: #{attn_net_gated_forward.1} parent=5 // pred_check
      %p8823 = pneg %p8822
    $region54: #{attn_net_gated_forward.1} parent=5 // pred_check_branch
      %8825 = sbr.rel (%p8823) target = $region56
    $region55: #{attn_net_gated_forward.1} parent=5 // pred_region
      %s8826 = ssub.s32 %s13, 2
      // Predicated region
      $region57: #{attn_net_gated_forward.1} parent=55 // pred_check
        %p8827 = pneg %p194
      $region58: #{attn_net_gated_forward.1} parent=55 // pred_check_branch
        %8829 = sbr.rel (%p8827) target = $region60
      $region59: #{attn_net_gated_forward.1} parent=55 // pred_region
        %s8830 = smul.u32 32, %s19
        %p8831 = scmp.lt.s32.totalorder %s8830, 63
        %s8832 = scalar_select %p8831, %s8830, 63
        %s8833 = smul.addr %s8832, 8
        %s8834 = scalar_lea.vmem %s7, %s8833
      $region60: #{attn_net_gated_forward.1} parent=55 // pred_fallthru
        _
    $region56: #{attn_net_gated_forward.1} parent=5 // pred_fallthru
      _
  $region6: #{attn_net_gated_forward.1} parent=0 // loop_footer
    %s17 = sadd.s32 1, %s13
  $region7: #{attn_net_gated_forward.1} parent=0 // loop_footer_branch
    %12 = sbr.rel target = $region3
  $region8: #{attn_net_gated_forward.1} parent=0 // loop_exit
    _

</llo_original>
